<compile_context>
chip_gen: v5e
topology: v5e:2x2
jax: 0.10.0
libtpu: 0.0.40
codegen_flags: <defaults>
</compile_context>

<pallas_src>
import functools

import jax
import jax.numpy as jnp
from jax.experimental import pallas as pl
from jax.experimental.pallas import tpu as pltpu


NUM_RES_BLOCKS = 4
POLICY_C = 32          # policy-head conv output channels (fixed by the module)
VALUE_C = 3            # value-head conv output channels (fixed by the module)
HEAD_C = 64            # merged head conv width: [0:32]=policy, [32:35]=value, rest 0


# ----------------------------- Pallas kernels ------------------------------ #

def fused_convnet_kernel(x_ref, wbb_ref, bbb_ref, whead_ref, bhead_ref, o_ref,
                         pad_ref, patch_ref, *, H, W, CH, num_blocks):
    """Start conv + residual backbone + merged head conv for ONE batch element.

    x_ref     : (1, H, W, CH)        input, channels zero-padded 3 -> CH
    wbb_ref   : (1+2*blocks, 9*CH, CH)   BN-folded im2col conv weights (bf16)
    bbb_ref   : (1+2*blocks, CH)         BN-folded biases (f32)
    whead_ref : (9*CH, HEAD_C)           merged policy/value head conv weight (bf16)
    bhead_ref : (1, HEAD_C)              merged head bias (f32)
    o_ref     : (1, H*W, HEAD_C)         ReLU'd head activations (bf16)
    pad_ref   : (H+2, W+2, CH) f32       VMEM-resident padded activation
    patch_ref : (H*W, 9*CH)    bf16      im2col staging buffer (MXU lhs)
    """
    HW = H * W

    def conv(w, bias):
        # Build the (HW, 9*CH) im2col patch from 9 shifted windows, then a single
        # fused K=9*CH matmul on the MXU (bf16 x bf16 -> f32 accumulate).
        xp = pad_ref[...]                                        # (H+2, W+2, CH) f32
        for k in range(9):
            dy, dx = divmod(k, 3)
            tap = xp[dy:dy + H, dx:dx + W, :].reshape(HW, CH)
            patch_ref[:, k * CH:(k + 1) * CH] = tap.astype(patch_ref.dtype)
        acc = jnp.dot(patch_ref[...], w, preferred_element_type=jnp.float32)
        return acc + bias                                        # (HW, cout) f32

    def write_act(a):
        # Overwrite the interior; the zero border written below is never touched
        # again, so "same" padding is free for every subsequent layer.
        pad_ref[1:H + 1, 1:W + 1, :] = a.reshape(H, W, CH)

    # One-time zero init of the padded activation buffer, then load the input.
    pad_ref[...] = jnp.zeros_like(pad_ref)
    pad_ref[1:H + 1, 1:W + 1, :] = x_ref[0]

    # start block: Conv -> (folded) BN -> ReLU
    h = jnp.maximum(conv(wbb_ref[0], bbb_ref[0]), 0.0)           # (HW, CH) f32
    write_act(h)

    # residual backbone (residual kept in f32 registers between layers)
    for blk in range(num_blocks):
        res = h
        t = jnp.maximum(conv(wbb_ref[1 + 2 * blk], bbb_ref[1 + 2 * blk]), 0.0)
        write_act(t)
        h = jnp.maximum(conv(wbb_ref[2 + 2 * blk], bbb_ref[2 + 2 * blk]) + res, 0.0)
        write_act(h)

    # merged policy/value head conv (+ReLU); channels [0:32]=policy, [32:35]=value
    head = jnp.maximum(conv(whead_ref[...], bhead_ref[0]), 0.0)   # (HW, HEAD_C) f32
    o_ref[0] = head.astype(o_ref.dtype)


def fused_convnet(x_nhwc, kp, *, H, W):
    """x_nhwc: (B, H, W, CH). Returns (B, H*W, HEAD_C) bf16 head activations."""
    B = x_nhwc.shape[0]
    CH = kp["wbb"].shape[-1]
    num_blocks = (kp["wbb"].shape[0] - 1) // 2
    HW = H * W
    kernel = functools.partial(fused_convnet_kernel, H=H, W=W, CH=CH,
                               num_blocks=num_blocks)
    return pl.pallas_call(
        kernel,
        out_shape=jax.ShapeDtypeStruct((B, HW, HEAD_C), jnp.bfloat16),
        grid=(B,),
        in_specs=[
            pl.BlockSpec((1, H, W, CH), lambda b: (b, 0, 0, 0)),
            pl.BlockSpec(kp["wbb"].shape, lambda b: (0, 0, 0)),
            pl.BlockSpec(kp["bbb"].shape, lambda b: (0, 0)),
            pl.BlockSpec(kp["whead"].shape, lambda b: (0, 0)),
            pl.BlockSpec(kp["bhead"].shape, lambda b: (0, 0)),
        ],
        out_specs=pl.BlockSpec((1, HW, HEAD_C), lambda b: (b, 0, 0)),
        scratch_shapes=[
            pltpu.VMEM((H + 2, W + 2, CH), jnp.float32),
            pltpu.VMEM((HW, 9 * CH), jnp.bfloat16),
        ],
        compiler_params=pltpu.CompilerParams(dimension_semantics=("parallel",)),
    )(x_nhwc, kp["wbb"], kp["bbb"], kp["whead"], kp["bhead"])


def heads_fc_kernel(hf_ref, w_ref, b_ref, pol_ref, val_ref, *, action_size):
    """Single merged FC for both heads: policy logits + tanh(value)."""
    y = jnp.dot(hf_ref[...], w_ref[...], preferred_element_type=jnp.float32)
    y = y + b_ref[0]
    pol_ref[...] = y[:, :action_size]
    val_ref[...] = jnp.tanh(y[:, action_size:action_size + 1])


def heads_fc(hf, wcomb, bcomb, *, action_size):
    """hf: (B, HW*HEAD_C) bf16; wcomb: (HW*HEAD_C, A+1) bf16; bcomb: (1, A+1)."""
    B, F = hf.shape
    return pl.pallas_call(
        functools.partial(heads_fc_kernel, action_size=action_size),
        out_shape=(jax.ShapeDtypeStruct((B, action_size), jnp.float32),
                   jax.ShapeDtypeStruct((B, 1), jnp.float32)),
        grid=(1,),
        in_specs=[
            pl.BlockSpec((B, F), lambda i: (0, 0)),
            pl.BlockSpec(wcomb.shape, lambda i: (0, 0)),
            pl.BlockSpec(bcomb.shape, lambda i: (0, 0)),
        ],
        out_specs=(pl.BlockSpec((B, action_size), lambda i: (0, 0)),
                   pl.BlockSpec((B, 1), lambda i: (0, 0))),
    )(hf, wcomb, bcomb)


# --------------------------- parameter initialization ---------------------- #

def init_conv_bn(key, cin, cout):
    """Conv2d(3x3, bias) + BatchNorm2d (eval mode) folded into (w_eff, b_eff)."""
    kw, kb, kg, kbt, km, kv = jax.random.split(key, 6)
    w = 0.1 * jax.random.normal(kw, (3, 3, cin, cout), jnp.float32)
    b = 0.1 * jax.random.normal(kb, (cout,), jnp.float32)
    gamma = 1.0 + 0.1 * jax.random.normal(kg, (cout,), jnp.float32)
    beta = 0.1 * jax.random.normal(kbt, (cout,), jnp.float32)
    mean = 0.1 * jax.random.normal(km, (cout,), jnp.float32)
    var = jax.random.uniform(kv, (cout,), jnp.float32, minval=0.5, maxval=1.5)
    scale = gamma * jax.lax.rsqrt(var + 1e-5)
    w_eff = w * scale                       # broadcast over Cout (last dim)
    b_eff = scale * (b - mean) + beta
    return w_eff, b_eff


def init_linear(key, fin, fout):
    """Linear weight stored (fin, fout); fin indexed in torch NCHW-Flatten order."""
    kw, kb = jax.random.split(key)
    w = 0.1 * jax.random.normal(kw, (fin, fout), jnp.float32)
    b = 0.1 * jax.random.normal(kb, (fout,), jnp.float32)
    return w, b


def init_gonnet_params(key, num_hidden, board_x, board_y, action_size,
                       num_res_blocks=NUM_RES_BLOCKS):
    keys = jax.random.split(key, 2 + 2 * num_res_blocks + 4)
    it = iter(keys)
    return {
        "start": init_conv_bn(next(it), 3, num_hidden),
        "blocks": [
            (init_conv_bn(next(it), num_hidden, num_hidden),
             init_conv_bn(next(it), num_hidden, num_hidden))
            for _ in range(num_res_blocks)
        ],
        "policy_conv": init_conv_bn(next(it), num_hidden, POLICY_C),
        "policy_fc": init_linear(next(it), POLICY_C * board_x * board_y, action_size),
        "value_conv": init_conv_bn(next(it), num_hidden, VALUE_C),
        "value_fc": init_linear(next(it), VALUE_C * board_x * board_y, 1),
    }


def pack_params(raw, num_hidden, board_x, board_y, action_size):
    """Repack torch-layout (BN-folded) params into kernel-ready layouts."""
    CH, HW, A = num_hidden, board_x * board_y, action_size

    def im2col(w):                                   # (3,3,CH,cout) -> (9*CH, cout)
        return w.reshape(9 * CH, w.shape[-1])        # row order = (dy, dx, cin)

    # --- backbone conv stack (start conv's Cin zero-padded 3 -> CH) ---
    w0, b0 = raw["start"]
    w0 = jnp.pad(w0, ((0, 0), (0, 0), (0, CH - 3), (0, 0)))
    conv_ws, conv_bs = [w0], [b0]
    for (w1, b1), (w2, b2) in raw["blocks"]:
        conv_ws += [w1, w2]
        conv_bs += [b1, b2]
    wbb = jnp.stack([im2col(w) for w in conv_ws]).astype(jnp.bfloat16)
    bbb = jnp.stack(conv_bs).astype(jnp.float32)

    # --- merged policy/value head conv: channels [0:32]=policy, [32:35]=value ---
    wp_c, bp_c = raw["policy_conv"]
    wv_c, bv_c = raw["value_conv"]
    whead = jnp.zeros((3, 3, CH, HEAD_C), jnp.float32)
    whead = whead.at[..., :POLICY_C].set(wp_c)
    whead = whead.at[..., POLICY_C:POLICY_C + VALUE_C].set(wv_c)
    whead = im2col(whead).astype(jnp.bfloat16)
    bhead = jnp.zeros((HEAD_C,), jnp.float32)
    bhead = bhead.at[:POLICY_C].set(bp_c).at[POLICY_C:POLICY_C + VALUE_C].set(bv_c)
    bhead = bhead.reshape(1, HEAD_C)

    # --- merged FC consuming the NHWC-flattened head activation ---
    # Kernel feature index  f      = hw * HEAD_C + ch   (NHWC flatten)
    # Torch feature index   f_torch = c * HW + hw       (NCHW Flatten)
    # so permute FC-weight rows from (c, hw) order to (hw, c) order here (free).
    wp, bp = raw["policy_fc"]                         # (POLICY_C*HW, A)
    wv, bv = raw["value_fc"]                          # (VALUE_C*HW, 1)
    wp3 = jnp.transpose(wp.reshape(POLICY_C, HW, A), (1, 0, 2))   # (HW, 32, A)
    wv3 = jnp.transpose(wv.reshape(VALUE_C, HW, 1), (1, 0, 2))    # (HW, 3, 1)
    wcomb = jnp.zeros((HW, HEAD_C, A + 1), jnp.float32)
    wcomb = wcomb.at[:, :POLICY_C, :A].set(wp3)
    wcomb = wcomb.at[:, POLICY_C:POLICY_C + VALUE_C, A:].set(wv3)
    wcomb = wcomb.reshape(HW * HEAD_C, A + 1).astype(jnp.bfloat16)
    bcomb = jnp.concatenate([bp, bv]).reshape(1, A + 1).astype(jnp.float32)

    return {"wbb": wbb, "bbb": bbb, "whead": whead, "bhead": bhead,
            "wcomb": wcomb, "bcomb": bcomb}


# --------------------------------- forward --------------------------------- #

def gonnet_forward(kp, x, board_x, board_y):
    """x: any shape reshapeable to (-1, 3, board_x, board_y) (NCHW, like PyTorch)."""
    CH = kp["wbb"].shape[-1]
    action_size = kp["wcomb"].shape[-1] - 1

    x = x.reshape(-1, 3, board_x, board_y).astype(jnp.float32)
    B = x.shape[0]
    # One tiny transpose+pad on the raw input (NCHW -> NHWC, channels 3 -> CH).
    xh = jnp.transpose(x, (0, 2, 3, 1))
    xh = jnp.pad(xh, ((0, 0), (0, 0), (0, 0), (0, CH - 3)))

    head = fused_convnet(xh, kp, H=board_x, W=board_y)     # (B, HW, HEAD_C) bf16
    hf = head.reshape(B, board_x * board_y * HEAD_C)        # pure row-major reshape

    policy, value = heads_fc(hf, kp["wcomb"], kp["bcomb"], action_size=action_size)
    return policy, value


# ----------------------------------- main ----------------------------------- #

if __name__ == "__main__":
    board_x, board_y = 8, 8
    num_channels = 32
    action_size = board_x * board_y + 1   # 65, Go-style (board + pass)
    batch = 2

    key = jax.random.PRNGKey(0)
    k_params, k_input = jax.random.split(key)

    raw = init_gonnet_params(k_params, num_channels, board_x, board_y, action_size)
    kp = pack_params(raw, num_channels, board_x, board_y, action_size)
    x = jax.random.normal(k_input, (batch, 3, board_x, board_y), jnp.float32)

    fwd = jax.jit(functools.partial(gonnet_forward, board_x=board_x, board_y=board_y))
    policy, value = fwd(kp, x)
    jax.block_until_ready(policy)
    jax.block_until_ready(value)

    assert policy.shape == (batch, action_size)
    assert value.shape == (batch, 1)
    assert bool(jnp.all(jnp.isfinite(policy))) and bool(jnp.all(jnp.isfinite(value)))
    assert bool(jnp.all(jnp.abs(value) <= 1.0))
    print("KERNEL_OK")
</pallas_src>

<mosaic_0001>
module attributes {stable_mosaic.version = 11 : i64} {
  func.func @fused_convnet_kernel(%arg0: i32, %arg1: memref<1x8x8x32xf32, #tpu.memory_space<vmem>>, %arg2: memref<9x288x32xbf16, #tpu.memory_space<vmem>>, %arg3: memref<9x32xf32, #tpu.memory_space<vmem>>, %arg4: memref<288x64xbf16, #tpu.memory_space<vmem>>, %arg5: memref<1x64xf32, #tpu.memory_space<vmem>>, %arg6: memref<1x64x64xbf16, #tpu.memory_space<vmem>>, %arg7: memref<10x10x32xf32, #tpu.memory_space<vmem>>, %arg8: memref<64x288xbf16, #tpu.memory_space<vmem>>) attributes {dimension_semantics = [#tpu.dimension_semantics<parallel>], iteration_bounds = array<i64: 2>, scalar_prefetch = 0 : i64, scratch_operands = 2 : i64, tpu.core_type = #tpu.core_type<tc>, window_params = [{transform_indices = @transform_0, window_bounds = array<i64: 1, 8, 8, 32>}, {pipeline_mode = #tpu.pipeline_mode<synchronous>, transform_indices = @transform_1, window_bounds = array<i64: 9, 288, 32>}, {pipeline_mode = #tpu.pipeline_mode<synchronous>, transform_indices = @transform_2, window_bounds = array<i64: 9, 32>}, {pipeline_mode = #tpu.pipeline_mode<synchronous>, transform_indices = @transform_3, window_bounds = array<i64: 288, 64>}, {pipeline_mode = #tpu.pipeline_mode<synchronous>, transform_indices = @transform_4, window_bounds = array<i64: 1, 64>}, {transform_indices = @transform_5, window_bounds = array<i64: 1, 64, 64>}]} {
    %cst = arith.constant 0.000000e+00 : f32
    %0 = vector.broadcast %cst : f32 to vector<10x10x32xf32>
    %c0 = arith.constant 0 : index
    %c0_0 = arith.constant 0 : index
    %c0_1 = arith.constant 0 : index
    %1 = vector.load %arg7[%c0, %c0_0, %c0_1] : memref<10x10x32xf32, #tpu.memory_space<vmem>>, vector<10x10x32xf32>
    tpu.vector_store %arg7[%c0, %c0_0, %c0_1], %0 {strides = array<i32>} : memref<10x10x32xf32, #tpu.memory_space<vmem>>, vector<10x10x32xf32>,
    %c0_2 = arith.constant 0 : index
    %c0_3 = arith.constant 0 : index
    %c0_4 = arith.constant 0 : index
    %c0_5 = arith.constant 0 : index
    %2 = vector.load %arg1[%c0_2, %c0_3, %c0_4, %c0_5] : memref<1x8x8x32xf32, #tpu.memory_space<vmem>>, vector<1x8x8x32xf32>
    %3 = vector.shape_cast %2 : vector<1x8x8x32xf32> to vector<8x8x32xf32>
    %c1 = arith.constant 1 : index
    %c1_6 = arith.constant 1 : index
    %c0_7 = arith.constant 0 : index
    %4 = vector.load %arg7[%c1, %c1_6, %c0_7] : memref<10x10x32xf32, #tpu.memory_space<vmem>>, vector<8x8x32xf32>
    tpu.vector_store %arg7[%c1, %c1_6, %c0_7], %3 {strides = array<i32>} : memref<10x10x32xf32, #tpu.memory_space<vmem>>, vector<8x8x32xf32>,
    %c0_8 = arith.constant 0 : index
    %c0_9 = arith.constant 0 : index
    %c0_10 = arith.constant 0 : index
    %5 = vector.load %arg2[%c0_8, %c0_9, %c0_10] : memref<9x288x32xbf16, #tpu.memory_space<vmem>>, vector<1x288x32xbf16>
    %6 = vector.shape_cast %5 : vector<1x288x32xbf16> to vector<288x32xbf16>
    %c0_11 = arith.constant 0 : index
    %c0_12 = arith.constant 0 : index
    %7 = vector.load %arg3[%c0_11, %c0_12] : memref<9x32xf32, #tpu.memory_space<vmem>>, vector<1x32xf32>
    %8 = vector.shape_cast %7 : vector<1x32xf32> to vector<32xf32>
    %c0_13 = arith.constant 0 : index
    %c0_14 = arith.constant 0 : index
    %c0_15 = arith.constant 0 : index
    %9 = vector.load %arg7[%c0_13, %c0_14, %c0_15] : memref<10x10x32xf32, #tpu.memory_space<vmem>>, vector<10x10x32xf32>
    %10 = vector.extract_strided_slice %9 {offsets = [0, 0, 0], sizes = [8, 8, 32], strides = [1, 1, 1]} : vector<10x10x32xf32> to vector<8x8x32xf32>
    %11 = vector.shape_cast %10 : vector<8x8x32xf32> to vector<64x32xf32>
    %12 = arith.truncf %11 : vector<64x32xf32> to vector<64x32xbf16>
    %c0_16 = arith.constant 0 : index
    %c0_17 = arith.constant 0 : index
    %13 = vector.load %arg8[%c0_16, %c0_17] : memref<64x288xbf16, #tpu.memory_space<vmem>>, vector<64x32xbf16>
    tpu.vector_store %arg8[%c0_16, %c0_17], %12 {strides = array<i32>} : memref<64x288xbf16, #tpu.memory_space<vmem>>, vector<64x32xbf16>,
    %14 = vector.extract_strided_slice %9 {offsets = [0, 1, 0], sizes = [8, 8, 32], strides = [1, 1, 1]} : vector<10x10x32xf32> to vector<8x8x32xf32>
    %15 = vector.shape_cast %14 : vector<8x8x32xf32> to vector<64x32xf32>
    %16 = arith.truncf %15 : vector<64x32xf32> to vector<64x32xbf16>
    %c0_18 = arith.constant 0 : index
    %c32 = arith.constant 32 : index
    %17 = vector.load %arg8[%c0_18, %c32] : memref<64x288xbf16, #tpu.memory_space<vmem>>, vector<64x32xbf16>
    tpu.vector_store %arg8[%c0_18, %c32], %16 {strides = array<i32>} : memref<64x288xbf16, #tpu.memory_space<vmem>>, vector<64x32xbf16>,
    %18 = vector.extract_strided_slice %9 {offsets = [0, 2, 0], sizes = [8, 8, 32], strides = [1, 1, 1]} : vector<10x10x32xf32> to vector<8x8x32xf32>
    %19 = vector.shape_cast %18 : vector<8x8x32xf32> to vector<64x32xf32>
    %20 = arith.truncf %19 : vector<64x32xf32> to vector<64x32xbf16>
    %c0_19 = arith.constant 0 : index
    %c64 = arith.constant 64 : index
    %21 = vector.load %arg8[%c0_19, %c64] : memref<64x288xbf16, #tpu.memory_space<vmem>>, vector<64x32xbf16>
    tpu.vector_store %arg8[%c0_19, %c64], %20 {strides = array<i32>} : memref<64x288xbf16, #tpu.memory_space<vmem>>, vector<64x32xbf16>,
    %22 = vector.extract_strided_slice %9 {offsets = [1, 0, 0], sizes = [8, 8, 32], strides = [1, 1, 1]} : vector<10x10x32xf32> to vector<8x8x32xf32>
    %23 = vector.shape_cast %22 : vector<8x8x32xf32> to vector<64x32xf32>
    %24 = arith.truncf %23 : vector<64x32xf32> to vector<64x32xbf16>
    %c0_20 = arith.constant 0 : index
    %c96 = arith.constant 96 : index
    %25 = vector.load %arg8[%c0_20, %c96] : memref<64x288xbf16, #tpu.memory_space<vmem>>, vector<64x32xbf16>
    tpu.vector_store %arg8[%c0_20, %c96], %24 {strides = array<i32>} : memref<64x288xbf16, #tpu.memory_space<vmem>>, vector<64x32xbf16>,
    %26 = vector.extract_strided_slice %9 {offsets = [1, 1, 0], sizes = [8, 8, 32], strides = [1, 1, 1]} : vector<10x10x32xf32> to vector<8x8x32xf32>
    %27 = vector.shape_cast %26 : vector<8x8x32xf32> to vector<64x32xf32>
    %28 = arith.truncf %27 : vector<64x32xf32> to vector<64x32xbf16>
    %c0_21 = arith.constant 0 : index
    %c128 = arith.constant 128 : index
    %29 = vector.load %arg8[%c0_21, %c128] : memref<64x288xbf16, #tpu.memory_space<vmem>>, vector<64x32xbf16>
    tpu.vector_store %arg8[%c0_21, %c128], %28 {strides = array<i32>} : memref<64x288xbf16, #tpu.memory_space<vmem>>, vector<64x32xbf16>,
    %30 = vector.extract_strided_slice %9 {offsets = [1, 2, 0], sizes = [8, 8, 32], strides = [1, 1, 1]} : vector<10x10x32xf32> to vector<8x8x32xf32>
    %31 = vector.shape_cast %30 : vector<8x8x32xf32> to vector<64x32xf32>
    %32 = arith.truncf %31 : vector<64x32xf32> to vector<64x32xbf16>
    %c0_22 = arith.constant 0 : index
    %c160 = arith.constant 160 : index
    %33 = vector.load %arg8[%c0_22, %c160] : memref<64x288xbf16, #tpu.memory_space<vmem>>, vector<64x32xbf16>
    tpu.vector_store %arg8[%c0_22, %c160], %32 {strides = array<i32>} : memref<64x288xbf16, #tpu.memory_space<vmem>>, vector<64x32xbf16>,
    %34 = vector.extract_strided_slice %9 {offsets = [2, 0, 0], sizes = [8, 8, 32], strides = [1, 1, 1]} : vector<10x10x32xf32> to vector<8x8x32xf32>
    %35 = vector.shape_cast %34 : vector<8x8x32xf32> to vector<64x32xf32>
    %36 = arith.truncf %35 : vector<64x32xf32> to vector<64x32xbf16>
    %c0_23 = arith.constant 0 : index
    %c192 = arith.constant 192 : index
    %37 = vector.load %arg8[%c0_23, %c192] : memref<64x288xbf16, #tpu.memory_space<vmem>>, vector<64x32xbf16>
    tpu.vector_store %arg8[%c0_23, %c192], %36 {strides = array<i32>} : memref<64x288xbf16, #tpu.memory_space<vmem>>, vector<64x32xbf16>,
    %38 = vector.extract_strided_slice %9 {offsets = [2, 1, 0], sizes = [8, 8, 32], strides = [1, 1, 1]} : vector<10x10x32xf32> to vector<8x8x32xf32>
    %39 = vector.shape_cast %38 : vector<8x8x32xf32> to vector<64x32xf32>
    %40 = arith.truncf %39 : vector<64x32xf32> to vector<64x32xbf16>
    %c0_24 = arith.constant 0 : index
    %c224 = arith.constant 224 : index
    %41 = vector.load %arg8[%c0_24, %c224] : memref<64x288xbf16, #tpu.memory_space<vmem>>, vector<64x32xbf16>
    tpu.vector_store %arg8[%c0_24, %c224], %40 {strides = array<i32>} : memref<64x288xbf16, #tpu.memory_space<vmem>>, vector<64x32xbf16>,
    %42 = vector.extract_strided_slice %9 {offsets = [2, 2, 0], sizes = [8, 8, 32], strides = [1, 1, 1]} : vector<10x10x32xf32> to vector<8x8x32xf32>
    %43 = vector.shape_cast %42 : vector<8x8x32xf32> to vector<64x32xf32>
    %44 = arith.truncf %43 : vector<64x32xf32> to vector<64x32xbf16>
    %c0_25 = arith.constant 0 : index
    %c256 = arith.constant 256 : index
    %45 = vector.load %arg8[%c0_25, %c256] : memref<64x288xbf16, #tpu.memory_space<vmem>>, vector<64x32xbf16>
    tpu.vector_store %arg8[%c0_25, %c256], %44 {strides = array<i32>} : memref<64x288xbf16, #tpu.memory_space<vmem>>, vector<64x32xbf16>,
    %c0_26 = arith.constant 0 : index
    %c0_27 = arith.constant 0 : index
    %46 = vector.load %arg8[%c0_26, %c0_27] : memref<64x288xbf16, #tpu.memory_space<vmem>>, vector<64x288xbf16>
    %cst_28 = arith.constant dense<0.000000e+00> : vector<64x32xf32>
    %47 = tpu.matmul %46, %6, %cst_28 {dimension_numbers = #tpu.dot_dimension_numbers<[1], [0], [0], [1], [0, 0, 1, 1], [], []>} : vector<64x288xbf16>, vector<288x32xbf16>, vector<64x32xf32> -> vector<64x32xf32>
    %48 = vector.shape_cast %8 : vector<32xf32> to vector<1x32xf32>
    %49 = vector.broadcast %48 : vector<1x32xf32> to vector<64x32xf32>
    %50 = arith.addf %47, %49 : vector<64x32xf32>
    %cst_29 = arith.constant 0.000000e+00 : f32
    %51 = vector.broadcast %cst_29 : f32 to vector<64x32xf32>
    %52 = arith.maximumf %50, %51 : vector<64x32xf32>
    %53 = vector.shape_cast %52 : vector<64x32xf32> to vector<8x8x32xf32>
    %c1_30 = arith.constant 1 : index
    %c1_31 = arith.constant 1 : index
    %c0_32 = arith.constant 0 : index
    %54 = vector.load %arg7[%c1_30, %c1_31, %c0_32] : memref<10x10x32xf32, #tpu.memory_space<vmem>>, vector<8x8x32xf32>
    tpu.vector_store %arg7[%c1_30, %c1_31, %c0_32], %53 {strides = array<i32>} : memref<10x10x32xf32, #tpu.memory_space<vmem>>, vector<8x8x32xf32>,
    %c1_33 = arith.constant 1 : index
    %c0_34 = arith.constant 0 : index
    %c0_35 = arith.constant 0 : index
    %55 = vector.load %arg2[%c1_33, %c0_34, %c0_35] : memref<9x288x32xbf16, #tpu.memory_space<vmem>>, vector<1x288x32xbf16>
    %56 = vector.shape_cast %55 : vector<1x288x32xbf16> to vector<288x32xbf16>
    %c1_36 = arith.constant 1 : index
    %c0_37 = arith.constant 0 : index
    %57 = vector.load %arg3[%c1_36, %c0_37] : memref<9x32xf32, #tpu.memory_space<vmem>>, vector<1x32xf32>
    %58 = vector.shape_cast %57 : vector<1x32xf32> to vector<32xf32>
    %c0_38 = arith.constant 0 : index
    %c0_39 = arith.constant 0 : index
    %c0_40 = arith.constant 0 : index
    %59 = vector.load %arg7[%c0_38, %c0_39, %c0_40] : memref<10x10x32xf32, #tpu.memory_space<vmem>>, vector<10x10x32xf32>
    %60 = vector.extract_strided_slice %59 {offsets = [0, 0, 0], sizes = [8, 8, 32], strides = [1, 1, 1]} : vector<10x10x32xf32> to vector<8x8x32xf32>
    %61 = vector.shape_cast %60 : vector<8x8x32xf32> to vector<64x32xf32>
    %62 = arith.truncf %61 : vector<64x32xf32> to vector<64x32xbf16>
    %c0_41 = arith.constant 0 : index
    %c0_42 = arith.constant 0 : index
    %63 = vector.load %arg8[%c0_41, %c0_42] : memref<64x288xbf16, #tpu.memory_space<vmem>>, vector<64x32xbf16>
    tpu.vector_store %arg8[%c0_41, %c0_42], %62 {strides = array<i32>} : memref<64x288xbf16, #tpu.memory_space<vmem>>, vector<64x32xbf16>,
    %64 = vector.extract_strided_slice %59 {offsets = [0, 1, 0], sizes = [8, 8, 32], strides = [1, 1, 1]} : vector<10x10x32xf32> to vector<8x8x32xf32>
    %65 = vector.shape_cast %64 : vector<8x8x32xf32> to vector<64x32xf32>
    %66 = arith.truncf %65 : vector<64x32xf32> to vector<64x32xbf16>
    %c0_43 = arith.constant 0 : index
    %c32_44 = arith.constant 32 : index
    %67 = vector.load %arg8[%c0_43, %c32_44] : memref<64x288xbf16, #tpu.memory_space<vmem>>, vector<64x32xbf16>
    tpu.vector_store %arg8[%c0_43, %c32_44], %66 {strides = array<i32>} : memref<64x288xbf16, #tpu.memory_space<vmem>>, vector<64x32xbf16>,
    %68 = vector.extract_strided_slice %59 {offsets = [0, 2, 0], sizes = [8, 8, 32], strides = [1, 1, 1]} : vector<10x10x32xf32> to vector<8x8x32xf32>
    %69 = vector.shape_cast %68 : vector<8x8x32xf32> to vector<64x32xf32>
    %70 = arith.truncf %69 : vector<64x32xf32> to vector<64x32xbf16>
    %c0_45 = arith.constant 0 : index
    %c64_46 = arith.constant 64 : index
    %71 = vector.load %arg8[%c0_45, %c64_46] : memref<64x288xbf16, #tpu.memory_space<vmem>>, vector<64x32xbf16>
    tpu.vector_store %arg8[%c0_45, %c64_46], %70 {strides = array<i32>} : memref<64x288xbf16, #tpu.memory_space<vmem>>, vector<64x32xbf16>,
    %72 = vector.extract_strided_slice %59 {offsets = [1, 0, 0], sizes = [8, 8, 32], strides = [1, 1, 1]} : vector<10x10x32xf32> to vector<8x8x32xf32>
    %73 = vector.shape_cast %72 : vector<8x8x32xf32> to vector<64x32xf32>
    %74 = arith.truncf %73 : vector<64x32xf32> to vector<64x32xbf16>
    %c0_47 = arith.constant 0 : index
    %c96_48 = arith.constant 96 : index
    %75 = vector.load %arg8[%c0_47, %c96_48] : memref<64x288xbf16, #tpu.memory_space<vmem>>, vector<64x32xbf16>
    tpu.vector_store %arg8[%c0_47, %c96_48], %74 {strides = array<i32>} : memref<64x288xbf16, #tpu.memory_space<vmem>>, vector<64x32xbf16>,
    %76 = vector.extract_strided_slice %59 {offsets = [1, 1, 0], sizes = [8, 8, 32], strides = [1, 1, 1]} : vector<10x10x32xf32> to vector<8x8x32xf32>
    %77 = vector.shape_cast %76 : vector<8x8x32xf32> to vector<64x32xf32>
    %78 = arith.truncf %77 : vector<64x32xf32> to vector<64x32xbf16>
    %c0_49 = arith.constant 0 : index
    %c128_50 = arith.constant 128 : index
    %79 = vector.load %arg8[%c0_49, %c128_50] : memref<64x288xbf16, #tpu.memory_space<vmem>>, vector<64x32xbf16>
    tpu.vector_store %arg8[%c0_49, %c128_50], %78 {strides = array<i32>} : memref<64x288xbf16, #tpu.memory_space<vmem>>, vector<64x32xbf16>,
    %80 = vector.extract_strided_slice %59 {offsets = [1, 2, 0], sizes = [8, 8, 32], strides = [1, 1, 1]} : vector<10x10x32xf32> to vector<8x8x32xf32>
    %81 = vector.shape_cast %80 : vector<8x8x32xf32> to vector<64x32xf32>
    %82 = arith.truncf %81 : vector<64x32xf32> to vector<64x32xbf16>
    %c0_51 = arith.constant 0 : index
    %c160_52 = arith.constant 160 : index
    %83 = vector.load %arg8[%c0_51, %c160_52] : memref<64x288xbf16, #tpu.memory_space<vmem>>, vector<64x32xbf16>
    tpu.vector_store %arg8[%c0_51, %c160_52], %82 {strides = array<i32>} : memref<64x288xbf16, #tpu.memory_space<vmem>>, vector<64x32xbf16>,
    %84 = vector.extract_strided_slice %59 {offsets = [2, 0, 0], sizes = [8, 8, 32], strides = [1, 1, 1]} : vector<10x10x32xf32> to vector<8x8x32xf32>
    %85 = vector.shape_cast %84 : vector<8x8x32xf32> to vector<64x32xf32>
    %86 = arith.truncf %85 : vector<64x32xf32> to vector<64x32xbf16>
    %c0_53 = arith.constant 0 : index
    %c192_54 = arith.constant 192 : index
    %87 = vector.load %arg8[%c0_53, %c192_54] : memref<64x288xbf16, #tpu.memory_space<vmem>>, vector<64x32xbf16>
    tpu.vector_store %arg8[%c0_53, %c192_54], %86 {strides = array<i32>} : memref<64x288xbf16, #tpu.memory_space<vmem>>, vector<64x32xbf16>,
    %88 = vector.extract_strided_slice %59 {offsets = [2, 1, 0], sizes = [8, 8, 32], strides = [1, 1, 1]} : vector<10x10x32xf32> to vector<8x8x32xf32>
    %89 = vector.shape_cast %88 : vector<8x8x32xf32> to vector<64x32xf32>
    %90 = arith.truncf %89 : vector<64x32xf32> to vector<64x32xbf16>
    %c0_55 = arith.constant 0 : index
    %c224_56 = arith.constant 224 : index
    %91 = vector.load %arg8[%c0_55, %c224_56] : memref<64x288xbf16, #tpu.memory_space<vmem>>, vector<64x32xbf16>
    tpu.vector_store %arg8[%c0_55, %c224_56], %90 {strides = array<i32>} : memref<64x288xbf16, #tpu.memory_space<vmem>>, vector<64x32xbf16>,
    %92 = vector.extract_strided_slice %59 {offsets = [2, 2, 0], sizes = [8, 8, 32], strides = [1, 1, 1]} : vector<10x10x32xf32> to vector<8x8x32xf32>
    %93 = vector.shape_cast %92 : vector<8x8x32xf32> to vector<64x32xf32>
    %94 = arith.truncf %93 : vector<64x32xf32> to vector<64x32xbf16>
    %c0_57 = arith.constant 0 : index
    %c256_58 = arith.constant 256 : index
    %95 = vector.load %arg8[%c0_57, %c256_58] : memref<64x288xbf16, #tpu.memory_space<vmem>>, vector<64x32xbf16>
    tpu.vector_store %arg8[%c0_57, %c256_58], %94 {strides = array<i32>} : memref<64x288xbf16, #tpu.memory_space<vmem>>, vector<64x32xbf16>,
    %c0_59 = arith.constant 0 : index
    %c0_60 = arith.constant 0 : index
    %96 = vector.load %arg8[%c0_59, %c0_60] : memref<64x288xbf16, #tpu.memory_space<vmem>>, vector<64x288xbf16>
    %cst_61 = arith.constant dense<0.000000e+00> : vector<64x32xf32>
    %97 = tpu.matmul %96, %56, %cst_61 {dimension_numbers = #tpu.dot_dimension_numbers<[1], [0], [0], [1], [0, 0, 1, 1], [], []>} : vector<64x288xbf16>, vector<288x32xbf16>, vector<64x32xf32> -> vector<64x32xf32>
    %98 = vector.shape_cast %58 : vector<32xf32> to vector<1x32xf32>
    %99 = vector.broadcast %98 : vector<1x32xf32> to vector<64x32xf32>
    %100 = arith.addf %97, %99 : vector<64x32xf32>
    %cst_62 = arith.constant 0.000000e+00 : f32
    %101 = vector.broadcast %cst_62 : f32 to vector<64x32xf32>
    %102 = arith.maximumf %100, %101 : vector<64x32xf32>
    %103 = vector.shape_cast %102 : vector<64x32xf32> to vector<8x8x32xf32>
    %c1_63 = arith.constant 1 : index
    %c1_64 = arith.constant 1 : index
    %c0_65 = arith.constant 0 : index
    %104 = vector.load %arg7[%c1_63, %c1_64, %c0_65] : memref<10x10x32xf32, #tpu.memory_space<vmem>>, vector<8x8x32xf32>
    tpu.vector_store %arg7[%c1_63, %c1_64, %c0_65], %103 {strides = array<i32>} : memref<10x10x32xf32, #tpu.memory_space<vmem>>, vector<8x8x32xf32>,
    %c2 = arith.constant 2 : index
    %c0_66 = arith.constant 0 : index
    %c0_67 = arith.constant 0 : index
    %105 = vector.load %arg2[%c2, %c0_66, %c0_67] : memref<9x288x32xbf16, #tpu.memory_space<vmem>>, vector<1x288x32xbf16>
    %106 = vector.shape_cast %105 : vector<1x288x32xbf16> to vector<288x32xbf16>
    %c2_68 = arith.constant 2 : index
    %c0_69 = arith.constant 0 : index
    %107 = vector.load %arg3[%c2_68, %c0_69] : memref<9x32xf32, #tpu.memory_space<vmem>>, vector<1x32xf32>
    %108 = vector.shape_cast %107 : vector<1x32xf32> to vector<32xf32>
    %c0_70 = arith.constant 0 : index
    %c0_71 = arith.constant 0 : index
    %c0_72 = arith.constant 0 : index
    %109 = vector.load %arg7[%c0_70, %c0_71, %c0_72] : memref<10x10x32xf32, #tpu.memory_space<vmem>>, vector<10x10x32xf32>
    %110 = vector.extract_strided_slice %109 {offsets = [0, 0, 0], sizes = [8, 8, 32], strides = [1, 1, 1]} : vector<10x10x32xf32> to vector<8x8x32xf32>
    %111 = vector.shape_cast %110 : vector<8x8x32xf32> to vector<64x32xf32>
    %112 = arith.truncf %111 : vector<64x32xf32> to vector<64x32xbf16>
    %c0_73 = arith.constant 0 : index
    %c0_74 = arith.constant 0 : index
    %113 = vector.load %arg8[%c0_73, %c0_74] : memref<64x288xbf16, #tpu.memory_space<vmem>>, vector<64x32xbf16>
    tpu.vector_store %arg8[%c0_73, %c0_74], %112 {strides = array<i32>} : memref<64x288xbf16, #tpu.memory_space<vmem>>, vector<64x32xbf16>,
    %114 = vector.extract_strided_slice %109 {offsets = [0, 1, 0], sizes = [8, 8, 32], strides = [1, 1, 1]} : vector<10x10x32xf32> to vector<8x8x32xf32>
    %115 = vector.shape_cast %114 : vector<8x8x32xf32> to vector<64x32xf32>
    %116 = arith.truncf %115 : vector<64x32xf32> to vector<64x32xbf16>
    %c0_75 = arith.constant 0 : index
    %c32_76 = arith.constant 32 : index
    %117 = vector.load %arg8[%c0_75, %c32_76] : memref<64x288xbf16, #tpu.memory_space<vmem>>, vector<64x32xbf16>
    tpu.vector_store %arg8[%c0_75, %c32_76], %116 {strides = array<i32>} : memref<64x288xbf16, #tpu.memory_space<vmem>>, vector<64x32xbf16>,
    %118 = vector.extract_strided_slice %109 {offsets = [0, 2, 0], sizes = [8, 8, 32], strides = [1, 1, 1]} : vector<10x10x32xf32> to vector<8x8x32xf32>
    %119 = vector.shape_cast %118 : vector<8x8x32xf32> to vector<64x32xf32>
    %120 = arith.truncf %119 : vector<64x32xf32> to vector<64x32xbf16>
    %c0_77 = arith.constant 0 : index
    %c64_78 = arith.constant 64 : index
    %121 = vector.load %arg8[%c0_77, %c64_78] : memref<64x288xbf16, #tpu.memory_space<vmem>>, vector<64x32xbf16>
    tpu.vector_store %arg8[%c0_77, %c64_78], %120 {strides = array<i32>} : memref<64x288xbf16, #tpu.memory_space<vmem>>, vector<64x32xbf16>,
    %122 = vector.extract_strided_slice %109 {offsets = [1, 0, 0], sizes = [8, 8, 32], strides = [1, 1, 1]} : vector<10x10x32xf32> to vector<8x8x32xf32>
    %123 = vector.shape_cast %122 : vector<8x8x32xf32> to vector<64x32xf32>
    %124 = arith.truncf %123 : vector<64x32xf32> to vector<64x32xbf16>
    %c0_79 = arith.constant 0 : index
    %c96_80 = arith.constant 96 : index
    %125 = vector.load %arg8[%c0_79, %c96_80] : memref<64x288xbf16, #tpu.memory_space<vmem>>, vector<64x32xbf16>
    tpu.vector_store %arg8[%c0_79, %c96_80], %124 {strides = array<i32>} : memref<64x288xbf16, #tpu.memory_space<vmem>>, vector<64x32xbf16>,
    %126 = vector.extract_strided_slice %109 {offsets = [1, 1, 0], sizes = [8, 8, 32], strides = [1, 1, 1]} : vector<10x10x32xf32> to vector<8x8x32xf32>
    %127 = vector.shape_cast %126 : vector<8x8x32xf32> to vector<64x32xf32>
    %128 = arith.truncf %127 : vector<64x32xf32> to vector<64x32xbf16>
    %c0_81 = arith.constant 0 : index
    %c128_82 = arith.constant 128 : index
    %129 = vector.load %arg8[%c0_81, %c128_82] : memref<64x288xbf16, #tpu.memory_space<vmem>>, vector<64x32xbf16>
    tpu.vector_store %arg8[%c0_81, %c128_82], %128 {strides = array<i32>} : memref<64x288xbf16, #tpu.memory_space<vmem>>, vector<64x32xbf16>,
    %130 = vector.extract_strided_slice %109 {offsets = [1, 2, 0], sizes = [8, 8, 32], strides = [1, 1, 1]} : vector<10x10x32xf32> to vector<8x8x32xf32>
    %131 = vector.shape_cast %130 : vector<8x8x32xf32> to vector<64x32xf32>
    %132 = arith.truncf %131 : vector<64x32xf32> to vector<64x32xbf16>
    %c0_83 = arith.constant 0 : index
    %c160_84 = arith.constant 160 : index
    %133 = vector.load %arg8[%c0_83, %c160_84] : memref<64x288xbf16, #tpu.memory_space<vmem>>, vector<64x32xbf16>
    tpu.vector_store %arg8[%c0_83, %c160_84], %132 {strides = array<i32>} : memref<64x288xbf16, #tpu.memory_space<vmem>>, vector<64x32xbf16>,
    %134 = vector.extract_strided_slice %109 {offsets = [2, 0, 0], sizes = [8, 8, 32], strides = [1, 1, 1]} : vector<10x10x32xf32> to vector<8x8x32xf32>
    %135 = vector.shape_cast %134 : vector<8x8x32xf32> to vector<64x32xf32>
    %136 = arith.truncf %135 : vector<64x32xf32> to vector<64x32xbf16>
    %c0_85 = arith.constant 0 : index
    %c192_86 = arith.constant 192 : index
    %137 = vector.load %arg8[%c0_85, %c192_86] : memref<64x288xbf16, #tpu.memory_space<vmem>>, vector<64x32xbf16>
    tpu.vector_store %arg8[%c0_85, %c192_86], %136 {strides = array<i32>} : memref<64x288xbf16, #tpu.memory_space<vmem>>, vector<64x32xbf16>,
    %138 = vector.extract_strided_slice %109 {offsets = [2, 1, 0], sizes = [8, 8, 32], strides = [1, 1, 1]} : vector<10x10x32xf32> to vector<8x8x32xf32>
    %139 = vector.shape_cast %138 : vector<8x8x32xf32> to vector<64x32xf32>
    %140 = arith.truncf %139 : vector<64x32xf32> to vector<64x32xbf16>
    %c0_87 = arith.constant 0 : index
    %c224_88 = arith.constant 224 : index
    %141 = vector.load %arg8[%c0_87, %c224_88] : memref<64x288xbf16, #tpu.memory_space<vmem>>, vector<64x32xbf16>
    tpu.vector_store %arg8[%c0_87, %c224_88], %140 {strides = array<i32>} : memref<64x288xbf16, #tpu.memory_space<vmem>>, vector<64x32xbf16>,
    %142 = vector.extract_strided_slice %109 {offsets = [2, 2, 0], sizes = [8, 8, 32], strides = [1, 1, 1]} : vector<10x10x32xf32> to vector<8x8x32xf32>
    %143 = vector.shape_cast %142 : vector<8x8x32xf32> to vector<64x32xf32>
    %144 = arith.truncf %143 : vector<64x32xf32> to vector<64x32xbf16>
    %c0_89 = arith.constant 0 : index
    %c256_90 = arith.constant 256 : index
    %145 = vector.load %arg8[%c0_89, %c256_90] : memref<64x288xbf16, #tpu.memory_space<vmem>>, vector<64x32xbf16>
    tpu.vector_store %arg8[%c0_89, %c256_90], %144 {strides = array<i32>} : memref<64x288xbf16, #tpu.memory_space<vmem>>, vector<64x32xbf16>,
    %c0_91 = arith.constant 0 : index
    %c0_92 = arith.constant 0 : index
    %146 = vector.load %arg8[%c0_91, %c0_92] : memref<64x288xbf16, #tpu.memory_space<vmem>>, vector<64x288xbf16>
    %cst_93 = arith.constant dense<0.000000e+00> : vector<64x32xf32>
    %147 = tpu.matmul %146, %106, %cst_93 {dimension_numbers = #tpu.dot_dimension_numbers<[1], [0], [0], [1], [0, 0, 1, 1], [], []>} : vector<64x288xbf16>, vector<288x32xbf16>, vector<64x32xf32> -> vector<64x32xf32>
    %148 = vector.shape_cast %108 : vector<32xf32> to vector<1x32xf32>
    %149 = vector.broadcast %148 : vector<1x32xf32> to vector<64x32xf32>
    %150 = arith.addf %147, %149 : vector<64x32xf32>
    %151 = arith.addf %150, %52 : vector<64x32xf32>
    %cst_94 = arith.constant 0.000000e+00 : f32
    %152 = vector.broadcast %cst_94 : f32 to vector<64x32xf32>
    %153 = arith.maximumf %151, %152 : vector<64x32xf32>
    %154 = vector.shape_cast %153 : vector<64x32xf32> to vector<8x8x32xf32>
    %c1_95 = arith.constant 1 : index
    %c1_96 = arith.constant 1 : index
    %c0_97 = arith.constant 0 : index
    %155 = vector.load %arg7[%c1_95, %c1_96, %c0_97] : memref<10x10x32xf32, #tpu.memory_space<vmem>>, vector<8x8x32xf32>
    tpu.vector_store %arg7[%c1_95, %c1_96, %c0_97], %154 {strides = array<i32>} : memref<10x10x32xf32, #tpu.memory_space<vmem>>, vector<8x8x32xf32>,
    %c3 = arith.constant 3 : index
    %c0_98 = arith.constant 0 : index
    %c0_99 = arith.constant 0 : index
    %156 = vector.load %arg2[%c3, %c0_98, %c0_99] : memref<9x288x32xbf16, #tpu.memory_space<vmem>>, vector<1x288x32xbf16>
    %157 = vector.shape_cast %156 : vector<1x288x32xbf16> to vector<288x32xbf16>
    %c3_100 = arith.constant 3 : index
    %c0_101 = arith.constant 0 : index
    %158 = vector.load %arg3[%c3_100, %c0_101] : memref<9x32xf32, #tpu.memory_space<vmem>>, vector<1x32xf32>
    %159 = vector.shape_cast %158 : vector<1x32xf32> to vector<32xf32>
    %c0_102 = arith.constant 0 : index
    %c0_103 = arith.constant 0 : index
    %c0_104 = arith.constant 0 : index
    %160 = vector.load %arg7[%c0_102, %c0_103, %c0_104] : memref<10x10x32xf32, #tpu.memory_space<vmem>>, vector<10x10x32xf32>
    %161 = vector.extract_strided_slice %160 {offsets = [0, 0, 0], sizes = [8, 8, 32], strides = [1, 1, 1]} : vector<10x10x32xf32> to vector<8x8x32xf32>
    %162 = vector.shape_cast %161 : vector<8x8x32xf32> to vector<64x32xf32>
    %163 = arith.truncf %162 : vector<64x32xf32> to vector<64x32xbf16>
    %c0_105 = arith.constant 0 : index
    %c0_106 = arith.constant 0 : index
    %164 = vector.load %arg8[%c0_105, %c0_106] : memref<64x288xbf16, #tpu.memory_space<vmem>>, vector<64x32xbf16>
    tpu.vector_store %arg8[%c0_105, %c0_106], %163 {strides = array<i32>} : memref<64x288xbf16, #tpu.memory_space<vmem>>, vector<64x32xbf16>,
    %165 = vector.extract_strided_slice %160 {offsets = [0, 1, 0], sizes = [8, 8, 32], strides = [1, 1, 1]} : vector<10x10x32xf32> to vector<8x8x32xf32>
    %166 = vector.shape_cast %165 : vector<8x8x32xf32> to vector<64x32xf32>
    %167 = arith.truncf %166 : vector<64x32xf32> to vector<64x32xbf16>
    %c0_107 = arith.constant 0 : index
    %c32_108 = arith.constant 32 : index
    %168 = vector.load %arg8[%c0_107, %c32_108] : memref<64x288xbf16, #tpu.memory_space<vmem>>, vector<64x32xbf16>
    tpu.vector_store %arg8[%c0_107, %c32_108], %167 {strides = array<i32>} : memref<64x288xbf16, #tpu.memory_space<vmem>>, vector<64x32xbf16>,
    %169 = vector.extract_strided_slice %160 {offsets = [0, 2, 0], sizes = [8, 8, 32], strides = [1, 1, 1]} : vector<10x10x32xf32> to vector<8x8x32xf32>
    %170 = vector.shape_cast %169 : vector<8x8x32xf32> to vector<64x32xf32>
    %171 = arith.truncf %170 : vector<64x32xf32> to vector<64x32xbf16>
    %c0_109 = arith.constant 0 : index
    %c64_110 = arith.constant 64 : index
    %172 = vector.load %arg8[%c0_109, %c64_110] : memref<64x288xbf16, #tpu.memory_space<vmem>>, vector<64x32xbf16>
    tpu.vector_store %arg8[%c0_109, %c64_110], %171 {strides = array<i32>} : memref<64x288xbf16, #tpu.memory_space<vmem>>, vector<64x32xbf16>,
    %173 = vector.extract_strided_slice %160 {offsets = [1, 0, 0], sizes = [8, 8, 32], strides = [1, 1, 1]} : vector<10x10x32xf32> to vector<8x8x32xf32>
    %174 = vector.shape_cast %173 : vector<8x8x32xf32> to vector<64x32xf32>
    %175 = arith.truncf %174 : vector<64x32xf32> to vector<64x32xbf16>
    %c0_111 = arith.constant 0 : index
    %c96_112 = arith.constant 96 : index
    %176 = vector.load %arg8[%c0_111, %c96_112] : memref<64x288xbf16, #tpu.memory_space<vmem>>, vector<64x32xbf16>
    tpu.vector_store %arg8[%c0_111, %c96_112], %175 {strides = array<i32>} : memref<64x288xbf16, #tpu.memory_space<vmem>>, vector<64x32xbf16>,
    %177 = vector.extract_strided_slice %160 {offsets = [1, 1, 0], sizes = [8, 8, 32], strides = [1, 1, 1]} : vector<10x10x32xf32> to vector<8x8x32xf32>
    %178 = vector.shape_cast %177 : vector<8x8x32xf32> to vector<64x32xf32>
    %179 = arith.truncf %178 : vector<64x32xf32> to vector<64x32xbf16>
    %c0_113 = arith.constant 0 : index
    %c128_114 = arith.constant 128 : index
    %180 = vector.load %arg8[%c0_113, %c128_114] : memref<64x288xbf16, #tpu.memory_space<vmem>>, vector<64x32xbf16>
    tpu.vector_store %arg8[%c0_113, %c128_114], %179 {strides = array<i32>} : memref<64x288xbf16, #tpu.memory_space<vmem>>, vector<64x32xbf16>,
    %181 = vector.extract_strided_slice %160 {offsets = [1, 2, 0], sizes = [8, 8, 32], strides = [1, 1, 1]} : vector<10x10x32xf32> to vector<8x8x32xf32>
    %182 = vector.shape_cast %181 : vector<8x8x32xf32> to vector<64x32xf32>
    %183 = arith.truncf %182 : vector<64x32xf32> to vector<64x32xbf16>
    %c0_115 = arith.constant 0 : index
    %c160_116 = arith.constant 160 : index
    %184 = vector.load %arg8[%c0_115, %c160_116] : memref<64x288xbf16, #tpu.memory_space<vmem>>, vector<64x32xbf16>
    tpu.vector_store %arg8[%c0_115, %c160_116], %183 {strides = array<i32>} : memref<64x288xbf16, #tpu.memory_space<vmem>>, vector<64x32xbf16>,
    %185 = vector.extract_strided_slice %160 {offsets = [2, 0, 0], sizes = [8, 8, 32], strides = [1, 1, 1]} : vector<10x10x32xf32> to vector<8x8x32xf32>
    %186 = vector.shape_cast %185 : vector<8x8x32xf32> to vector<64x32xf32>
    %187 = arith.truncf %186 : vector<64x32xf32> to vector<64x32xbf16>
    %c0_117 = arith.constant 0 : index
    %c192_118 = arith.constant 192 : index
    %188 = vector.load %arg8[%c0_117, %c192_118] : memref<64x288xbf16, #tpu.memory_space<vmem>>, vector<64x32xbf16>
    tpu.vector_store %arg8[%c0_117, %c192_118], %187 {strides = array<i32>} : memref<64x288xbf16, #tpu.memory_space<vmem>>, vector<64x32xbf16>,
    %189 = vector.extract_strided_slice %160 {offsets = [2, 1, 0], sizes = [8, 8, 32], strides = [1, 1, 1]} : vector<10x10x32xf32> to vector<8x8x32xf32>
    %190 = vector.shape_cast %189 : vector<8x8x32xf32> to vector<64x32xf32>
    %191 = arith.truncf %190 : vector<64x32xf32> to vector<64x32xbf16>
    %c0_119 = arith.constant 0 : index
    %c224_120 = arith.constant 224 : index
    %192 = vector.load %arg8[%c0_119, %c224_120] : memref<64x288xbf16, #tpu.memory_space<vmem>>, vector<64x32xbf16>
    tpu.vector_store %arg8[%c0_119, %c224_120], %191 {strides = array<i32>} : memref<64x288xbf16, #tpu.memory_space<vmem>>, vector<64x32xbf16>,
    %193 = vector.extract_strided_slice %160 {offsets = [2, 2, 0], sizes = [8, 8, 32], strides = [1, 1, 1]} : vector<10x10x32xf32> to vector<8x8x32xf32>
    %194 = vector.shape_cast %193 : vector<8x8x32xf32> to vector<64x32xf32>
    %195 = arith.truncf %194 : vector<64x32xf32> to vector<64x32xbf16>
    %c0_121 = arith.constant 0 : index
    %c256_122 = arith.constant 256 : index
    %196 = vector.load %arg8[%c0_121, %c256_122] : memref<64x288xbf16, #tpu.memory_space<vmem>>, vector<64x32xbf16>
    tpu.vector_store %arg8[%c0_121, %c256_122], %195 {strides = array<i32>} : memref<64x288xbf16, #tpu.memory_space<vmem>>, vector<64x32xbf16>,
    %c0_123 = arith.constant 0 : index
    %c0_124 = arith.constant 0 : index
    %197 = vector.load %arg8[%c0_123, %c0_124] : memref<64x288xbf16, #tpu.memory_space<vmem>>, vector<64x288xbf16>
    %cst_125 = arith.constant dense<0.000000e+00> : vector<64x32xf32>
    %198 = tpu.matmul %197, %157, %cst_125 {dimension_numbers = #tpu.dot_dimension_numbers<[1], [0], [0], [1], [0, 0, 1, 1], [], []>} : vector<64x288xbf16>, vector<288x32xbf16>, vector<64x32xf32> -> vector<64x32xf32>
    %199 = vector.shape_cast %159 : vector<32xf32> to vector<1x32xf32>
    %200 = vector.broadcast %199 : vector<1x32xf32> to vector<64x32xf32>
    %201 = arith.addf %198, %200 : vector<64x32xf32>
    %cst_126 = arith.constant 0.000000e+00 : f32
    %202 = vector.broadcast %cst_126 : f32 to vector<64x32xf32>
    %203 = arith.maximumf %201, %202 : vector<64x32xf32>
    %204 = vector.shape_cast %203 : vector<64x32xf32> to vector<8x8x32xf32>
    %c1_127 = arith.constant 1 : index
    %c1_128 = arith.constant 1 : index
    %c0_129 = arith.constant 0 : index
    %205 = vector.load %arg7[%c1_127, %c1_128, %c0_129] : memref<10x10x32xf32, #tpu.memory_space<vmem>>, vector<8x8x32xf32>
    tpu.vector_store %arg7[%c1_127, %c1_128, %c0_129], %204 {strides = array<i32>} : memref<10x10x32xf32, #tpu.memory_space<vmem>>, vector<8x8x32xf32>,
    %c4 = arith.constant 4 : index
    %c0_130 = arith.constant 0 : index
    %c0_131 = arith.constant 0 : index
    %206 = vector.load %arg2[%c4, %c0_130, %c0_131] : memref<9x288x32xbf16, #tpu.memory_space<vmem>>, vector<1x288x32xbf16>
    %207 = vector.shape_cast %206 : vector<1x288x32xbf16> to vector<288x32xbf16>
    %c4_132 = arith.constant 4 : index
    %c0_133 = arith.constant 0 : index
    %208 = vector.load %arg3[%c4_132, %c0_133] : memref<9x32xf32, #tpu.memory_space<vmem>>, vector<1x32xf32>
    %209 = vector.shape_cast %208 : vector<1x32xf32> to vector<32xf32>
    %c0_134 = arith.constant 0 : index
    %c0_135 = arith.constant 0 : index
    %c0_136 = arith.constant 0 : index
    %210 = vector.load %arg7[%c0_134, %c0_135, %c0_136] : memref<10x10x32xf32, #tpu.memory_space<vmem>>, vector<10x10x32xf32>
    %211 = vector.extract_strided_slice %210 {offsets = [0, 0, 0], sizes = [8, 8, 32], strides = [1, 1, 1]} : vector<10x10x32xf32> to vector<8x8x32xf32>
    %212 = vector.shape_cast %211 : vector<8x8x32xf32> to vector<64x32xf32>
    %213 = arith.truncf %212 : vector<64x32xf32> to vector<64x32xbf16>
    %c0_137 = arith.constant 0 : index
    %c0_138 = arith.constant 0 : index
    %214 = vector.load %arg8[%c0_137, %c0_138] : memref<64x288xbf16, #tpu.memory_space<vmem>>, vector<64x32xbf16>
    tpu.vector_store %arg8[%c0_137, %c0_138], %213 {strides = array<i32>} : memref<64x288xbf16, #tpu.memory_space<vmem>>, vector<64x32xbf16>,
    %215 = vector.extract_strided_slice %210 {offsets = [0, 1, 0], sizes = [8, 8, 32], strides = [1, 1, 1]} : vector<10x10x32xf32> to vector<8x8x32xf32>
    %216 = vector.shape_cast %215 : vector<8x8x32xf32> to vector<64x32xf32>
    %217 = arith.truncf %216 : vector<64x32xf32> to vector<64x32xbf16>
    %c0_139 = arith.constant 0 : index
    %c32_140 = arith.constant 32 : index
    %218 = vector.load %arg8[%c0_139, %c32_140] : memref<64x288xbf16, #tpu.memory_space<vmem>>, vector<64x32xbf16>
    tpu.vector_store %arg8[%c0_139, %c32_140], %217 {strides = array<i32>} : memref<64x288xbf16, #tpu.memory_space<vmem>>, vector<64x32xbf16>,
    %219 = vector.extract_strided_slice %210 {offsets = [0, 2, 0], sizes = [8, 8, 32], strides = [1, 1, 1]} : vector<10x10x32xf32> to vector<8x8x32xf32>
    %220 = vector.shape_cast %219 : vector<8x8x32xf32> to vector<64x32xf32>
    %221 = arith.truncf %220 : vector<64x32xf32> to vector<64x32xbf16>
    %c0_141 = arith.constant 0 : index
    %c64_142 = arith.constant 64 : index
    %222 = vector.load %arg8[%c0_141, %c64_142] : memref<64x288xbf16, #tpu.memory_space<vmem>>, vector<64x32xbf16>
    tpu.vector_store %arg8[%c0_141, %c64_142], %221 {strides = array<i32>} : memref<64x288xbf16, #tpu.memory_space<vmem>>, vector<64x32xbf16>,
    %223 = vector.extract_strided_slice %210 {offsets = [1, 0, 0], sizes = [8, 8, 32], strides = [1, 1, 1]} : vector<10x10x32xf32> to vector<8x8x32xf32>
    %224 = vector.shape_cast %223 : vector<8x8x32xf32> to vector<64x32xf32>
    %225 = arith.truncf %224 : vector<64x32xf32> to vector<64x32xbf16>
    %c0_143 = arith.constant 0 : index
    %c96_144 = arith.constant 96 : index
    %226 = vector.load %arg8[%c0_143, %c96_144] : memref<64x288xbf16, #tpu.memory_space<vmem>>, vector<64x32xbf16>
    tpu.vector_store %arg8[%c0_143, %c96_144], %225 {strides = array<i32>} : memref<64x288xbf16, #tpu.memory_space<vmem>>, vector<64x32xbf16>,
    %227 = vector.extract_strided_slice %210 {offsets = [1, 1, 0], sizes = [8, 8, 32], strides = [1, 1, 1]} : vector<10x10x32xf32> to vector<8x8x32xf32>
    %228 = vector.shape_cast %227 : vector<8x8x32xf32> to vector<64x32xf32>
    %229 = arith.truncf %228 : vector<64x32xf32> to vector<64x32xbf16>
    %c0_145 = arith.constant 0 : index
    %c128_146 = arith.constant 128 : index
    %230 = vector.load %arg8[%c0_145, %c128_146] : memref<64x288xbf16, #tpu.memory_space<vmem>>, vector<64x32xbf16>
    tpu.vector_store %arg8[%c0_145, %c128_146], %229 {strides = array<i32>} : memref<64x288xbf16, #tpu.memory_space<vmem>>, vector<64x32xbf16>,
    %231 = vector.extract_strided_slice %210 {offsets = [1, 2, 0], sizes = [8, 8, 32], strides = [1, 1, 1]} : vector<10x10x32xf32> to vector<8x8x32xf32>
    %232 = vector.shape_cast %231 : vector<8x8x32xf32> to vector<64x32xf32>
    %233 = arith.truncf %232 : vector<64x32xf32> to vector<64x32xbf16>
    %c0_147 = arith.constant 0 : index
    %c160_148 = arith.constant 160 : index
    %234 = vector.load %arg8[%c0_147, %c160_148] : memref<64x288xbf16, #tpu.memory_space<vmem>>, vector<64x32xbf16>
    tpu.vector_store %arg8[%c0_147, %c160_148], %233 {strides = array<i32>} : memref<64x288xbf16, #tpu.memory_space<vmem>>, vector<64x32xbf16>,
    %235 = vector.extract_strided_slice %210 {offsets = [2, 0, 0], sizes = [8, 8, 32], strides = [1, 1, 1]} : vector<10x10x32xf32> to vector<8x8x32xf32>
    %236 = vector.shape_cast %235 : vector<8x8x32xf32> to vector<64x32xf32>
    %237 = arith.truncf %236 : vector<64x32xf32> to vector<64x32xbf16>
    %c0_149 = arith.constant 0 : index
    %c192_150 = arith.constant 192 : index
    %238 = vector.load %arg8[%c0_149, %c192_150] : memref<64x288xbf16, #tpu.memory_space<vmem>>, vector<64x32xbf16>
    tpu.vector_store %arg8[%c0_149, %c192_150], %237 {strides = array<i32>} : memref<64x288xbf16, #tpu.memory_space<vmem>>, vector<64x32xbf16>,
    %239 = vector.extract_strided_slice %210 {offsets = [2, 1, 0], sizes = [8, 8, 32], strides = [1, 1, 1]} : vector<10x10x32xf32> to vector<8x8x32xf32>
    %240 = vector.shape_cast %239 : vector<8x8x32xf32> to vector<64x32xf32>
    %241 = arith.truncf %240 : vector<64x32xf32> to vector<64x32xbf16>
    %c0_151 = arith.constant 0 : index
    %c224_152 = arith.constant 224 : index
    %242 = vector.load %arg8[%c0_151, %c224_152] : memref<64x288xbf16, #tpu.memory_space<vmem>>, vector<64x32xbf16>
    tpu.vector_store %arg8[%c0_151, %c224_152], %241 {strides = array<i32>} : memref<64x288xbf16, #tpu.memory_space<vmem>>, vector<64x32xbf16>,
    %243 = vector.extract_strided_slice %210 {offsets = [2, 2, 0], sizes = [8, 8, 32], strides = [1, 1, 1]} : vector<10x10x32xf32> to vector<8x8x32xf32>
    %244 = vector.shape_cast %243 : vector<8x8x32xf32> to vector<64x32xf32>
    %245 = arith.truncf %244 : vector<64x32xf32> to vector<64x32xbf16>
    %c0_153 = arith.constant 0 : index
    %c256_154 = arith.constant 256 : index
    %246 = vector.load %arg8[%c0_153, %c256_154] : memref<64x288xbf16, #tpu.memory_space<vmem>>, vector<64x32xbf16>
    tpu.vector_store %arg8[%c0_153, %c256_154], %245 {strides = array<i32>} : memref<64x288xbf16, #tpu.memory_space<vmem>>, vector<64x32xbf16>,
    %c0_155 = arith.constant 0 : index
    %c0_156 = arith.constant 0 : index
    %247 = vector.load %arg8[%c0_155, %c0_156] : memref<64x288xbf16, #tpu.memory_space<vmem>>, vector<64x288xbf16>
    %cst_157 = arith.constant dense<0.000000e+00> : vector<64x32xf32>
    %248 = tpu.matmul %247, %207, %cst_157 {dimension_numbers = #tpu.dot_dimension_numbers<[1], [0], [0], [1], [0, 0, 1, 1], [], []>} : vector<64x288xbf16>, vector<288x32xbf16>, vector<64x32xf32> -> vector<64x32xf32>
    %249 = vector.shape_cast %209 : vector<32xf32> to vector<1x32xf32>
    %250 = vector.broadcast %249 : vector<1x32xf32> to vector<64x32xf32>
    %251 = arith.addf %248, %250 : vector<64x32xf32>
    %252 = arith.addf %251, %153 : vector<64x32xf32>
    %cst_158 = arith.constant 0.000000e+00 : f32
    %253 = vector.broadcast %cst_158 : f32 to vector<64x32xf32>
    %254 = arith.maximumf %252, %253 : vector<64x32xf32>
    %255 = vector.shape_cast %254 : vector<64x32xf32> to vector<8x8x32xf32>
    %c1_159 = arith.constant 1 : index
    %c1_160 = arith.constant 1 : index
    %c0_161 = arith.constant 0 : index
    %256 = vector.load %arg7[%c1_159, %c1_160, %c0_161] : memref<10x10x32xf32, #tpu.memory_space<vmem>>, vector<8x8x32xf32>
    tpu.vector_store %arg7[%c1_159, %c1_160, %c0_161], %255 {strides = array<i32>} : memref<10x10x32xf32, #tpu.memory_space<vmem>>, vector<8x8x32xf32>,
    %c5 = arith.constant 5 : index
    %c0_162 = arith.constant 0 : index
    %c0_163 = arith.constant 0 : index
    %257 = vector.load %arg2[%c5, %c0_162, %c0_163] : memref<9x288x32xbf16, #tpu.memory_space<vmem>>, vector<1x288x32xbf16>
    %258 = vector.shape_cast %257 : vector<1x288x32xbf16> to vector<288x32xbf16>
    %c5_164 = arith.constant 5 : index
    %c0_165 = arith.constant 0 : index
    %259 = vector.load %arg3[%c5_164, %c0_165] : memref<9x32xf32, #tpu.memory_space<vmem>>, vector<1x32xf32>
    %260 = vector.shape_cast %259 : vector<1x32xf32> to vector<32xf32>
    %c0_166 = arith.constant 0 : index
    %c0_167 = arith.constant 0 : index
    %c0_168 = arith.constant 0 : index
    %261 = vector.load %arg7[%c0_166, %c0_167, %c0_168] : memref<10x10x32xf32, #tpu.memory_space<vmem>>, vector<10x10x32xf32>
    %262 = vector.extract_strided_slice %261 {offsets = [0, 0, 0], sizes = [8, 8, 32], strides = [1, 1, 1]} : vector<10x10x32xf32> to vector<8x8x32xf32>
    %263 = vector.shape_cast %262 : vector<8x8x32xf32> to vector<64x32xf32>
    %264 = arith.truncf %263 : vector<64x32xf32> to vector<64x32xbf16>
    %c0_169 = arith.constant 0 : index
    %c0_170 = arith.constant 0 : index
    %265 = vector.load %arg8[%c0_169, %c0_170] : memref<64x288xbf16, #tpu.memory_space<vmem>>, vector<64x32xbf16>
    tpu.vector_store %arg8[%c0_169, %c0_170], %264 {strides = array<i32>} : memref<64x288xbf16, #tpu.memory_space<vmem>>, vector<64x32xbf16>,
    %266 = vector.extract_strided_slice %261 {offsets = [0, 1, 0], sizes = [8, 8, 32], strides = [1, 1, 1]} : vector<10x10x32xf32> to vector<8x8x32xf32>
    %267 = vector.shape_cast %266 : vector<8x8x32xf32> to vector<64x32xf32>
    %268 = arith.truncf %267 : vector<64x32xf32> to vector<64x32xbf16>
    %c0_171 = arith.constant 0 : index
    %c32_172 = arith.constant 32 : index
    %269 = vector.load %arg8[%c0_171, %c32_172] : memref<64x288xbf16, #tpu.memory_space<vmem>>, vector<64x32xbf16>
    tpu.vector_store %arg8[%c0_171, %c32_172], %268 {strides = array<i32>} : memref<64x288xbf16, #tpu.memory_space<vmem>>, vector<64x32xbf16>,
    %270 = vector.extract_strided_slice %261 {offsets = [0, 2, 0], sizes = [8, 8, 32], strides = [1, 1, 1]} : vector<10x10x32xf32> to vector<8x8x32xf32>
    %271 = vector.shape_cast %270 : vector<8x8x32xf32> to vector<64x32xf32>
    %272 = arith.truncf %271 : vector<64x32xf32> to vector<64x32xbf16>
    %c0_173 = arith.constant 0 : index
    %c64_174 = arith.constant 64 : index
    %273 = vector.load %arg8[%c0_173, %c64_174] : memref<64x288xbf16, #tpu.memory_space<vmem>>, vector<64x32xbf16>
    tpu.vector_store %arg8[%c0_173, %c64_174], %272 {strides = array<i32>} : memref<64x288xbf16, #tpu.memory_space<vmem>>, vector<64x32xbf16>,
    %274 = vector.extract_strided_slice %261 {offsets = [1, 0, 0], sizes = [8, 8, 32], strides = [1, 1, 1]} : vector<10x10x32xf32> to vector<8x8x32xf32>
    %275 = vector.shape_cast %274 : vector<8x8x32xf32> to vector<64x32xf32>
    %276 = arith.truncf %275 : vector<64x32xf32> to vector<64x32xbf16>
    %c0_175 = arith.constant 0 : index
    %c96_176 = arith.constant 96 : index
    %277 = vector.load %arg8[%c0_175, %c96_176] : memref<64x288xbf16, #tpu.memory_space<vmem>>, vector<64x32xbf16>
    tpu.vector_store %arg8[%c0_175, %c96_176], %276 {strides = array<i32>} : memref<64x288xbf16, #tpu.memory_space<vmem>>, vector<64x32xbf16>,
    %278 = vector.extract_strided_slice %261 {offsets = [1, 1, 0], sizes = [8, 8, 32], strides = [1, 1, 1]} : vector<10x10x32xf32> to vector<8x8x32xf32>
    %279 = vector.shape_cast %278 : vector<8x8x32xf32> to vector<64x32xf32>
    %280 = arith.truncf %279 : vector<64x32xf32> to vector<64x32xbf16>
    %c0_177 = arith.constant 0 : index
    %c128_178 = arith.constant 128 : index
    %281 = vector.load %arg8[%c0_177, %c128_178] : memref<64x288xbf16, #tpu.memory_space<vmem>>, vector<64x32xbf16>
    tpu.vector_store %arg8[%c0_177, %c128_178], %280 {strides = array<i32>} : memref<64x288xbf16, #tpu.memory_space<vmem>>, vector<64x32xbf16>,
    %282 = vector.extract_strided_slice %261 {offsets = [1, 2, 0], sizes = [8, 8, 32], strides = [1, 1, 1]} : vector<10x10x32xf32> to vector<8x8x32xf32>
    %283 = vector.shape_cast %282 : vector<8x8x32xf32> to vector<64x32xf32>
    %284 = arith.truncf %283 : vector<64x32xf32> to vector<64x32xbf16>
    %c0_179 = arith.constant 0 : index
    %c160_180 = arith.constant 160 : index
    %285 = vector.load %arg8[%c0_179, %c160_180] : memref<64x288xbf16, #tpu.memory_space<vmem>>, vector<64x32xbf16>
    tpu.vector_store %arg8[%c0_179, %c160_180], %284 {strides = array<i32>} : memref<64x288xbf16, #tpu.memory_space<vmem>>, vector<64x32xbf16>,
    %286 = vector.extract_strided_slice %261 {offsets = [2, 0, 0], sizes = [8, 8, 32], strides = [1, 1, 1]} : vector<10x10x32xf32> to vector<8x8x32xf32>
    %287 = vector.shape_cast %286 : vector<8x8x32xf32> to vector<64x32xf32>
    %288 = arith.truncf %287 : vector<64x32xf32> to vector<64x32xbf16>
    %c0_181 = arith.constant 0 : index
    %c192_182 = arith.constant 192 : index
    %289 = vector.load %arg8[%c0_181, %c192_182] : memref<64x288xbf16, #tpu.memory_space<vmem>>, vector<64x32xbf16>
    tpu.vector_store %arg8[%c0_181, %c192_182], %288 {strides = array<i32>} : memref<64x288xbf16, #tpu.memory_space<vmem>>, vector<64x32xbf16>,
    %290 = vector.extract_strided_slice %261 {offsets = [2, 1, 0], sizes = [8, 8, 32], strides = [1, 1, 1]} : vector<10x10x32xf32> to vector<8x8x32xf32>
    %291 = vector.shape_cast %290 : vector<8x8x32xf32> to vector<64x32xf32>
    %292 = arith.truncf %291 : vector<64x32xf32> to vector<64x32xbf16>
    %c0_183 = arith.constant 0 : index
    %c224_184 = arith.constant 224 : index
    %293 = vector.load %arg8[%c0_183, %c224_184] : memref<64x288xbf16, #tpu.memory_space<vmem>>, vector<64x32xbf16>
    tpu.vector_store %arg8[%c0_183, %c224_184], %292 {strides = array<i32>} : memref<64x288xbf16, #tpu.memory_space<vmem>>, vector<64x32xbf16>,
    %294 = vector.extract_strided_slice %261 {offsets = [2, 2, 0], sizes = [8, 8, 32], strides = [1, 1, 1]} : vector<10x10x32xf32> to vector<8x8x32xf32>
    %295 = vector.shape_cast %294 : vector<8x8x32xf32> to vector<64x32xf32>
    %296 = arith.truncf %295 : vector<64x32xf32> to vector<64x32xbf16>
    %c0_185 = arith.constant 0 : index
    %c256_186 = arith.constant 256 : index
    %297 = vector.load %arg8[%c0_185, %c256_186] : memref<64x288xbf16, #tpu.memory_space<vmem>>, vector<64x32xbf16>
    tpu.vector_store %arg8[%c0_185, %c256_186], %296 {strides = array<i32>} : memref<64x288xbf16, #tpu.memory_space<vmem>>, vector<64x32xbf16>,
    %c0_187 = arith.constant 0 : index
    %c0_188 = arith.constant 0 : index
    %298 = vector.load %arg8[%c0_187, %c0_188] : memref<64x288xbf16, #tpu.memory_space<vmem>>, vector<64x288xbf16>
    %cst_189 = arith.constant dense<0.000000e+00> : vector<64x32xf32>
    %299 = tpu.matmul %298, %258, %cst_189 {dimension_numbers = #tpu.dot_dimension_numbers<[1], [0], [0], [1], [0, 0, 1, 1], [], []>} : vector<64x288xbf16>, vector<288x32xbf16>, vector<64x32xf32> -> vector<64x32xf32>
    %300 = vector.shape_cast %260 : vector<32xf32> to vector<1x32xf32>
    %301 = vector.broadcast %300 : vector<1x32xf32> to vector<64x32xf32>
    %302 = arith.addf %299, %301 : vector<64x32xf32>
    %cst_190 = arith.constant 0.000000e+00 : f32
    %303 = vector.broadcast %cst_190 : f32 to vector<64x32xf32>
    %304 = arith.maximumf %302, %303 : vector<64x32xf32>
    %305 = vector.shape_cast %304 : vector<64x32xf32> to vector<8x8x32xf32>
    %c1_191 = arith.constant 1 : index
    %c1_192 = arith.constant 1 : index
    %c0_193 = arith.constant 0 : index
    %306 = vector.load %arg7[%c1_191, %c1_192, %c0_193] : memref<10x10x32xf32, #tpu.memory_space<vmem>>, vector<8x8x32xf32>
    tpu.vector_store %arg7[%c1_191, %c1_192, %c0_193], %305 {strides = array<i32>} : memref<10x10x32xf32, #tpu.memory_space<vmem>>, vector<8x8x32xf32>,
    %c6 = arith.constant 6 : index
    %c0_194 = arith.constant 0 : index
    %c0_195 = arith.constant 0 : index
    %307 = vector.load %arg2[%c6, %c0_194, %c0_195] : memref<9x288x32xbf16, #tpu.memory_space<vmem>>, vector<1x288x32xbf16>
    %308 = vector.shape_cast %307 : vector<1x288x32xbf16> to vector<288x32xbf16>
    %c6_196 = arith.constant 6 : index
    %c0_197 = arith.constant 0 : index
    %309 = vector.load %arg3[%c6_196, %c0_197] : memref<9x32xf32, #tpu.memory_space<vmem>>, vector<1x32xf32>
    %310 = vector.shape_cast %309 : vector<1x32xf32> to vector<32xf32>
    %c0_198 = arith.constant 0 : index
    %c0_199 = arith.constant 0 : index
    %c0_200 = arith.constant 0 : index
    %311 = vector.load %arg7[%c0_198, %c0_199, %c0_200] : memref<10x10x32xf32, #tpu.memory_space<vmem>>, vector<10x10x32xf32>
    %312 = vector.extract_strided_slice %311 {offsets = [0, 0, 0], sizes = [8, 8, 32], strides = [1, 1, 1]} : vector<10x10x32xf32> to vector<8x8x32xf32>
    %313 = vector.shape_cast %312 : vector<8x8x32xf32> to vector<64x32xf32>
    %314 = arith.truncf %313 : vector<64x32xf32> to vector<64x32xbf16>
    %c0_201 = arith.constant 0 : index
    %c0_202 = arith.constant 0 : index
    %315 = vector.load %arg8[%c0_201, %c0_202] : memref<64x288xbf16, #tpu.memory_space<vmem>>, vector<64x32xbf16>
    tpu.vector_store %arg8[%c0_201, %c0_202], %314 {strides = array<i32>} : memref<64x288xbf16, #tpu.memory_space<vmem>>, vector<64x32xbf16>,
    %316 = vector.extract_strided_slice %311 {offsets = [0, 1, 0], sizes = [8, 8, 32], strides = [1, 1, 1]} : vector<10x10x32xf32> to vector<8x8x32xf32>
    %317 = vector.shape_cast %316 : vector<8x8x32xf32> to vector<64x32xf32>
    %318 = arith.truncf %317 : vector<64x32xf32> to vector<64x32xbf16>
    %c0_203 = arith.constant 0 : index
    %c32_204 = arith.constant 32 : index
    %319 = vector.load %arg8[%c0_203, %c32_204] : memref<64x288xbf16, #tpu.memory_space<vmem>>, vector<64x32xbf16>
    tpu.vector_store %arg8[%c0_203, %c32_204], %318 {strides = array<i32>} : memref<64x288xbf16, #tpu.memory_space<vmem>>, vector<64x32xbf16>,
    %320 = vector.extract_strided_slice %311 {offsets = [0, 2, 0], sizes = [8, 8, 32], strides = [1, 1, 1]} : vector<10x10x32xf32> to vector<8x8x32xf32>
    %321 = vector.shape_cast %320 : vector<8x8x32xf32> to vector<64x32xf32>
    %322 = arith.truncf %321 : vector<64x32xf32> to vector<64x32xbf16>
    %c0_205 = arith.constant 0 : index
    %c64_206 = arith.constant 64 : index
    %323 = vector.load %arg8[%c0_205, %c64_206] : memref<64x288xbf16, #tpu.memory_space<vmem>>, vector<64x32xbf16>
    tpu.vector_store %arg8[%c0_205, %c64_206], %322 {strides = array<i32>} : memref<64x288xbf16, #tpu.memory_space<vmem>>, vector<64x32xbf16>,
    %324 = vector.extract_strided_slice %311 {offsets = [1, 0, 0], sizes = [8, 8, 32], strides = [1, 1, 1]} : vector<10x10x32xf32> to vector<8x8x32xf32>
    %325 = vector.shape_cast %324 : vector<8x8x32xf32> to vector<64x32xf32>
    %326 = arith.truncf %325 : vector<64x32xf32> to vector<64x32xbf16>
    %c0_207 = arith.constant 0 : index
    %c96_208 = arith.constant 96 : index
    %327 = vector.load %arg8[%c0_207, %c96_208] : memref<64x288xbf16, #tpu.memory_space<vmem>>, vector<64x32xbf16>
    tpu.vector_store %arg8[%c0_207, %c96_208], %326 {strides = array<i32>} : memref<64x288xbf16, #tpu.memory_space<vmem>>, vector<64x32xbf16>,
    %328 = vector.extract_strided_slice %311 {offsets = [1, 1, 0], sizes = [8, 8, 32], strides = [1, 1, 1]} : vector<10x10x32xf32> to vector<8x8x32xf32>
    %329 = vector.shape_cast %328 : vector<8x8x32xf32> to vector<64x32xf32>
    %330 = arith.truncf %329 : vector<64x32xf32> to vector<64x32xbf16>
    %c0_209 = arith.constant 0 : index
    %c128_210 = arith.constant 128 : index
    %331 = vector.load %arg8[%c0_209, %c128_210] : memref<64x288xbf16, #tpu.memory_space<vmem>>, vector<64x32xbf16>
    tpu.vector_store %arg8[%c0_209, %c128_210], %330 {strides = array<i32>} : memref<64x288xbf16, #tpu.memory_space<vmem>>, vector<64x32xbf16>,
    %332 = vector.extract_strided_slice %311 {offsets = [1, 2, 0], sizes = [8, 8, 32], strides = [1, 1, 1]} : vector<10x10x32xf32> to vector<8x8x32xf32>
    %333 = vector.shape_cast %332 : vector<8x8x32xf32> to vector<64x32xf32>
    %334 = arith.truncf %333 : vector<64x32xf32> to vector<64x32xbf16>
    %c0_211 = arith.constant 0 : index
    %c160_212 = arith.constant 160 : index
    %335 = vector.load %arg8[%c0_211, %c160_212] : memref<64x288xbf16, #tpu.memory_space<vmem>>, vector<64x32xbf16>
    tpu.vector_store %arg8[%c0_211, %c160_212], %334 {strides = array<i32>} : memref<64x288xbf16, #tpu.memory_space<vmem>>, vector<64x32xbf16>,
    %336 = vector.extract_strided_slice %311 {offsets = [2, 0, 0], sizes = [8, 8, 32], strides = [1, 1, 1]} : vector<10x10x32xf32> to vector<8x8x32xf32>
    %337 = vector.shape_cast %336 : vector<8x8x32xf32> to vector<64x32xf32>
    %338 = arith.truncf %337 : vector<64x32xf32> to vector<64x32xbf16>
    %c0_213 = arith.constant 0 : index
    %c192_214 = arith.constant 192 : index
    %339 = vector.load %arg8[%c0_213, %c192_214] : memref<64x288xbf16, #tpu.memory_space<vmem>>, vector<64x32xbf16>
    tpu.vector_store %arg8[%c0_213, %c192_214], %338 {strides = array<i32>} : memref<64x288xbf16, #tpu.memory_space<vmem>>, vector<64x32xbf16>,
    %340 = vector.extract_strided_slice %311 {offsets = [2, 1, 0], sizes = [8, 8, 32], strides = [1, 1, 1]} : vector<10x10x32xf32> to vector<8x8x32xf32>
    %341 = vector.shape_cast %340 : vector<8x8x32xf32> to vector<64x32xf32>
    %342 = arith.truncf %341 : vector<64x32xf32> to vector<64x32xbf16>
    %c0_215 = arith.constant 0 : index
    %c224_216 = arith.constant 224 : index
    %343 = vector.load %arg8[%c0_215, %c224_216] : memref<64x288xbf16, #tpu.memory_space<vmem>>, vector<64x32xbf16>
    tpu.vector_store %arg8[%c0_215, %c224_216], %342 {strides = array<i32>} : memref<64x288xbf16, #tpu.memory_space<vmem>>, vector<64x32xbf16>,
    %344 = vector.extract_strided_slice %311 {offsets = [2, 2, 0], sizes = [8, 8, 32], strides = [1, 1, 1]} : vector<10x10x32xf32> to vector<8x8x32xf32>
    %345 = vector.shape_cast %344 : vector<8x8x32xf32> to vector<64x32xf32>
    %346 = arith.truncf %345 : vector<64x32xf32> to vector<64x32xbf16>
    %c0_217 = arith.constant 0 : index
    %c256_218 = arith.constant 256 : index
    %347 = vector.load %arg8[%c0_217, %c256_218] : memref<64x288xbf16, #tpu.memory_space<vmem>>, vector<64x32xbf16>
    tpu.vector_store %arg8[%c0_217, %c256_218], %346 {strides = array<i32>} : memref<64x288xbf16, #tpu.memory_space<vmem>>, vector<64x32xbf16>,
    %c0_219 = arith.constant 0 : index
    %c0_220 = arith.constant 0 : index
    %348 = vector.load %arg8[%c0_219, %c0_220] : memref<64x288xbf16, #tpu.memory_space<vmem>>, vector<64x288xbf16>
    %cst_221 = arith.constant dense<0.000000e+00> : vector<64x32xf32>
    %349 = tpu.matmul %348, %308, %cst_221 {dimension_numbers = #tpu.dot_dimension_numbers<[1], [0], [0], [1], [0, 0, 1, 1], [], []>} : vector<64x288xbf16>, vector<288x32xbf16>, vector<64x32xf32> -> vector<64x32xf32>
    %350 = vector.shape_cast %310 : vector<32xf32> to vector<1x32xf32>
    %351 = vector.broadcast %350 : vector<1x32xf32> to vector<64x32xf32>
    %352 = arith.addf %349, %351 : vector<64x32xf32>
    %353 = arith.addf %352, %254 : vector<64x32xf32>
    %cst_222 = arith.constant 0.000000e+00 : f32
    %354 = vector.broadcast %cst_222 : f32 to vector<64x32xf32>
    %355 = arith.maximumf %353, %354 : vector<64x32xf32>
    %356 = vector.shape_cast %355 : vector<64x32xf32> to vector<8x8x32xf32>
    %c1_223 = arith.constant 1 : index
    %c1_224 = arith.constant 1 : index
    %c0_225 = arith.constant 0 : index
    %357 = vector.load %arg7[%c1_223, %c1_224, %c0_225] : memref<10x10x32xf32, #tpu.memory_space<vmem>>, vector<8x8x32xf32>
    tpu.vector_store %arg7[%c1_223, %c1_224, %c0_225], %356 {strides = array<i32>} : memref<10x10x32xf32, #tpu.memory_space<vmem>>, vector<8x8x32xf32>,
    %c7 = arith.constant 7 : index
    %c0_226 = arith.constant 0 : index
    %c0_227 = arith.constant 0 : index
    %358 = vector.load %arg2[%c7, %c0_226, %c0_227] : memref<9x288x32xbf16, #tpu.memory_space<vmem>>, vector<1x288x32xbf16>
    %359 = vector.shape_cast %358 : vector<1x288x32xbf16> to vector<288x32xbf16>
    %c7_228 = arith.constant 7 : index
    %c0_229 = arith.constant 0 : index
    %360 = vector.load %arg3[%c7_228, %c0_229] : memref<9x32xf32, #tpu.memory_space<vmem>>, vector<1x32xf32>
    %361 = vector.shape_cast %360 : vector<1x32xf32> to vector<32xf32>
    %c0_230 = arith.constant 0 : index
    %c0_231 = arith.constant 0 : index
    %c0_232 = arith.constant 0 : index
    %362 = vector.load %arg7[%c0_230, %c0_231, %c0_232] : memref<10x10x32xf32, #tpu.memory_space<vmem>>, vector<10x10x32xf32>
    %363 = vector.extract_strided_slice %362 {offsets = [0, 0, 0], sizes = [8, 8, 32], strides = [1, 1, 1]} : vector<10x10x32xf32> to vector<8x8x32xf32>
    %364 = vector.shape_cast %363 : vector<8x8x32xf32> to vector<64x32xf32>
    %365 = arith.truncf %364 : vector<64x32xf32> to vector<64x32xbf16>
    %c0_233 = arith.constant 0 : index
    %c0_234 = arith.constant 0 : index
    %366 = vector.load %arg8[%c0_233, %c0_234] : memref<64x288xbf16, #tpu.memory_space<vmem>>, vector<64x32xbf16>
    tpu.vector_store %arg8[%c0_233, %c0_234], %365 {strides = array<i32>} : memref<64x288xbf16, #tpu.memory_space<vmem>>, vector<64x32xbf16>,
    %367 = vector.extract_strided_slice %362 {offsets = [0, 1, 0], sizes = [8, 8, 32], strides = [1, 1, 1]} : vector<10x10x32xf32> to vector<8x8x32xf32>
    %368 = vector.shape_cast %367 : vector<8x8x32xf32> to vector<64x32xf32>
    %369 = arith.truncf %368 : vector<64x32xf32> to vector<64x32xbf16>
    %c0_235 = arith.constant 0 : index
    %c32_236 = arith.constant 32 : index
    %370 = vector.load %arg8[%c0_235, %c32_236] : memref<64x288xbf16, #tpu.memory_space<vmem>>, vector<64x32xbf16>
    tpu.vector_store %arg8[%c0_235, %c32_236], %369 {strides = array<i32>} : memref<64x288xbf16, #tpu.memory_space<vmem>>, vector<64x32xbf16>,
    %371 = vector.extract_strided_slice %362 {offsets = [0, 2, 0], sizes = [8, 8, 32], strides = [1, 1, 1]} : vector<10x10x32xf32> to vector<8x8x32xf32>
    %372 = vector.shape_cast %371 : vector<8x8x32xf32> to vector<64x32xf32>
    %373 = arith.truncf %372 : vector<64x32xf32> to vector<64x32xbf16>
    %c0_237 = arith.constant 0 : index
    %c64_238 = arith.constant 64 : index
    %374 = vector.load %arg8[%c0_237, %c64_238] : memref<64x288xbf16, #tpu.memory_space<vmem>>, vector<64x32xbf16>
    tpu.vector_store %arg8[%c0_237, %c64_238], %373 {strides = array<i32>} : memref<64x288xbf16, #tpu.memory_space<vmem>>, vector<64x32xbf16>,
    %375 = vector.extract_strided_slice %362 {offsets = [1, 0, 0], sizes = [8, 8, 32], strides = [1, 1, 1]} : vector<10x10x32xf32> to vector<8x8x32xf32>
    %376 = vector.shape_cast %375 : vector<8x8x32xf32> to vector<64x32xf32>
    %377 = arith.truncf %376 : vector<64x32xf32> to vector<64x32xbf16>
    %c0_239 = arith.constant 0 : index
    %c96_240 = arith.constant 96 : index
    %378 = vector.load %arg8[%c0_239, %c96_240] : memref<64x288xbf16, #tpu.memory_space<vmem>>, vector<64x32xbf16>
    tpu.vector_store %arg8[%c0_239, %c96_240], %377 {strides = array<i32>} : memref<64x288xbf16, #tpu.memory_space<vmem>>, vector<64x32xbf16>,
    %379 = vector.extract_strided_slice %362 {offsets = [1, 1, 0], sizes = [8, 8, 32], strides = [1, 1, 1]} : vector<10x10x32xf32> to vector<8x8x32xf32>
    %380 = vector.shape_cast %379 : vector<8x8x32xf32> to vector<64x32xf32>
    %381 = arith.truncf %380 : vector<64x32xf32> to vector<64x32xbf16>
    %c0_241 = arith.constant 0 : index
    %c128_242 = arith.constant 128 : index
    %382 = vector.load %arg8[%c0_241, %c128_242] : memref<64x288xbf16, #tpu.memory_space<vmem>>, vector<64x32xbf16>
    tpu.vector_store %arg8[%c0_241, %c128_242], %381 {strides = array<i32>} : memref<64x288xbf16, #tpu.memory_space<vmem>>, vector<64x32xbf16>,
    %383 = vector.extract_strided_slice %362 {offsets = [1, 2, 0], sizes = [8, 8, 32], strides = [1, 1, 1]} : vector<10x10x32xf32> to vector<8x8x32xf32>
    %384 = vector.shape_cast %383 : vector<8x8x32xf32> to vector<64x32xf32>
    %385 = arith.truncf %384 : vector<64x32xf32> to vector<64x32xbf16>
    %c0_243 = arith.constant 0 : index
    %c160_244 = arith.constant 160 : index
    %386 = vector.load %arg8[%c0_243, %c160_244] : memref<64x288xbf16, #tpu.memory_space<vmem>>, vector<64x32xbf16>
    tpu.vector_store %arg8[%c0_243, %c160_244], %385 {strides = array<i32>} : memref<64x288xbf16, #tpu.memory_space<vmem>>, vector<64x32xbf16>,
    %387 = vector.extract_strided_slice %362 {offsets = [2, 0, 0], sizes = [8, 8, 32], strides = [1, 1, 1]} : vector<10x10x32xf32> to vector<8x8x32xf32>
    %388 = vector.shape_cast %387 : vector<8x8x32xf32> to vector<64x32xf32>
    %389 = arith.truncf %388 : vector<64x32xf32> to vector<64x32xbf16>
    %c0_245 = arith.constant 0 : index
    %c192_246 = arith.constant 192 : index
    %390 = vector.load %arg8[%c0_245, %c192_246] : memref<64x288xbf16, #tpu.memory_space<vmem>>, vector<64x32xbf16>
    tpu.vector_store %arg8[%c0_245, %c192_246], %389 {strides = array<i32>} : memref<64x288xbf16, #tpu.memory_space<vmem>>, vector<64x32xbf16>,
    %391 = vector.extract_strided_slice %362 {offsets = [2, 1, 0], sizes = [8, 8, 32], strides = [1, 1, 1]} : vector<10x10x32xf32> to vector<8x8x32xf32>
    %392 = vector.shape_cast %391 : vector<8x8x32xf32> to vector<64x32xf32>
    %393 = arith.truncf %392 : vector<64x32xf32> to vector<64x32xbf16>
    %c0_247 = arith.constant 0 : index
    %c224_248 = arith.constant 224 : index
    %394 = vector.load %arg8[%c0_247, %c224_248] : memref<64x288xbf16, #tpu.memory_space<vmem>>, vector<64x32xbf16>
    tpu.vector_store %arg8[%c0_247, %c224_248], %393 {strides = array<i32>} : memref<64x288xbf16, #tpu.memory_space<vmem>>, vector<64x32xbf16>,
    %395 = vector.extract_strided_slice %362 {offsets = [2, 2, 0], sizes = [8, 8, 32], strides = [1, 1, 1]} : vector<10x10x32xf32> to vector<8x8x32xf32>
    %396 = vector.shape_cast %395 : vector<8x8x32xf32> to vector<64x32xf32>
    %397 = arith.truncf %396 : vector<64x32xf32> to vector<64x32xbf16>
    %c0_249 = arith.constant 0 : index
    %c256_250 = arith.constant 256 : index
    %398 = vector.load %arg8[%c0_249, %c256_250] : memref<64x288xbf16, #tpu.memory_space<vmem>>, vector<64x32xbf16>
    tpu.vector_store %arg8[%c0_249, %c256_250], %397 {strides = array<i32>} : memref<64x288xbf16, #tpu.memory_space<vmem>>, vector<64x32xbf16>,
    %c0_251 = arith.constant 0 : index
    %c0_252 = arith.constant 0 : index
    %399 = vector.load %arg8[%c0_251, %c0_252] : memref<64x288xbf16, #tpu.memory_space<vmem>>, vector<64x288xbf16>
    %cst_253 = arith.constant dense<0.000000e+00> : vector<64x32xf32>
    %400 = tpu.matmul %399, %359, %cst_253 {dimension_numbers = #tpu.dot_dimension_numbers<[1], [0], [0], [1], [0, 0, 1, 1], [], []>} : vector<64x288xbf16>, vector<288x32xbf16>, vector<64x32xf32> -> vector<64x32xf32>
    %401 = vector.shape_cast %361 : vector<32xf32> to vector<1x32xf32>
    %402 = vector.broadcast %401 : vector<1x32xf32> to vector<64x32xf32>
    %403 = arith.addf %400, %402 : vector<64x32xf32>
    %cst_254 = arith.constant 0.000000e+00 : f32
    %404 = vector.broadcast %cst_254 : f32 to vector<64x32xf32>
    %405 = arith.maximumf %403, %404 : vector<64x32xf32>
    %406 = vector.shape_cast %405 : vector<64x32xf32> to vector<8x8x32xf32>
    %c1_255 = arith.constant 1 : index
    %c1_256 = arith.constant 1 : index
    %c0_257 = arith.constant 0 : index
    %407 = vector.load %arg7[%c1_255, %c1_256, %c0_257] : memref<10x10x32xf32, #tpu.memory_space<vmem>>, vector<8x8x32xf32>
    tpu.vector_store %arg7[%c1_255, %c1_256, %c0_257], %406 {strides = array<i32>} : memref<10x10x32xf32, #tpu.memory_space<vmem>>, vector<8x8x32xf32>,
    %c8 = arith.constant 8 : index
    %c0_258 = arith.constant 0 : index
    %c0_259 = arith.constant 0 : index
    %408 = vector.load %arg2[%c8, %c0_258, %c0_259] : memref<9x288x32xbf16, #tpu.memory_space<vmem>>, vector<1x288x32xbf16>
    %409 = vector.shape_cast %408 : vector<1x288x32xbf16> to vector<288x32xbf16>
    %c8_260 = arith.constant 8 : index
    %c0_261 = arith.constant 0 : index
    %410 = vector.load %arg3[%c8_260, %c0_261] : memref<9x32xf32, #tpu.memory_space<vmem>>, vector<1x32xf32>
    %411 = vector.shape_cast %410 : vector<1x32xf32> to vector<32xf32>
    %c0_262 = arith.constant 0 : index
    %c0_263 = arith.constant 0 : index
    %c0_264 = arith.constant 0 : index
    %412 = vector.load %arg7[%c0_262, %c0_263, %c0_264] : memref<10x10x32xf32, #tpu.memory_space<vmem>>, vector<10x10x32xf32>
    %413 = vector.extract_strided_slice %412 {offsets = [0, 0, 0], sizes = [8, 8, 32], strides = [1, 1, 1]} : vector<10x10x32xf32> to vector<8x8x32xf32>
    %414 = vector.shape_cast %413 : vector<8x8x32xf32> to vector<64x32xf32>
    %415 = arith.truncf %414 : vector<64x32xf32> to vector<64x32xbf16>
    %c0_265 = arith.constant 0 : index
    %c0_266 = arith.constant 0 : index
    %416 = vector.load %arg8[%c0_265, %c0_266] : memref<64x288xbf16, #tpu.memory_space<vmem>>, vector<64x32xbf16>
    tpu.vector_store %arg8[%c0_265, %c0_266], %415 {strides = array<i32>} : memref<64x288xbf16, #tpu.memory_space<vmem>>, vector<64x32xbf16>,
    %417 = vector.extract_strided_slice %412 {offsets = [0, 1, 0], sizes = [8, 8, 32], strides = [1, 1, 1]} : vector<10x10x32xf32> to vector<8x8x32xf32>
    %418 = vector.shape_cast %417 : vector<8x8x32xf32> to vector<64x32xf32>
    %419 = arith.truncf %418 : vector<64x32xf32> to vector<64x32xbf16>
    %c0_267 = arith.constant 0 : index
    %c32_268 = arith.constant 32 : index
    %420 = vector.load %arg8[%c0_267, %c32_268] : memref<64x288xbf16, #tpu.memory_space<vmem>>, vector<64x32xbf16>
    tpu.vector_store %arg8[%c0_267, %c32_268], %419 {strides = array<i32>} : memref<64x288xbf16, #tpu.memory_space<vmem>>, vector<64x32xbf16>,
    %421 = vector.extract_strided_slice %412 {offsets = [0, 2, 0], sizes = [8, 8, 32], strides = [1, 1, 1]} : vector<10x10x32xf32> to vector<8x8x32xf32>
    %422 = vector.shape_cast %421 : vector<8x8x32xf32> to vector<64x32xf32>
    %423 = arith.truncf %422 : vector<64x32xf32> to vector<64x32xbf16>
    %c0_269 = arith.constant 0 : index
    %c64_270 = arith.constant 64 : index
    %424 = vector.load %arg8[%c0_269, %c64_270] : memref<64x288xbf16, #tpu.memory_space<vmem>>, vector<64x32xbf16>
    tpu.vector_store %arg8[%c0_269, %c64_270], %423 {strides = array<i32>} : memref<64x288xbf16, #tpu.memory_space<vmem>>, vector<64x32xbf16>,
    %425 = vector.extract_strided_slice %412 {offsets = [1, 0, 0], sizes = [8, 8, 32], strides = [1, 1, 1]} : vector<10x10x32xf32> to vector<8x8x32xf32>
    %426 = vector.shape_cast %425 : vector<8x8x32xf32> to vector<64x32xf32>
    %427 = arith.truncf %426 : vector<64x32xf32> to vector<64x32xbf16>
    %c0_271 = arith.constant 0 : index
    %c96_272 = arith.constant 96 : index
    %428 = vector.load %arg8[%c0_271, %c96_272] : memref<64x288xbf16, #tpu.memory_space<vmem>>, vector<64x32xbf16>
    tpu.vector_store %arg8[%c0_271, %c96_272], %427 {strides = array<i32>} : memref<64x288xbf16, #tpu.memory_space<vmem>>, vector<64x32xbf16>,
    %429 = vector.extract_strided_slice %412 {offsets = [1, 1, 0], sizes = [8, 8, 32], strides = [1, 1, 1]} : vector<10x10x32xf32> to vector<8x8x32xf32>
    %430 = vector.shape_cast %429 : vector<8x8x32xf32> to vector<64x32xf32>
    %431 = arith.truncf %430 : vector<64x32xf32> to vector<64x32xbf16>
    %c0_273 = arith.constant 0 : index
    %c128_274 = arith.constant 128 : index
    %432 = vector.load %arg8[%c0_273, %c128_274] : memref<64x288xbf16, #tpu.memory_space<vmem>>, vector<64x32xbf16>
    tpu.vector_store %arg8[%c0_273, %c128_274], %431 {strides = array<i32>} : memref<64x288xbf16, #tpu.memory_space<vmem>>, vector<64x32xbf16>,
    %433 = vector.extract_strided_slice %412 {offsets = [1, 2, 0], sizes = [8, 8, 32], strides = [1, 1, 1]} : vector<10x10x32xf32> to vector<8x8x32xf32>
    %434 = vector.shape_cast %433 : vector<8x8x32xf32> to vector<64x32xf32>
    %435 = arith.truncf %434 : vector<64x32xf32> to vector<64x32xbf16>
    %c0_275 = arith.constant 0 : index
    %c160_276 = arith.constant 160 : index
    %436 = vector.load %arg8[%c0_275, %c160_276] : memref<64x288xbf16, #tpu.memory_space<vmem>>, vector<64x32xbf16>
    tpu.vector_store %arg8[%c0_275, %c160_276], %435 {strides = array<i32>} : memref<64x288xbf16, #tpu.memory_space<vmem>>, vector<64x32xbf16>,
    %437 = vector.extract_strided_slice %412 {offsets = [2, 0, 0], sizes = [8, 8, 32], strides = [1, 1, 1]} : vector<10x10x32xf32> to vector<8x8x32xf32>
    %438 = vector.shape_cast %437 : vector<8x8x32xf32> to vector<64x32xf32>
    %439 = arith.truncf %438 : vector<64x32xf32> to vector<64x32xbf16>
    %c0_277 = arith.constant 0 : index
    %c192_278 = arith.constant 192 : index
    %440 = vector.load %arg8[%c0_277, %c192_278] : memref<64x288xbf16, #tpu.memory_space<vmem>>, vector<64x32xbf16>
    tpu.vector_store %arg8[%c0_277, %c192_278], %439 {strides = array<i32>} : memref<64x288xbf16, #tpu.memory_space<vmem>>, vector<64x32xbf16>,
    %441 = vector.extract_strided_slice %412 {offsets = [2, 1, 0], sizes = [8, 8, 32], strides = [1, 1, 1]} : vector<10x10x32xf32> to vector<8x8x32xf32>
    %442 = vector.shape_cast %441 : vector<8x8x32xf32> to vector<64x32xf32>
    %443 = arith.truncf %442 : vector<64x32xf32> to vector<64x32xbf16>
    %c0_279 = arith.constant 0 : index
    %c224_280 = arith.constant 224 : index
    %444 = vector.load %arg8[%c0_279, %c224_280] : memref<64x288xbf16, #tpu.memory_space<vmem>>, vector<64x32xbf16>
    tpu.vector_store %arg8[%c0_279, %c224_280], %443 {strides = array<i32>} : memref<64x288xbf16, #tpu.memory_space<vmem>>, vector<64x32xbf16>,
    %445 = vector.extract_strided_slice %412 {offsets = [2, 2, 0], sizes = [8, 8, 32], strides = [1, 1, 1]} : vector<10x10x32xf32> to vector<8x8x32xf32>
    %446 = vector.shape_cast %445 : vector<8x8x32xf32> to vector<64x32xf32>
    %447 = arith.truncf %446 : vector<64x32xf32> to vector<64x32xbf16>
    %c0_281 = arith.constant 0 : index
    %c256_282 = arith.constant 256 : index
    %448 = vector.load %arg8[%c0_281, %c256_282] : memref<64x288xbf16, #tpu.memory_space<vmem>>, vector<64x32xbf16>
    tpu.vector_store %arg8[%c0_281, %c256_282], %447 {strides = array<i32>} : memref<64x288xbf16, #tpu.memory_space<vmem>>, vector<64x32xbf16>,
    %c0_283 = arith.constant 0 : index
    %c0_284 = arith.constant 0 : index
    %449 = vector.load %arg8[%c0_283, %c0_284] : memref<64x288xbf16, #tpu.memory_space<vmem>>, vector<64x288xbf16>
    %cst_285 = arith.constant dense<0.000000e+00> : vector<64x32xf32>
    %450 = tpu.matmul %449, %409, %cst_285 {dimension_numbers = #tpu.dot_dimension_numbers<[1], [0], [0], [1], [0, 0, 1, 1], [], []>} : vector<64x288xbf16>, vector<288x32xbf16>, vector<64x32xf32> -> vector<64x32xf32>
    %451 = vector.shape_cast %411 : vector<32xf32> to vector<1x32xf32>
    %452 = vector.broadcast %451 : vector<1x32xf32> to vector<64x32xf32>
    %453 = arith.addf %450, %452 : vector<64x32xf32>
    %454 = arith.addf %453, %355 : vector<64x32xf32>
    %cst_286 = arith.constant 0.000000e+00 : f32
    %455 = vector.broadcast %cst_286 : f32 to vector<64x32xf32>
    %456 = arith.maximumf %454, %455 : vector<64x32xf32>
    %457 = vector.shape_cast %456 : vector<64x32xf32> to vector<8x8x32xf32>
    %c1_287 = arith.constant 1 : index
    %c1_288 = arith.constant 1 : index
    %c0_289 = arith.constant 0 : index
    %458 = vector.load %arg7[%c1_287, %c1_288, %c0_289] : memref<10x10x32xf32, #tpu.memory_space<vmem>>, vector<8x8x32xf32>
    tpu.vector_store %arg7[%c1_287, %c1_288, %c0_289], %457 {strides = array<i32>} : memref<10x10x32xf32, #tpu.memory_space<vmem>>, vector<8x8x32xf32>,
    %c0_290 = arith.constant 0 : index
    %c0_291 = arith.constant 0 : index
    %459 = vector.load %arg4[%c0_290, %c0_291] : memref<288x64xbf16, #tpu.memory_space<vmem>>, vector<288x64xbf16>
    %c0_292 = arith.constant 0 : index
    %c0_293 = arith.constant 0 : index
    %460 = vector.load %arg5[%c0_292, %c0_293] : memref<1x64xf32, #tpu.memory_space<vmem>>, vector<1x64xf32>
    %461 = vector.shape_cast %460 : vector<1x64xf32> to vector<64xf32>
    %c0_294 = arith.constant 0 : index
    %c0_295 = arith.constant 0 : index
    %c0_296 = arith.constant 0 : index
    %462 = vector.load %arg7[%c0_294, %c0_295, %c0_296] : memref<10x10x32xf32, #tpu.memory_space<vmem>>, vector<10x10x32xf32>
    %463 = vector.extract_strided_slice %462 {offsets = [0, 0, 0], sizes = [8, 8, 32], strides = [1, 1, 1]} : vector<10x10x32xf32> to vector<8x8x32xf32>
    %464 = vector.shape_cast %463 : vector<8x8x32xf32> to vector<64x32xf32>
    %465 = arith.truncf %464 : vector<64x32xf32> to vector<64x32xbf16>
    %c0_297 = arith.constant 0 : index
    %c0_298 = arith.constant 0 : index
    %466 = vector.load %arg8[%c0_297, %c0_298] : memref<64x288xbf16, #tpu.memory_space<vmem>>, vector<64x32xbf16>
    tpu.vector_store %arg8[%c0_297, %c0_298], %465 {strides = array<i32>} : memref<64x288xbf16, #tpu.memory_space<vmem>>, vector<64x32xbf16>,
    %467 = vector.extract_strided_slice %462 {offsets = [0, 1, 0], sizes = [8, 8, 32], strides = [1, 1, 1]} : vector<10x10x32xf32> to vector<8x8x32xf32>
    %468 = vector.shape_cast %467 : vector<8x8x32xf32> to vector<64x32xf32>
    %469 = arith.truncf %468 : vector<64x32xf32> to vector<64x32xbf16>
    %c0_299 = arith.constant 0 : index
    %c32_300 = arith.constant 32 : index
    %470 = vector.load %arg8[%c0_299, %c32_300] : memref<64x288xbf16, #tpu.memory_space<vmem>>, vector<64x32xbf16>
    tpu.vector_store %arg8[%c0_299, %c32_300], %469 {strides = array<i32>} : memref<64x288xbf16, #tpu.memory_space<vmem>>, vector<64x32xbf16>,
    %471 = vector.extract_strided_slice %462 {offsets = [0, 2, 0], sizes = [8, 8, 32], strides = [1, 1, 1]} : vector<10x10x32xf32> to vector<8x8x32xf32>
    %472 = vector.shape_cast %471 : vector<8x8x32xf32> to vector<64x32xf32>
    %473 = arith.truncf %472 : vector<64x32xf32> to vector<64x32xbf16>
    %c0_301 = arith.constant 0 : index
    %c64_302 = arith.constant 64 : index
    %474 = vector.load %arg8[%c0_301, %c64_302] : memref<64x288xbf16, #tpu.memory_space<vmem>>, vector<64x32xbf16>
    tpu.vector_store %arg8[%c0_301, %c64_302], %473 {strides = array<i32>} : memref<64x288xbf16, #tpu.memory_space<vmem>>, vector<64x32xbf16>,
    %475 = vector.extract_strided_slice %462 {offsets = [1, 0, 0], sizes = [8, 8, 32], strides = [1, 1, 1]} : vector<10x10x32xf32> to vector<8x8x32xf32>
    %476 = vector.shape_cast %475 : vector<8x8x32xf32> to vector<64x32xf32>
    %477 = arith.truncf %476 : vector<64x32xf32> to vector<64x32xbf16>
    %c0_303 = arith.constant 0 : index
    %c96_304 = arith.constant 96 : index
    %478 = vector.load %arg8[%c0_303, %c96_304] : memref<64x288xbf16, #tpu.memory_space<vmem>>, vector<64x32xbf16>
    tpu.vector_store %arg8[%c0_303, %c96_304], %477 {strides = array<i32>} : memref<64x288xbf16, #tpu.memory_space<vmem>>, vector<64x32xbf16>,
    %479 = vector.extract_strided_slice %462 {offsets = [1, 1, 0], sizes = [8, 8, 32], strides = [1, 1, 1]} : vector<10x10x32xf32> to vector<8x8x32xf32>
    %480 = vector.shape_cast %479 : vector<8x8x32xf32> to vector<64x32xf32>
    %481 = arith.truncf %480 : vector<64x32xf32> to vector<64x32xbf16>
    %c0_305 = arith.constant 0 : index
    %c128_306 = arith.constant 128 : index
    %482 = vector.load %arg8[%c0_305, %c128_306] : memref<64x288xbf16, #tpu.memory_space<vmem>>, vector<64x32xbf16>
    tpu.vector_store %arg8[%c0_305, %c128_306], %481 {strides = array<i32>} : memref<64x288xbf16, #tpu.memory_space<vmem>>, vector<64x32xbf16>,
    %483 = vector.extract_strided_slice %462 {offsets = [1, 2, 0], sizes = [8, 8, 32], strides = [1, 1, 1]} : vector<10x10x32xf32> to vector<8x8x32xf32>
    %484 = vector.shape_cast %483 : vector<8x8x32xf32> to vector<64x32xf32>
    %485 = arith.truncf %484 : vector<64x32xf32> to vector<64x32xbf16>
    %c0_307 = arith.constant 0 : index
    %c160_308 = arith.constant 160 : index
    %486 = vector.load %arg8[%c0_307, %c160_308] : memref<64x288xbf16, #tpu.memory_space<vmem>>, vector<64x32xbf16>
    tpu.vector_store %arg8[%c0_307, %c160_308], %485 {strides = array<i32>} : memref<64x288xbf16, #tpu.memory_space<vmem>>, vector<64x32xbf16>,
    %487 = vector.extract_strided_slice %462 {offsets = [2, 0, 0], sizes = [8, 8, 32], strides = [1, 1, 1]} : vector<10x10x32xf32> to vector<8x8x32xf32>
    %488 = vector.shape_cast %487 : vector<8x8x32xf32> to vector<64x32xf32>
    %489 = arith.truncf %488 : vector<64x32xf32> to vector<64x32xbf16>
    %c0_309 = arith.constant 0 : index
    %c192_310 = arith.constant 192 : index
    %490 = vector.load %arg8[%c0_309, %c192_310] : memref<64x288xbf16, #tpu.memory_space<vmem>>, vector<64x32xbf16>
    tpu.vector_store %arg8[%c0_309, %c192_310], %489 {strides = array<i32>} : memref<64x288xbf16, #tpu.memory_space<vmem>>, vector<64x32xbf16>,
    %491 = vector.extract_strided_slice %462 {offsets = [2, 1, 0], sizes = [8, 8, 32], strides = [1, 1, 1]} : vector<10x10x32xf32> to vector<8x8x32xf32>
    %492 = vector.shape_cast %491 : vector<8x8x32xf32> to vector<64x32xf32>
    %493 = arith.truncf %492 : vector<64x32xf32> to vector<64x32xbf16>
    %c0_311 = arith.constant 0 : index
    %c224_312 = arith.constant 224 : index
    %494 = vector.load %arg8[%c0_311, %c224_312] : memref<64x288xbf16, #tpu.memory_space<vmem>>, vector<64x32xbf16>
    tpu.vector_store %arg8[%c0_311, %c224_312], %493 {strides = array<i32>} : memref<64x288xbf16, #tpu.memory_space<vmem>>, vector<64x32xbf16>,
    %495 = vector.extract_strided_slice %462 {offsets = [2, 2, 0], sizes = [8, 8, 32], strides = [1, 1, 1]} : vector<10x10x32xf32> to vector<8x8x32xf32>
    %496 = vector.shape_cast %495 : vector<8x8x32xf32> to vector<64x32xf32>
    %497 = arith.truncf %496 : vector<64x32xf32> to vector<64x32xbf16>
    %c0_313 = arith.constant 0 : index
    %c256_314 = arith.constant 256 : index
    %498 = vector.load %arg8[%c0_313, %c256_314] : memref<64x288xbf16, #tpu.memory_space<vmem>>, vector<64x32xbf16>
    tpu.vector_store %arg8[%c0_313, %c256_314], %497 {strides = array<i32>} : memref<64x288xbf16, #tpu.memory_space<vmem>>, vector<64x32xbf16>,
    %c0_315 = arith.constant 0 : index
    %c0_316 = arith.constant 0 : index
    %499 = vector.load %arg8[%c0_315, %c0_316] : memref<64x288xbf16, #tpu.memory_space<vmem>>, vector<64x288xbf16>
    %cst_317 = arith.constant dense<0.000000e+00> : vector<64x64xf32>
    %500 = tpu.matmul %499, %459, %cst_317 {dimension_numbers = #tpu.dot_dimension_numbers<[1], [0], [0], [1], [0, 0, 1, 1], [], []>} : vector<64x288xbf16>, vector<288x64xbf16>, vector<64x64xf32> -> vector<64x64xf32>
    %501 = vector.shape_cast %461 : vector<64xf32> to vector<1x64xf32>
    %502 = vector.broadcast %501 : vector<1x64xf32> to vector<64x64xf32>
    %503 = arith.addf %500, %502 : vector<64x64xf32>
    %cst_318 = arith.constant 0.000000e+00 : f32
    %504 = vector.broadcast %cst_318 : f32 to vector<64x64xf32>
    %505 = arith.maximumf %503, %504 : vector<64x64xf32>
    %506 = arith.truncf %505 : vector<64x64xf32> to vector<64x64xbf16>
    %c0_319 = arith.constant 0 : index
    %c0_320 = arith.constant 0 : index
    %c0_321 = arith.constant 0 : index
    %507 = vector.load %arg6[%c0_319, %c0_320, %c0_321] : memref<1x64x64xbf16, #tpu.memory_space<vmem>>, vector<1x64x64xbf16>
    %508 = vector.shape_cast %507 : vector<1x64x64xbf16> to vector<64x64xbf16>
    %509 = vector.shape_cast %506 : vector<64x64xbf16> to vector<1x64x64xbf16>
    tpu.vector_store %arg6[%c0_319, %c0_320, %c0_321], %509 {strides = array<i32>} : memref<1x64x64xbf16, #tpu.memory_space<vmem>>, vector<1x64x64xbf16>,
    return
  }
  func.func @transform_0(%arg0: i32) -> (i32, i32, i32, i32) {
    %c0_i32 = arith.constant 0 : i32
    %c0_i32_0 = arith.constant 0 : i32
    %c0_i32_1 = arith.constant 0 : i32
    %c0_i32_2 = arith.constant 0 : i32
    return %arg0, %c0_i32, %c0_i32_0, %c0_i32_1 : i32, i32, i32, i32
  }
  func.func @transform_1(%arg0: i32) -> (i32, i32, i32) {
    %c0_i32 = arith.constant 0 : i32
    %c0_i32_0 = arith.constant 0 : i32
    %c0_i32_1 = arith.constant 0 : i32
    %c0_i32_2 = arith.constant 0 : i32
    return %c0_i32, %c0_i32_0, %c0_i32_1 : i32, i32, i32
  }
  func.func @transform_2(%arg0: i32) -> (i32, i32) {
    %c0_i32 = arith.constant 0 : i32
    %c0_i32_0 = arith.constant 0 : i32
    %c0_i32_1 = arith.constant 0 : i32
    return %c0_i32, %c0_i32_0 : i32, i32
  }
  func.func @transform_3(%arg0: i32) -> (i32, i32) {
    %c0_i32 = arith.constant 0 : i32
    %c0_i32_0 = arith.constant 0 : i32
    %c0_i32_1 = arith.constant 0 : i32
    return %c0_i32, %c0_i32_0 : i32, i32
  }
  func.func @transform_4(%arg0: i32) -> (i32, i32) {
    %c0_i32 = arith.constant 0 : i32
    %c0_i32_0 = arith.constant 0 : i32
    %c0_i32_1 = arith.constant 0 : i32
    return %c0_i32, %c0_i32_0 : i32, i32
  }
  func.func @transform_5(%arg0: i32) -> (i32, i32, i32) {
    %c0_i32 = arith.constant 0 : i32
    %c0_i32_0 = arith.constant 0 : i32
    %c0_i32_1 = arith.constant 0 : i32
    return %arg0, %c0_i32, %c0_i32_0 : i32, i32, i32
  }
}

module attributes {stable_mosaic.version = 11 : i64} {
  func.func @heads_fc_kernel(%arg0: i32, %arg1: memref<2x4096xbf16, #tpu.memory_space<vmem>>, %arg2: memref<4096x66xbf16, #tpu.memory_space<vmem>>, %arg3: memref<1x66xf32, #tpu.memory_space<vmem>>, %arg4: memref<2x65xf32, #tpu.memory_space<vmem>>, %arg5: memref<2x1xf32, #tpu.memory_space<vmem>>) attributes {dimension_semantics = [#tpu.dimension_semantics<arbitrary>], iteration_bounds = array<i64: 1>, scalar_prefetch = 0 : i64, scratch_operands = 0 : i64, tpu.core_type = #tpu.core_type<tc>, window_params = [{pipeline_mode = #tpu.pipeline_mode<synchronous>, transform_indices = @transform_0, window_bounds = array<i64: 2, 4096>}, {pipeline_mode = #tpu.pipeline_mode<synchronous>, transform_indices = @transform_1, window_bounds = array<i64: 4096, 66>}, {pipeline_mode = #tpu.pipeline_mode<synchronous>, transform_indices = @transform_2, window_bounds = array<i64: 1, 66>}, {pipeline_mode = #tpu.pipeline_mode<synchronous>, transform_indices = @transform_3, window_bounds = array<i64: 2, 65>}, {pipeline_mode = #tpu.pipeline_mode<synchronous>, transform_indices = @transform_4, window_bounds = array<i64: 2, 1>}]} {
    %c0 = arith.constant 0 : index
    %c0_0 = arith.constant 0 : index
    %0 = vector.load %arg1[%c0, %c0_0] : memref<2x4096xbf16, #tpu.memory_space<vmem>>, vector<2x4096xbf16>
    %c0_1 = arith.constant 0 : index
    %c0_2 = arith.constant 0 : index
    %1 = vector.load %arg2[%c0_1, %c0_2] : memref<4096x66xbf16, #tpu.memory_space<vmem>>, vector<4096x66xbf16>
    %cst = arith.constant dense<0.000000e+00> : vector<2x66xf32>
    %2 = tpu.matmul %0, %1, %cst {dimension_numbers = #tpu.dot_dimension_numbers<[1], [0], [0], [1], [0, 0, 1, 1], [], []>} : vector<2x4096xbf16>, vector<4096x66xbf16>, vector<2x66xf32> -> vector<2x66xf32>
    %c0_3 = arith.constant 0 : index
    %c0_4 = arith.constant 0 : index
    %3 = vector.load %arg3[%c0_3, %c0_4] : memref<1x66xf32, #tpu.memory_space<vmem>>, vector<1x66xf32>
    %4 = vector.shape_cast %3 : vector<1x66xf32> to vector<66xf32>
    %5 = vector.shape_cast %4 : vector<66xf32> to vector<1x66xf32>
    %6 = vector.broadcast %5 : vector<1x66xf32> to vector<2x66xf32>
    %7 = arith.addf %2, %6 : vector<2x66xf32>
    %8 = vector.extract_strided_slice %7 {offsets = [0, 0], sizes = [2, 65], strides = [1, 1]} : vector<2x66xf32> to vector<2x65xf32>
    %c0_5 = arith.constant 0 : index
    %c0_6 = arith.constant 0 : index
    %9 = vector.load %arg4[%c0_5, %c0_6] : memref<2x65xf32, #tpu.memory_space<vmem>>, vector<2x65xf32>
    tpu.vector_store %arg4[%c0_5, %c0_6], %8 {strides = array<i32>} : memref<2x65xf32, #tpu.memory_space<vmem>>, vector<2x65xf32>,
    %10 = vector.extract_strided_slice %7 {offsets = [0, 65], sizes = [2, 1], strides = [1, 1]} : vector<2x66xf32> to vector<2x1xf32>
    %11 = math.tanh %10 : vector<2x1xf32>
    %c0_7 = arith.constant 0 : index
    %c0_8 = arith.constant 0 : index
    %12 = vector.load %arg5[%c0_7, %c0_8] : memref<2x1xf32, #tpu.memory_space<vmem>>, vector<2x1xf32>
    tpu.vector_store %arg5[%c0_7, %c0_8], %11 {strides = array<i32>} : memref<2x1xf32, #tpu.memory_space<vmem>>, vector<2x1xf32>,
    return
  }
  func.func @transform_0(%arg0: i32) -> (i32, i32) {
    %c0_i32 = arith.constant 0 : i32
    %c0_i32_0 = arith.constant 0 : i32
    %c0_i32_1 = arith.constant 0 : i32
    return %c0_i32, %c0_i32_0 : i32, i32
  }
  func.func @transform_1(%arg0: i32) -> (i32, i32) {
    %c0_i32 = arith.constant 0 : i32
    %c0_i32_0 = arith.constant 0 : i32
    %c0_i32_1 = arith.constant 0 : i32
    return %c0_i32, %c0_i32_0 : i32, i32
  }
  func.func @transform_2(%arg0: i32) -> (i32, i32) {
    %c0_i32 = arith.constant 0 : i32
    %c0_i32_0 = arith.constant 0 : i32
    %c0_i32_1 = arith.constant 0 : i32
    return %c0_i32, %c0_i32_0 : i32, i32
  }
  func.func @transform_3(%arg0: i32) -> (i32, i32) {
    %c0_i32 = arith.constant 0 : i32
    %c0_i32_0 = arith.constant 0 : i32
    %c0_i32_1 = arith.constant 0 : i32
    return %c0_i32, %c0_i32_0 : i32, i32
  }
  func.func @transform_4(%arg0: i32) -> (i32, i32) {
    %c0_i32 = arith.constant 0 : i32
    %c0_i32_0 = arith.constant 0 : i32
    %c0_i32_1 = arith.constant 0 : i32
    return %c0_i32, %c0_i32_0 : i32, i32
  }
}

</mosaic_0001>

<llo_original>
// kernel: gonnet_forward.3
$region0: #{gonnet_forward.3}
  #allocation0 [shape = 'u32[]', space=smem, size = 0x4, offset = 0x4, fixed_abs, tag = 'smem constant byte address 0x4 - core index']
  #allocation1 [shape = 'u32[72,128]{1,0:T(1,128)}', space=vmem, size = 0x9000, scoped, tag = 'internal scratch']
  %s0 = inlined_call_operand.vmem [shape: bf16[2,4096], index: 0, kind: input, shape index: {}]
  %s1 = inlined_call_operand.vmem [shape: bf16[4096,66], index: 1, kind: input, shape index: {}]
  %s2 = inlined_call_operand.vmem [shape: f32[1,66], index: 2, kind: input, shape index: {}]
  %s3 = inlined_call_operand.hbm [shape: f32[2,65], index: 3, kind: output, shape index: {0}]
  %s4 = inlined_call_operand.vmem [shape: f32[2,1], index: 4, kind: output, shape index: {1}]
  %5 = xla_tuple %s3, %s4
  %s6 = sld [smem:[#allocation0]]
  $region30: #{gonnet_forward.3} parent=0
    _
  %s8 = ssub.s32 1, %s6
  %s9 = scalar_select 0, %s8, %s6
  $region1: #{gonnet_forward.3} parent=0
    #allocation2 [shape = 'u8[1024]{0}', space=vmem, size = 0x400, scoped, tag = 'output window, operand 0, single buffered']
    #allocation3 [shape = 's32[1]{0}', space=sflag, size = 0x4, scoped, tag = 'scoped memory for gonnet_forward.3']
    %10 = vsyncpa [#allocation3], 0
    // Predicated region
    $region2: #{gonnet_forward.3} parent=1 // pred_check
      _
    $region3: #{gonnet_forward.3} parent=1 // pred_check_branch
      %12 = sbr.rel (0) target = $region5
    $region4: #{gonnet_forward.3} parent=1 // pred_region
      _
    $region5: #{gonnet_forward.3} parent=1 // pred_fallthru
      _
    // Predicated region
    $region6: #{gonnet_forward.3} parent=1 // pred_check
      _
    $region7: #{gonnet_forward.3} parent=1 // pred_check_branch
      %14 = sbr.rel (0) target = $region9
    $region8: #{gonnet_forward.3} parent=1 // pred_region
      _
    $region9: #{gonnet_forward.3} parent=1 // pred_fallthru
      _
    // Predicated region
    $region10: #{gonnet_forward.3} parent=1 // pred_check
      _
    $region11: #{gonnet_forward.3} parent=1 // pred_check_branch
      %16 = sbr.rel (0) target = $region13
    $region12: #{gonnet_forward.3} parent=1 // pred_region
      _
    $region13: #{gonnet_forward.3} parent=1 // pred_fallthru
      _
    %v17 = vld [vmem:[%s0] sm:$0xff]
    %v18 = vld [vmem:[%s0 + $0x8] sm:$0xff]
    %v19 = vld [vmem:[%s0 + $0x10] sm:$0xff]
    %v20 = vld [vmem:[%s0 + $0x18] sm:$0xff]
    %v21 = vld [vmem:[%s1] sm:$0xf]
    %v22 = vld [vmem:[%s1 + $0x4] sm:$0xf]
    %v23 = vld [vmem:[%s1 + $0x8] sm:$0xf]
    %v24 = vld [vmem:[%s1 + $0xc] sm:$0xf]
    %v25 = vld [vmem:[%s1 + $0x10] sm:$0xf]
    %v26 = vld [vmem:[%s1 + $0x14] sm:$0xf]
    %v27 = vld [vmem:[%s1 + $0x18] sm:$0xf]
    %v28 = vld [vmem:[%s1 + $0x1c] sm:$0xf]
    %v29 = vld [vmem:[%s1 + $0x20] sm:$0xf]
    %v30 = vld [vmem:[%s1 + $0x24] sm:$0xf]
    %v31 = vld [vmem:[%s1 + $0x28] sm:$0xf]
    %v32 = vld [vmem:[%s1 + $0x2c] sm:$0xf]
    %v33 = vld [vmem:[%s1 + $0x30] sm:$0xf]
    %v34 = vld [vmem:[%s1 + $0x34] sm:$0xf]
    %v35 = vld [vmem:[%s1 + $0x38] sm:$0xf]
    %v36 = vld [vmem:[%s1 + $0x3c] sm:$0xf]
    %v37 = vld [vmem:[%s1 + $0x40] sm:$0xf]
    %v38 = vld [vmem:[%s1 + $0x44] sm:$0xf]
    %v39 = vld [vmem:[%s1 + $0x48] sm:$0xf]
    %v40 = vld [vmem:[%s1 + $0x4c] sm:$0xf]
    %v41 = vld [vmem:[%s1 + $0x50] sm:$0xf]
    %v42 = vld [vmem:[%s1 + $0x54] sm:$0xf]
    %v43 = vld [vmem:[%s1 + $0x58] sm:$0xf]
    %v44 = vld [vmem:[%s1 + $0x5c] sm:$0xf]
    %v45 = vld [vmem:[%s1 + $0x60] sm:$0xf]
    %v46 = vld [vmem:[%s1 + $0x64] sm:$0xf]
    %v47 = vld [vmem:[%s1 + $0x68] sm:$0xf]
    %v48 = vld [vmem:[%s1 + $0x6c] sm:$0xf]
    %v49 = vld [vmem:[%s1 + $0x70] sm:$0xf]
    %v50 = vld [vmem:[%s1 + $0x74] sm:$0xf]
    %v51 = vld [vmem:[%s1 + $0x78] sm:$0xf]
    %v52 = vld [vmem:[%s1 + $0x7c] sm:$0xf]
    %v53 = vld [vmem:[%s1 + $0x80] sm:$0xf]
    %v54 = vld [vmem:[%s1 + $0x84] sm:$0xf]
    %v55 = vld [vmem:[%s1 + $0x88] sm:$0xf]
    %v56 = vld [vmem:[%s1 + $0x8c] sm:$0xf]
    %v57 = vld [vmem:[%s1 + $0x90] sm:$0xf]
    %v58 = vld [vmem:[%s1 + $0x94] sm:$0xf]
    %v59 = vld [vmem:[%s1 + $0x98] sm:$0xf]
    %v60 = vld [vmem:[%s1 + $0x9c] sm:$0xf]
    %v61 = vld [vmem:[%s1 + $0xa0] sm:$0xf]
    %v62 = vld [vmem:[%s1 + $0xa4] sm:$0xf]
    %v63 = vld [vmem:[%s1 + $0xa8] sm:$0xf]
    %v64 = vld [vmem:[%s1 + $0xac] sm:$0xf]
    %v65 = vld [vmem:[%s1 + $0xb0] sm:$0xf]
    %v66 = vld [vmem:[%s1 + $0xb4] sm:$0xf]
    %v67 = vld [vmem:[%s1 + $0xb8] sm:$0xf]
    %v68 = vld [vmem:[%s1 + $0xbc] sm:$0xf]
    %v69 = vld [vmem:[%s1 + $0xc0] sm:$0xf]
    %v70 = vld [vmem:[%s1 + $0xc4] sm:$0xf]
    %v71 = vld [vmem:[%s1 + $0xc8] sm:$0xf]
    %v72 = vld [vmem:[%s1 + $0xcc] sm:$0xf]
    %v73 = vld [vmem:[%s1 + $0xd0] sm:$0xf]
    %v74 = vld [vmem:[%s1 + $0xd4] sm:$0xf]
    %v75 = vld [vmem:[%s1 + $0xd8] sm:$0xf]
    %v76 = vld [vmem:[%s1 + $0xdc] sm:$0xf]
    %v77 = vld [vmem:[%s1 + $0xe0] sm:$0xf]
    %v78 = vld [vmem:[%s1 + $0xe4] sm:$0xf]
    %v79 = vld [vmem:[%s1 + $0xe8] sm:$0xf]
    %v80 = vld [vmem:[%s1 + $0xec] sm:$0xf]
    %v81 = vld [vmem:[%s1 + $0xf0] sm:$0xf]
    %v82 = vld [vmem:[%s1 + $0xf4] sm:$0xf]
    %v83 = vld [vmem:[%s1 + $0xf8] sm:$0xf]
    %v84 = vld [vmem:[%s1 + $0xfc] sm:$0xf]
    %v85 = vld [vmem:[%s1 + $0x100] sm:$0xf]
    %v86 = vld [vmem:[%s1 + $0x104] sm:$0xf]
    %v87 = vld [vmem:[%s1 + $0x108] sm:$0xf]
    %v88 = vld [vmem:[%s1 + $0x10c] sm:$0xf]
    %v89 = vld [vmem:[%s1 + $0x110] sm:$0xf]
    %v90 = vld [vmem:[%s1 + $0x114] sm:$0xf]
    %v91 = vld [vmem:[%s1 + $0x118] sm:$0xf]
    %v92 = vld [vmem:[%s1 + $0x11c] sm:$0xf]
    %v93 = vld [vmem:[%s1 + $0x120] sm:$0xf]
    %v94 = vld [vmem:[%s1 + $0x124] sm:$0xf]
    %v95 = vld [vmem:[%s1 + $0x128] sm:$0xf]
    %v96 = vld [vmem:[%s1 + $0x12c] sm:$0xf]
    %v97 = vld [vmem:[%s1 + $0x130] sm:$0xf]
    %v98 = vld [vmem:[%s1 + $0x134] sm:$0xf]
    %v99 = vld [vmem:[%s1 + $0x138] sm:$0xf]
    %v100 = vld [vmem:[%s1 + $0x13c] sm:$0xf]
    %v101 = vld [vmem:[%s1 + $0x140] sm:$0xf]
    %v102 = vld [vmem:[%s1 + $0x144] sm:$0xf]
    %v103 = vld [vmem:[%s1 + $0x148] sm:$0xf]
    %v104 = vld [vmem:[%s1 + $0x14c] sm:$0xf]
    %v105 = vld [vmem:[%s1 + $0x150] sm:$0xf]
    %v106 = vld [vmem:[%s1 + $0x154] sm:$0xf]
    %v107 = vld [vmem:[%s1 + $0x158] sm:$0xf]
    %v108 = vld [vmem:[%s1 + $0x15c] sm:$0xf]
    %v109 = vld [vmem:[%s1 + $0x160] sm:$0xf]
    %v110 = vld [vmem:[%s1 + $0x164] sm:$0xf]
    %v111 = vld [vmem:[%s1 + $0x168] sm:$0xf]
    %v112 = vld [vmem:[%s1 + $0x16c] sm:$0xf]
    %v113 = vld [vmem:[%s1 + $0x170] sm:$0xf]
    %v114 = vld [vmem:[%s1 + $0x174] sm:$0xf]
    %v115 = vld [vmem:[%s1 + $0x178] sm:$0xf]
    %v116 = vld [vmem:[%s1 + $0x17c] sm:$0xf]
    %v117 = vld [vmem:[%s1 + $0x180] sm:$0xf]
    %v118 = vld [vmem:[%s1 + $0x184] sm:$0xf]
    %v119 = vld [vmem:[%s1 + $0x188] sm:$0xf]
    %v120 = vld [vmem:[%s1 + $0x18c] sm:$0xf]
    %v121 = vld [vmem:[%s1 + $0x190] sm:$0xf]
    %v122 = vld [vmem:[%s1 + $0x194] sm:$0xf]
    %v123 = vld [vmem:[%s1 + $0x198] sm:$0xf]
    %v124 = vld [vmem:[%s1 + $0x19c] sm:$0xf]
    %v125 = vld [vmem:[%s1 + $0x1a0] sm:$0xf]
    %v126 = vld [vmem:[%s1 + $0x1a4] sm:$0xf]
    %v127 = vld [vmem:[%s1 + $0x1a8] sm:$0xf]
    %v128 = vld [vmem:[%s1 + $0x1ac] sm:$0xf]
    %v129 = vld [vmem:[%s1 + $0x1b0] sm:$0xf]
    %v130 = vld [vmem:[%s1 + $0x1b4] sm:$0xf]
    %v131 = vld [vmem:[%s1 + $0x1b8] sm:$0xf]
    %v132 = vld [vmem:[%s1 + $0x1bc] sm:$0xf]
    %v133 = vld [vmem:[%s1 + $0x1c0] sm:$0xf]
    %v134 = vld [vmem:[%s1 + $0x1c4] sm:$0xf]
    %v135 = vld [vmem:[%s1 + $0x1c8] sm:$0xf]
    %v136 = vld [vmem:[%s1 + $0x1cc] sm:$0xf]
    %v137 = vld [vmem:[%s1 + $0x1d0] sm:$0xf]
    %v138 = vld [vmem:[%s1 + $0x1d4] sm:$0xf]
    %v139 = vld [vmem:[%s1 + $0x1d8] sm:$0xf]
    %v140 = vld [vmem:[%s1 + $0x1dc] sm:$0xf]
    %v141 = vld [vmem:[%s1 + $0x1e0] sm:$0xf]
    %v142 = vld [vmem:[%s1 + $0x1e4] sm:$0xf]
    %v143 = vld [vmem:[%s1 + $0x1e8] sm:$0xf]
    %v144 = vld [vmem:[%s1 + $0x1ec] sm:$0xf]
    %v145 = vld [vmem:[%s1 + $0x1f0] sm:$0xf]
    %v146 = vld [vmem:[%s1 + $0x1f4] sm:$0xf]
    %v147 = vld [vmem:[%s1 + $0x1f8] sm:$0xf]
    %v148 = vld [vmem:[%s1 + $0x1fc] sm:$0xf]
    %v149 = vld [vmem:[%s1 + $0x200] sm:$0xf]
    %v150 = vld [vmem:[%s1 + $0x204] sm:$0xf]
    %v151 = vld [vmem:[%s1 + $0x208] sm:$0xf]
    %v152 = vld [vmem:[%s1 + $0x20c] sm:$0xf]
    %v153 = vld [vmem:[%s1 + $0x210] sm:$0xf]
    %v154 = vld [vmem:[%s1 + $0x214] sm:$0xf]
    %v155 = vld [vmem:[%s1 + $0x218] sm:$0xf]
    %v156 = vld [vmem:[%s1 + $0x21c] sm:$0xf]
    %v157 = vld [vmem:[%s1 + $0x220] sm:$0xf]
    %v158 = vld [vmem:[%s1 + $0x224] sm:$0xf]
    %v159 = vld [vmem:[%s1 + $0x228] sm:$0xf]
    %v160 = vld [vmem:[%s1 + $0x22c] sm:$0xf]
    %v161 = vld [vmem:[%s1 + $0x230] sm:$0xf]
    %v162 = vld [vmem:[%s1 + $0x234] sm:$0xf]
    %v163 = vld [vmem:[%s1 + $0x238] sm:$0xf]
    %v164 = vld [vmem:[%s1 + $0x23c] sm:$0xf]
    %v165 = vld [vmem:[%s1 + $0x240] sm:$0xf]
    %v166 = vld [vmem:[%s1 + $0x244] sm:$0xf]
    %v167 = vld [vmem:[%s1 + $0x248] sm:$0xf]
    %v168 = vld [vmem:[%s1 + $0x24c] sm:$0xf]
    %v169 = vld [vmem:[%s1 + $0x250] sm:$0xf]
    %v170 = vld [vmem:[%s1 + $0x254] sm:$0xf]
    %v171 = vld [vmem:[%s1 + $0x258] sm:$0xf]
    %v172 = vld [vmem:[%s1 + $0x25c] sm:$0xf]
    %v173 = vld [vmem:[%s1 + $0x260] sm:$0xf]
    %v174 = vld [vmem:[%s1 + $0x264] sm:$0xf]
    %v175 = vld [vmem:[%s1 + $0x268] sm:$0xf]
    %v176 = vld [vmem:[%s1 + $0x26c] sm:$0xf]
    %v177 = vld [vmem:[%s1 + $0x270] sm:$0xf]
    %v178 = vld [vmem:[%s1 + $0x274] sm:$0xf]
    %v179 = vld [vmem:[%s1 + $0x278] sm:$0xf]
    %v180 = vld [vmem:[%s1 + $0x27c] sm:$0xf]
    %v181 = vld [vmem:[%s1 + $0x280] sm:$0xf]
    %v182 = vld [vmem:[%s1 + $0x284] sm:$0xf]
    %v183 = vld [vmem:[%s1 + $0x288] sm:$0xf]
    %v184 = vld [vmem:[%s1 + $0x28c] sm:$0xf]
    %v185 = vld [vmem:[%s1 + $0x290] sm:$0xf]
    %v186 = vld [vmem:[%s1 + $0x294] sm:$0xf]
    %v187 = vld [vmem:[%s1 + $0x298] sm:$0xf]
    %v188 = vld [vmem:[%s1 + $0x29c] sm:$0xf]
    %v189 = vld [vmem:[%s1 + $0x2a0] sm:$0xf]
    %v190 = vld [vmem:[%s1 + $0x2a4] sm:$0xf]
    %v191 = vld [vmem:[%s1 + $0x2a8] sm:$0xf]
    %v192 = vld [vmem:[%s1 + $0x2ac] sm:$0xf]
    %v193 = vld [vmem:[%s1 + $0x2b0] sm:$0xf]
    %v194 = vld [vmem:[%s1 + $0x2b4] sm:$0xf]
    %v195 = vld [vmem:[%s1 + $0x2b8] sm:$0xf]
    %v196 = vld [vmem:[%s1 + $0x2bc] sm:$0xf]
    %v197 = vld [vmem:[%s1 + $0x2c0] sm:$0xf]
    %v198 = vld [vmem:[%s1 + $0x2c4] sm:$0xf]
    %v199 = vld [vmem:[%s1 + $0x2c8] sm:$0xf]
    %v200 = vld [vmem:[%s1 + $0x2cc] sm:$0xf]
    %v201 = vld [vmem:[%s1 + $0x2d0] sm:$0xf]
    %v202 = vld [vmem:[%s1 + $0x2d4] sm:$0xf]
    %v203 = vld [vmem:[%s1 + $0x2d8] sm:$0xf]
    %v204 = vld [vmem:[%s1 + $0x2dc] sm:$0xf]
    %v205 = vld [vmem:[%s1 + $0x2e0] sm:$0xf]
    %v206 = vld [vmem:[%s1 + $0x2e4] sm:$0xf]
    %v207 = vld [vmem:[%s1 + $0x2e8] sm:$0xf]
    %v208 = vld [vmem:[%s1 + $0x2ec] sm:$0xf]
    %v209 = vld [vmem:[%s1 + $0x2f0] sm:$0xf]
    %v210 = vld [vmem:[%s1 + $0x2f4] sm:$0xf]
    %v211 = vld [vmem:[%s1 + $0x2f8] sm:$0xf]
    %v212 = vld [vmem:[%s1 + $0x2fc] sm:$0xf]
    %v213 = vld [vmem:[%s1 + $0x300] sm:$0xf]
    %v214 = vld [vmem:[%s1 + $0x304] sm:$0xf]
    %v215 = vld [vmem:[%s1 + $0x308] sm:$0xf]
    %v216 = vld [vmem:[%s1 + $0x30c] sm:$0xf]
    %v217 = vld [vmem:[%s1 + $0x310] sm:$0xf]
    %v218 = vld [vmem:[%s1 + $0x314] sm:$0xf]
    %v219 = vld [vmem:[%s1 + $0x318] sm:$0xf]
    %v220 = vld [vmem:[%s1 + $0x31c] sm:$0xf]
    %v221 = vld [vmem:[%s1 + $0x320] sm:$0xf]
    %v222 = vld [vmem:[%s1 + $0x324] sm:$0xf]
    %v223 = vld [vmem:[%s1 + $0x328] sm:$0xf]
    %v224 = vld [vmem:[%s1 + $0x32c] sm:$0xf]
    %v225 = vld [vmem:[%s1 + $0x330] sm:$0xf]
    %v226 = vld [vmem:[%s1 + $0x334] sm:$0xf]
    %v227 = vld [vmem:[%s1 + $0x338] sm:$0xf]
    %v228 = vld [vmem:[%s1 + $0x33c] sm:$0xf]
    %v229 = vld [vmem:[%s1 + $0x340] sm:$0xf]
    %v230 = vld [vmem:[%s1 + $0x344] sm:$0xf]
    %v231 = vld [vmem:[%s1 + $0x348] sm:$0xf]
    %v232 = vld [vmem:[%s1 + $0x34c] sm:$0xf]
    %v233 = vld [vmem:[%s1 + $0x350] sm:$0xf]
    %v234 = vld [vmem:[%s1 + $0x354] sm:$0xf]
    %v235 = vld [vmem:[%s1 + $0x358] sm:$0xf]
    %v236 = vld [vmem:[%s1 + $0x35c] sm:$0xf]
    %v237 = vld [vmem:[%s1 + $0x360] sm:$0xf]
    %v238 = vld [vmem:[%s1 + $0x364] sm:$0xf]
    %v239 = vld [vmem:[%s1 + $0x368] sm:$0xf]
    %v240 = vld [vmem:[%s1 + $0x36c] sm:$0xf]
    %v241 = vld [vmem:[%s1 + $0x370] sm:$0xf]
    %v242 = vld [vmem:[%s1 + $0x374] sm:$0xf]
    %v243 = vld [vmem:[%s1 + $0x378] sm:$0xf]
    %v244 = vld [vmem:[%s1 + $0x37c] sm:$0xf]
    %v245 = vld [vmem:[%s1 + $0x380] sm:$0xf]
    %v246 = vld [vmem:[%s1 + $0x384] sm:$0xf]
    %v247 = vld [vmem:[%s1 + $0x388] sm:$0xf]
    %v248 = vld [vmem:[%s1 + $0x38c] sm:$0xf]
    %v249 = vld [vmem:[%s1 + $0x390] sm:$0xf]
    %v250 = vld [vmem:[%s1 + $0x394] sm:$0xf]
    %v251 = vld [vmem:[%s1 + $0x398] sm:$0xf]
    %v252 = vld [vmem:[%s1 + $0x39c] sm:$0xf]
    %v253 = vld [vmem:[%s1 + $0x3a0] sm:$0xf]
    %v254 = vld [vmem:[%s1 + $0x3a4] sm:$0xf]
    %v255 = vld [vmem:[%s1 + $0x3a8] sm:$0xf]
    %v256 = vld [vmem:[%s1 + $0x3ac] sm:$0xf]
    %v257 = vld [vmem:[%s1 + $0x3b0] sm:$0xf]
    %v258 = vld [vmem:[%s1 + $0x3b4] sm:$0xf]
    %v259 = vld [vmem:[%s1 + $0x3b8] sm:$0xf]
    %v260 = vld [vmem:[%s1 + $0x3bc] sm:$0xf]
    %v261 = vld [vmem:[%s1 + $0x3c0] sm:$0xf]
    %v262 = vld [vmem:[%s1 + $0x3c4] sm:$0xf]
    %v263 = vld [vmem:[%s1 + $0x3c8] sm:$0xf]
    %v264 = vld [vmem:[%s1 + $0x3cc] sm:$0xf]
    %v265 = vld [vmem:[%s1 + $0x3d0] sm:$0xf]
    %v266 = vld [vmem:[%s1 + $0x3d4] sm:$0xf]
    %v267 = vld [vmem:[%s1 + $0x3d8] sm:$0xf]
    %v268 = vld [vmem:[%s1 + $0x3dc] sm:$0xf]
    %v269 = vld [vmem:[%s1 + $0x3e0] sm:$0xf]
    %v270 = vld [vmem:[%s1 + $0x3e4] sm:$0xf]
    %v271 = vld [vmem:[%s1 + $0x3e8] sm:$0xf]
    %v272 = vld [vmem:[%s1 + $0x3ec] sm:$0xf]
    %v273 = vld [vmem:[%s1 + $0x3f0] sm:$0xf]
    %v274 = vld [vmem:[%s1 + $0x3f4] sm:$0xf]
    %v275 = vld [vmem:[%s1 + $0x3f8] sm:$0xf]
    %v276 = vld [vmem:[%s1 + $0x3fc] sm:$0xf]
    %v277 = vld [vmem:[%s1 + $0x400] sm:$0xf]
    %v278 = vld [vmem:[%s1 + $0x404] sm:$0xf]
    %v279 = vld [vmem:[%s1 + $0x408] sm:$0xf]
    %v280 = vld [vmem:[%s1 + $0x40c] sm:$0xf]
    %v281 = vld [vmem:[%s1 + $0x410] sm:$0xf]
    %v282 = vld [vmem:[%s1 + $0x414] sm:$0xf]
    %v283 = vld [vmem:[%s1 + $0x418] sm:$0xf]
    %v284 = vld [vmem:[%s1 + $0x41c] sm:$0xf]
    %v285 = vld [vmem:[%s1 + $0x420] sm:$0xf]
    %v286 = vld [vmem:[%s1 + $0x424] sm:$0xf]
    %v287 = vld [vmem:[%s1 + $0x428] sm:$0xf]
    %v288 = vld [vmem:[%s1 + $0x42c] sm:$0xf]
    %v289 = vld [vmem:[%s1 + $0x430] sm:$0xf]
    %v290 = vld [vmem:[%s1 + $0x434] sm:$0xf]
    %v291 = vld [vmem:[%s1 + $0x438] sm:$0xf]
    %v292 = vld [vmem:[%s1 + $0x43c] sm:$0xf]
    %v293 = vld [vmem:[%s1 + $0x440] sm:$0xf]
    %v294 = vld [vmem:[%s1 + $0x444] sm:$0xf]
    %v295 = vld [vmem:[%s1 + $0x448] sm:$0xf]
    %v296 = vld [vmem:[%s1 + $0x44c] sm:$0xf]
    %v297 = vld [vmem:[%s1 + $0x450] sm:$0xf]
    %v298 = vld [vmem:[%s1 + $0x454] sm:$0xf]
    %v299 = vld [vmem:[%s1 + $0x458] sm:$0xf]
    %v300 = vld [vmem:[%s1 + $0x45c] sm:$0xf]
    %v301 = vld [vmem:[%s1 + $0x460] sm:$0xf]
    %v302 = vld [vmem:[%s1 + $0x464] sm:$0xf]
    %v303 = vld [vmem:[%s1 + $0x468] sm:$0xf]
    %v304 = vld [vmem:[%s1 + $0x46c] sm:$0xf]
    %v305 = vld [vmem:[%s1 + $0x470] sm:$0xf]
    %v306 = vld [vmem:[%s1 + $0x474] sm:$0xf]
    %v307 = vld [vmem:[%s1 + $0x478] sm:$0xf]
    %v308 = vld [vmem:[%s1 + $0x47c] sm:$0xf]
    %v309 = vld [vmem:[%s1 + $0x480] sm:$0xf]
    %v310 = vld [vmem:[%s1 + $0x484] sm:$0xf]
    %v311 = vld [vmem:[%s1 + $0x488] sm:$0xf]
    %v312 = vld [vmem:[%s1 + $0x48c] sm:$0xf]
    %v313 = vld [vmem:[%s1 + $0x490] sm:$0xf]
    %v314 = vld [vmem:[%s1 + $0x494] sm:$0xf]
    %v315 = vld [vmem:[%s1 + $0x498] sm:$0xf]
    %v316 = vld [vmem:[%s1 + $0x49c] sm:$0xf]
    %v317 = vld [vmem:[%s1 + $0x4a0] sm:$0xf]
    %v318 = vld [vmem:[%s1 + $0x4a4] sm:$0xf]
    %v319 = vld [vmem:[%s1 + $0x4a8] sm:$0xf]
    %v320 = vld [vmem:[%s1 + $0x4ac] sm:$0xf]
    %v321 = vld [vmem:[%s1 + $0x4b0] sm:$0xf]
    %v322 = vld [vmem:[%s1 + $0x4b4] sm:$0xf]
    %v323 = vld [vmem:[%s1 + $0x4b8] sm:$0xf]
    %v324 = vld [vmem:[%s1 + $0x4bc] sm:$0xf]
    %v325 = vld [vmem:[%s1 + $0x4c0] sm:$0xf]
    %v326 = vld [vmem:[%s1 + $0x4c4] sm:$0xf]
    %v327 = vld [vmem:[%s1 + $0x4c8] sm:$0xf]
    %v328 = vld [vmem:[%s1 + $0x4cc] sm:$0xf]
    %v329 = vld [vmem:[%s1 + $0x4d0] sm:$0xf]
    %v330 = vld [vmem:[%s1 + $0x4d4] sm:$0xf]
    %v331 = vld [vmem:[%s1 + $0x4d8] sm:$0xf]
    %v332 = vld [vmem:[%s1 + $0x4dc] sm:$0xf]
    %v333 = vld [vmem:[%s1 + $0x4e0] sm:$0xf]
    %v334 = vld [vmem:[%s1 + $0x4e4] sm:$0xf]
    %v335 = vld [vmem:[%s1 + $0x4e8] sm:$0xf]
    %v336 = vld [vmem:[%s1 + $0x4ec] sm:$0xf]
    %v337 = vld [vmem:[%s1 + $0x4f0] sm:$0xf]
    %v338 = vld [vmem:[%s1 + $0x4f4] sm:$0xf]
    %v339 = vld [vmem:[%s1 + $0x4f8] sm:$0xf]
    %v340 = vld [vmem:[%s1 + $0x4fc] sm:$0xf]
    %v341 = vld [vmem:[%s1 + $0x500] sm:$0xf]
    %v342 = vld [vmem:[%s1 + $0x504] sm:$0xf]
    %v343 = vld [vmem:[%s1 + $0x508] sm:$0xf]
    %v344 = vld [vmem:[%s1 + $0x50c] sm:$0xf]
    %v345 = vld [vmem:[%s1 + $0x510] sm:$0xf]
    %v346 = vld [vmem:[%s1 + $0x514] sm:$0xf]
    %v347 = vld [vmem:[%s1 + $0x518] sm:$0xf]
    %v348 = vld [vmem:[%s1 + $0x51c] sm:$0xf]
    %v349 = vld [vmem:[%s1 + $0x520] sm:$0xf]
    %v350 = vld [vmem:[%s1 + $0x524] sm:$0xf]
    %v351 = vld [vmem:[%s1 + $0x528] sm:$0xf]
    %v352 = vld [vmem:[%s1 + $0x52c] sm:$0xf]
    %v353 = vld [vmem:[%s1 + $0x530] sm:$0xf]
    %v354 = vld [vmem:[%s1 + $0x534] sm:$0xf]
    %v355 = vld [vmem:[%s1 + $0x538] sm:$0xf]
    %v356 = vld [vmem:[%s1 + $0x53c] sm:$0xf]
    %v357 = vld [vmem:[%s1 + $0x540] sm:$0xf]
    %v358 = vld [vmem:[%s1 + $0x544] sm:$0xf]
    %v359 = vld [vmem:[%s1 + $0x548] sm:$0xf]
    %v360 = vld [vmem:[%s1 + $0x54c] sm:$0xf]
    %v361 = vld [vmem:[%s1 + $0x550] sm:$0xf]
    %v362 = vld [vmem:[%s1 + $0x554] sm:$0xf]
    %v363 = vld [vmem:[%s1 + $0x558] sm:$0xf]
    %v364 = vld [vmem:[%s1 + $0x55c] sm:$0xf]
    %v365 = vld [vmem:[%s1 + $0x560] sm:$0xf]
    %v366 = vld [vmem:[%s1 + $0x564] sm:$0xf]
    %v367 = vld [vmem:[%s1 + $0x568] sm:$0xf]
    %v368 = vld [vmem:[%s1 + $0x56c] sm:$0xf]
    %v369 = vld [vmem:[%s1 + $0x570] sm:$0xf]
    %v370 = vld [vmem:[%s1 + $0x574] sm:$0xf]
    %v371 = vld [vmem:[%s1 + $0x578] sm:$0xf]
    %v372 = vld [vmem:[%s1 + $0x57c] sm:$0xf]
    %v373 = vld [vmem:[%s1 + $0x580] sm:$0xf]
    %v374 = vld [vmem:[%s1 + $0x584] sm:$0xf]
    %v375 = vld [vmem:[%s1 + $0x588] sm:$0xf]
    %v376 = vld [vmem:[%s1 + $0x58c] sm:$0xf]
    %v377 = vld [vmem:[%s1 + $0x590] sm:$0xf]
    %v378 = vld [vmem:[%s1 + $0x594] sm:$0xf]
    %v379 = vld [vmem:[%s1 + $0x598] sm:$0xf]
    %v380 = vld [vmem:[%s1 + $0x59c] sm:$0xf]
    %v381 = vld [vmem:[%s1 + $0x5a0] sm:$0xf]
    %v382 = vld [vmem:[%s1 + $0x5a4] sm:$0xf]
    %v383 = vld [vmem:[%s1 + $0x5a8] sm:$0xf]
    %v384 = vld [vmem:[%s1 + $0x5ac] sm:$0xf]
    %v385 = vld [vmem:[%s1 + $0x5b0] sm:$0xf]
    %v386 = vld [vmem:[%s1 + $0x5b4] sm:$0xf]
    %v387 = vld [vmem:[%s1 + $0x5b8] sm:$0xf]
    %v388 = vld [vmem:[%s1 + $0x5bc] sm:$0xf]
    %v389 = vld [vmem:[%s1 + $0x5c0] sm:$0xf]
    %v390 = vld [vmem:[%s1 + $0x5c4] sm:$0xf]
    %v391 = vld [vmem:[%s1 + $0x5c8] sm:$0xf]
    %v392 = vld [vmem:[%s1 + $0x5cc] sm:$0xf]
    %v393 = vld [vmem:[%s1 + $0x5d0] sm:$0xf]
    %v394 = vld [vmem:[%s1 + $0x5d4] sm:$0xf]
    %v395 = vld [vmem:[%s1 + $0x5d8] sm:$0xf]
    %v396 = vld [vmem:[%s1 + $0x5dc] sm:$0xf]
    %v397 = vld [vmem:[%s1 + $0x5e0] sm:$0xf]
    %v398 = vld [vmem:[%s1 + $0x5e4] sm:$0xf]
    %v399 = vld [vmem:[%s1 + $0x5e8] sm:$0xf]
    %v400 = vld [vmem:[%s1 + $0x5ec] sm:$0xf]
    %v401 = vld [vmem:[%s1 + $0x5f0] sm:$0xf]
    %v402 = vld [vmem:[%s1 + $0x5f4] sm:$0xf]
    %v403 = vld [vmem:[%s1 + $0x5f8] sm:$0xf]
    %v404 = vld [vmem:[%s1 + $0x5fc] sm:$0xf]
    %v405 = vld [vmem:[%s1 + $0x600] sm:$0xf]
    %v406 = vld [vmem:[%s1 + $0x604] sm:$0xf]
    %v407 = vld [vmem:[%s1 + $0x608] sm:$0xf]
    %v408 = vld [vmem:[%s1 + $0x60c] sm:$0xf]
    %v409 = vld [vmem:[%s1 + $0x610] sm:$0xf]
    %v410 = vld [vmem:[%s1 + $0x614] sm:$0xf]
    %v411 = vld [vmem:[%s1 + $0x618] sm:$0xf]
    %v412 = vld [vmem:[%s1 + $0x61c] sm:$0xf]
    %v413 = vld [vmem:[%s1 + $0x620] sm:$0xf]
    %v414 = vld [vmem:[%s1 + $0x624] sm:$0xf]
    %v415 = vld [vmem:[%s1 + $0x628] sm:$0xf]
    %v416 = vld [vmem:[%s1 + $0x62c] sm:$0xf]
    %v417 = vld [vmem:[%s1 + $0x630] sm:$0xf]
    %v418 = vld [vmem:[%s1 + $0x634] sm:$0xf]
    %v419 = vld [vmem:[%s1 + $0x638] sm:$0xf]
    %v420 = vld [vmem:[%s1 + $0x63c] sm:$0xf]
    %v421 = vld [vmem:[%s1 + $0x640] sm:$0xf]
    %v422 = vld [vmem:[%s1 + $0x644] sm:$0xf]
    %v423 = vld [vmem:[%s1 + $0x648] sm:$0xf]
    %v424 = vld [vmem:[%s1 + $0x64c] sm:$0xf]
    %v425 = vld [vmem:[%s1 + $0x650] sm:$0xf]
    %v426 = vld [vmem:[%s1 + $0x654] sm:$0xf]
    %v427 = vld [vmem:[%s1 + $0x658] sm:$0xf]
    %v428 = vld [vmem:[%s1 + $0x65c] sm:$0xf]
    %v429 = vld [vmem:[%s1 + $0x660] sm:$0xf]
    %v430 = vld [vmem:[%s1 + $0x664] sm:$0xf]
    %v431 = vld [vmem:[%s1 + $0x668] sm:$0xf]
    %v432 = vld [vmem:[%s1 + $0x66c] sm:$0xf]
    %v433 = vld [vmem:[%s1 + $0x670] sm:$0xf]
    %v434 = vld [vmem:[%s1 + $0x674] sm:$0xf]
    %v435 = vld [vmem:[%s1 + $0x678] sm:$0xf]
    %v436 = vld [vmem:[%s1 + $0x67c] sm:$0xf]
    %v437 = vld [vmem:[%s1 + $0x680] sm:$0xf]
    %v438 = vld [vmem:[%s1 + $0x684] sm:$0xf]
    %v439 = vld [vmem:[%s1 + $0x688] sm:$0xf]
    %v440 = vld [vmem:[%s1 + $0x68c] sm:$0xf]
    %v441 = vld [vmem:[%s1 + $0x690] sm:$0xf]
    %v442 = vld [vmem:[%s1 + $0x694] sm:$0xf]
    %v443 = vld [vmem:[%s1 + $0x698] sm:$0xf]
    %v444 = vld [vmem:[%s1 + $0x69c] sm:$0xf]
    %v445 = vld [vmem:[%s1 + $0x6a0] sm:$0xf]
    %v446 = vld [vmem:[%s1 + $0x6a4] sm:$0xf]
    %v447 = vld [vmem:[%s1 + $0x6a8] sm:$0xf]
    %v448 = vld [vmem:[%s1 + $0x6ac] sm:$0xf]
    %v449 = vld [vmem:[%s1 + $0x6b0] sm:$0xf]
    %v450 = vld [vmem:[%s1 + $0x6b4] sm:$0xf]
    %v451 = vld [vmem:[%s1 + $0x6b8] sm:$0xf]
    %v452 = vld [vmem:[%s1 + $0x6bc] sm:$0xf]
    %v453 = vld [vmem:[%s1 + $0x6c0] sm:$0xf]
    %v454 = vld [vmem:[%s1 + $0x6c4] sm:$0xf]
    %v455 = vld [vmem:[%s1 + $0x6c8] sm:$0xf]
    %v456 = vld [vmem:[%s1 + $0x6cc] sm:$0xf]
    %v457 = vld [vmem:[%s1 + $0x6d0] sm:$0xf]
    %v458 = vld [vmem:[%s1 + $0x6d4] sm:$0xf]
    %v459 = vld [vmem:[%s1 + $0x6d8] sm:$0xf]
    %v460 = vld [vmem:[%s1 + $0x6dc] sm:$0xf]
    %v461 = vld [vmem:[%s1 + $0x6e0] sm:$0xf]
    %v462 = vld [vmem:[%s1 + $0x6e4] sm:$0xf]
    %v463 = vld [vmem:[%s1 + $0x6e8] sm:$0xf]
    %v464 = vld [vmem:[%s1 + $0x6ec] sm:$0xf]
    %v465 = vld [vmem:[%s1 + $0x6f0] sm:$0xf]
    %v466 = vld [vmem:[%s1 + $0x6f4] sm:$0xf]
    %v467 = vld [vmem:[%s1 + $0x6f8] sm:$0xf]
    %v468 = vld [vmem:[%s1 + $0x6fc] sm:$0xf]
    %v469 = vld [vmem:[%s1 + $0x700] sm:$0xf]
    %v470 = vld [vmem:[%s1 + $0x704] sm:$0xf]
    %v471 = vld [vmem:[%s1 + $0x708] sm:$0xf]
    %v472 = vld [vmem:[%s1 + $0x70c] sm:$0xf]
    %v473 = vld [vmem:[%s1 + $0x710] sm:$0xf]
    %v474 = vld [vmem:[%s1 + $0x714] sm:$0xf]
    %v475 = vld [vmem:[%s1 + $0x718] sm:$0xf]
    %v476 = vld [vmem:[%s1 + $0x71c] sm:$0xf]
    %v477 = vld [vmem:[%s1 + $0x720] sm:$0xf]
    %v478 = vld [vmem:[%s1 + $0x724] sm:$0xf]
    %v479 = vld [vmem:[%s1 + $0x728] sm:$0xf]
    %v480 = vld [vmem:[%s1 + $0x72c] sm:$0xf]
    %v481 = vld [vmem:[%s1 + $0x730] sm:$0xf]
    %v482 = vld [vmem:[%s1 + $0x734] sm:$0xf]
    %v483 = vld [vmem:[%s1 + $0x738] sm:$0xf]
    %v484 = vld [vmem:[%s1 + $0x73c] sm:$0xf]
    %v485 = vld [vmem:[%s1 + $0x740] sm:$0xf]
    %v486 = vld [vmem:[%s1 + $0x744] sm:$0xf]
    %v487 = vld [vmem:[%s1 + $0x748] sm:$0xf]
    %v488 = vld [vmem:[%s1 + $0x74c] sm:$0xf]
    %v489 = vld [vmem:[%s1 + $0x750] sm:$0xf]
    %v490 = vld [vmem:[%s1 + $0x754] sm:$0xf]
    %v491 = vld [vmem:[%s1 + $0x758] sm:$0xf]
    %v492 = vld [vmem:[%s1 + $0x75c] sm:$0xf]
    %v493 = vld [vmem:[%s1 + $0x760] sm:$0xf]
    %v494 = vld [vmem:[%s1 + $0x764] sm:$0xf]
    %v495 = vld [vmem:[%s1 + $0x768] sm:$0xf]
    %v496 = vld [vmem:[%s1 + $0x76c] sm:$0xf]
    %v497 = vld [vmem:[%s1 + $0x770] sm:$0xf]
    %v498 = vld [vmem:[%s1 + $0x774] sm:$0xf]
    %v499 = vld [vmem:[%s1 + $0x778] sm:$0xf]
    %v500 = vld [vmem:[%s1 + $0x77c] sm:$0xf]
    %v501 = vld [vmem:[%s1 + $0x780] sm:$0xf]
    %v502 = vld [vmem:[%s1 + $0x784] sm:$0xf]
    %v503 = vld [vmem:[%s1 + $0x788] sm:$0xf]
    %v504 = vld [vmem:[%s1 + $0x78c] sm:$0xf]
    %v505 = vld [vmem:[%s1 + $0x790] sm:$0xf]
    %v506 = vld [vmem:[%s1 + $0x794] sm:$0xf]
    %v507 = vld [vmem:[%s1 + $0x798] sm:$0xf]
    %v508 = vld [vmem:[%s1 + $0x79c] sm:$0xf]
    %v509 = vld [vmem:[%s1 + $0x7a0] sm:$0xf]
    %v510 = vld [vmem:[%s1 + $0x7a4] sm:$0xf]
    %v511 = vld [vmem:[%s1 + $0x7a8] sm:$0xf]
    %v512 = vld [vmem:[%s1 + $0x7ac] sm:$0xf]
    %v513 = vld [vmem:[%s1 + $0x7b0] sm:$0xf]
    %v514 = vld [vmem:[%s1 + $0x7b4] sm:$0xf]
    %v515 = vld [vmem:[%s1 + $0x7b8] sm:$0xf]
    %v516 = vld [vmem:[%s1 + $0x7bc] sm:$0xf]
    %v517 = vld [vmem:[%s1 + $0x7c0] sm:$0xf]
    %v518 = vld [vmem:[%s1 + $0x7c4] sm:$0xf]
    %v519 = vld [vmem:[%s1 + $0x7c8] sm:$0xf]
    %v520 = vld [vmem:[%s1 + $0x7cc] sm:$0xf]
    %v521 = vld [vmem:[%s1 + $0x7d0] sm:$0xf]
    %v522 = vld [vmem:[%s1 + $0x7d4] sm:$0xf]
    %v523 = vld [vmem:[%s1 + $0x7d8] sm:$0xf]
    %v524 = vld [vmem:[%s1 + $0x7dc] sm:$0xf]
    %v525 = vld [vmem:[%s1 + $0x7e0] sm:$0xf]
    %v526 = vld [vmem:[%s1 + $0x7e4] sm:$0xf]
    %v527 = vld [vmem:[%s1 + $0x7e8] sm:$0xf]
    %v528 = vld [vmem:[%s1 + $0x7ec] sm:$0xf]
    %v529 = vld [vmem:[%s1 + $0x7f0] sm:$0xf]
    %v530 = vld [vmem:[%s1 + $0x7f4] sm:$0xf]
    %v531 = vld [vmem:[%s1 + $0x7f8] sm:$0xf]
    %v532 = vld [vmem:[%s1 + $0x7fc] sm:$0xf]
    %v533 = vld [vmem:[%s2] sm:$0x1]
    %v535 = vperm.slane %v533, 0
    %538 = vst [vmem:[#allocation1] ss:$9 sm:$0xff] %v17
    %v539 = vld [vmem:[#allocation1] sm:$0xff]
    %v540 = vld [vmem:[#allocation1 + $0x9] sm:$0xff]
    %v541 = vld [vmem:[#allocation1 + $0x12] sm:$0xff]
    %v542 = vld [vmem:[#allocation1 + $0x1b] sm:$0xff]
    %v543 = vld [vmem:[#allocation1 + $0x24] sm:$0xff]
    %v544 = vld [vmem:[#allocation1 + $0x2d] sm:$0xff]
    %v545 = vld [vmem:[#allocation1 + $0x36] sm:$0xff]
    %v546 = vld [vmem:[#allocation1 + $0x3f] sm:$0xff]
    %548 = vst [vmem:[#allocation1] ss:$9 sm:$0xff] %v18
    %v549 = vld [vmem:[#allocation1] sm:$0xff]
    %v550 = vld [vmem:[#allocation1 + $0x9] sm:$0xff]
    %v551 = vld [vmem:[#allocation1 + $0x12] sm:$0xff]
    %v552 = vld [vmem:[#allocation1 + $0x1b] sm:$0xff]
    %v553 = vld [vmem:[#allocation1 + $0x24] sm:$0xff]
    %v554 = vld [vmem:[#allocation1 + $0x2d] sm:$0xff]
    %v555 = vld [vmem:[#allocation1 + $0x36] sm:$0xff]
    %v556 = vld [vmem:[#allocation1 + $0x3f] sm:$0xff]
    %558 = vst [vmem:[#allocation1] ss:$9 sm:$0xff] %v19
    %v559 = vld [vmem:[#allocation1] sm:$0xff]
    %v560 = vld [vmem:[#allocation1 + $0x9] sm:$0xff]
    %v561 = vld [vmem:[#allocation1 + $0x12] sm:$0xff]
    %v562 = vld [vmem:[#allocation1 + $0x1b] sm:$0xff]
    %v563 = vld [vmem:[#allocation1 + $0x24] sm:$0xff]
    %v564 = vld [vmem:[#allocation1 + $0x2d] sm:$0xff]
    %v565 = vld [vmem:[#allocation1 + $0x36] sm:$0xff]
    %v566 = vld [vmem:[#allocation1 + $0x3f] sm:$0xff]
    %568 = vst [vmem:[#allocation1] ss:$9 sm:$0xff] %v20
    %v569 = vld [vmem:[#allocation1] sm:$0xff]
    %v570 = vld [vmem:[#allocation1 + $0x9] sm:$0xff]
    %v571 = vld [vmem:[#allocation1 + $0x12] sm:$0xff]
    %v572 = vld [vmem:[#allocation1 + $0x1b] sm:$0xff]
    %v573 = vld [vmem:[#allocation1 + $0x24] sm:$0xff]
    %v574 = vld [vmem:[#allocation1 + $0x2d] sm:$0xff]
    %v575 = vld [vmem:[#allocation1 + $0x36] sm:$0xff]
    %v576 = vld [vmem:[#allocation1 + $0x3f] sm:$0xff]
    %v1121 = vunpack.c.l.b16 %v21
    %v1122 = vunpack.c.l.b16 %v22
    %v1123 = vunpack.c.l.b16 %v23
    %v1124 = vunpack.c.l.b16 %v24
    %v1125 = vunpack.c.l.b16 %v25
    %v1126 = vunpack.c.l.b16 %v26
    %v1127 = vunpack.c.l.b16 %v27
    %v1128 = vunpack.c.l.b16 %v28
    %v1129 = vunpack.c.l.b16 %v29
    %v1130 = vunpack.c.l.b16 %v30
    %v1131 = vunpack.c.l.b16 %v31
    %v1132 = vunpack.c.l.b16 %v32
    %v1133 = vunpack.c.l.b16 %v33
    %v1134 = vunpack.c.l.b16 %v34
    %v1135 = vunpack.c.l.b16 %v35
    %v1136 = vunpack.c.l.b16 %v36
    %v1137 = vunpack.c.l.b16 %v37
    %v1138 = vunpack.c.l.b16 %v38
    %v1139 = vunpack.c.l.b16 %v39
    %v1140 = vunpack.c.l.b16 %v40
    %v1141 = vunpack.c.l.b16 %v41
    %v1142 = vunpack.c.l.b16 %v42
    %v1143 = vunpack.c.l.b16 %v43
    %v1144 = vunpack.c.l.b16 %v44
    %v1145 = vunpack.c.l.b16 %v45
    %v1146 = vunpack.c.l.b16 %v46
    %v1147 = vunpack.c.l.b16 %v47
    %v1148 = vunpack.c.l.b16 %v48
    %v1149 = vunpack.c.l.b16 %v49
    %v1150 = vunpack.c.l.b16 %v50
    %v1151 = vunpack.c.l.b16 %v51
    %v1152 = vunpack.c.l.b16 %v52
    %v1153 = vunpack.c.l.b16 %v53
    %v1154 = vunpack.c.l.b16 %v54
    %v1155 = vunpack.c.l.b16 %v55
    %v1156 = vunpack.c.l.b16 %v56
    %v1157 = vunpack.c.l.b16 %v57
    %v1158 = vunpack.c.l.b16 %v58
    %v1159 = vunpack.c.l.b16 %v59
    %v1160 = vunpack.c.l.b16 %v60
    %v1161 = vunpack.c.l.b16 %v61
    %v1162 = vunpack.c.l.b16 %v62
    %v1163 = vunpack.c.l.b16 %v63
    %v1164 = vunpack.c.l.b16 %v64
    %v1165 = vunpack.c.l.b16 %v65
    %v1166 = vunpack.c.l.b16 %v66
    %v1167 = vunpack.c.l.b16 %v67
    %v1168 = vunpack.c.l.b16 %v68
    %v1169 = vunpack.c.l.b16 %v69
    %v1170 = vunpack.c.l.b16 %v70
    %v1171 = vunpack.c.l.b16 %v71
    %v1172 = vunpack.c.l.b16 %v72
    %v1173 = vunpack.c.l.b16 %v73
    %v1174 = vunpack.c.l.b16 %v74
    %v1175 = vunpack.c.l.b16 %v75
    %v1176 = vunpack.c.l.b16 %v76
    %v1177 = vunpack.c.l.b16 %v77
    %v1178 = vunpack.c.l.b16 %v78
    %v1179 = vunpack.c.l.b16 %v79
    %v1180 = vunpack.c.l.b16 %v80
    %v1181 = vunpack.c.l.b16 %v81
    %v1182 = vunpack.c.l.b16 %v82
    %v1183 = vunpack.c.l.b16 %v83
    %v1184 = vunpack.c.l.b16 %v84
    %v1185 = vunpack.c.l.b16 %v85
    %v1186 = vunpack.c.l.b16 %v86
    %v1187 = vunpack.c.l.b16 %v87
    %v1188 = vunpack.c.l.b16 %v88
    %v1189 = vunpack.c.l.b16 %v89
    %v1190 = vunpack.c.l.b16 %v90
    %v1191 = vunpack.c.l.b16 %v91
    %v1192 = vunpack.c.l.b16 %v92
    %v1193 = vunpack.c.l.b16 %v93
    %v1194 = vunpack.c.l.b16 %v94
    %v1195 = vunpack.c.l.b16 %v95
    %v1196 = vunpack.c.l.b16 %v96
    %v1197 = vunpack.c.l.b16 %v97
    %v1198 = vunpack.c.l.b16 %v98
    %v1199 = vunpack.c.l.b16 %v99
    %v1200 = vunpack.c.l.b16 %v100
    %v1201 = vunpack.c.l.b16 %v101
    %v1202 = vunpack.c.l.b16 %v102
    %v1203 = vunpack.c.l.b16 %v103
    %v1204 = vunpack.c.l.b16 %v104
    %v1205 = vunpack.c.l.b16 %v105
    %v1206 = vunpack.c.l.b16 %v106
    %v1207 = vunpack.c.l.b16 %v107
    %v1208 = vunpack.c.l.b16 %v108
    %v1209 = vunpack.c.l.b16 %v109
    %v1210 = vunpack.c.l.b16 %v110
    %v1211 = vunpack.c.l.b16 %v111
    %v1212 = vunpack.c.l.b16 %v112
    %v1213 = vunpack.c.l.b16 %v113
    %v1214 = vunpack.c.l.b16 %v114
    %v1215 = vunpack.c.l.b16 %v115
    %v1216 = vunpack.c.l.b16 %v116
    %v1217 = vunpack.c.l.b16 %v117
    %v1218 = vunpack.c.l.b16 %v118
    %v1219 = vunpack.c.l.b16 %v119
    %v1220 = vunpack.c.l.b16 %v120
    %v1221 = vunpack.c.l.b16 %v121
    %v1222 = vunpack.c.l.b16 %v122
    %v1223 = vunpack.c.l.b16 %v123
    %v1224 = vunpack.c.l.b16 %v124
    %v1225 = vunpack.c.l.b16 %v125
    %v1226 = vunpack.c.l.b16 %v126
    %v1227 = vunpack.c.l.b16 %v127
    %v1228 = vunpack.c.l.b16 %v128
    %v1229 = vunpack.c.l.b16 %v129
    %v1230 = vunpack.c.l.b16 %v130
    %v1231 = vunpack.c.l.b16 %v131
    %v1232 = vunpack.c.l.b16 %v132
    %v1233 = vunpack.c.l.b16 %v133
    %v1234 = vunpack.c.l.b16 %v134
    %v1235 = vunpack.c.l.b16 %v135
    %v1236 = vunpack.c.l.b16 %v136
    %v1237 = vunpack.c.l.b16 %v137
    %v1238 = vunpack.c.l.b16 %v138
    %v1239 = vunpack.c.l.b16 %v139
    %v1240 = vunpack.c.l.b16 %v140
    %v1241 = vunpack.c.l.b16 %v141
    %v1242 = vunpack.c.l.b16 %v142
    %v1243 = vunpack.c.l.b16 %v143
    %v1244 = vunpack.c.l.b16 %v144
    %v1245 = vunpack.c.l.b16 %v145
    %v1246 = vunpack.c.l.b16 %v146
    %v1247 = vunpack.c.l.b16 %v147
    %v1248 = vunpack.c.l.b16 %v148
    %v1249 = vunpack.c.l.b16 %v149
    %v1250 = vunpack.c.l.b16 %v150
    %v1251 = vunpack.c.l.b16 %v151
    %v1252 = vunpack.c.l.b16 %v152
    %v1253 = vunpack.c.l.b16 %v153
    %v1254 = vunpack.c.l.b16 %v154
    %v1255 = vunpack.c.l.b16 %v155
    %v1256 = vunpack.c.l.b16 %v156
    %v1257 = vunpack.c.l.b16 %v157
    %v1258 = vunpack.c.l.b16 %v158
    %v1259 = vunpack.c.l.b16 %v159
    %v1260 = vunpack.c.l.b16 %v160
    %v1261 = vunpack.c.l.b16 %v161
    %v1262 = vunpack.c.l.b16 %v162
    %v1263 = vunpack.c.l.b16 %v163
    %v1264 = vunpack.c.l.b16 %v164
    %v1265 = vunpack.c.l.b16 %v165
    %v1266 = vunpack.c.l.b16 %v166
    %v1267 = vunpack.c.l.b16 %v167
    %v1268 = vunpack.c.l.b16 %v168
    %v1269 = vunpack.c.l.b16 %v169
    %v1270 = vunpack.c.l.b16 %v170
    %v1271 = vunpack.c.l.b16 %v171
    %v1272 = vunpack.c.l.b16 %v172
    %v1273 = vunpack.c.l.b16 %v173
    %v1274 = vunpack.c.l.b16 %v174
    %v1275 = vunpack.c.l.b16 %v175
    %v1276 = vunpack.c.l.b16 %v176
    %v1277 = vunpack.c.l.b16 %v177
    %v1278 = vunpack.c.l.b16 %v178
    %v1279 = vunpack.c.l.b16 %v179
    %v1280 = vunpack.c.l.b16 %v180
    %v1281 = vunpack.c.l.b16 %v181
    %v1282 = vunpack.c.l.b16 %v182
    %v1283 = vunpack.c.l.b16 %v183
    %v1284 = vunpack.c.l.b16 %v184
    %v1285 = vunpack.c.l.b16 %v185
    %v1286 = vunpack.c.l.b16 %v186
    %v1287 = vunpack.c.l.b16 %v187
    %v1288 = vunpack.c.l.b16 %v188
    %v1289 = vunpack.c.l.b16 %v189
    %v1290 = vunpack.c.l.b16 %v190
    %v1291 = vunpack.c.l.b16 %v191
    %v1292 = vunpack.c.l.b16 %v192
    %v1293 = vunpack.c.l.b16 %v193
    %v1294 = vunpack.c.l.b16 %v194
    %v1295 = vunpack.c.l.b16 %v195
    %v1296 = vunpack.c.l.b16 %v196
    %v1297 = vunpack.c.l.b16 %v197
    %v1298 = vunpack.c.l.b16 %v198
    %v1299 = vunpack.c.l.b16 %v199
    %v1300 = vunpack.c.l.b16 %v200
    %v1301 = vunpack.c.l.b16 %v201
    %v1302 = vunpack.c.l.b16 %v202
    %v1303 = vunpack.c.l.b16 %v203
    %v1304 = vunpack.c.l.b16 %v204
    %v1305 = vunpack.c.l.b16 %v205
    %v1306 = vunpack.c.l.b16 %v206
    %v1307 = vunpack.c.l.b16 %v207
    %v1308 = vunpack.c.l.b16 %v208
    %v1309 = vunpack.c.l.b16 %v209
    %v1310 = vunpack.c.l.b16 %v210
    %v1311 = vunpack.c.l.b16 %v211
    %v1312 = vunpack.c.l.b16 %v212
    %v1313 = vunpack.c.l.b16 %v213
    %v1314 = vunpack.c.l.b16 %v214
    %v1315 = vunpack.c.l.b16 %v215
    %v1316 = vunpack.c.l.b16 %v216
    %v1317 = vunpack.c.l.b16 %v217
    %v1318 = vunpack.c.l.b16 %v218
    %v1319 = vunpack.c.l.b16 %v219
    %v1320 = vunpack.c.l.b16 %v220
    %v1321 = vunpack.c.l.b16 %v221
    %v1322 = vunpack.c.l.b16 %v222
    %v1323 = vunpack.c.l.b16 %v223
    %v1324 = vunpack.c.l.b16 %v224
    %v1325 = vunpack.c.l.b16 %v225
    %v1326 = vunpack.c.l.b16 %v226
    %v1327 = vunpack.c.l.b16 %v227
    %v1328 = vunpack.c.l.b16 %v228
    %v1329 = vunpack.c.l.b16 %v229
    %v1330 = vunpack.c.l.b16 %v230
    %v1331 = vunpack.c.l.b16 %v231
    %v1332 = vunpack.c.l.b16 %v232
    %v1333 = vunpack.c.l.b16 %v233
    %v1334 = vunpack.c.l.b16 %v234
    %v1335 = vunpack.c.l.b16 %v235
    %v1336 = vunpack.c.l.b16 %v236
    %v1337 = vunpack.c.l.b16 %v237
    %v1338 = vunpack.c.l.b16 %v238
    %v1339 = vunpack.c.l.b16 %v239
    %v1340 = vunpack.c.l.b16 %v240
    %v1341 = vunpack.c.l.b16 %v241
    %v1342 = vunpack.c.l.b16 %v242
    %v1343 = vunpack.c.l.b16 %v243
    %v1344 = vunpack.c.l.b16 %v244
    %v1345 = vunpack.c.l.b16 %v245
    %v1346 = vunpack.c.l.b16 %v246
    %v1347 = vunpack.c.l.b16 %v247
    %v1348 = vunpack.c.l.b16 %v248
    %v1349 = vunpack.c.l.b16 %v249
    %v1350 = vunpack.c.l.b16 %v250
    %v1351 = vunpack.c.l.b16 %v251
    %v1352 = vunpack.c.l.b16 %v252
    %v1353 = vunpack.c.l.b16 %v253
    %v1354 = vunpack.c.l.b16 %v254
    %v1355 = vunpack.c.l.b16 %v255
    %v1356 = vunpack.c.l.b16 %v256
    %v1357 = vunpack.c.l.b16 %v257
    %v1358 = vunpack.c.l.b16 %v258
    %v1359 = vunpack.c.l.b16 %v259
    %v1360 = vunpack.c.l.b16 %v260
    %v1361 = vunpack.c.l.b16 %v261
    %v1362 = vunpack.c.l.b16 %v262
    %v1363 = vunpack.c.l.b16 %v263
    %v1364 = vunpack.c.l.b16 %v264
    %v1365 = vunpack.c.l.b16 %v265
    %v1366 = vunpack.c.l.b16 %v266
    %v1367 = vunpack.c.l.b16 %v267
    %v1368 = vunpack.c.l.b16 %v268
    %v1369 = vunpack.c.l.b16 %v269
    %v1370 = vunpack.c.l.b16 %v270
    %v1371 = vunpack.c.l.b16 %v271
    %v1372 = vunpack.c.l.b16 %v272
    %v1373 = vunpack.c.l.b16 %v273
    %v1374 = vunpack.c.l.b16 %v274
    %v1375 = vunpack.c.l.b16 %v275
    %v1376 = vunpack.c.l.b16 %v276
    %v1377 = vunpack.c.l.b16 %v277
    %v1378 = vunpack.c.l.b16 %v278
    %v1379 = vunpack.c.l.b16 %v279
    %v1380 = vunpack.c.l.b16 %v280
    %v1381 = vunpack.c.l.b16 %v281
    %v1382 = vunpack.c.l.b16 %v282
    %v1383 = vunpack.c.l.b16 %v283
    %v1384 = vunpack.c.l.b16 %v284
    %v1385 = vunpack.c.l.b16 %v285
    %v1386 = vunpack.c.l.b16 %v286
    %v1387 = vunpack.c.l.b16 %v287
    %v1388 = vunpack.c.l.b16 %v288
    %v1389 = vunpack.c.l.b16 %v289
    %v1390 = vunpack.c.l.b16 %v290
    %v1391 = vunpack.c.l.b16 %v291
    %v1392 = vunpack.c.l.b16 %v292
    %v1393 = vunpack.c.l.b16 %v293
    %v1394 = vunpack.c.l.b16 %v294
    %v1395 = vunpack.c.l.b16 %v295
    %v1396 = vunpack.c.l.b16 %v296
    %v1397 = vunpack.c.l.b16 %v297
    %v1398 = vunpack.c.l.b16 %v298
    %v1399 = vunpack.c.l.b16 %v299
    %v1400 = vunpack.c.l.b16 %v300
    %v1401 = vunpack.c.l.b16 %v301
    %v1402 = vunpack.c.l.b16 %v302
    %v1403 = vunpack.c.l.b16 %v303
    %v1404 = vunpack.c.l.b16 %v304
    %v1405 = vunpack.c.l.b16 %v305
    %v1406 = vunpack.c.l.b16 %v306
    %v1407 = vunpack.c.l.b16 %v307
    %v1408 = vunpack.c.l.b16 %v308
    %v1409 = vunpack.c.l.b16 %v309
    %v1410 = vunpack.c.l.b16 %v310
    %v1411 = vunpack.c.l.b16 %v311
    %v1412 = vunpack.c.l.b16 %v312
    %v1413 = vunpack.c.l.b16 %v313
    %v1414 = vunpack.c.l.b16 %v314
    %v1415 = vunpack.c.l.b16 %v315
    %v1416 = vunpack.c.l.b16 %v316
    %v1417 = vunpack.c.l.b16 %v317
    %v1418 = vunpack.c.l.b16 %v318
    %v1419 = vunpack.c.l.b16 %v319
    %v1420 = vunpack.c.l.b16 %v320
    %v1421 = vunpack.c.l.b16 %v321
    %v1422 = vunpack.c.l.b16 %v322
    %v1423 = vunpack.c.l.b16 %v323
    %v1424 = vunpack.c.l.b16 %v324
    %v1425 = vunpack.c.l.b16 %v325
    %v1426 = vunpack.c.l.b16 %v326
    %v1427 = vunpack.c.l.b16 %v327
    %v1428 = vunpack.c.l.b16 %v328
    %v1429 = vunpack.c.l.b16 %v329
    %v1430 = vunpack.c.l.b16 %v330
    %v1431 = vunpack.c.l.b16 %v331
    %v1432 = vunpack.c.l.b16 %v332
    %v1433 = vunpack.c.l.b16 %v333
    %v1434 = vunpack.c.l.b16 %v334
    %v1435 = vunpack.c.l.b16 %v335
    %v1436 = vunpack.c.l.b16 %v336
    %v1437 = vunpack.c.l.b16 %v337
    %v1438 = vunpack.c.l.b16 %v338
    %v1439 = vunpack.c.l.b16 %v339
    %v1440 = vunpack.c.l.b16 %v340
    %v1441 = vunpack.c.l.b16 %v341
    %v1442 = vunpack.c.l.b16 %v342
    %v1443 = vunpack.c.l.b16 %v343
    %v1444 = vunpack.c.l.b16 %v344
    %v1445 = vunpack.c.l.b16 %v345
    %v1446 = vunpack.c.l.b16 %v346
    %v1447 = vunpack.c.l.b16 %v347
    %v1448 = vunpack.c.l.b16 %v348
    %v1449 = vunpack.c.l.b16 %v349
    %v1450 = vunpack.c.l.b16 %v350
    %v1451 = vunpack.c.l.b16 %v351
    %v1452 = vunpack.c.l.b16 %v352
    %v1453 = vunpack.c.l.b16 %v353
    %v1454 = vunpack.c.l.b16 %v354
    %v1455 = vunpack.c.l.b16 %v355
    %v1456 = vunpack.c.l.b16 %v356
    %v1457 = vunpack.c.l.b16 %v357
    %v1458 = vunpack.c.l.b16 %v358
    %v1459 = vunpack.c.l.b16 %v359
    %v1460 = vunpack.c.l.b16 %v360
    %v1461 = vunpack.c.l.b16 %v361
    %v1462 = vunpack.c.l.b16 %v362
    %v1463 = vunpack.c.l.b16 %v363
    %v1464 = vunpack.c.l.b16 %v364
    %v1465 = vunpack.c.l.b16 %v365
    %v1466 = vunpack.c.l.b16 %v366
    %v1467 = vunpack.c.l.b16 %v367
    %v1468 = vunpack.c.l.b16 %v368
    %v1469 = vunpack.c.l.b16 %v369
    %v1470 = vunpack.c.l.b16 %v370
    %v1471 = vunpack.c.l.b16 %v371
    %v1472 = vunpack.c.l.b16 %v372
    %v1473 = vunpack.c.l.b16 %v373
    %v1474 = vunpack.c.l.b16 %v374
    %v1475 = vunpack.c.l.b16 %v375
    %v1476 = vunpack.c.l.b16 %v376
    %v1477 = vunpack.c.l.b16 %v377
    %v1478 = vunpack.c.l.b16 %v378
    %v1479 = vunpack.c.l.b16 %v379
    %v1480 = vunpack.c.l.b16 %v380
    %v1481 = vunpack.c.l.b16 %v381
    %v1482 = vunpack.c.l.b16 %v382
    %v1483 = vunpack.c.l.b16 %v383
    %v1484 = vunpack.c.l.b16 %v384
    %v1485 = vunpack.c.l.b16 %v385
    %v1486 = vunpack.c.l.b16 %v386
    %v1487 = vunpack.c.l.b16 %v387
    %v1488 = vunpack.c.l.b16 %v388
    %v1489 = vunpack.c.l.b16 %v389
    %v1490 = vunpack.c.l.b16 %v390
    %v1491 = vunpack.c.l.b16 %v391
    %v1492 = vunpack.c.l.b16 %v392
    %v1493 = vunpack.c.l.b16 %v393
    %v1494 = vunpack.c.l.b16 %v394
    %v1495 = vunpack.c.l.b16 %v395
    %v1496 = vunpack.c.l.b16 %v396
    %v1497 = vunpack.c.l.b16 %v397
    %v1498 = vunpack.c.l.b16 %v398
    %v1499 = vunpack.c.l.b16 %v399
    %v1500 = vunpack.c.l.b16 %v400
    %v1501 = vunpack.c.l.b16 %v401
    %v1502 = vunpack.c.l.b16 %v402
    %v1503 = vunpack.c.l.b16 %v403
    %v1504 = vunpack.c.l.b16 %v404
    %v1505 = vunpack.c.l.b16 %v405
    %v1506 = vunpack.c.l.b16 %v406
    %v1507 = vunpack.c.l.b16 %v407
    %v1508 = vunpack.c.l.b16 %v408
    %v1509 = vunpack.c.l.b16 %v409
    %v1510 = vunpack.c.l.b16 %v410
    %v1511 = vunpack.c.l.b16 %v411
    %v1512 = vunpack.c.l.b16 %v412
    %v1513 = vunpack.c.l.b16 %v413
    %v1514 = vunpack.c.l.b16 %v414
    %v1515 = vunpack.c.l.b16 %v415
    %v1516 = vunpack.c.l.b16 %v416
    %v1517 = vunpack.c.l.b16 %v417
    %v1518 = vunpack.c.l.b16 %v418
    %v1519 = vunpack.c.l.b16 %v419
    %v1520 = vunpack.c.l.b16 %v420
    %v1521 = vunpack.c.l.b16 %v421
    %v1522 = vunpack.c.l.b16 %v422
    %v1523 = vunpack.c.l.b16 %v423
    %v1524 = vunpack.c.l.b16 %v424
    %v1525 = vunpack.c.l.b16 %v425
    %v1526 = vunpack.c.l.b16 %v426
    %v1527 = vunpack.c.l.b16 %v427
    %v1528 = vunpack.c.l.b16 %v428
    %v1529 = vunpack.c.l.b16 %v429
    %v1530 = vunpack.c.l.b16 %v430
    %v1531 = vunpack.c.l.b16 %v431
    %v1532 = vunpack.c.l.b16 %v432
    %v1533 = vunpack.c.l.b16 %v433
    %v1534 = vunpack.c.l.b16 %v434
    %v1535 = vunpack.c.l.b16 %v435
    %v1536 = vunpack.c.l.b16 %v436
    %v1537 = vunpack.c.l.b16 %v437
    %v1538 = vunpack.c.l.b16 %v438
    %v1539 = vunpack.c.l.b16 %v439
    %v1540 = vunpack.c.l.b16 %v440
    %v1541 = vunpack.c.l.b16 %v441
    %v1542 = vunpack.c.l.b16 %v442
    %v1543 = vunpack.c.l.b16 %v443
    %v1544 = vunpack.c.l.b16 %v444
    %v1545 = vunpack.c.l.b16 %v445
    %v1546 = vunpack.c.l.b16 %v446
    %v1547 = vunpack.c.l.b16 %v447
    %v1548 = vunpack.c.l.b16 %v448
    %v1549 = vunpack.c.l.b16 %v449
    %v1550 = vunpack.c.l.b16 %v450
    %v1551 = vunpack.c.l.b16 %v451
    %v1552 = vunpack.c.l.b16 %v452
    %v1553 = vunpack.c.l.b16 %v453
    %v1554 = vunpack.c.l.b16 %v454
    %v1555 = vunpack.c.l.b16 %v455
    %v1556 = vunpack.c.l.b16 %v456
    %v1557 = vunpack.c.l.b16 %v457
    %v1558 = vunpack.c.l.b16 %v458
    %v1559 = vunpack.c.l.b16 %v459
    %v1560 = vunpack.c.l.b16 %v460
    %v1561 = vunpack.c.l.b16 %v461
    %v1562 = vunpack.c.l.b16 %v462
    %v1563 = vunpack.c.l.b16 %v463
    %v1564 = vunpack.c.l.b16 %v464
    %v1565 = vunpack.c.l.b16 %v465
    %v1566 = vunpack.c.l.b16 %v466
    %v1567 = vunpack.c.l.b16 %v467
    %v1568 = vunpack.c.l.b16 %v468
    %v1569 = vunpack.c.l.b16 %v469
    %v1570 = vunpack.c.l.b16 %v470
    %v1571 = vunpack.c.l.b16 %v471
    %v1572 = vunpack.c.l.b16 %v472
    %v1573 = vunpack.c.l.b16 %v473
    %v1574 = vunpack.c.l.b16 %v474
    %v1575 = vunpack.c.l.b16 %v475
    %v1576 = vunpack.c.l.b16 %v476
    %v1577 = vunpack.c.l.b16 %v477
    %v1578 = vunpack.c.l.b16 %v478
    %v1579 = vunpack.c.l.b16 %v479
    %v1580 = vunpack.c.l.b16 %v480
    %v1581 = vunpack.c.l.b16 %v481
    %v1582 = vunpack.c.l.b16 %v482
    %v1583 = vunpack.c.l.b16 %v483
    %v1584 = vunpack.c.l.b16 %v484
    %v1585 = vunpack.c.l.b16 %v485
    %v1586 = vunpack.c.l.b16 %v486
    %v1587 = vunpack.c.l.b16 %v487
    %v1588 = vunpack.c.l.b16 %v488
    %v1589 = vunpack.c.l.b16 %v489
    %v1590 = vunpack.c.l.b16 %v490
    %v1591 = vunpack.c.l.b16 %v491
    %v1592 = vunpack.c.l.b16 %v492
    %v1593 = vunpack.c.l.b16 %v493
    %v1594 = vunpack.c.l.b16 %v494
    %v1595 = vunpack.c.l.b16 %v495
    %v1596 = vunpack.c.l.b16 %v496
    %v1597 = vunpack.c.l.b16 %v497
    %v1598 = vunpack.c.l.b16 %v498
    %v1599 = vunpack.c.l.b16 %v499
    %v1600 = vunpack.c.l.b16 %v500
    %v1601 = vunpack.c.l.b16 %v501
    %v1602 = vunpack.c.l.b16 %v502
    %v1603 = vunpack.c.l.b16 %v503
    %v1604 = vunpack.c.l.b16 %v504
    %v1605 = vunpack.c.l.b16 %v505
    %v1606 = vunpack.c.l.b16 %v506
    %v1607 = vunpack.c.l.b16 %v507
    %v1608 = vunpack.c.l.b16 %v508
    %v1609 = vunpack.c.l.b16 %v509
    %v1610 = vunpack.c.l.b16 %v510
    %v1611 = vunpack.c.l.b16 %v511
    %v1612 = vunpack.c.l.b16 %v512
    %v1613 = vunpack.c.l.b16 %v513
    %v1614 = vunpack.c.l.b16 %v514
    %v1615 = vunpack.c.l.b16 %v515
    %v1616 = vunpack.c.l.b16 %v516
    %v1617 = vunpack.c.l.b16 %v517
    %v1618 = vunpack.c.l.b16 %v518
    %v1619 = vunpack.c.l.b16 %v519
    %v1620 = vunpack.c.l.b16 %v520
    %v1621 = vunpack.c.l.b16 %v521
    %v1622 = vunpack.c.l.b16 %v522
    %v1623 = vunpack.c.l.b16 %v523
    %v1624 = vunpack.c.l.b16 %v524
    %v1625 = vunpack.c.l.b16 %v525
    %v1626 = vunpack.c.l.b16 %v526
    %v1627 = vunpack.c.l.b16 %v527
    %v1628 = vunpack.c.l.b16 %v528
    %v1629 = vunpack.c.l.b16 %v529
    %v1630 = vunpack.c.l.b16 %v530
    %v1631 = vunpack.c.l.b16 %v531
    %v1632 = vunpack.c.l.b16 %v532
    %v1633 = vpack.c.b16 %v1122, %v1121
    %v1634 = vpack.c.b16 %v1124, %v1123
    %v1635 = vpack.c.b16 %v1126, %v1125
    %v1636 = vpack.c.b16 %v1128, %v1127
    %v1637 = vpack.c.b16 %v1130, %v1129
    %v1638 = vpack.c.b16 %v1132, %v1131
    %v1639 = vpack.c.b16 %v1134, %v1133
    %v1640 = vpack.c.b16 %v1136, %v1135
    %v1641 = vpack.c.b16 %v1138, %v1137
    %v1642 = vpack.c.b16 %v1140, %v1139
    %v1643 = vpack.c.b16 %v1142, %v1141
    %v1644 = vpack.c.b16 %v1144, %v1143
    %v1645 = vpack.c.b16 %v1146, %v1145
    %v1646 = vpack.c.b16 %v1148, %v1147
    %v1647 = vpack.c.b16 %v1150, %v1149
    %v1648 = vpack.c.b16 %v1152, %v1151
    %v1649 = vpack.c.b16 %v1154, %v1153
    %v1650 = vpack.c.b16 %v1156, %v1155
    %v1651 = vpack.c.b16 %v1158, %v1157
    %v1652 = vpack.c.b16 %v1160, %v1159
    %v1653 = vpack.c.b16 %v1162, %v1161
    %v1654 = vpack.c.b16 %v1164, %v1163
    %v1655 = vpack.c.b16 %v1166, %v1165
    %v1656 = vpack.c.b16 %v1168, %v1167
    %v1657 = vpack.c.b16 %v1170, %v1169
    %v1658 = vpack.c.b16 %v1172, %v1171
    %v1659 = vpack.c.b16 %v1174, %v1173
    %v1660 = vpack.c.b16 %v1176, %v1175
    %v1661 = vpack.c.b16 %v1178, %v1177
    %v1662 = vpack.c.b16 %v1180, %v1179
    %v1663 = vpack.c.b16 %v1182, %v1181
    %v1664 = vpack.c.b16 %v1184, %v1183
    %v1665 = vpack.c.b16 %v1186, %v1185
    %v1666 = vpack.c.b16 %v1188, %v1187
    %v1667 = vpack.c.b16 %v1190, %v1189
    %v1668 = vpack.c.b16 %v1192, %v1191
    %v1669 = vpack.c.b16 %v1194, %v1193
    %v1670 = vpack.c.b16 %v1196, %v1195
    %v1671 = vpack.c.b16 %v1198, %v1197
    %v1672 = vpack.c.b16 %v1200, %v1199
    %v1673 = vpack.c.b16 %v1202, %v1201
    %v1674 = vpack.c.b16 %v1204, %v1203
    %v1675 = vpack.c.b16 %v1206, %v1205
    %v1676 = vpack.c.b16 %v1208, %v1207
    %v1677 = vpack.c.b16 %v1210, %v1209
    %v1678 = vpack.c.b16 %v1212, %v1211
    %v1679 = vpack.c.b16 %v1214, %v1213
    %v1680 = vpack.c.b16 %v1216, %v1215
    %v1681 = vpack.c.b16 %v1218, %v1217
    %v1682 = vpack.c.b16 %v1220, %v1219
    %v1683 = vpack.c.b16 %v1222, %v1221
    %v1684 = vpack.c.b16 %v1224, %v1223
    %v1685 = vpack.c.b16 %v1226, %v1225
    %v1686 = vpack.c.b16 %v1228, %v1227
    %v1687 = vpack.c.b16 %v1230, %v1229
    %v1688 = vpack.c.b16 %v1232, %v1231
    %v1689 = vpack.c.b16 %v1234, %v1233
    %v1690 = vpack.c.b16 %v1236, %v1235
    %v1691 = vpack.c.b16 %v1238, %v1237
    %v1692 = vpack.c.b16 %v1240, %v1239
    %v1693 = vpack.c.b16 %v1242, %v1241
    %v1694 = vpack.c.b16 %v1244, %v1243
    %v1695 = vpack.c.b16 %v1246, %v1245
    %v1696 = vpack.c.b16 %v1248, %v1247
    %v1697 = vpack.c.b16 %v1250, %v1249
    %v1698 = vpack.c.b16 %v1252, %v1251
    %v1699 = vpack.c.b16 %v1254, %v1253
    %v1700 = vpack.c.b16 %v1256, %v1255
    %v1701 = vpack.c.b16 %v1258, %v1257
    %v1702 = vpack.c.b16 %v1260, %v1259
    %v1703 = vpack.c.b16 %v1262, %v1261
    %v1704 = vpack.c.b16 %v1264, %v1263
    %v1705 = vpack.c.b16 %v1266, %v1265
    %v1706 = vpack.c.b16 %v1268, %v1267
    %v1707 = vpack.c.b16 %v1270, %v1269
    %v1708 = vpack.c.b16 %v1272, %v1271
    %v1709 = vpack.c.b16 %v1274, %v1273
    %v1710 = vpack.c.b16 %v1276, %v1275
    %v1711 = vpack.c.b16 %v1278, %v1277
    %v1712 = vpack.c.b16 %v1280, %v1279
    %v1713 = vpack.c.b16 %v1282, %v1281
    %v1714 = vpack.c.b16 %v1284, %v1283
    %v1715 = vpack.c.b16 %v1286, %v1285
    %v1716 = vpack.c.b16 %v1288, %v1287
    %v1717 = vpack.c.b16 %v1290, %v1289
    %v1718 = vpack.c.b16 %v1292, %v1291
    %v1719 = vpack.c.b16 %v1294, %v1293
    %v1720 = vpack.c.b16 %v1296, %v1295
    %v1721 = vpack.c.b16 %v1298, %v1297
    %v1722 = vpack.c.b16 %v1300, %v1299
    %v1723 = vpack.c.b16 %v1302, %v1301
    %v1724 = vpack.c.b16 %v1304, %v1303
    %v1725 = vpack.c.b16 %v1306, %v1305
    %v1726 = vpack.c.b16 %v1308, %v1307
    %v1727 = vpack.c.b16 %v1310, %v1309
    %v1728 = vpack.c.b16 %v1312, %v1311
    %v1729 = vpack.c.b16 %v1314, %v1313
    %v1730 = vpack.c.b16 %v1316, %v1315
    %v1731 = vpack.c.b16 %v1318, %v1317
    %v1732 = vpack.c.b16 %v1320, %v1319
    %v1733 = vpack.c.b16 %v1322, %v1321
    %v1734 = vpack.c.b16 %v1324, %v1323
    %v1735 = vpack.c.b16 %v1326, %v1325
    %v1736 = vpack.c.b16 %v1328, %v1327
    %v1737 = vpack.c.b16 %v1330, %v1329
    %v1738 = vpack.c.b16 %v1332, %v1331
    %v1739 = vpack.c.b16 %v1334, %v1333
    %v1740 = vpack.c.b16 %v1336, %v1335
    %v1741 = vpack.c.b16 %v1338, %v1337
    %v1742 = vpack.c.b16 %v1340, %v1339
    %v1743 = vpack.c.b16 %v1342, %v1341
    %v1744 = vpack.c.b16 %v1344, %v1343
    %v1745 = vpack.c.b16 %v1346, %v1345
    %v1746 = vpack.c.b16 %v1348, %v1347
    %v1747 = vpack.c.b16 %v1350, %v1349
    %v1748 = vpack.c.b16 %v1352, %v1351
    %v1749 = vpack.c.b16 %v1354, %v1353
    %v1750 = vpack.c.b16 %v1356, %v1355
    %v1751 = vpack.c.b16 %v1358, %v1357
    %v1752 = vpack.c.b16 %v1360, %v1359
    %v1753 = vpack.c.b16 %v1362, %v1361
    %v1754 = vpack.c.b16 %v1364, %v1363
    %v1755 = vpack.c.b16 %v1366, %v1365
    %v1756 = vpack.c.b16 %v1368, %v1367
    %v1757 = vpack.c.b16 %v1370, %v1369
    %v1758 = vpack.c.b16 %v1372, %v1371
    %v1759 = vpack.c.b16 %v1374, %v1373
    %v1760 = vpack.c.b16 %v1376, %v1375
    %v1761 = vpack.c.b16 %v1378, %v1377
    %v1762 = vpack.c.b16 %v1380, %v1379
    %v1763 = vpack.c.b16 %v1382, %v1381
    %v1764 = vpack.c.b16 %v1384, %v1383
    %v1765 = vpack.c.b16 %v1386, %v1385
    %v1766 = vpack.c.b16 %v1388, %v1387
    %v1767 = vpack.c.b16 %v1390, %v1389
    %v1768 = vpack.c.b16 %v1392, %v1391
    %v1769 = vpack.c.b16 %v1394, %v1393
    %v1770 = vpack.c.b16 %v1396, %v1395
    %v1771 = vpack.c.b16 %v1398, %v1397
    %v1772 = vpack.c.b16 %v1400, %v1399
    %v1773 = vpack.c.b16 %v1402, %v1401
    %v1774 = vpack.c.b16 %v1404, %v1403
    %v1775 = vpack.c.b16 %v1406, %v1405
    %v1776 = vpack.c.b16 %v1408, %v1407
    %v1777 = vpack.c.b16 %v1410, %v1409
    %v1778 = vpack.c.b16 %v1412, %v1411
    %v1779 = vpack.c.b16 %v1414, %v1413
    %v1780 = vpack.c.b16 %v1416, %v1415
    %v1781 = vpack.c.b16 %v1418, %v1417
    %v1782 = vpack.c.b16 %v1420, %v1419
    %v1783 = vpack.c.b16 %v1422, %v1421
    %v1784 = vpack.c.b16 %v1424, %v1423
    %v1785 = vpack.c.b16 %v1426, %v1425
    %v1786 = vpack.c.b16 %v1428, %v1427
    %v1787 = vpack.c.b16 %v1430, %v1429
    %v1788 = vpack.c.b16 %v1432, %v1431
    %v1789 = vpack.c.b16 %v1434, %v1433
    %v1790 = vpack.c.b16 %v1436, %v1435
    %v1791 = vpack.c.b16 %v1438, %v1437
    %v1792 = vpack.c.b16 %v1440, %v1439
    %v1793 = vpack.c.b16 %v1442, %v1441
    %v1794 = vpack.c.b16 %v1444, %v1443
    %v1795 = vpack.c.b16 %v1446, %v1445
    %v1796 = vpack.c.b16 %v1448, %v1447
    %v1797 = vpack.c.b16 %v1450, %v1449
    %v1798 = vpack.c.b16 %v1452, %v1451
    %v1799 = vpack.c.b16 %v1454, %v1453
    %v1800 = vpack.c.b16 %v1456, %v1455
    %v1801 = vpack.c.b16 %v1458, %v1457
    %v1802 = vpack.c.b16 %v1460, %v1459
    %v1803 = vpack.c.b16 %v1462, %v1461
    %v1804 = vpack.c.b16 %v1464, %v1463
    %v1805 = vpack.c.b16 %v1466, %v1465
    %v1806 = vpack.c.b16 %v1468, %v1467
    %v1807 = vpack.c.b16 %v1470, %v1469
    %v1808 = vpack.c.b16 %v1472, %v1471
    %v1809 = vpack.c.b16 %v1474, %v1473
    %v1810 = vpack.c.b16 %v1476, %v1475
    %v1811 = vpack.c.b16 %v1478, %v1477
    %v1812 = vpack.c.b16 %v1480, %v1479
    %v1813 = vpack.c.b16 %v1482, %v1481
    %v1814 = vpack.c.b16 %v1484, %v1483
    %v1815 = vpack.c.b16 %v1486, %v1485
    %v1816 = vpack.c.b16 %v1488, %v1487
    %v1817 = vpack.c.b16 %v1490, %v1489
    %v1818 = vpack.c.b16 %v1492, %v1491
    %v1819 = vpack.c.b16 %v1494, %v1493
    %v1820 = vpack.c.b16 %v1496, %v1495
    %v1821 = vpack.c.b16 %v1498, %v1497
    %v1822 = vpack.c.b16 %v1500, %v1499
    %v1823 = vpack.c.b16 %v1502, %v1501
    %v1824 = vpack.c.b16 %v1504, %v1503
    %v1825 = vpack.c.b16 %v1506, %v1505
    %v1826 = vpack.c.b16 %v1508, %v1507
    %v1827 = vpack.c.b16 %v1510, %v1509
    %v1828 = vpack.c.b16 %v1512, %v1511
    %v1829 = vpack.c.b16 %v1514, %v1513
    %v1830 = vpack.c.b16 %v1516, %v1515
    %v1831 = vpack.c.b16 %v1518, %v1517
    %v1832 = vpack.c.b16 %v1520, %v1519
    %v1833 = vpack.c.b16 %v1522, %v1521
    %v1834 = vpack.c.b16 %v1524, %v1523
    %v1835 = vpack.c.b16 %v1526, %v1525
    %v1836 = vpack.c.b16 %v1528, %v1527
    %v1837 = vpack.c.b16 %v1530, %v1529
    %v1838 = vpack.c.b16 %v1532, %v1531
    %v1839 = vpack.c.b16 %v1534, %v1533
    %v1840 = vpack.c.b16 %v1536, %v1535
    %v1841 = vpack.c.b16 %v1538, %v1537
    %v1842 = vpack.c.b16 %v1540, %v1539
    %v1843 = vpack.c.b16 %v1542, %v1541
    %v1844 = vpack.c.b16 %v1544, %v1543
    %v1845 = vpack.c.b16 %v1546, %v1545
    %v1846 = vpack.c.b16 %v1548, %v1547
    %v1847 = vpack.c.b16 %v1550, %v1549
    %v1848 = vpack.c.b16 %v1552, %v1551
    %v1849 = vpack.c.b16 %v1554, %v1553
    %v1850 = vpack.c.b16 %v1556, %v1555
    %v1851 = vpack.c.b16 %v1558, %v1557
    %v1852 = vpack.c.b16 %v1560, %v1559
    %v1853 = vpack.c.b16 %v1562, %v1561
    %v1854 = vpack.c.b16 %v1564, %v1563
    %v1855 = vpack.c.b16 %v1566, %v1565
    %v1856 = vpack.c.b16 %v1568, %v1567
    %v1857 = vpack.c.b16 %v1570, %v1569
    %v1858 = vpack.c.b16 %v1572, %v1571
    %v1859 = vpack.c.b16 %v1574, %v1573
    %v1860 = vpack.c.b16 %v1576, %v1575
    %v1861 = vpack.c.b16 %v1578, %v1577
    %v1862 = vpack.c.b16 %v1580, %v1579
    %v1863 = vpack.c.b16 %v1582, %v1581
    %v1864 = vpack.c.b16 %v1584, %v1583
    %v1865 = vpack.c.b16 %v1586, %v1585
    %v1866 = vpack.c.b16 %v1588, %v1587
    %v1867 = vpack.c.b16 %v1590, %v1589
    %v1868 = vpack.c.b16 %v1592, %v1591
    %v1869 = vpack.c.b16 %v1594, %v1593
    %v1870 = vpack.c.b16 %v1596, %v1595
    %v1871 = vpack.c.b16 %v1598, %v1597
    %v1872 = vpack.c.b16 %v1600, %v1599
    %v1873 = vpack.c.b16 %v1602, %v1601
    %v1874 = vpack.c.b16 %v1604, %v1603
    %v1875 = vpack.c.b16 %v1606, %v1605
    %v1876 = vpack.c.b16 %v1608, %v1607
    %v1877 = vpack.c.b16 %v1610, %v1609
    %v1878 = vpack.c.b16 %v1612, %v1611
    %v1879 = vpack.c.b16 %v1614, %v1613
    %v1880 = vpack.c.b16 %v1616, %v1615
    %v1881 = vpack.c.b16 %v1618, %v1617
    %v1882 = vpack.c.b16 %v1620, %v1619
    %v1883 = vpack.c.b16 %v1622, %v1621
    %v1884 = vpack.c.b16 %v1624, %v1623
    %v1885 = vpack.c.b16 %v1626, %v1625
    %v1886 = vpack.c.b16 %v1628, %v1627
    %v1887 = vpack.c.b16 %v1630, %v1629
    %v1888 = vpack.c.b16 %v1632, %v1631
    %2145 = vmatpush.bf16.msra.mxu0 %v1640
    %2146 = vmatpush.bf16.msra.mxu0 %v1639
    %2147 = vmatpush.bf16.msra.mxu0 %v1638
    %2148 = vmatpush.bf16.msra.mxu0 %v1637
    %2149 = vmatpush.bf16.msra.mxu0 %v1636
    %2150 = vmatpush.bf16.msra.mxu0 %v1635
    %2151 = vmatpush.bf16.msra.mxu0 %v1634
    %2152 = vmatpush.bf16.msra.mxu0 %v1633
    %2153 = vmatmul.bf16.gmra.mxu0 %v539
    %v2154 = vpop.f32.mrf.mxu0
    %v2155 = vadd.f32 %v535, %v2154
    %v2156 = vpop.f32.mrf.mxu0
    %2157 = vdwg.mxu0
    %2158 = vmatpush.bf16.msra.mxu0 %v1648
    %2159 = vmatpush.bf16.msra.mxu0 %v1647
    %2160 = vmatpush.bf16.msra.mxu0 %v1646
    %2161 = vmatpush.bf16.msra.mxu0 %v1645
    %2162 = vmatpush.bf16.msra.mxu0 %v1644
    %2163 = vmatpush.bf16.msra.mxu0 %v1643
    %2164 = vmatpush.bf16.msra.mxu0 %v1642
    %2165 = vmatpush.bf16.msra.mxu0 %v1641
    %2166 = vmatmul.bf16.gmra.mxu0 %v540
    %v2167 = vpop.f32.mrf.mxu0
    %v2168 = vadd.f32 %v2155, %v2167
    %v2169 = vpop.f32.mrf.mxu0
    %2170 = vdwg.mxu0
    %2171 = vmatpush.bf16.msra.mxu0 %v1656
    %2172 = vmatpush.bf16.msra.mxu0 %v1655
    %2173 = vmatpush.bf16.msra.mxu0 %v1654
    %2174 = vmatpush.bf16.msra.mxu0 %v1653
    %2175 = vmatpush.bf16.msra.mxu0 %v1652
    %2176 = vmatpush.bf16.msra.mxu0 %v1651
    %2177 = vmatpush.bf16.msra.mxu0 %v1650
    %2178 = vmatpush.bf16.msra.mxu0 %v1649
    %2179 = vmatmul.bf16.gmra.mxu0 %v541
    %v2180 = vpop.f32.mrf.mxu0
    %v2181 = vadd.f32 %v2168, %v2180
    %v2182 = vpop.f32.mrf.mxu0
    %2183 = vdwg.mxu0
    %2184 = vmatpush.bf16.msra.mxu0 %v1664
    %2185 = vmatpush.bf16.msra.mxu0 %v1663
    %2186 = vmatpush.bf16.msra.mxu0 %v1662
    %2187 = vmatpush.bf16.msra.mxu0 %v1661
    %2188 = vmatpush.bf16.msra.mxu0 %v1660
    %2189 = vmatpush.bf16.msra.mxu0 %v1659
    %2190 = vmatpush.bf16.msra.mxu0 %v1658
    %2191 = vmatpush.bf16.msra.mxu0 %v1657
    %2192 = vmatmul.bf16.gmra.mxu0 %v542
    %v2193 = vpop.f32.mrf.mxu0
    %v2194 = vadd.f32 %v2181, %v2193
    %v2195 = vpop.f32.mrf.mxu0
    %2196 = vdwg.mxu0
    %2197 = vmatpush.bf16.msra.mxu0 %v1672
    %2198 = vmatpush.bf16.msra.mxu0 %v1671
    %2199 = vmatpush.bf16.msra.mxu0 %v1670
    %2200 = vmatpush.bf16.msra.mxu0 %v1669
    %2201 = vmatpush.bf16.msra.mxu0 %v1668
    %2202 = vmatpush.bf16.msra.mxu0 %v1667
    %2203 = vmatpush.bf16.msra.mxu0 %v1666
    %2204 = vmatpush.bf16.msra.mxu0 %v1665
    %2205 = vmatmul.bf16.gmra.mxu0 %v543
    %v2206 = vpop.f32.mrf.mxu0
    %v2207 = vadd.f32 %v2194, %v2206
    %v2208 = vpop.f32.mrf.mxu0
    %2209 = vdwg.mxu0
    %2210 = vmatpush.bf16.msra.mxu0 %v1680
    %2211 = vmatpush.bf16.msra.mxu0 %v1679
    %2212 = vmatpush.bf16.msra.mxu0 %v1678
    %2213 = vmatpush.bf16.msra.mxu0 %v1677
    %2214 = vmatpush.bf16.msra.mxu0 %v1676
    %2215 = vmatpush.bf16.msra.mxu0 %v1675
    %2216 = vmatpush.bf16.msra.mxu0 %v1674
    %2217 = vmatpush.bf16.msra.mxu0 %v1673
    %2218 = vmatmul.bf16.gmra.mxu0 %v544
    %v2219 = vpop.f32.mrf.mxu0
    %v2220 = vadd.f32 %v2207, %v2219
    %v2221 = vpop.f32.mrf.mxu0
    %2222 = vdwg.mxu0
    %2223 = vmatpush.bf16.msra.mxu0 %v1688
    %2224 = vmatpush.bf16.msra.mxu0 %v1687
    %2225 = vmatpush.bf16.msra.mxu0 %v1686
    %2226 = vmatpush.bf16.msra.mxu0 %v1685
    %2227 = vmatpush.bf16.msra.mxu0 %v1684
    %2228 = vmatpush.bf16.msra.mxu0 %v1683
    %2229 = vmatpush.bf16.msra.mxu0 %v1682
    %2230 = vmatpush.bf16.msra.mxu0 %v1681
    %2231 = vmatmul.bf16.gmra.mxu0 %v545
    %v2232 = vpop.f32.mrf.mxu0
    %v2233 = vadd.f32 %v2220, %v2232
    %v2234 = vpop.f32.mrf.mxu0
    %2235 = vdwg.mxu0
    %2236 = vmatpush.bf16.msra.mxu0 %v1696
    %2237 = vmatpush.bf16.msra.mxu0 %v1695
    %2238 = vmatpush.bf16.msra.mxu0 %v1694
    %2239 = vmatpush.bf16.msra.mxu0 %v1693
    %2240 = vmatpush.bf16.msra.mxu0 %v1692
    %2241 = vmatpush.bf16.msra.mxu0 %v1691
    %2242 = vmatpush.bf16.msra.mxu0 %v1690
    %2243 = vmatpush.bf16.msra.mxu0 %v1689
    %2244 = vmatmul.bf16.gmra.mxu0 %v546
    %v2245 = vpop.f32.mrf.mxu0
    %v2246 = vadd.f32 %v2233, %v2245
    %v2247 = vpop.f32.mrf.mxu0
    %2248 = vdwg.mxu0
    %2249 = vmatpush.bf16.msra.mxu0 %v1704
    %2250 = vmatpush.bf16.msra.mxu0 %v1703
    %2251 = vmatpush.bf16.msra.mxu0 %v1702
    %2252 = vmatpush.bf16.msra.mxu0 %v1701
    %2253 = vmatpush.bf16.msra.mxu0 %v1700
    %2254 = vmatpush.bf16.msra.mxu0 %v1699
    %2255 = vmatpush.bf16.msra.mxu0 %v1698
    %2256 = vmatpush.bf16.msra.mxu0 %v1697
    %2257 = vmatmul.bf16.gmra.mxu0 %v549
    %v2258 = vpop.f32.mrf.mxu0
    %v2259 = vadd.f32 %v2246, %v2258
    %v2260 = vpop.f32.mrf.mxu0
    %2261 = vdwg.mxu0
    %2262 = vmatpush.bf16.msra.mxu0 %v1712
    %2263 = vmatpush.bf16.msra.mxu0 %v1711
    %2264 = vmatpush.bf16.msra.mxu0 %v1710
    %2265 = vmatpush.bf16.msra.mxu0 %v1709
    %2266 = vmatpush.bf16.msra.mxu0 %v1708
    %2267 = vmatpush.bf16.msra.mxu0 %v1707
    %2268 = vmatpush.bf16.msra.mxu0 %v1706
    %2269 = vmatpush.bf16.msra.mxu0 %v1705
    %2270 = vmatmul.bf16.gmra.mxu0 %v550
    %v2271 = vpop.f32.mrf.mxu0
    %v2272 = vadd.f32 %v2259, %v2271
    %v2273 = vpop.f32.mrf.mxu0
    %2274 = vdwg.mxu0
    %2275 = vmatpush.bf16.msra.mxu0 %v1720
    %2276 = vmatpush.bf16.msra.mxu0 %v1719
    %2277 = vmatpush.bf16.msra.mxu0 %v1718
    %2278 = vmatpush.bf16.msra.mxu0 %v1717
    %2279 = vmatpush.bf16.msra.mxu0 %v1716
    %2280 = vmatpush.bf16.msra.mxu0 %v1715
    %2281 = vmatpush.bf16.msra.mxu0 %v1714
    %2282 = vmatpush.bf16.msra.mxu0 %v1713
    %2283 = vmatmul.bf16.gmra.mxu0 %v551
    %v2284 = vpop.f32.mrf.mxu0
    %v2285 = vadd.f32 %v2272, %v2284
    %v2286 = vpop.f32.mrf.mxu0
    %2287 = vdwg.mxu0
    %2288 = vmatpush.bf16.msra.mxu0 %v1728
    %2289 = vmatpush.bf16.msra.mxu0 %v1727
    %2290 = vmatpush.bf16.msra.mxu0 %v1726
    %2291 = vmatpush.bf16.msra.mxu0 %v1725
    %2292 = vmatpush.bf16.msra.mxu0 %v1724
    %2293 = vmatpush.bf16.msra.mxu0 %v1723
    %2294 = vmatpush.bf16.msra.mxu0 %v1722
    %2295 = vmatpush.bf16.msra.mxu0 %v1721
    %2296 = vmatmul.bf16.gmra.mxu0 %v552
    %v2297 = vpop.f32.mrf.mxu0
    %v2298 = vadd.f32 %v2285, %v2297
    %v2299 = vpop.f32.mrf.mxu0
    %2300 = vdwg.mxu0
    %2301 = vmatpush.bf16.msra.mxu0 %v1736
    %2302 = vmatpush.bf16.msra.mxu0 %v1735
    %2303 = vmatpush.bf16.msra.mxu0 %v1734
    %2304 = vmatpush.bf16.msra.mxu0 %v1733
    %2305 = vmatpush.bf16.msra.mxu0 %v1732
    %2306 = vmatpush.bf16.msra.mxu0 %v1731
    %2307 = vmatpush.bf16.msra.mxu0 %v1730
    %2308 = vmatpush.bf16.msra.mxu0 %v1729
    %2309 = vmatmul.bf16.gmra.mxu0 %v553
    %v2310 = vpop.f32.mrf.mxu0
    %v2311 = vadd.f32 %v2298, %v2310
    %v2312 = vpop.f32.mrf.mxu0
    %2313 = vdwg.mxu0
    %2314 = vmatpush.bf16.msra.mxu0 %v1744
    %2315 = vmatpush.bf16.msra.mxu0 %v1743
    %2316 = vmatpush.bf16.msra.mxu0 %v1742
    %2317 = vmatpush.bf16.msra.mxu0 %v1741
    %2318 = vmatpush.bf16.msra.mxu0 %v1740
    %2319 = vmatpush.bf16.msra.mxu0 %v1739
    %2320 = vmatpush.bf16.msra.mxu0 %v1738
    %2321 = vmatpush.bf16.msra.mxu0 %v1737
    %2322 = vmatmul.bf16.gmra.mxu0 %v554
    %v2323 = vpop.f32.mrf.mxu0
    %v2324 = vadd.f32 %v2311, %v2323
    %v2325 = vpop.f32.mrf.mxu0
    %2326 = vdwg.mxu0
    %2327 = vmatpush.bf16.msra.mxu0 %v1752
    %2328 = vmatpush.bf16.msra.mxu0 %v1751
    %2329 = vmatpush.bf16.msra.mxu0 %v1750
    %2330 = vmatpush.bf16.msra.mxu0 %v1749
    %2331 = vmatpush.bf16.msra.mxu0 %v1748
    %2332 = vmatpush.bf16.msra.mxu0 %v1747
    %2333 = vmatpush.bf16.msra.mxu0 %v1746
    %2334 = vmatpush.bf16.msra.mxu0 %v1745
    %2335 = vmatmul.bf16.gmra.mxu0 %v555
    %v2336 = vpop.f32.mrf.mxu0
    %v2337 = vadd.f32 %v2324, %v2336
    %v2338 = vpop.f32.mrf.mxu0
    %2339 = vdwg.mxu0
    %2340 = vmatpush.bf16.msra.mxu0 %v1760
    %2341 = vmatpush.bf16.msra.mxu0 %v1759
    %2342 = vmatpush.bf16.msra.mxu0 %v1758
    %2343 = vmatpush.bf16.msra.mxu0 %v1757
    %2344 = vmatpush.bf16.msra.mxu0 %v1756
    %2345 = vmatpush.bf16.msra.mxu0 %v1755
    %2346 = vmatpush.bf16.msra.mxu0 %v1754
    %2347 = vmatpush.bf16.msra.mxu0 %v1753
    %2348 = vmatmul.bf16.gmra.mxu0 %v556
    %v2349 = vpop.f32.mrf.mxu0
    %v2350 = vadd.f32 %v2337, %v2349
    %v2351 = vpop.f32.mrf.mxu0
    %2352 = vdwg.mxu0
    %2353 = vmatpush.bf16.msra.mxu0 %v1768
    %2354 = vmatpush.bf16.msra.mxu0 %v1767
    %2355 = vmatpush.bf16.msra.mxu0 %v1766
    %2356 = vmatpush.bf16.msra.mxu0 %v1765
    %2357 = vmatpush.bf16.msra.mxu0 %v1764
    %2358 = vmatpush.bf16.msra.mxu0 %v1763
    %2359 = vmatpush.bf16.msra.mxu0 %v1762
    %2360 = vmatpush.bf16.msra.mxu0 %v1761
    %2361 = vmatmul.bf16.gmra.mxu0 %v559
    %v2362 = vpop.f32.mrf.mxu0
    %v2363 = vadd.f32 %v2350, %v2362
    %v2364 = vpop.f32.mrf.mxu0
    %2365 = vdwg.mxu0
    %2366 = vmatpush.bf16.msra.mxu0 %v1776
    %2367 = vmatpush.bf16.msra.mxu0 %v1775
    %2368 = vmatpush.bf16.msra.mxu0 %v1774
    %2369 = vmatpush.bf16.msra.mxu0 %v1773
    %2370 = vmatpush.bf16.msra.mxu0 %v1772
    %2371 = vmatpush.bf16.msra.mxu0 %v1771
    %2372 = vmatpush.bf16.msra.mxu0 %v1770
    %2373 = vmatpush.bf16.msra.mxu0 %v1769
    %2374 = vmatmul.bf16.gmra.mxu0 %v560
    %v2375 = vpop.f32.mrf.mxu0
    %v2376 = vadd.f32 %v2363, %v2375
    %v2377 = vpop.f32.mrf.mxu0
    %2378 = vdwg.mxu0
    %2379 = vmatpush.bf16.msra.mxu0 %v1784
    %2380 = vmatpush.bf16.msra.mxu0 %v1783
    %2381 = vmatpush.bf16.msra.mxu0 %v1782
    %2382 = vmatpush.bf16.msra.mxu0 %v1781
    %2383 = vmatpush.bf16.msra.mxu0 %v1780
    %2384 = vmatpush.bf16.msra.mxu0 %v1779
    %2385 = vmatpush.bf16.msra.mxu0 %v1778
    %2386 = vmatpush.bf16.msra.mxu0 %v1777
    %2387 = vmatmul.bf16.gmra.mxu0 %v561
    %v2388 = vpop.f32.mrf.mxu0
    %v2389 = vadd.f32 %v2376, %v2388
    %v2390 = vpop.f32.mrf.mxu0
    %2391 = vdwg.mxu0
    %2392 = vmatpush.bf16.msra.mxu0 %v1792
    %2393 = vmatpush.bf16.msra.mxu0 %v1791
    %2394 = vmatpush.bf16.msra.mxu0 %v1790
    %2395 = vmatpush.bf16.msra.mxu0 %v1789
    %2396 = vmatpush.bf16.msra.mxu0 %v1788
    %2397 = vmatpush.bf16.msra.mxu0 %v1787
    %2398 = vmatpush.bf16.msra.mxu0 %v1786
    %2399 = vmatpush.bf16.msra.mxu0 %v1785
    %2400 = vmatmul.bf16.gmra.mxu0 %v562
    %v2401 = vpop.f32.mrf.mxu0
    %v2402 = vadd.f32 %v2389, %v2401
    %v2403 = vpop.f32.mrf.mxu0
    %2404 = vdwg.mxu0
    %2405 = vmatpush.bf16.msra.mxu0 %v1800
    %2406 = vmatpush.bf16.msra.mxu0 %v1799
    %2407 = vmatpush.bf16.msra.mxu0 %v1798
    %2408 = vmatpush.bf16.msra.mxu0 %v1797
    %2409 = vmatpush.bf16.msra.mxu0 %v1796
    %2410 = vmatpush.bf16.msra.mxu0 %v1795
    %2411 = vmatpush.bf16.msra.mxu0 %v1794
    %2412 = vmatpush.bf16.msra.mxu0 %v1793
    %2413 = vmatmul.bf16.gmra.mxu0 %v563
    %v2414 = vpop.f32.mrf.mxu0
    %v2415 = vadd.f32 %v2402, %v2414
    %v2416 = vpop.f32.mrf.mxu0
    %2417 = vdwg.mxu0
    %2418 = vmatpush.bf16.msra.mxu0 %v1808
    %2419 = vmatpush.bf16.msra.mxu0 %v1807
    %2420 = vmatpush.bf16.msra.mxu0 %v1806
    %2421 = vmatpush.bf16.msra.mxu0 %v1805
    %2422 = vmatpush.bf16.msra.mxu0 %v1804
    %2423 = vmatpush.bf16.msra.mxu0 %v1803
    %2424 = vmatpush.bf16.msra.mxu0 %v1802
    %2425 = vmatpush.bf16.msra.mxu0 %v1801
    %2426 = vmatmul.bf16.gmra.mxu0 %v564
    %v2427 = vpop.f32.mrf.mxu0
    %v2428 = vadd.f32 %v2415, %v2427
    %v2429 = vpop.f32.mrf.mxu0
    %2430 = vdwg.mxu0
    %2431 = vmatpush.bf16.msra.mxu0 %v1816
    %2432 = vmatpush.bf16.msra.mxu0 %v1815
    %2433 = vmatpush.bf16.msra.mxu0 %v1814
    %2434 = vmatpush.bf16.msra.mxu0 %v1813
    %2435 = vmatpush.bf16.msra.mxu0 %v1812
    %2436 = vmatpush.bf16.msra.mxu0 %v1811
    %2437 = vmatpush.bf16.msra.mxu0 %v1810
    %2438 = vmatpush.bf16.msra.mxu0 %v1809
    %2439 = vmatmul.bf16.gmra.mxu0 %v565
    %v2440 = vpop.f32.mrf.mxu0
    %v2441 = vadd.f32 %v2428, %v2440
    %v2442 = vpop.f32.mrf.mxu0
    %2443 = vdwg.mxu0
    %2444 = vmatpush.bf16.msra.mxu0 %v1824
    %2445 = vmatpush.bf16.msra.mxu0 %v1823
    %2446 = vmatpush.bf16.msra.mxu0 %v1822
    %2447 = vmatpush.bf16.msra.mxu0 %v1821
    %2448 = vmatpush.bf16.msra.mxu0 %v1820
    %2449 = vmatpush.bf16.msra.mxu0 %v1819
    %2450 = vmatpush.bf16.msra.mxu0 %v1818
    %2451 = vmatpush.bf16.msra.mxu0 %v1817
    %2452 = vmatmul.bf16.gmra.mxu0 %v566
    %v2453 = vpop.f32.mrf.mxu0
    %v2454 = vadd.f32 %v2441, %v2453
    %v2455 = vpop.f32.mrf.mxu0
    %2456 = vdwg.mxu0
    %2457 = vmatpush.bf16.msra.mxu0 %v1832
    %2458 = vmatpush.bf16.msra.mxu0 %v1831
    %2459 = vmatpush.bf16.msra.mxu0 %v1830
    %2460 = vmatpush.bf16.msra.mxu0 %v1829
    %2461 = vmatpush.bf16.msra.mxu0 %v1828
    %2462 = vmatpush.bf16.msra.mxu0 %v1827
    %2463 = vmatpush.bf16.msra.mxu0 %v1826
    %2464 = vmatpush.bf16.msra.mxu0 %v1825
    %2465 = vmatmul.bf16.gmra.mxu0 %v569
    %v2466 = vpop.f32.mrf.mxu0
    %v2467 = vadd.f32 %v2454, %v2466
    %v2468 = vpop.f32.mrf.mxu0
    %2469 = vdwg.mxu0
    %2470 = vmatpush.bf16.msra.mxu0 %v1840
    %2471 = vmatpush.bf16.msra.mxu0 %v1839
    %2472 = vmatpush.bf16.msra.mxu0 %v1838
    %2473 = vmatpush.bf16.msra.mxu0 %v1837
    %2474 = vmatpush.bf16.msra.mxu0 %v1836
    %2475 = vmatpush.bf16.msra.mxu0 %v1835
    %2476 = vmatpush.bf16.msra.mxu0 %v1834
    %2477 = vmatpush.bf16.msra.mxu0 %v1833
    %2478 = vmatmul.bf16.gmra.mxu0 %v570
    %v2479 = vpop.f32.mrf.mxu0
    %v2480 = vadd.f32 %v2467, %v2479
    %v2481 = vpop.f32.mrf.mxu0
    %2482 = vdwg.mxu0
    %2483 = vmatpush.bf16.msra.mxu0 %v1848
    %2484 = vmatpush.bf16.msra.mxu0 %v1847
    %2485 = vmatpush.bf16.msra.mxu0 %v1846
    %2486 = vmatpush.bf16.msra.mxu0 %v1845
    %2487 = vmatpush.bf16.msra.mxu0 %v1844
    %2488 = vmatpush.bf16.msra.mxu0 %v1843
    %2489 = vmatpush.bf16.msra.mxu0 %v1842
    %2490 = vmatpush.bf16.msra.mxu0 %v1841
    %2491 = vmatmul.bf16.gmra.mxu0 %v571
    %v2492 = vpop.f32.mrf.mxu0
    %v2493 = vadd.f32 %v2480, %v2492
    %v2494 = vpop.f32.mrf.mxu0
    %2495 = vdwg.mxu0
    %2496 = vmatpush.bf16.msra.mxu0 %v1856
    %2497 = vmatpush.bf16.msra.mxu0 %v1855
    %2498 = vmatpush.bf16.msra.mxu0 %v1854
    %2499 = vmatpush.bf16.msra.mxu0 %v1853
    %2500 = vmatpush.bf16.msra.mxu0 %v1852
    %2501 = vmatpush.bf16.msra.mxu0 %v1851
    %2502 = vmatpush.bf16.msra.mxu0 %v1850
    %2503 = vmatpush.bf16.msra.mxu0 %v1849
    %2504 = vmatmul.bf16.gmra.mxu0 %v572
    %v2505 = vpop.f32.mrf.mxu0
    %v2506 = vadd.f32 %v2493, %v2505
    %v2507 = vpop.f32.mrf.mxu0
    %2508 = vdwg.mxu0
    %2509 = vmatpush.bf16.msra.mxu0 %v1864
    %2510 = vmatpush.bf16.msra.mxu0 %v1863
    %2511 = vmatpush.bf16.msra.mxu0 %v1862
    %2512 = vmatpush.bf16.msra.mxu0 %v1861
    %2513 = vmatpush.bf16.msra.mxu0 %v1860
    %2514 = vmatpush.bf16.msra.mxu0 %v1859
    %2515 = vmatpush.bf16.msra.mxu0 %v1858
    %2516 = vmatpush.bf16.msra.mxu0 %v1857
    %2517 = vmatmul.bf16.gmra.mxu0 %v573
    %v2518 = vpop.f32.mrf.mxu0
    %v2519 = vadd.f32 %v2506, %v2518
    %v2520 = vpop.f32.mrf.mxu0
    %2521 = vdwg.mxu0
    %2522 = vmatpush.bf16.msra.mxu0 %v1872
    %2523 = vmatpush.bf16.msra.mxu0 %v1871
    %2524 = vmatpush.bf16.msra.mxu0 %v1870
    %2525 = vmatpush.bf16.msra.mxu0 %v1869
    %2526 = vmatpush.bf16.msra.mxu0 %v1868
    %2527 = vmatpush.bf16.msra.mxu0 %v1867
    %2528 = vmatpush.bf16.msra.mxu0 %v1866
    %2529 = vmatpush.bf16.msra.mxu0 %v1865
    %2530 = vmatmul.bf16.gmra.mxu0 %v574
    %v2531 = vpop.f32.mrf.mxu0
    %v2532 = vadd.f32 %v2519, %v2531
    %v2533 = vpop.f32.mrf.mxu0
    %2534 = vdwg.mxu0
    %2535 = vmatpush.bf16.msra.mxu0 %v1880
    %2536 = vmatpush.bf16.msra.mxu0 %v1879
    %2537 = vmatpush.bf16.msra.mxu0 %v1878
    %2538 = vmatpush.bf16.msra.mxu0 %v1877
    %2539 = vmatpush.bf16.msra.mxu0 %v1876
    %2540 = vmatpush.bf16.msra.mxu0 %v1875
    %2541 = vmatpush.bf16.msra.mxu0 %v1874
    %2542 = vmatpush.bf16.msra.mxu0 %v1873
    %2543 = vmatmul.bf16.gmra.mxu0 %v575
    %v2544 = vpop.f32.mrf.mxu0
    %v2545 = vadd.f32 %v2532, %v2544
    %v2546 = vpop.f32.mrf.mxu0
    %2547 = vdwg.mxu0
    %2548 = vmatpush.bf16.msra.mxu0 %v1888
    %2549 = vmatpush.bf16.msra.mxu0 %v1887
    %2550 = vmatpush.bf16.msra.mxu0 %v1886
    %2551 = vmatpush.bf16.msra.mxu0 %v1885
    %2552 = vmatpush.bf16.msra.mxu0 %v1884
    %2553 = vmatpush.bf16.msra.mxu0 %v1883
    %2554 = vmatpush.bf16.msra.mxu0 %v1882
    %2555 = vmatpush.bf16.msra.mxu0 %v1881
    %2556 = vmatmul.bf16.gmra.mxu0 %v576
    %v2557 = vpop.f32.mrf.mxu0
    %v2558 = vadd.f32 %v2545, %v2557
    %v2559 = vpop.f32.mrf.mxu0
    %2560 = vdwg.mxu0
    %vm2561 = vcmask 525312
    %2562 = vst.msk [vmem:[#allocation2] sm:$0x3] %vm2561, %v2558
    %v2563 = vtanh.pop %v2558
    %2565 = vrot.lane.b32.xlu0 %v2563, 63
    %v2566 = vpop.permute.xlu0 %2565
    %vm2568 = vcmask 1024
    %2569 = vst.msk [vmem:[%s4] sm:$0x3] %vm2568, %v2566
    // Predicated region
    $region14: #{gonnet_forward.3} parent=1 // pred_check
      _
    $region15: #{gonnet_forward.3} parent=1 // pred_check_branch
      %2571 = sbr.rel (0) target = $region17
    $region16: #{gonnet_forward.3} parent=1 // pred_region
      %2573 = vsyncadd [#allocation3], 0
      %s2575 = sshll.u32 [#allocation2], 4
      %s2576 = int_to_ptr.vmem [resolvable:$true] %s2575
      %s2577 = sshll.u32 %s3, 4
      %s2578 = int_to_ptr.hbm [resolvable:$true] %s2577
      %2580 = dma.vmem_to_hbm [thread:$0]  %s2576, 32, %s2578, [#allocation3]
    $region17: #{gonnet_forward.3} parent=1 // pred_fallthru
      _
    // Predicated region
    $region18: #{gonnet_forward.3} parent=1 // pred_check
      _
    $region19: #{gonnet_forward.3} parent=1 // pred_check_branch
      %2582 = sbr.rel (0) target = $region21
    $region20: #{gonnet_forward.3} parent=1 // pred_region
      _
    $region21: #{gonnet_forward.3} parent=1 // pred_fallthru
      _
    // Predicated region
    $region22: #{gonnet_forward.3} parent=1 // pred_check
      _
    $region23: #{gonnet_forward.3} parent=1 // pred_check_branch
      %2584 = sbr.rel (0) target = $region25
    $region24: #{gonnet_forward.3} parent=1 // pred_region
      %2586 = dma.done [#allocation3], 32
    $region25: #{gonnet_forward.3} parent=1 // pred_fallthru
      _
    // Predicated region
    $region26: #{gonnet_forward.3} parent=1 // pred_check
      _
    $region27: #{gonnet_forward.3} parent=1 // pred_check_branch
      %2588 = sbr.rel (0) target = $region29
    $region28: #{gonnet_forward.3} parent=1 // pred_region
      _
    $region29: #{gonnet_forward.3} parent=1 // pred_fallthru
      _
    %2589 = vsyncpa [#allocation3], 1

// kernel: gonnet_forward.2
$region0: #{gonnet_forward.2}
  #allocation0 [shape = 'u32[]', space=smem, size = 0x4, offset = 0x4, fixed_abs, tag = 'smem constant byte address 0x4 - core index']
  #allocation1 [shape = 'u32[72,128]{1,0:T(1,128)}', space=vmem, size = 0x9000, scoped, tag = 'internal scratch']
  #allocation2 [shape = 'f32[10,10,32]{2,1,0:T(8,128)}', space=vmem, size = 0x14000, scoped, tag = 'scratch operand']
  #allocation3 [shape = 'bf16[64,288]{1,0:T(8,128)(2,1)}', space=vmem, size = 0xc000, scoped, tag = 'scratch operand']
  %s0 = inlined_call_operand.vmem [shape: f32[2,8,8,32], index: 0, kind: input, shape index: {}]
  %s1 = inlined_call_operand.vmem [shape: bf16[9,288,32], index: 1, kind: input, shape index: {}]
  %s2 = inlined_call_operand.vmem [shape: f32[9,32], index: 2, kind: input, shape index: {}]
  %s3 = inlined_call_operand.vmem [shape: bf16[288,64], index: 3, kind: input, shape index: {}]
  %s4 = inlined_call_operand.vmem [shape: f32[1,64], index: 4, kind: input, shape index: {}]
  %s5 = inlined_call_operand.vmem [shape: bf16[2,64,64], index: 5, kind: output, shape index: {}]
  %s6 = sld [smem:[#allocation0]]
  $region53: #{gonnet_forward.2} parent=0
    _
  %s8 = ssub.s32 1, %s6
  %s9 = scalar_select 0, %s8, %s6
  loop: start=0, step=1, limit=4
  $region2: #{gonnet_forward.2} parent=0 // loop_pre_header
    _
  $region3: #{gonnet_forward.2} parent=0 // loop_header
    %s11 = sphi 0, %s15
    %p12 = scmp.ge.s32.totalorder %s11, 4
    %s21 = sphi 0, %s23
    %s24 = sphi 0, %s21
    %s25 = sphi 0, %s24
    %s41 = sphi 0, %s25
    %s45 = sphi 0, %s45
    %s47 = sphi 0, %s45
    %s48 = sphi 0, %s47
    %s62 = sphi 0, %s48
    %s66 = sphi 0, %s66
    %s68 = sphi 0, %s66
    %s69 = sphi 0, %s68
    %s83 = sphi 0, %s69
    %s87 = sphi 0, %s87
    %s89 = sphi 0, %s87
    %s90 = sphi 0, %s89
    %s104 = sphi 0, %s90
    %s108 = sphi 0, %s108
    %s110 = sphi 0, %s108
    %s111 = sphi 0, %s110
    %s125 = sphi 0, %s111
    %s131 = sphi 0, %s133
    %s134 = sphi 0, %s131
    %s135 = sphi 0, %s134
    %s151 = sphi 0, %s135
  $region4: #{gonnet_forward.2} parent=0 // loop_header_branch
    %14 = sbr.rel (%p12) target = $region8
  $region5: #{gonnet_forward.2} parent=0 // loop_body
    %s16 = ssub.s32 %s11, 1
    %s17 = ssub.s32 %s11, 2
    %s18 = sadd.s32 %s11, 1
    %s19 = ssub.s32 %s11, %s18
    %p20 = scmp.eq.s32.totalorder %s19, 0
    %s22 = sadd.s32 %s21, 1
    %s23 = scalar_select %p20, %s21, %s22
    %p26 = pneg %p20
    %p27 = scmp.eq.s32.totalorder %s11, 1
    %p28 = por %p26, %p27
    %p29 = scmp.ne.s32.totalorder %s21, %s24
    %p30 = scmp.eq.s32.totalorder %s11, 0
    %p31 = por %p29, %p30
    %p32 = scmp.ne.s32.totalorder %s21, %s24
    %p33 = scmp.eq.s32.totalorder %s16, 1
    %p34 = por %p32, %p33
    %p35 = scmp.ne.s32.totalorder %s24, %s25
    %p36 = scmp.eq.s32.totalorder %s16, 0
    %p37 = por %p35, %p36
    %p38 = scmp.ne.s32.totalorder %s24, %s25
    %p39 = scmp.eq.s32.totalorder %s17, 1
    %p40 = por %p38, %p39
    %p42 = scmp.ne.s32.totalorder %s25, %s41
    %p43 = scmp.eq.s32.totalorder %s17, 0
    %p44 = por %p42, %p43
    %s46 = sadd.s32 %s45, 1
    %p49 = scmp.eq.s32.totalorder %s11, 1
    %p50 = scmp.ne.s32.totalorder %s45, %s47
    %p51 = scmp.eq.s32.totalorder %s11, 0
    %p52 = por %p50, %p51
    %p53 = scmp.ne.s32.totalorder %s45, %s47
    %p54 = scmp.eq.s32.totalorder %s16, 1
    %p55 = por %p53, %p54
    %p56 = scmp.ne.s32.totalorder %s47, %s48
    %p57 = scmp.eq.s32.totalorder %s16, 0
    %p58 = por %p56, %p57
    %p59 = scmp.ne.s32.totalorder %s47, %s48
    %p60 = scmp.eq.s32.totalorder %s17, 1
    %p61 = por %p59, %p60
    %p63 = scmp.ne.s32.totalorder %s48, %s62
    %p64 = scmp.eq.s32.totalorder %s17, 0
    %p65 = por %p63, %p64
    %s67 = sadd.s32 %s66, 1
    %p70 = scmp.eq.s32.totalorder %s11, 1
    %p71 = scmp.ne.s32.totalorder %s66, %s68
    %p72 = scmp.eq.s32.totalorder %s11, 0
    %p73 = por %p71, %p72
    %p74 = scmp.ne.s32.totalorder %s66, %s68
    %p75 = scmp.eq.s32.totalorder %s16, 1
    %p76 = por %p74, %p75
    %p77 = scmp.ne.s32.totalorder %s68, %s69
    %p78 = scmp.eq.s32.totalorder %s16, 0
    %p79 = por %p77, %p78
    %p80 = scmp.ne.s32.totalorder %s68, %s69
    %p81 = scmp.eq.s32.totalorder %s17, 1
    %p82 = por %p80, %p81
    %p84 = scmp.ne.s32.totalorder %s69, %s83
    %p85 = scmp.eq.s32.totalorder %s17, 0
    %p86 = por %p84, %p85
    %s88 = sadd.s32 %s87, 1
    %p91 = scmp.eq.s32.totalorder %s11, 1
    %p92 = scmp.ne.s32.totalorder %s87, %s89
    %p93 = scmp.eq.s32.totalorder %s11, 0
    %p94 = por %p92, %p93
    %p95 = scmp.ne.s32.totalorder %s87, %s89
    %p96 = scmp.eq.s32.totalorder %s16, 1
    %p97 = por %p95, %p96
    %p98 = scmp.ne.s32.totalorder %s89, %s90
    %p99 = scmp.eq.s32.totalorder %s16, 0
    %p100 = por %p98, %p99
    %p101 = scmp.ne.s32.totalorder %s89, %s90
    %p102 = scmp.eq.s32.totalorder %s17, 1
    %p103 = por %p101, %p102
    %p105 = scmp.ne.s32.totalorder %s90, %s104
    %p106 = scmp.eq.s32.totalorder %s17, 0
    %p107 = por %p105, %p106
    %s109 = sadd.s32 %s108, 1
    %p112 = scmp.eq.s32.totalorder %s11, 1
    %p113 = scmp.ne.s32.totalorder %s108, %s110
    %p114 = scmp.eq.s32.totalorder %s11, 0
    %p115 = por %p113, %p114
    %p116 = scmp.ne.s32.totalorder %s108, %s110
    %p117 = scmp.eq.s32.totalorder %s16, 1
    %p118 = por %p116, %p117
    %p119 = scmp.ne.s32.totalorder %s110, %s111
    %p120 = scmp.eq.s32.totalorder %s16, 0
    %p121 = por %p119, %p120
    %p122 = scmp.ne.s32.totalorder %s110, %s111
    %p123 = scmp.eq.s32.totalorder %s17, 1
    %p124 = por %p122, %p123
    %p126 = scmp.ne.s32.totalorder %s111, %s125
    %p127 = scmp.eq.s32.totalorder %s17, 0
    %p128 = por %p126, %p127
    %s129 = ssub.s32 %s11, %s18
    %p130 = scmp.eq.s32.totalorder %s129, 0
    %s132 = sadd.s32 %s131, 1
    %s133 = scalar_select %p130, %s131, %s132
    %p136 = pneg %p130
    %p137 = scmp.eq.s32.totalorder %s11, 1
    %p138 = por %p136, %p137
    %p139 = scmp.ne.s32.totalorder %s131, %s134
    %p140 = scmp.eq.s32.totalorder %s11, 0
    %p141 = por %p139, %p140
    %p142 = scmp.ne.s32.totalorder %s131, %s134
    %p143 = scmp.eq.s32.totalorder %s16, 1
    %p144 = por %p142, %p143
    %p145 = scmp.ne.s32.totalorder %s134, %s135
    %p146 = scmp.eq.s32.totalorder %s16, 0
    %p147 = por %p145, %p146
    %p148 = scmp.ne.s32.totalorder %s134, %s135
    %p149 = scmp.eq.s32.totalorder %s17, 1
    %p150 = por %p148, %p149
    %p152 = scmp.ne.s32.totalorder %s135, %s151
    %p153 = scmp.eq.s32.totalorder %s17, 0
    %p154 = por %p152, %p153
    %p155 = scmp.le.s32.totalorder 1, %s11
    %p156 = scmp.lt.s32.totalorder %s11, 3
    %p157 = pnand %p155, %p156
    %p158 = pneg %p157
    // Predicated region
    $region9: #{gonnet_forward.2} parent=5 // pred_check
      _
    $region10: #{gonnet_forward.2} parent=5 // pred_check_branch
      %160 = sbr.rel (%p157) target = $region12
    $region11: #{gonnet_forward.2} parent=5 // pred_region
      %s161 = ssub.s32 %s11, 1
      // Predicated region
      $region13: #{gonnet_forward.2} parent=11 // pred_check
        %p162 = pneg %p58
      $region14: #{gonnet_forward.2} parent=11 // pred_check_branch
        %164 = sbr.rel (%p162) target = $region16
      $region15: #{gonnet_forward.2} parent=11 // pred_region
        _
      $region16: #{gonnet_forward.2} parent=11 // pred_fallthru
        _
      // Predicated region
      $region17: #{gonnet_forward.2} parent=11 // pred_check
        %p165 = pneg %p79
      $region18: #{gonnet_forward.2} parent=11 // pred_check_branch
        %167 = sbr.rel (%p165) target = $region20
      $region19: #{gonnet_forward.2} parent=11 // pred_region
        _
      $region20: #{gonnet_forward.2} parent=11 // pred_fallthru
        _
      // Predicated region
      $region21: #{gonnet_forward.2} parent=11 // pred_check
        %p168 = pneg %p100
      $region22: #{gonnet_forward.2} parent=11 // pred_check_branch
        %170 = sbr.rel (%p168) target = $region24
      $region23: #{gonnet_forward.2} parent=11 // pred_region
        _
      $region24: #{gonnet_forward.2} parent=11 // pred_fallthru
        _
      // Predicated region
      $region25: #{gonnet_forward.2} parent=11 // pred_check
        %p171 = pneg %p121
      $region26: #{gonnet_forward.2} parent=11 // pred_check_branch
        %173 = sbr.rel (%p171) target = $region28
      $region27: #{gonnet_forward.2} parent=11 // pred_region
        _
      $region28: #{gonnet_forward.2} parent=11 // pred_fallthru
        _
    $region12: #{gonnet_forward.2} parent=5 // pred_fallthru
      _
    %p174 = scmp.lt.s32.totalorder %s11, 2
    // Predicated region
    $region29: #{gonnet_forward.2} parent=5 // pred_check
      %p175 = pneg %p174
    $region30: #{gonnet_forward.2} parent=5 // pred_check_branch
      %177 = sbr.rel (%p175) target = $region32
    $region31: #{gonnet_forward.2} parent=5 // pred_region
      // Predicated region
      $region33: #{gonnet_forward.2} parent=31 // pred_check
        %p178 = pneg %p31
      $region34: #{gonnet_forward.2} parent=31 // pred_check_branch
        %180 = sbr.rel (%p178) target = $region36
      $region35: #{gonnet_forward.2} parent=31 // pred_region
        %p181 = scmp.lt.s32.totalorder %s11, 1
        %s182 = scalar_select %p181, %s11, 1
        %s183 = smul.addr %s182, 8
        %s184 = smul.addr %s183, 8
        %s185 = scalar_lea.vmem %s0, %s184
      $region36: #{gonnet_forward.2} parent=31 // pred_fallthru
        _
    $region32: #{gonnet_forward.2} parent=5 // pred_fallthru
      _
    %p186 = scmp.le.s32.totalorder 1, %s11
    %p187 = scmp.lt.s32.totalorder %s11, 3
    %p188 = pnand %p186, %p187
    %p189 = pneg %p188
    // Predicated region
    $region37: #{gonnet_forward.2} parent=5 // pred_check
      _
    $region38: #{gonnet_forward.2} parent=5 // pred_check_branch
      %191 = sbr.rel (%p188) target = $region40
    $region39: #{gonnet_forward.2} parent=5 // pred_region
      %s192 = ssub.s32 %s11, 1
      %p193 = scmp.lt.s32.totalorder %s16, 1
      %s194 = scalar_select %p193, %s16, 1
      %s195 = smul.addr %s194, 8
      %s196 = smul.addr %s195, 8
      %s197 = scalar_lea.vmem %s0, %s196
      %p198 = pneg %p37
      %p199 = pneg %p34
      %p200 = pneg %p58
      %p201 = pneg %p55
      %p202 = pneg %p79
      %p203 = pneg %p76
      %p204 = pneg %p100
      %p205 = pneg %p97
      %p206 = pneg %p121
      %p207 = pneg %p118
      %p208 = pneg %p147
      %p209 = pneg %p144
      %p210 = scmp.lt.s32.totalorder %s16, 1
      %s211 = scalar_select %p210, %s16, 1
      %s212 = smul.addr %s211, 8
      %s213 = smul.addr %s212, 4
      %s214 = scalar_lea.vmem %s5, %s213
      %p215 = scmp.lt.s32.totalorder %s16, 1
      %s216 = scalar_select %p215, %s16, 1
      %s217 = smul.addr %s216, 8
      %s218 = smul.addr %s217, 8
      %s219 = scalar_lea.vmem %s0, %s218
      %p220 = scmp.lt.s32.totalorder %s16, 1
      %s221 = scalar_select %p220, %s16, 1
      %s222 = smul.addr %s221, 8
      %s223 = smul.addr %s222, 4
      %s224 = scalar_lea.vmem %s5, %s223
      %vm226 = vcmask 261120
      %227 = vst.msk [vmem:[#allocation2] sm:$0xff] %vm226, 0.0
      %vm228 = vcmask 254976
      %229 = vst.msk [vmem:[#allocation2 + $0x8] sm:$0x3] %vm228, 0.0
      %230 = vst.msk [vmem:[#allocation2 + $0x10] sm:$0xff] %vm226, 0.0
      %231 = vst.msk [vmem:[#allocation2 + $0x18] sm:$0x3] %vm228, 0.0
      %232 = vst.msk [vmem:[#allocation2 + $0x20] sm:$0xff] %vm226, 0.0
      %233 = vst.msk [vmem:[#allocation2 + $0x28] sm:$0x3] %vm228, 0.0
      %234 = vst.msk [vmem:[#allocation2 + $0x30] sm:$0xff] %vm226, 0.0
      %235 = vst.msk [vmem:[#allocation2 + $0x38] sm:$0x3] %vm228, 0.0
      %236 = vst.msk [vmem:[#allocation2 + $0x40] sm:$0xff] %vm226, 0.0
      %237 = vst.msk [vmem:[#allocation2 + $0x48] sm:$0x3] %vm228, 0.0
      %238 = vst.msk [vmem:[#allocation2 + $0x50] sm:$0xff] %vm226, 0.0
      %239 = vst.msk [vmem:[#allocation2 + $0x58] sm:$0x3] %vm228, 0.0
      %240 = vst.msk [vmem:[#allocation2 + $0x60] sm:$0xff] %vm226, 0.0
      %241 = vst.msk [vmem:[#allocation2 + $0x68] sm:$0x3] %vm228, 0.0
      %242 = vst.msk [vmem:[#allocation2 + $0x70] sm:$0xff] %vm226, 0.0
      %243 = vst.msk [vmem:[#allocation2 + $0x78] sm:$0x3] %vm228, 0.0
      %244 = vst.msk [vmem:[#allocation2 + $0x80] sm:$0xff] %vm226, 0.0
      %245 = vst.msk [vmem:[#allocation2 + $0x88] sm:$0x3] %vm228, 0.0
      %246 = vst.msk [vmem:[#allocation2 + $0x90] sm:$0xff] %vm226, 0.0
      %247 = vst.msk [vmem:[#allocation2 + $0x98] sm:$0x3] %vm228, 0.0
      %v248 = vld [vmem:[%s219] sm:$0xff]
      %v249 = vld [vmem:[%s219 + $0x8] sm:$0xff]
      %v250 = vld [vmem:[%s219 + $0x10] sm:$0xff]
      %v251 = vld [vmem:[%s219 + $0x18] sm:$0xff]
      %v252 = vld [vmem:[%s219 + $0x20] sm:$0xff]
      %v253 = vld [vmem:[%s219 + $0x28] sm:$0xff]
      %v254 = vld [vmem:[%s219 + $0x30] sm:$0xff]
      %v255 = vld [vmem:[%s219 + $0x38] sm:$0xff]
      %s256 = scalar_lea.vmem [#allocation2], 16
      %257 = vst.msk [vmem:[%s256 + $0x1] sm:$0xff] %vm226, %v248
      %258 = vst.msk [vmem:[%s256 + $0x11] sm:$0xff] %vm226, %v249
      %259 = vst.msk [vmem:[%s256 + $0x21] sm:$0xff] %vm226, %v250
      %260 = vst.msk [vmem:[%s256 + $0x31] sm:$0xff] %vm226, %v251
      %261 = vst.msk [vmem:[%s256 + $0x41] sm:$0xff] %vm226, %v252
      %262 = vst.msk [vmem:[%s256 + $0x51] sm:$0xff] %vm226, %v253
      %263 = vst.msk [vmem:[%s256 + $0x61] sm:$0xff] %vm226, %v254
      %264 = vst.msk [vmem:[%s256 + $0x71] sm:$0xff] %vm226, %v255
      %v265 = vld [vmem:[%s1] sm:$0xf]
      %v266 = vld [vmem:[%s1 + $0x4] sm:$0xf]
      %v267 = vld [vmem:[%s1 + $0x8] sm:$0xf]
      %v268 = vld [vmem:[%s1 + $0xc] sm:$0xf]
      %v269 = vld [vmem:[%s1 + $0x10] sm:$0xf]
      %v270 = vld [vmem:[%s1 + $0x14] sm:$0xf]
      %v271 = vld [vmem:[%s1 + $0x18] sm:$0xf]
      %v272 = vld [vmem:[%s1 + $0x1c] sm:$0xf]
      %v273 = vld [vmem:[%s1 + $0x20] sm:$0xf]
      %v274 = vld [vmem:[%s1 + $0x24] sm:$0xf]
      %v275 = vld [vmem:[%s1 + $0x28] sm:$0xf]
      %v276 = vld [vmem:[%s1 + $0x2c] sm:$0xf]
      %v277 = vld [vmem:[%s1 + $0x30] sm:$0xf]
      %v278 = vld [vmem:[%s1 + $0x34] sm:$0xf]
      %v279 = vld [vmem:[%s1 + $0x38] sm:$0xf]
      %v280 = vld [vmem:[%s1 + $0x3c] sm:$0xf]
      %v281 = vld [vmem:[%s1 + $0x40] sm:$0xf]
      %v282 = vld [vmem:[%s1 + $0x44] sm:$0xf]
      %v283 = vld [vmem:[%s1 + $0x48] sm:$0xf]
      %v284 = vld [vmem:[%s1 + $0x4c] sm:$0xf]
      %v285 = vld [vmem:[%s1 + $0x50] sm:$0xf]
      %v286 = vld [vmem:[%s1 + $0x54] sm:$0xf]
      %v287 = vld [vmem:[%s1 + $0x58] sm:$0xf]
      %v288 = vld [vmem:[%s1 + $0x5c] sm:$0xf]
      %v289 = vld [vmem:[%s1 + $0x60] sm:$0xf]
      %v290 = vld [vmem:[%s1 + $0x64] sm:$0xf]
      %v291 = vld [vmem:[%s1 + $0x68] sm:$0xf]
      %v292 = vld [vmem:[%s1 + $0x6c] sm:$0xf]
      %v293 = vld [vmem:[%s1 + $0x70] sm:$0xf]
      %v294 = vld [vmem:[%s1 + $0x74] sm:$0xf]
      %v295 = vld [vmem:[%s1 + $0x78] sm:$0xf]
      %v296 = vld [vmem:[%s1 + $0x7c] sm:$0xf]
      %v297 = vld [vmem:[%s1 + $0x80] sm:$0xf]
      %v298 = vld [vmem:[%s1 + $0x84] sm:$0xf]
      %v299 = vld [vmem:[%s1 + $0x88] sm:$0xf]
      %v300 = vld [vmem:[%s1 + $0x8c] sm:$0xf]
      %v301 = vld [vmem:[%s2] sm:$0x1]
      %v302 = vld [vmem:[#allocation2] sm:$0xff]
      %v303 = vld [vmem:[#allocation2 + $0x8] sm:$0x3]
      %v304 = vld [vmem:[#allocation2 + $0x10] sm:$0xff]
      %v305 = vld [vmem:[#allocation2 + $0x18] sm:$0x3]
      %v306 = vld [vmem:[#allocation2 + $0x20] sm:$0xff]
      %v307 = vld [vmem:[#allocation2 + $0x28] sm:$0x3]
      %v308 = vld [vmem:[#allocation2 + $0x30] sm:$0xff]
      %v309 = vld [vmem:[#allocation2 + $0x38] sm:$0x3]
      %v310 = vld [vmem:[#allocation2 + $0x40] sm:$0xff]
      %v311 = vld [vmem:[#allocation2 + $0x48] sm:$0x3]
      %v312 = vld [vmem:[#allocation2 + $0x50] sm:$0xff]
      %v313 = vld [vmem:[#allocation2 + $0x58] sm:$0x3]
      %v314 = vld [vmem:[#allocation2 + $0x60] sm:$0xff]
      %v315 = vld [vmem:[#allocation2 + $0x68] sm:$0x3]
      %v316 = vld [vmem:[#allocation2 + $0x70] sm:$0xff]
      %v317 = vld [vmem:[#allocation2 + $0x78] sm:$0x3]
      %v318 = vld [vmem:[#allocation2 + $0x80] sm:$0xff]
      %v319 = vld [vmem:[#allocation2 + $0x88] sm:$0x3]
      %v320 = vld [vmem:[#allocation2 + $0x90] sm:$0xff]
      %v321 = vld [vmem:[#allocation2 + $0x98] sm:$0x3]
      %v322 = vpack.c.bf16 %v302, %v302
      %v323 = vpack.c.bf16 %v304, %v304
      %v324 = vpack.c.bf16 %v306, %v306
      %v325 = vpack.c.bf16 %v308, %v308
      %v326 = vpack.c.bf16 %v310, %v310
      %v327 = vpack.c.bf16 %v312, %v312
      %v328 = vpack.c.bf16 %v314, %v314
      %v329 = vpack.c.bf16 %v316, %v316
      %vm330 = vcmask 257024
      %331 = vst.msk [vmem:[#allocation3] sm:$0xf] %vm330, %v322
      %332 = vst.msk [vmem:[#allocation3 + $0xc] sm:$0xf] %vm330, %v323
      %333 = vst.msk [vmem:[#allocation3 + $0x18] sm:$0xf] %vm330, %v324
      %334 = vst.msk [vmem:[#allocation3 + $0x24] sm:$0xf] %vm330, %v325
      %335 = vst.msk [vmem:[#allocation3 + $0x30] sm:$0xf] %vm330, %v326
      %336 = vst.msk [vmem:[#allocation3 + $0x3c] sm:$0xf] %vm330, %v327
      %337 = vst.msk [vmem:[#allocation3 + $0x48] sm:$0xf] %vm330, %v328
      %338 = vst.msk [vmem:[#allocation3 + $0x54] sm:$0xf] %vm330, %v329
      %vm355 = vcmask 1046528
      %v356 = vrot.slane %v302, 1
      %v357 = vrot.slane %v303, 1
      %v358 = vsel %vm355, %v356, %v357
      %v359 = vrot.slane %v304, 1
      %v360 = vrot.slane %v305, 1
      %v361 = vsel %vm355, %v359, %v360
      %v362 = vrot.slane %v306, 1
      %v363 = vrot.slane %v307, 1
      %v364 = vsel %vm355, %v362, %v363
      %v365 = vrot.slane %v308, 1
      %v366 = vrot.slane %v309, 1
      %v367 = vsel %vm355, %v365, %v366
      %v368 = vrot.slane %v310, 1
      %v369 = vrot.slane %v311, 1
      %v370 = vsel %vm355, %v368, %v369
      %v371 = vrot.slane %v312, 1
      %v372 = vrot.slane %v313, 1
      %v373 = vsel %vm355, %v371, %v372
      %v374 = vrot.slane %v314, 1
      %v375 = vrot.slane %v315, 1
      %v376 = vsel %vm355, %v374, %v375
      %v377 = vrot.slane %v316, 1
      %v378 = vrot.slane %v317, 1
      %v379 = vsel %vm355, %v377, %v378
      %v388 = vpack.c.bf16 %v358, %v358
      %v389 = vpack.c.bf16 %v361, %v361
      %v390 = vpack.c.bf16 %v364, %v364
      %v391 = vpack.c.bf16 %v367, %v367
      %v392 = vpack.c.bf16 %v370, %v370
      %v393 = vpack.c.bf16 %v373, %v373
      %v394 = vpack.c.bf16 %v376, %v376
      %v395 = vpack.c.bf16 %v379, %v379
      %404 = vrot.lane.b32.xlu0 %v388, 32
      %v405 = vpop.permute.xlu0 %404
      %406 = vrot.lane.b32.xlu0 %v389, 32
      %v407 = vpop.permute.xlu0 %406
      %408 = vrot.lane.b32.xlu0 %v390, 32
      %v409 = vpop.permute.xlu0 %408
      %410 = vrot.lane.b32.xlu0 %v391, 32
      %v411 = vpop.permute.xlu0 %410
      %412 = vrot.lane.b32.xlu0 %v392, 32
      %v413 = vpop.permute.xlu0 %412
      %414 = vrot.lane.b32.xlu0 %v393, 32
      %v415 = vpop.permute.xlu0 %414
      %416 = vrot.lane.b32.xlu0 %v394, 32
      %v417 = vpop.permute.xlu0 %416
      %418 = vrot.lane.b32.xlu0 %v395, 32
      %v419 = vpop.permute.xlu0 %418
      %vm428 = vcmask 519424
      %429 = vst.msk [vmem:[#allocation3] sm:$0xf] %vm428, %v405
      %430 = vst.msk [vmem:[#allocation3 + $0xc] sm:$0xf] %vm428, %v407
      %431 = vst.msk [vmem:[#allocation3 + $0x18] sm:$0xf] %vm428, %v409
      %432 = vst.msk [vmem:[#allocation3 + $0x24] sm:$0xf] %vm428, %v411
      %433 = vst.msk [vmem:[#allocation3 + $0x30] sm:$0xf] %vm428, %v413
      %434 = vst.msk [vmem:[#allocation3 + $0x3c] sm:$0xf] %vm428, %v415
      %435 = vst.msk [vmem:[#allocation3 + $0x48] sm:$0xf] %vm428, %v417
      %436 = vst.msk [vmem:[#allocation3 + $0x54] sm:$0xf] %vm428, %v419
      %vm437 = vcmask 1045504
      %v438 = vrot.slane %v302, 2
      %v439 = vrot.slane %v303, 2
      %v440 = vsel %vm437, %v438, %v439
      %v441 = vrot.slane %v304, 2
      %v442 = vrot.slane %v305, 2
      %v443 = vsel %vm437, %v441, %v442
      %v444 = vrot.slane %v306, 2
      %v445 = vrot.slane %v307, 2
      %v446 = vsel %vm437, %v444, %v445
      %v447 = vrot.slane %v308, 2
      %v448 = vrot.slane %v309, 2
      %v449 = vsel %vm437, %v447, %v448
      %v450 = vrot.slane %v310, 2
      %v451 = vrot.slane %v311, 2
      %v452 = vsel %vm437, %v450, %v451
      %v453 = vrot.slane %v312, 2
      %v454 = vrot.slane %v313, 2
      %v455 = vsel %vm437, %v453, %v454
      %v456 = vrot.slane %v314, 2
      %v457 = vrot.slane %v315, 2
      %v458 = vsel %vm437, %v456, %v457
      %v459 = vrot.slane %v316, 2
      %v460 = vrot.slane %v317, 2
      %v461 = vsel %vm437, %v459, %v460
      %v470 = vpack.c.bf16 %v440, %v440
      %v471 = vpack.c.bf16 %v443, %v443
      %v472 = vpack.c.bf16 %v446, %v446
      %v473 = vpack.c.bf16 %v449, %v449
      %v474 = vpack.c.bf16 %v452, %v452
      %v475 = vpack.c.bf16 %v455, %v455
      %v476 = vpack.c.bf16 %v458, %v458
      %v477 = vpack.c.bf16 %v461, %v461
      %486 = vrot.lane.b32.xlu0 %v470, 64
      %v487 = vpop.permute.xlu0 %486
      %488 = vrot.lane.b32.xlu0 %v471, 64
      %v489 = vpop.permute.xlu0 %488
      %490 = vrot.lane.b32.xlu0 %v472, 64
      %v491 = vpop.permute.xlu0 %490
      %492 = vrot.lane.b32.xlu0 %v473, 64
      %v493 = vpop.permute.xlu0 %492
      %494 = vrot.lane.b32.xlu0 %v474, 64
      %v495 = vpop.permute.xlu0 %494
      %496 = vrot.lane.b32.xlu0 %v475, 64
      %v497 = vpop.permute.xlu0 %496
      %498 = vrot.lane.b32.xlu0 %v476, 64
      %v499 = vpop.permute.xlu0 %498
      %500 = vrot.lane.b32.xlu0 %v477, 64
      %v501 = vpop.permute.xlu0 %500
      %vm510 = vcmask 781824
      %511 = vst.msk [vmem:[#allocation3] sm:$0xf] %vm510, %v487
      %512 = vst.msk [vmem:[#allocation3 + $0xc] sm:$0xf] %vm510, %v489
      %513 = vst.msk [vmem:[#allocation3 + $0x18] sm:$0xf] %vm510, %v491
      %514 = vst.msk [vmem:[#allocation3 + $0x24] sm:$0xf] %vm510, %v493
      %515 = vst.msk [vmem:[#allocation3 + $0x30] sm:$0xf] %vm510, %v495
      %516 = vst.msk [vmem:[#allocation3 + $0x3c] sm:$0xf] %vm510, %v497
      %517 = vst.msk [vmem:[#allocation3 + $0x48] sm:$0xf] %vm510, %v499
      %518 = vst.msk [vmem:[#allocation3 + $0x54] sm:$0xf] %vm510, %v501
      %v519 = vpack.c.bf16 %v318, %v318
      %528 = vrot.lane.b32.xlu0 %v323, 96
      %v529 = vpop.permute.xlu0 %528
      %530 = vrot.lane.b32.xlu0 %v324, 96
      %v531 = vpop.permute.xlu0 %530
      %532 = vrot.lane.b32.xlu0 %v325, 96
      %v533 = vpop.permute.xlu0 %532
      %534 = vrot.lane.b32.xlu0 %v326, 96
      %v535 = vpop.permute.xlu0 %534
      %536 = vrot.lane.b32.xlu0 %v327, 96
      %v537 = vpop.permute.xlu0 %536
      %538 = vrot.lane.b32.xlu0 %v328, 96
      %v539 = vpop.permute.xlu0 %538
      %540 = vrot.lane.b32.xlu0 %v329, 96
      %v541 = vpop.permute.xlu0 %540
      %542 = vrot.lane.b32.xlu0 %v519, 96
      %v543 = vpop.permute.xlu0 %542
      %vm552 = vcmask 1044224
      %553 = vst.msk [vmem:[#allocation3] sm:$0xf] %vm552, %v529
      %554 = vst.msk [vmem:[#allocation3 + $0xc] sm:$0xf] %vm552, %v531
      %555 = vst.msk [vmem:[#allocation3 + $0x18] sm:$0xf] %vm552, %v533
      %556 = vst.msk [vmem:[#allocation3 + $0x24] sm:$0xf] %vm552, %v535
      %557 = vst.msk [vmem:[#allocation3 + $0x30] sm:$0xf] %vm552, %v537
      %558 = vst.msk [vmem:[#allocation3 + $0x3c] sm:$0xf] %vm552, %v539
      %559 = vst.msk [vmem:[#allocation3 + $0x48] sm:$0xf] %vm552, %v541
      %560 = vst.msk [vmem:[#allocation3 + $0x54] sm:$0xf] %vm552, %v543
      %v563 = vrot.slane %v318, 1
      %v564 = vrot.slane %v319, 1
      %v565 = vsel %vm355, %v563, %v564
      %v567 = vpack.c.bf16 %v565, %v565
      %568 = vst.msk [vmem:[#allocation3 + $0x4] sm:$0xf] %vm330, %v389
      %569 = vst.msk [vmem:[#allocation3 + $0x10] sm:$0xf] %vm330, %v390
      %570 = vst.msk [vmem:[#allocation3 + $0x1c] sm:$0xf] %vm330, %v391
      %571 = vst.msk [vmem:[#allocation3 + $0x28] sm:$0xf] %vm330, %v392
      %572 = vst.msk [vmem:[#allocation3 + $0x34] sm:$0xf] %vm330, %v393
      %573 = vst.msk [vmem:[#allocation3 + $0x40] sm:$0xf] %vm330, %v394
      %574 = vst.msk [vmem:[#allocation3 + $0x4c] sm:$0xf] %vm330, %v395
      %575 = vst.msk [vmem:[#allocation3 + $0x58] sm:$0xf] %vm330, %v567
      %v576 = vrot.slane %v318, 2
      %v577 = vrot.slane %v319, 2
      %v578 = vsel %vm437, %v576, %v577
      %v580 = vpack.c.bf16 %v578, %v578
      %582 = vrot.lane.b32.xlu0 %v471, 32
      %v583 = vpop.permute.xlu0 %582
      %584 = vrot.lane.b32.xlu0 %v472, 32
      %v585 = vpop.permute.xlu0 %584
      %586 = vrot.lane.b32.xlu0 %v473, 32
      %v587 = vpop.permute.xlu0 %586
      %588 = vrot.lane.b32.xlu0 %v474, 32
      %v589 = vpop.permute.xlu0 %588
      %590 = vrot.lane.b32.xlu0 %v475, 32
      %v591 = vpop.permute.xlu0 %590
      %592 = vrot.lane.b32.xlu0 %v476, 32
      %v593 = vpop.permute.xlu0 %592
      %594 = vrot.lane.b32.xlu0 %v477, 32
      %v595 = vpop.permute.xlu0 %594
      %596 = vrot.lane.b32.xlu0 %v580, 32
      %v597 = vpop.permute.xlu0 %596
      %606 = vst.msk [vmem:[#allocation3 + $0x4] sm:$0xf] %vm428, %v583
      %607 = vst.msk [vmem:[#allocation3 + $0x10] sm:$0xf] %vm428, %v585
      %608 = vst.msk [vmem:[#allocation3 + $0x1c] sm:$0xf] %vm428, %v587
      %609 = vst.msk [vmem:[#allocation3 + $0x28] sm:$0xf] %vm428, %v589
      %610 = vst.msk [vmem:[#allocation3 + $0x34] sm:$0xf] %vm428, %v591
      %611 = vst.msk [vmem:[#allocation3 + $0x40] sm:$0xf] %vm428, %v593
      %612 = vst.msk [vmem:[#allocation3 + $0x4c] sm:$0xf] %vm428, %v595
      %613 = vst.msk [vmem:[#allocation3 + $0x58] sm:$0xf] %vm428, %v597
      %v614 = vpack.c.bf16 %v320, %v320
      %616 = vrot.lane.b32.xlu0 %v324, 64
      %v617 = vpop.permute.xlu0 %616
      %618 = vrot.lane.b32.xlu0 %v325, 64
      %v619 = vpop.permute.xlu0 %618
      %620 = vrot.lane.b32.xlu0 %v326, 64
      %v621 = vpop.permute.xlu0 %620
      %622 = vrot.lane.b32.xlu0 %v327, 64
      %v623 = vpop.permute.xlu0 %622
      %624 = vrot.lane.b32.xlu0 %v328, 64
      %v625 = vpop.permute.xlu0 %624
      %626 = vrot.lane.b32.xlu0 %v329, 64
      %v627 = vpop.permute.xlu0 %626
      %628 = vrot.lane.b32.xlu0 %v519, 64
      %v629 = vpop.permute.xlu0 %628
      %630 = vrot.lane.b32.xlu0 %v614, 64
      %v631 = vpop.permute.xlu0 %630
      %640 = vst.msk [vmem:[#allocation3 + $0x4] sm:$0xf] %vm510, %v617
      %641 = vst.msk [vmem:[#allocation3 + $0x10] sm:$0xf] %vm510, %v619
      %642 = vst.msk [vmem:[#allocation3 + $0x1c] sm:$0xf] %vm510, %v621
      %643 = vst.msk [vmem:[#allocation3 + $0x28] sm:$0xf] %vm510, %v623
      %644 = vst.msk [vmem:[#allocation3 + $0x34] sm:$0xf] %vm510, %v625
      %645 = vst.msk [vmem:[#allocation3 + $0x40] sm:$0xf] %vm510, %v627
      %646 = vst.msk [vmem:[#allocation3 + $0x4c] sm:$0xf] %vm510, %v629
      %647 = vst.msk [vmem:[#allocation3 + $0x58] sm:$0xf] %vm510, %v631
      %v650 = vrot.slane %v320, 1
      %v651 = vrot.slane %v321, 1
      %v652 = vsel %vm355, %v650, %v651
      %v654 = vpack.c.bf16 %v652, %v652
      %657 = vrot.lane.b32.xlu0 %v390, 96
      %v658 = vpop.permute.xlu0 %657
      %659 = vrot.lane.b32.xlu0 %v391, 96
      %v660 = vpop.permute.xlu0 %659
      %661 = vrot.lane.b32.xlu0 %v392, 96
      %v662 = vpop.permute.xlu0 %661
      %663 = vrot.lane.b32.xlu0 %v393, 96
      %v664 = vpop.permute.xlu0 %663
      %665 = vrot.lane.b32.xlu0 %v394, 96
      %v666 = vpop.permute.xlu0 %665
      %667 = vrot.lane.b32.xlu0 %v395, 96
      %v668 = vpop.permute.xlu0 %667
      %669 = vrot.lane.b32.xlu0 %v567, 96
      %v670 = vpop.permute.xlu0 %669
      %671 = vrot.lane.b32.xlu0 %v654, 96
      %v672 = vpop.permute.xlu0 %671
      %681 = vst.msk [vmem:[#allocation3 + $0x4] sm:$0xf] %vm552, %v658
      %682 = vst.msk [vmem:[#allocation3 + $0x10] sm:$0xf] %vm552, %v660
      %683 = vst.msk [vmem:[#allocation3 + $0x1c] sm:$0xf] %vm552, %v662
      %684 = vst.msk [vmem:[#allocation3 + $0x28] sm:$0xf] %vm552, %v664
      %685 = vst.msk [vmem:[#allocation3 + $0x34] sm:$0xf] %vm552, %v666
      %686 = vst.msk [vmem:[#allocation3 + $0x40] sm:$0xf] %vm552, %v668
      %687 = vst.msk [vmem:[#allocation3 + $0x4c] sm:$0xf] %vm552, %v670
      %688 = vst.msk [vmem:[#allocation3 + $0x58] sm:$0xf] %vm552, %v672
      %v689 = vrot.slane %v320, 2
      %v690 = vrot.slane %v321, 2
      %v691 = vsel %vm437, %v689, %v690
      %v693 = vpack.c.bf16 %v691, %v691
      %694 = vst.msk [vmem:[#allocation3 + $0x8] sm:$0xf] %vm330, %v472
      %695 = vst.msk [vmem:[#allocation3 + $0x14] sm:$0xf] %vm330, %v473
      %696 = vst.msk [vmem:[#allocation3 + $0x20] sm:$0xf] %vm330, %v474
      %697 = vst.msk [vmem:[#allocation3 + $0x2c] sm:$0xf] %vm330, %v475
      %698 = vst.msk [vmem:[#allocation3 + $0x38] sm:$0xf] %vm330, %v476
      %699 = vst.msk [vmem:[#allocation3 + $0x44] sm:$0xf] %vm330, %v477
      %700 = vst.msk [vmem:[#allocation3 + $0x50] sm:$0xf] %vm330, %v580
      %701 = vst.msk [vmem:[#allocation3 + $0x5c] sm:$0xf] %vm330, %v693
      %v702 = vld [vmem:[#allocation3] sm:$0xff]
      %v703 = vld [vmem:[#allocation3 + $0x8] sm:$0xf]
      %v704 = vld [vmem:[#allocation3 + $0xc] sm:$0xff]
      %v705 = vld [vmem:[#allocation3 + $0x14] sm:$0xf]
      %v706 = vld [vmem:[#allocation3 + $0x18] sm:$0xff]
      %v707 = vld [vmem:[#allocation3 + $0x20] sm:$0xf]
      %v708 = vld [vmem:[#allocation3 + $0x24] sm:$0xff]
      %v709 = vld [vmem:[#allocation3 + $0x2c] sm:$0xf]
      %v710 = vld [vmem:[#allocation3 + $0x30] sm:$0xff]
      %v711 = vld [vmem:[#allocation3 + $0x38] sm:$0xf]
      %v712 = vld [vmem:[#allocation3 + $0x3c] sm:$0xff]
      %v713 = vld [vmem:[#allocation3 + $0x44] sm:$0xf]
      %v714 = vld [vmem:[#allocation3 + $0x48] sm:$0xff]
      %v715 = vld [vmem:[#allocation3 + $0x50] sm:$0xf]
      %v716 = vld [vmem:[#allocation3 + $0x54] sm:$0xff]
      %v717 = vld [vmem:[#allocation3 + $0x5c] sm:$0xf]
      %v718 = vperm.slane %v301, 0
      %v735 = vunpack.c.l.b16 %v702
      %v736 = vunpack.c.h.b16 %v702
      %v737 = vunpack.c.l.b16 %v703
      %v738 = vunpack.c.l.b16 %v704
      %v739 = vunpack.c.h.b16 %v704
      %v740 = vunpack.c.l.b16 %v705
      %v741 = vunpack.c.l.b16 %v706
      %v742 = vunpack.c.h.b16 %v706
      %v743 = vunpack.c.l.b16 %v707
      %v744 = vunpack.c.l.b16 %v708
      %v745 = vunpack.c.h.b16 %v708
      %v746 = vunpack.c.l.b16 %v709
      %v747 = vunpack.c.l.b16 %v710
      %v748 = vunpack.c.h.b16 %v710
      %v749 = vunpack.c.l.b16 %v711
      %v750 = vunpack.c.l.b16 %v712
      %v751 = vunpack.c.h.b16 %v712
      %v752 = vunpack.c.l.b16 %v713
      %v753 = vunpack.c.l.b16 %v714
      %v754 = vunpack.c.h.b16 %v714
      %v755 = vunpack.c.l.b16 %v715
      %v756 = vunpack.c.l.b16 %v716
      %v757 = vunpack.c.h.b16 %v716
      %v758 = vunpack.c.l.b16 %v717
      %v759 = vpack.c.b16 %v738, %v735
      %v760 = vpack.c.b16 %v739, %v736
      %v761 = vpack.c.b16 %v740, %v737
      %v762 = vpack.c.b16 %v744, %v741
      %v763 = vpack.c.b16 %v745, %v742
      %v764 = vpack.c.b16 %v746, %v743
      %v765 = vpack.c.b16 %v750, %v747
      %v766 = vpack.c.b16 %v751, %v748
      %v767 = vpack.c.b16 %v752, %v749
      %v768 = vpack.c.b16 %v756, %v753
      %v769 = vpack.c.b16 %v757, %v754
      %v770 = vpack.c.b16 %v758, %v755
      %v815 = vunpack.c.l.b16 %v265
      %v816 = vunpack.c.l.b16 %v266
      %v817 = vunpack.c.l.b16 %v267
      %v818 = vunpack.c.l.b16 %v268
      %v819 = vunpack.c.l.b16 %v269
      %v820 = vunpack.c.l.b16 %v270
      %v821 = vunpack.c.l.b16 %v271
      %v822 = vunpack.c.l.b16 %v272
      %v823 = vunpack.c.l.b16 %v273
      %v824 = vunpack.c.l.b16 %v274
      %v825 = vunpack.c.l.b16 %v275
      %v826 = vunpack.c.l.b16 %v276
      %v827 = vunpack.c.l.b16 %v277
      %v828 = vunpack.c.l.b16 %v278
      %v829 = vunpack.c.l.b16 %v279
      %v830 = vunpack.c.l.b16 %v280
      %v831 = vunpack.c.l.b16 %v281
      %v832 = vunpack.c.l.b16 %v282
      %v833 = vunpack.c.l.b16 %v283
      %v834 = vunpack.c.l.b16 %v284
      %v835 = vunpack.c.l.b16 %v285
      %v836 = vunpack.c.l.b16 %v286
      %v837 = vunpack.c.l.b16 %v287
      %v838 = vunpack.c.l.b16 %v288
      %v839 = vunpack.c.l.b16 %v289
      %v840 = vunpack.c.l.b16 %v290
      %v841 = vunpack.c.l.b16 %v291
      %v842 = vunpack.c.l.b16 %v292
      %v843 = vunpack.c.l.b16 %v293
      %v844 = vunpack.c.l.b16 %v294
      %v845 = vunpack.c.l.b16 %v295
      %v846 = vunpack.c.l.b16 %v296
      %v847 = vunpack.c.l.b16 %v297
      %v848 = vunpack.c.l.b16 %v298
      %v849 = vunpack.c.l.b16 %v299
      %v850 = vunpack.c.l.b16 %v300
      %v851 = vpack.c.b16 %v816, %v815
      %v852 = vpack.c.b16 %v818, %v817
      %v853 = vpack.c.b16 %v820, %v819
      %v854 = vpack.c.b16 %v822, %v821
      %v855 = vpack.c.b16 %v824, %v823
      %v856 = vpack.c.b16 %v826, %v825
      %v857 = vpack.c.b16 %v828, %v827
      %v858 = vpack.c.b16 %v830, %v829
      %v859 = vpack.c.b16 %v832, %v831
      %v860 = vpack.c.b16 %v834, %v833
      %v861 = vpack.c.b16 %v836, %v835
      %v862 = vpack.c.b16 %v838, %v837
      %v863 = vpack.c.b16 %v840, %v839
      %v864 = vpack.c.b16 %v842, %v841
      %v865 = vpack.c.b16 %v844, %v843
      %v866 = vpack.c.b16 %v846, %v845
      %v867 = vpack.c.b16 %v848, %v847
      %v868 = vpack.c.b16 %v850, %v849
      %v888 = vsel %vm226, %v761, 0
      %v891 = vsel %vm226, %v764, 0
      %v894 = vsel %vm226, %v767, 0
      %v897 = vsel %vm226, %v770, 0
      %899 = vmatpush.bf16.msra.mxu0 %v858
      %900 = vmatpush.bf16.msra.mxu0 %v857
      %901 = vmatpush.bf16.msra.mxu0 %v856
      %902 = vmatpush.bf16.msra.mxu0 %v855
      %903 = vmatpush.bf16.msra.mxu0 %v854
      %904 = vmatpush.bf16.msra.mxu0 %v853
      %905 = vmatpush.bf16.msra.mxu0 %v852
      %906 = vmatpush.bf16.msra.mxu0 %v851
      %907 = vmatmul.bf16.gmra.mxu0 %v759
      %v908 = vpop.f32.mrf.mxu0
      %v909 = vadd.f32 %v718, %v908
      %v910 = vpop.f32.mrf.mxu0
      %v911 = vadd.f32 %v718, %v910
      %912 = vmatmul.bf16.gmra.mxu0 %v762
      %v913 = vpop.f32.mrf.mxu0
      %v914 = vadd.f32 %v718, %v913
      %v915 = vpop.f32.mrf.mxu0
      %v916 = vadd.f32 %v718, %v915
      %917 = vmatmul.bf16.gmra.mxu0 %v765
      %v918 = vpop.f32.mrf.mxu0
      %v919 = vadd.f32 %v718, %v918
      %v920 = vpop.f32.mrf.mxu0
      %v921 = vadd.f32 %v718, %v920
      %922 = vmatmul.bf16.gmra.mxu0 %v768
      %v923 = vpop.f32.mrf.mxu0
      %v924 = vadd.f32 %v718, %v923
      %v925 = vpop.f32.mrf.mxu0
      %v926 = vadd.f32 %v718, %v925
      %927 = vdwg.mxu0
      %928 = vmatpush.bf16.msra.mxu0 %v866
      %929 = vmatpush.bf16.msra.mxu0 %v865
      %930 = vmatpush.bf16.msra.mxu0 %v864
      %931 = vmatpush.bf16.msra.mxu0 %v863
      %932 = vmatpush.bf16.msra.mxu0 %v862
      %933 = vmatpush.bf16.msra.mxu0 %v861
      %934 = vmatpush.bf16.msra.mxu0 %v860
      %935 = vmatpush.bf16.msra.mxu0 %v859
      %936 = vmatmul.bf16.gmra.mxu0 %v760
      %v937 = vpop.f32.mrf.mxu0
      %v938 = vadd.f32 %v909, %v937
      %v939 = vpop.f32.mrf.mxu0
      %v940 = vadd.f32 %v911, %v939
      %941 = vmatmul.bf16.gmra.mxu0 %v763
      %v942 = vpop.f32.mrf.mxu0
      %v943 = vadd.f32 %v914, %v942
      %v944 = vpop.f32.mrf.mxu0
      %v945 = vadd.f32 %v916, %v944
      %946 = vmatmul.bf16.gmra.mxu0 %v766
      %v947 = vpop.f32.mrf.mxu0
      %v948 = vadd.f32 %v919, %v947
      %v949 = vpop.f32.mrf.mxu0
      %v950 = vadd.f32 %v921, %v949
      %951 = vmatmul.bf16.gmra.mxu0 %v769
      %v952 = vpop.f32.mrf.mxu0
      %v953 = vadd.f32 %v924, %v952
      %v954 = vpop.f32.mrf.mxu0
      %v955 = vadd.f32 %v926, %v954
      %956 = vdwg.mxu0
      %957 = vmatpush.bf16.msra.mxu0 0
      %958 = vmatpush.bf16.msra.mxu0 0
      %959 = vmatpush.bf16.msra.mxu0 0
      %960 = vmatpush.bf16.msra.mxu0 0
      %961 = vmatpush.bf16.msra.mxu0 0
      %962 = vmatpush.bf16.msra.mxu0 0
      %963 = vmatpush.bf16.msra.mxu0 %v868
      %964 = vmatpush.bf16.msra.mxu0 %v867
      %965 = vmatmul.bf16.gmra.mxu0 %v888
      %v966 = vpop.f32.mrf.mxu0
      %v967 = vadd.f32 %v938, %v966
      %v968 = vpop.f32.mrf.mxu0
      %v969 = vadd.f32 %v940, %v968
      %970 = vmatmul.bf16.gmra.mxu0 %v891
      %v971 = vpop.f32.mrf.mxu0
      %v972 = vadd.f32 %v943, %v971
      %v973 = vpop.f32.mrf.mxu0
      %v974 = vadd.f32 %v945, %v973
      %975 = vmatmul.bf16.gmra.mxu0 %v894
      %v976 = vpop.f32.mrf.mxu0
      %v977 = vadd.f32 %v948, %v976
      %v978 = vpop.f32.mrf.mxu0
      %v979 = vadd.f32 %v950, %v978
      %980 = vmatmul.bf16.gmra.mxu0 %v897
      %v981 = vpop.f32.mrf.mxu0
      %v982 = vadd.f32 %v953, %v981
      %v983 = vpop.f32.mrf.mxu0
      %v984 = vadd.f32 %v955, %v983
      %985 = vdwg.mxu0
      %v986 = vmax.f32 %v967, 0.0
      %v987 = vmax.f32 %v969, 0.0
      %v988 = vmax.f32 %v972, 0.0
      %v989 = vmax.f32 %v974, 0.0
      %v990 = vmax.f32 %v977, 0.0
      %v991 = vmax.f32 %v979, 0.0
      %v992 = vmax.f32 %v982, 0.0
      %v993 = vmax.f32 %v984, 0.0
      %994 = vst.msk [vmem:[%s256 + $0x1] sm:$0xff] %vm226, %v986
      %995 = vst.msk [vmem:[%s256 + $0x11] sm:$0xff] %vm226, %v987
      %996 = vst.msk [vmem:[%s256 + $0x21] sm:$0xff] %vm226, %v988
      %997 = vst.msk [vmem:[%s256 + $0x31] sm:$0xff] %vm226, %v989
      %998 = vst.msk [vmem:[%s256 + $0x41] sm:$0xff] %vm226, %v990
      %999 = vst.msk [vmem:[%s256 + $0x51] sm:$0xff] %vm226, %v991
      %1000 = vst.msk [vmem:[%s256 + $0x61] sm:$0xff] %vm226, %v992
      %1001 = vst.msk [vmem:[%s256 + $0x71] sm:$0xff] %vm226, %v993
      %s1002 = scalar_lea.vmem %s1, 144
      %v1003 = vld [vmem:[%s1002] sm:$0xf]
      %v1004 = vld [vmem:[%s1002 + $0x4] sm:$0xf]
      %v1005 = vld [vmem:[%s1002 + $0x8] sm:$0xf]
      %v1006 = vld [vmem:[%s1002 + $0xc] sm:$0xf]
      %v1007 = vld [vmem:[%s1002 + $0x10] sm:$0xf]
      %v1008 = vld [vmem:[%s1002 + $0x14] sm:$0xf]
      %v1009 = vld [vmem:[%s1002 + $0x18] sm:$0xf]
      %v1010 = vld [vmem:[%s1002 + $0x1c] sm:$0xf]
      %v1011 = vld [vmem:[%s1002 + $0x20] sm:$0xf]
      %v1012 = vld [vmem:[%s1002 + $0x24] sm:$0xf]
      %v1013 = vld [vmem:[%s1002 + $0x28] sm:$0xf]
      %v1014 = vld [vmem:[%s1002 + $0x2c] sm:$0xf]
      %v1015 = vld [vmem:[%s1002 + $0x30] sm:$0xf]
      %v1016 = vld [vmem:[%s1002 + $0x34] sm:$0xf]
      %v1017 = vld [vmem:[%s1002 + $0x38] sm:$0xf]
      %v1018 = vld [vmem:[%s1002 + $0x3c] sm:$0xf]
      %v1019 = vld [vmem:[%s1002 + $0x40] sm:$0xf]
      %v1020 = vld [vmem:[%s1002 + $0x44] sm:$0xf]
      %v1021 = vld [vmem:[%s1002 + $0x48] sm:$0xf]
      %v1022 = vld [vmem:[%s1002 + $0x4c] sm:$0xf]
      %v1023 = vld [vmem:[%s1002 + $0x50] sm:$0xf]
      %v1024 = vld [vmem:[%s1002 + $0x54] sm:$0xf]
      %v1025 = vld [vmem:[%s1002 + $0x58] sm:$0xf]
      %v1026 = vld [vmem:[%s1002 + $0x5c] sm:$0xf]
      %v1027 = vld [vmem:[%s1002 + $0x60] sm:$0xf]
      %v1028 = vld [vmem:[%s1002 + $0x64] sm:$0xf]
      %v1029 = vld [vmem:[%s1002 + $0x68] sm:$0xf]
      %v1030 = vld [vmem:[%s1002 + $0x6c] sm:$0xf]
      %v1031 = vld [vmem:[%s1002 + $0x70] sm:$0xf]
      %v1032 = vld [vmem:[%s1002 + $0x74] sm:$0xf]
      %v1033 = vld [vmem:[%s1002 + $0x78] sm:$0xf]
      %v1034 = vld [vmem:[%s1002 + $0x7c] sm:$0xf]
      %v1035 = vld [vmem:[%s1002 + $0x80] sm:$0xf]
      %v1036 = vld [vmem:[%s1002 + $0x84] sm:$0xf]
      %v1037 = vld [vmem:[%s1002 + $0x88] sm:$0xf]
      %v1038 = vld [vmem:[%s1002 + $0x8c] sm:$0xf]
      %v1039 = vld [vmem:[%s2 + $0x1] sm:$0x1]
      %v1040 = vld [vmem:[#allocation2] sm:$0xff]
      %v1041 = vld [vmem:[#allocation2 + $0x8] sm:$0x3]
      %v1042 = vld [vmem:[#allocation2 + $0x10] sm:$0xff]
      %v1043 = vld [vmem:[#allocation2 + $0x18] sm:$0x3]
      %v1044 = vld [vmem:[#allocation2 + $0x20] sm:$0xff]
      %v1045 = vld [vmem:[#allocation2 + $0x28] sm:$0x3]
      %v1046 = vld [vmem:[#allocation2 + $0x30] sm:$0xff]
      %v1047 = vld [vmem:[#allocation2 + $0x38] sm:$0x3]
      %v1048 = vld [vmem:[#allocation2 + $0x40] sm:$0xff]
      %v1049 = vld [vmem:[#allocation2 + $0x48] sm:$0x3]
      %v1050 = vld [vmem:[#allocation2 + $0x50] sm:$0xff]
      %v1051 = vld [vmem:[#allocation2 + $0x58] sm:$0x3]
      %v1052 = vld [vmem:[#allocation2 + $0x60] sm:$0xff]
      %v1053 = vld [vmem:[#allocation2 + $0x68] sm:$0x3]
      %v1054 = vld [vmem:[#allocation2 + $0x70] sm:$0xff]
      %v1055 = vld [vmem:[#allocation2 + $0x78] sm:$0x3]
      %v1056 = vld [vmem:[#allocation2 + $0x80] sm:$0xff]
      %v1057 = vld [vmem:[#allocation2 + $0x88] sm:$0x3]
      %v1058 = vld [vmem:[#allocation2 + $0x90] sm:$0xff]
      %v1059 = vld [vmem:[#allocation2 + $0x98] sm:$0x3]
      %v1060 = vpack.c.bf16 %v1040, %v1040
      %v1061 = vpack.c.bf16 %v1042, %v1042
      %v1062 = vpack.c.bf16 %v1044, %v1044
      %v1063 = vpack.c.bf16 %v1046, %v1046
      %v1064 = vpack.c.bf16 %v1048, %v1048
      %v1065 = vpack.c.bf16 %v1050, %v1050
      %v1066 = vpack.c.bf16 %v1052, %v1052
      %v1067 = vpack.c.bf16 %v1054, %v1054
      %1068 = vst.msk [vmem:[#allocation3] sm:$0xf] %vm330, %v1060
      %1069 = vst.msk [vmem:[#allocation3 + $0xc] sm:$0xf] %vm330, %v1061
      %1070 = vst.msk [vmem:[#allocation3 + $0x18] sm:$0xf] %vm330, %v1062
      %1071 = vst.msk [vmem:[#allocation3 + $0x24] sm:$0xf] %vm330, %v1063
      %1072 = vst.msk [vmem:[#allocation3 + $0x30] sm:$0xf] %vm330, %v1064
      %1073 = vst.msk [vmem:[#allocation3 + $0x3c] sm:$0xf] %vm330, %v1065
      %1074 = vst.msk [vmem:[#allocation3 + $0x48] sm:$0xf] %vm330, %v1066
      %1075 = vst.msk [vmem:[#allocation3 + $0x54] sm:$0xf] %vm330, %v1067
      %v1092 = vrot.slane %v1040, 1
      %v1093 = vrot.slane %v1041, 1
      %v1094 = vsel %vm355, %v1092, %v1093
      %v1095 = vrot.slane %v1042, 1
      %v1096 = vrot.slane %v1043, 1
      %v1097 = vsel %vm355, %v1095, %v1096
      %v1098 = vrot.slane %v1044, 1
      %v1099 = vrot.slane %v1045, 1
      %v1100 = vsel %vm355, %v1098, %v1099
      %v1101 = vrot.slane %v1046, 1
      %v1102 = vrot.slane %v1047, 1
      %v1103 = vsel %vm355, %v1101, %v1102
      %v1104 = vrot.slane %v1048, 1
      %v1105 = vrot.slane %v1049, 1
      %v1106 = vsel %vm355, %v1104, %v1105
      %v1107 = vrot.slane %v1050, 1
      %v1108 = vrot.slane %v1051, 1
      %v1109 = vsel %vm355, %v1107, %v1108
      %v1110 = vrot.slane %v1052, 1
      %v1111 = vrot.slane %v1053, 1
      %v1112 = vsel %vm355, %v1110, %v1111
      %v1113 = vrot.slane %v1054, 1
      %v1114 = vrot.slane %v1055, 1
      %v1115 = vsel %vm355, %v1113, %v1114
      %v1124 = vpack.c.bf16 %v1094, %v1094
      %v1125 = vpack.c.bf16 %v1097, %v1097
      %v1126 = vpack.c.bf16 %v1100, %v1100
      %v1127 = vpack.c.bf16 %v1103, %v1103
      %v1128 = vpack.c.bf16 %v1106, %v1106
      %v1129 = vpack.c.bf16 %v1109, %v1109
      %v1130 = vpack.c.bf16 %v1112, %v1112
      %v1131 = vpack.c.bf16 %v1115, %v1115
      %1140 = vrot.lane.b32.xlu0 %v1124, 32
      %v1141 = vpop.permute.xlu0 %1140
      %1142 = vrot.lane.b32.xlu0 %v1125, 32
      %v1143 = vpop.permute.xlu0 %1142
      %1144 = vrot.lane.b32.xlu0 %v1126, 32
      %v1145 = vpop.permute.xlu0 %1144
      %1146 = vrot.lane.b32.xlu0 %v1127, 32
      %v1147 = vpop.permute.xlu0 %1146
      %1148 = vrot.lane.b32.xlu0 %v1128, 32
      %v1149 = vpop.permute.xlu0 %1148
      %1150 = vrot.lane.b32.xlu0 %v1129, 32
      %v1151 = vpop.permute.xlu0 %1150
      %1152 = vrot.lane.b32.xlu0 %v1130, 32
      %v1153 = vpop.permute.xlu0 %1152
      %1154 = vrot.lane.b32.xlu0 %v1131, 32
      %v1155 = vpop.permute.xlu0 %1154
      %1164 = vst.msk [vmem:[#allocation3] sm:$0xf] %vm428, %v1141
      %1165 = vst.msk [vmem:[#allocation3 + $0xc] sm:$0xf] %vm428, %v1143
      %1166 = vst.msk [vmem:[#allocation3 + $0x18] sm:$0xf] %vm428, %v1145
      %1167 = vst.msk [vmem:[#allocation3 + $0x24] sm:$0xf] %vm428, %v1147
      %1168 = vst.msk [vmem:[#allocation3 + $0x30] sm:$0xf] %vm428, %v1149
      %1169 = vst.msk [vmem:[#allocation3 + $0x3c] sm:$0xf] %vm428, %v1151
      %1170 = vst.msk [vmem:[#allocation3 + $0x48] sm:$0xf] %vm428, %v1153
      %1171 = vst.msk [vmem:[#allocation3 + $0x54] sm:$0xf] %vm428, %v1155
      %v1172 = vrot.slane %v1040, 2
      %v1173 = vrot.slane %v1041, 2
      %v1174 = vsel %vm437, %v1172, %v1173
      %v1175 = vrot.slane %v1042, 2
      %v1176 = vrot.slane %v1043, 2
      %v1177 = vsel %vm437, %v1175, %v1176
      %v1178 = vrot.slane %v1044, 2
      %v1179 = vrot.slane %v1045, 2
      %v1180 = vsel %vm437, %v1178, %v1179
      %v1181 = vrot.slane %v1046, 2
      %v1182 = vrot.slane %v1047, 2
      %v1183 = vsel %vm437, %v1181, %v1182
      %v1184 = vrot.slane %v1048, 2
      %v1185 = vrot.slane %v1049, 2
      %v1186 = vsel %vm437, %v1184, %v1185
      %v1187 = vrot.slane %v1050, 2
      %v1188 = vrot.slane %v1051, 2
      %v1189 = vsel %vm437, %v1187, %v1188
      %v1190 = vrot.slane %v1052, 2
      %v1191 = vrot.slane %v1053, 2
      %v1192 = vsel %vm437, %v1190, %v1191
      %v1193 = vrot.slane %v1054, 2
      %v1194 = vrot.slane %v1055, 2
      %v1195 = vsel %vm437, %v1193, %v1194
      %v1204 = vpack.c.bf16 %v1174, %v1174
      %v1205 = vpack.c.bf16 %v1177, %v1177
      %v1206 = vpack.c.bf16 %v1180, %v1180
      %v1207 = vpack.c.bf16 %v1183, %v1183
      %v1208 = vpack.c.bf16 %v1186, %v1186
      %v1209 = vpack.c.bf16 %v1189, %v1189
      %v1210 = vpack.c.bf16 %v1192, %v1192
      %v1211 = vpack.c.bf16 %v1195, %v1195
      %1220 = vrot.lane.b32.xlu0 %v1204, 64
      %v1221 = vpop.permute.xlu0 %1220
      %1222 = vrot.lane.b32.xlu0 %v1205, 64
      %v1223 = vpop.permute.xlu0 %1222
      %1224 = vrot.lane.b32.xlu0 %v1206, 64
      %v1225 = vpop.permute.xlu0 %1224
      %1226 = vrot.lane.b32.xlu0 %v1207, 64
      %v1227 = vpop.permute.xlu0 %1226
      %1228 = vrot.lane.b32.xlu0 %v1208, 64
      %v1229 = vpop.permute.xlu0 %1228
      %1230 = vrot.lane.b32.xlu0 %v1209, 64
      %v1231 = vpop.permute.xlu0 %1230
      %1232 = vrot.lane.b32.xlu0 %v1210, 64
      %v1233 = vpop.permute.xlu0 %1232
      %1234 = vrot.lane.b32.xlu0 %v1211, 64
      %v1235 = vpop.permute.xlu0 %1234
      %1244 = vst.msk [vmem:[#allocation3] sm:$0xf] %vm510, %v1221
      %1245 = vst.msk [vmem:[#allocation3 + $0xc] sm:$0xf] %vm510, %v1223
      %1246 = vst.msk [vmem:[#allocation3 + $0x18] sm:$0xf] %vm510, %v1225
      %1247 = vst.msk [vmem:[#allocation3 + $0x24] sm:$0xf] %vm510, %v1227
      %1248 = vst.msk [vmem:[#allocation3 + $0x30] sm:$0xf] %vm510, %v1229
      %1249 = vst.msk [vmem:[#allocation3 + $0x3c] sm:$0xf] %vm510, %v1231
      %1250 = vst.msk [vmem:[#allocation3 + $0x48] sm:$0xf] %vm510, %v1233
      %1251 = vst.msk [vmem:[#allocation3 + $0x54] sm:$0xf] %vm510, %v1235
      %v1252 = vpack.c.bf16 %v1056, %v1056
      %1261 = vrot.lane.b32.xlu0 %v1061, 96
      %v1262 = vpop.permute.xlu0 %1261
      %1263 = vrot.lane.b32.xlu0 %v1062, 96
      %v1264 = vpop.permute.xlu0 %1263
      %1265 = vrot.lane.b32.xlu0 %v1063, 96
      %v1266 = vpop.permute.xlu0 %1265
      %1267 = vrot.lane.b32.xlu0 %v1064, 96
      %v1268 = vpop.permute.xlu0 %1267
      %1269 = vrot.lane.b32.xlu0 %v1065, 96
      %v1270 = vpop.permute.xlu0 %1269
      %1271 = vrot.lane.b32.xlu0 %v1066, 96
      %v1272 = vpop.permute.xlu0 %1271
      %1273 = vrot.lane.b32.xlu0 %v1067, 96
      %v1274 = vpop.permute.xlu0 %1273
      %1275 = vrot.lane.b32.xlu0 %v1252, 96
      %v1276 = vpop.permute.xlu0 %1275
      %1285 = vst.msk [vmem:[#allocation3] sm:$0xf] %vm552, %v1262
      %1286 = vst.msk [vmem:[#allocation3 + $0xc] sm:$0xf] %vm552, %v1264
      %1287 = vst.msk [vmem:[#allocation3 + $0x18] sm:$0xf] %vm552, %v1266
      %1288 = vst.msk [vmem:[#allocation3 + $0x24] sm:$0xf] %vm552, %v1268
      %1289 = vst.msk [vmem:[#allocation3 + $0x30] sm:$0xf] %vm552, %v1270
      %1290 = vst.msk [vmem:[#allocation3 + $0x3c] sm:$0xf] %vm552, %v1272
      %1291 = vst.msk [vmem:[#allocation3 + $0x48] sm:$0xf] %vm552, %v1274
      %1292 = vst.msk [vmem:[#allocation3 + $0x54] sm:$0xf] %vm552, %v1276
      %v1295 = vrot.slane %v1056, 1
      %v1296 = vrot.slane %v1057, 1
      %v1297 = vsel %vm355, %v1295, %v1296
      %v1299 = vpack.c.bf16 %v1297, %v1297
      %1300 = vst.msk [vmem:[#allocation3 + $0x4] sm:$0xf] %vm330, %v1125
      %1301 = vst.msk [vmem:[#allocation3 + $0x10] sm:$0xf] %vm330, %v1126
      %1302 = vst.msk [vmem:[#allocation3 + $0x1c] sm:$0xf] %vm330, %v1127
      %1303 = vst.msk [vmem:[#allocation3 + $0x28] sm:$0xf] %vm330, %v1128
      %1304 = vst.msk [vmem:[#allocation3 + $0x34] sm:$0xf] %vm330, %v1129
      %1305 = vst.msk [vmem:[#allocation3 + $0x40] sm:$0xf] %vm330, %v1130
      %1306 = vst.msk [vmem:[#allocation3 + $0x4c] sm:$0xf] %vm330, %v1131
      %1307 = vst.msk [vmem:[#allocation3 + $0x58] sm:$0xf] %vm330, %v1299
      %v1308 = vrot.slane %v1056, 2
      %v1309 = vrot.slane %v1057, 2
      %v1310 = vsel %vm437, %v1308, %v1309
      %v1312 = vpack.c.bf16 %v1310, %v1310
      %1314 = vrot.lane.b32.xlu0 %v1205, 32
      %v1315 = vpop.permute.xlu0 %1314
      %1316 = vrot.lane.b32.xlu0 %v1206, 32
      %v1317 = vpop.permute.xlu0 %1316
      %1318 = vrot.lane.b32.xlu0 %v1207, 32
      %v1319 = vpop.permute.xlu0 %1318
      %1320 = vrot.lane.b32.xlu0 %v1208, 32
      %v1321 = vpop.permute.xlu0 %1320
      %1322 = vrot.lane.b32.xlu0 %v1209, 32
      %v1323 = vpop.permute.xlu0 %1322
      %1324 = vrot.lane.b32.xlu0 %v1210, 32
      %v1325 = vpop.permute.xlu0 %1324
      %1326 = vrot.lane.b32.xlu0 %v1211, 32
      %v1327 = vpop.permute.xlu0 %1326
      %1328 = vrot.lane.b32.xlu0 %v1312, 32
      %v1329 = vpop.permute.xlu0 %1328
      %1338 = vst.msk [vmem:[#allocation3 + $0x4] sm:$0xf] %vm428, %v1315
      %1339 = vst.msk [vmem:[#allocation3 + $0x10] sm:$0xf] %vm428, %v1317
      %1340 = vst.msk [vmem:[#allocation3 + $0x1c] sm:$0xf] %vm428, %v1319
      %1341 = vst.msk [vmem:[#allocation3 + $0x28] sm:$0xf] %vm428, %v1321
      %1342 = vst.msk [vmem:[#allocation3 + $0x34] sm:$0xf] %vm428, %v1323
      %1343 = vst.msk [vmem:[#allocation3 + $0x40] sm:$0xf] %vm428, %v1325
      %1344 = vst.msk [vmem:[#allocation3 + $0x4c] sm:$0xf] %vm428, %v1327
      %1345 = vst.msk [vmem:[#allocation3 + $0x58] sm:$0xf] %vm428, %v1329
      %v1346 = vpack.c.bf16 %v1058, %v1058
      %1348 = vrot.lane.b32.xlu0 %v1062, 64
      %v1349 = vpop.permute.xlu0 %1348
      %1350 = vrot.lane.b32.xlu0 %v1063, 64
      %v1351 = vpop.permute.xlu0 %1350
      %1352 = vrot.lane.b32.xlu0 %v1064, 64
      %v1353 = vpop.permute.xlu0 %1352
      %1354 = vrot.lane.b32.xlu0 %v1065, 64
      %v1355 = vpop.permute.xlu0 %1354
      %1356 = vrot.lane.b32.xlu0 %v1066, 64
      %v1357 = vpop.permute.xlu0 %1356
      %1358 = vrot.lane.b32.xlu0 %v1067, 64
      %v1359 = vpop.permute.xlu0 %1358
      %1360 = vrot.lane.b32.xlu0 %v1252, 64
      %v1361 = vpop.permute.xlu0 %1360
      %1362 = vrot.lane.b32.xlu0 %v1346, 64
      %v1363 = vpop.permute.xlu0 %1362
      %1372 = vst.msk [vmem:[#allocation3 + $0x4] sm:$0xf] %vm510, %v1349
      %1373 = vst.msk [vmem:[#allocation3 + $0x10] sm:$0xf] %vm510, %v1351
      %1374 = vst.msk [vmem:[#allocation3 + $0x1c] sm:$0xf] %vm510, %v1353
      %1375 = vst.msk [vmem:[#allocation3 + $0x28] sm:$0xf] %vm510, %v1355
      %1376 = vst.msk [vmem:[#allocation3 + $0x34] sm:$0xf] %vm510, %v1357
      %1377 = vst.msk [vmem:[#allocation3 + $0x40] sm:$0xf] %vm510, %v1359
      %1378 = vst.msk [vmem:[#allocation3 + $0x4c] sm:$0xf] %vm510, %v1361
      %1379 = vst.msk [vmem:[#allocation3 + $0x58] sm:$0xf] %vm510, %v1363
      %v1382 = vrot.slane %v1058, 1
      %v1383 = vrot.slane %v1059, 1
      %v1384 = vsel %vm355, %v1382, %v1383
      %v1386 = vpack.c.bf16 %v1384, %v1384
      %1389 = vrot.lane.b32.xlu0 %v1126, 96
      %v1390 = vpop.permute.xlu0 %1389
      %1391 = vrot.lane.b32.xlu0 %v1127, 96
      %v1392 = vpop.permute.xlu0 %1391
      %1393 = vrot.lane.b32.xlu0 %v1128, 96
      %v1394 = vpop.permute.xlu0 %1393
      %1395 = vrot.lane.b32.xlu0 %v1129, 96
      %v1396 = vpop.permute.xlu0 %1395
      %1397 = vrot.lane.b32.xlu0 %v1130, 96
      %v1398 = vpop.permute.xlu0 %1397
      %1399 = vrot.lane.b32.xlu0 %v1131, 96
      %v1400 = vpop.permute.xlu0 %1399
      %1401 = vrot.lane.b32.xlu0 %v1299, 96
      %v1402 = vpop.permute.xlu0 %1401
      %1403 = vrot.lane.b32.xlu0 %v1386, 96
      %v1404 = vpop.permute.xlu0 %1403
      %1413 = vst.msk [vmem:[#allocation3 + $0x4] sm:$0xf] %vm552, %v1390
      %1414 = vst.msk [vmem:[#allocation3 + $0x10] sm:$0xf] %vm552, %v1392
      %1415 = vst.msk [vmem:[#allocation3 + $0x1c] sm:$0xf] %vm552, %v1394
      %1416 = vst.msk [vmem:[#allocation3 + $0x28] sm:$0xf] %vm552, %v1396
      %1417 = vst.msk [vmem:[#allocation3 + $0x34] sm:$0xf] %vm552, %v1398
      %1418 = vst.msk [vmem:[#allocation3 + $0x40] sm:$0xf] %vm552, %v1400
      %1419 = vst.msk [vmem:[#allocation3 + $0x4c] sm:$0xf] %vm552, %v1402
      %1420 = vst.msk [vmem:[#allocation3 + $0x58] sm:$0xf] %vm552, %v1404
      %v1421 = vrot.slane %v1058, 2
      %v1422 = vrot.slane %v1059, 2
      %v1423 = vsel %vm437, %v1421, %v1422
      %v1425 = vpack.c.bf16 %v1423, %v1423
      %1426 = vst.msk [vmem:[#allocation3 + $0x8] sm:$0xf] %vm330, %v1206
      %1427 = vst.msk [vmem:[#allocation3 + $0x14] sm:$0xf] %vm330, %v1207
      %1428 = vst.msk [vmem:[#allocation3 + $0x20] sm:$0xf] %vm330, %v1208
      %1429 = vst.msk [vmem:[#allocation3 + $0x2c] sm:$0xf] %vm330, %v1209
      %1430 = vst.msk [vmem:[#allocation3 + $0x38] sm:$0xf] %vm330, %v1210
      %1431 = vst.msk [vmem:[#allocation3 + $0x44] sm:$0xf] %vm330, %v1211
      %1432 = vst.msk [vmem:[#allocation3 + $0x50] sm:$0xf] %vm330, %v1312
      %1433 = vst.msk [vmem:[#allocation3 + $0x5c] sm:$0xf] %vm330, %v1425
      %v1434 = vld [vmem:[#allocation3] sm:$0xff]
      %v1435 = vld [vmem:[#allocation3 + $0x8] sm:$0xf]
      %v1436 = vld [vmem:[#allocation3 + $0xc] sm:$0xff]
      %v1437 = vld [vmem:[#allocation3 + $0x14] sm:$0xf]
      %v1438 = vld [vmem:[#allocation3 + $0x18] sm:$0xff]
      %v1439 = vld [vmem:[#allocation3 + $0x20] sm:$0xf]
      %v1440 = vld [vmem:[#allocation3 + $0x24] sm:$0xff]
      %v1441 = vld [vmem:[#allocation3 + $0x2c] sm:$0xf]
      %v1442 = vld [vmem:[#allocation3 + $0x30] sm:$0xff]
      %v1443 = vld [vmem:[#allocation3 + $0x38] sm:$0xf]
      %v1444 = vld [vmem:[#allocation3 + $0x3c] sm:$0xff]
      %v1445 = vld [vmem:[#allocation3 + $0x44] sm:$0xf]
      %v1446 = vld [vmem:[#allocation3 + $0x48] sm:$0xff]
      %v1447 = vld [vmem:[#allocation3 + $0x50] sm:$0xf]
      %v1448 = vld [vmem:[#allocation3 + $0x54] sm:$0xff]
      %v1449 = vld [vmem:[#allocation3 + $0x5c] sm:$0xf]
      %v1450 = vperm.slane %v1039, 0
      %v1467 = vunpack.c.l.b16 %v1434
      %v1468 = vunpack.c.h.b16 %v1434
      %v1469 = vunpack.c.l.b16 %v1435
      %v1470 = vunpack.c.l.b16 %v1436
      %v1471 = vunpack.c.h.b16 %v1436
      %v1472 = vunpack.c.l.b16 %v1437
      %v1473 = vunpack.c.l.b16 %v1438
      %v1474 = vunpack.c.h.b16 %v1438
      %v1475 = vunpack.c.l.b16 %v1439
      %v1476 = vunpack.c.l.b16 %v1440
      %v1477 = vunpack.c.h.b16 %v1440
      %v1478 = vunpack.c.l.b16 %v1441
      %v1479 = vunpack.c.l.b16 %v1442
      %v1480 = vunpack.c.h.b16 %v1442
      %v1481 = vunpack.c.l.b16 %v1443
      %v1482 = vunpack.c.l.b16 %v1444
      %v1483 = vunpack.c.h.b16 %v1444
      %v1484 = vunpack.c.l.b16 %v1445
      %v1485 = vunpack.c.l.b16 %v1446
      %v1486 = vunpack.c.h.b16 %v1446
      %v1487 = vunpack.c.l.b16 %v1447
      %v1488 = vunpack.c.l.b16 %v1448
      %v1489 = vunpack.c.h.b16 %v1448
      %v1490 = vunpack.c.l.b16 %v1449
      %v1491 = vpack.c.b16 %v1470, %v1467
      %v1492 = vpack.c.b16 %v1471, %v1468
      %v1493 = vpack.c.b16 %v1472, %v1469
      %v1494 = vpack.c.b16 %v1476, %v1473
      %v1495 = vpack.c.b16 %v1477, %v1474
      %v1496 = vpack.c.b16 %v1478, %v1475
      %v1497 = vpack.c.b16 %v1482, %v1479
      %v1498 = vpack.c.b16 %v1483, %v1480
      %v1499 = vpack.c.b16 %v1484, %v1481
      %v1500 = vpack.c.b16 %v1488, %v1485
      %v1501 = vpack.c.b16 %v1489, %v1486
      %v1502 = vpack.c.b16 %v1490, %v1487
      %v1547 = vunpack.c.l.b16 %v1003
      %v1548 = vunpack.c.l.b16 %v1004
      %v1549 = vunpack.c.l.b16 %v1005
      %v1550 = vunpack.c.l.b16 %v1006
      %v1551 = vunpack.c.l.b16 %v1007
      %v1552 = vunpack.c.l.b16 %v1008
      %v1553 = vunpack.c.l.b16 %v1009
      %v1554 = vunpack.c.l.b16 %v1010
      %v1555 = vunpack.c.l.b16 %v1011
      %v1556 = vunpack.c.l.b16 %v1012
      %v1557 = vunpack.c.l.b16 %v1013
      %v1558 = vunpack.c.l.b16 %v1014
      %v1559 = vunpack.c.l.b16 %v1015
      %v1560 = vunpack.c.l.b16 %v1016
      %v1561 = vunpack.c.l.b16 %v1017
      %v1562 = vunpack.c.l.b16 %v1018
      %v1563 = vunpack.c.l.b16 %v1019
      %v1564 = vunpack.c.l.b16 %v1020
      %v1565 = vunpack.c.l.b16 %v1021
      %v1566 = vunpack.c.l.b16 %v1022
      %v1567 = vunpack.c.l.b16 %v1023
      %v1568 = vunpack.c.l.b16 %v1024
      %v1569 = vunpack.c.l.b16 %v1025
      %v1570 = vunpack.c.l.b16 %v1026
      %v1571 = vunpack.c.l.b16 %v1027
      %v1572 = vunpack.c.l.b16 %v1028
      %v1573 = vunpack.c.l.b16 %v1029
      %v1574 = vunpack.c.l.b16 %v1030
      %v1575 = vunpack.c.l.b16 %v1031
      %v1576 = vunpack.c.l.b16 %v1032
      %v1577 = vunpack.c.l.b16 %v1033
      %v1578 = vunpack.c.l.b16 %v1034
      %v1579 = vunpack.c.l.b16 %v1035
      %v1580 = vunpack.c.l.b16 %v1036
      %v1581 = vunpack.c.l.b16 %v1037
      %v1582 = vunpack.c.l.b16 %v1038
      %v1583 = vpack.c.b16 %v1548, %v1547
      %v1584 = vpack.c.b16 %v1550, %v1549
      %v1585 = vpack.c.b16 %v1552, %v1551
      %v1586 = vpack.c.b16 %v1554, %v1553
      %v1587 = vpack.c.b16 %v1556, %v1555
      %v1588 = vpack.c.b16 %v1558, %v1557
      %v1589 = vpack.c.b16 %v1560, %v1559
      %v1590 = vpack.c.b16 %v1562, %v1561
      %v1591 = vpack.c.b16 %v1564, %v1563
      %v1592 = vpack.c.b16 %v1566, %v1565
      %v1593 = vpack.c.b16 %v1568, %v1567
      %v1594 = vpack.c.b16 %v1570, %v1569
      %v1595 = vpack.c.b16 %v1572, %v1571
      %v1596 = vpack.c.b16 %v1574, %v1573
      %v1597 = vpack.c.b16 %v1576, %v1575
      %v1598 = vpack.c.b16 %v1578, %v1577
      %v1599 = vpack.c.b16 %v1580, %v1579
      %v1600 = vpack.c.b16 %v1582, %v1581
      %v1620 = vsel %vm226, %v1493, 0
      %v1623 = vsel %vm226, %v1496, 0
      %v1626 = vsel %vm226, %v1499, 0
      %v1629 = vsel %vm226, %v1502, 0
      %1631 = vmatpush.bf16.msra.mxu0 %v1590
      %1632 = vmatpush.bf16.msra.mxu0 %v1589
      %1633 = vmatpush.bf16.msra.mxu0 %v1588
      %1634 = vmatpush.bf16.msra.mxu0 %v1587
      %1635 = vmatpush.bf16.msra.mxu0 %v1586
      %1636 = vmatpush.bf16.msra.mxu0 %v1585
      %1637 = vmatpush.bf16.msra.mxu0 %v1584
      %1638 = vmatpush.bf16.msra.mxu0 %v1583
      %1639 = vmatmul.bf16.gmra.mxu0 %v1491
      %v1640 = vpop.f32.mrf.mxu0
      %v1641 = vadd.f32 %v1450, %v1640
      %v1642 = vpop.f32.mrf.mxu0
      %v1643 = vadd.f32 %v1450, %v1642
      %1644 = vmatmul.bf16.gmra.mxu0 %v1494
      %v1645 = vpop.f32.mrf.mxu0
      %v1646 = vadd.f32 %v1450, %v1645
      %v1647 = vpop.f32.mrf.mxu0
      %v1648 = vadd.f32 %v1450, %v1647
      %1649 = vmatmul.bf16.gmra.mxu0 %v1497
      %v1650 = vpop.f32.mrf.mxu0
      %v1651 = vadd.f32 %v1450, %v1650
      %v1652 = vpop.f32.mrf.mxu0
      %v1653 = vadd.f32 %v1450, %v1652
      %1654 = vmatmul.bf16.gmra.mxu0 %v1500
      %v1655 = vpop.f32.mrf.mxu0
      %v1656 = vadd.f32 %v1450, %v1655
      %v1657 = vpop.f32.mrf.mxu0
      %v1658 = vadd.f32 %v1450, %v1657
      %1659 = vdwg.mxu0
      %1660 = vmatpush.bf16.msra.mxu0 %v1598
      %1661 = vmatpush.bf16.msra.mxu0 %v1597
      %1662 = vmatpush.bf16.msra.mxu0 %v1596
      %1663 = vmatpush.bf16.msra.mxu0 %v1595
      %1664 = vmatpush.bf16.msra.mxu0 %v1594
      %1665 = vmatpush.bf16.msra.mxu0 %v1593
      %1666 = vmatpush.bf16.msra.mxu0 %v1592
      %1667 = vmatpush.bf16.msra.mxu0 %v1591
      %1668 = vmatmul.bf16.gmra.mxu0 %v1492
      %v1669 = vpop.f32.mrf.mxu0
      %v1670 = vadd.f32 %v1641, %v1669
      %v1671 = vpop.f32.mrf.mxu0
      %v1672 = vadd.f32 %v1643, %v1671
      %1673 = vmatmul.bf16.gmra.mxu0 %v1495
      %v1674 = vpop.f32.mrf.mxu0
      %v1675 = vadd.f32 %v1646, %v1674
      %v1676 = vpop.f32.mrf.mxu0
      %v1677 = vadd.f32 %v1648, %v1676
      %1678 = vmatmul.bf16.gmra.mxu0 %v1498
      %v1679 = vpop.f32.mrf.mxu0
      %v1680 = vadd.f32 %v1651, %v1679
      %v1681 = vpop.f32.mrf.mxu0
      %v1682 = vadd.f32 %v1653, %v1681
      %1683 = vmatmul.bf16.gmra.mxu0 %v1501
      %v1684 = vpop.f32.mrf.mxu0
      %v1685 = vadd.f32 %v1656, %v1684
      %v1686 = vpop.f32.mrf.mxu0
      %v1687 = vadd.f32 %v1658, %v1686
      %1688 = vdwg.mxu0
      %1689 = vmatpush.bf16.msra.mxu0 0
      %1690 = vmatpush.bf16.msra.mxu0 0
      %1691 = vmatpush.bf16.msra.mxu0 0
      %1692 = vmatpush.bf16.msra.mxu0 0
      %1693 = vmatpush.bf16.msra.mxu0 0
      %1694 = vmatpush.bf16.msra.mxu0 0
      %1695 = vmatpush.bf16.msra.mxu0 %v1600
      %1696 = vmatpush.bf16.msra.mxu0 %v1599
      %1697 = vmatmul.bf16.gmra.mxu0 %v1620
      %v1698 = vpop.f32.mrf.mxu0
      %v1699 = vadd.f32 %v1670, %v1698
      %v1700 = vpop.f32.mrf.mxu0
      %v1701 = vadd.f32 %v1672, %v1700
      %1702 = vmatmul.bf16.gmra.mxu0 %v1623
      %v1703 = vpop.f32.mrf.mxu0
      %v1704 = vadd.f32 %v1675, %v1703
      %v1705 = vpop.f32.mrf.mxu0
      %v1706 = vadd.f32 %v1677, %v1705
      %1707 = vmatmul.bf16.gmra.mxu0 %v1626
      %v1708 = vpop.f32.mrf.mxu0
      %v1709 = vadd.f32 %v1680, %v1708
      %v1710 = vpop.f32.mrf.mxu0
      %v1711 = vadd.f32 %v1682, %v1710
      %1712 = vmatmul.bf16.gmra.mxu0 %v1629
      %v1713 = vpop.f32.mrf.mxu0
      %v1714 = vadd.f32 %v1685, %v1713
      %v1715 = vpop.f32.mrf.mxu0
      %v1716 = vadd.f32 %v1687, %v1715
      %1717 = vdwg.mxu0
      %v1718 = vmax.f32 %v1699, 0.0
      %v1719 = vmax.f32 %v1701, 0.0
      %v1720 = vmax.f32 %v1704, 0.0
      %v1721 = vmax.f32 %v1706, 0.0
      %v1722 = vmax.f32 %v1709, 0.0
      %v1723 = vmax.f32 %v1711, 0.0
      %v1724 = vmax.f32 %v1714, 0.0
      %v1725 = vmax.f32 %v1716, 0.0
      %1726 = vst.msk [vmem:[%s256 + $0x1] sm:$0xff] %vm226, %v1718
      %1727 = vst.msk [vmem:[%s256 + $0x11] sm:$0xff] %vm226, %v1719
      %1728 = vst.msk [vmem:[%s256 + $0x21] sm:$0xff] %vm226, %v1720
      %1729 = vst.msk [vmem:[%s256 + $0x31] sm:$0xff] %vm226, %v1721
      %1730 = vst.msk [vmem:[%s256 + $0x41] sm:$0xff] %vm226, %v1722
      %1731 = vst.msk [vmem:[%s256 + $0x51] sm:$0xff] %vm226, %v1723
      %1732 = vst.msk [vmem:[%s256 + $0x61] sm:$0xff] %vm226, %v1724
      %1733 = vst.msk [vmem:[%s256 + $0x71] sm:$0xff] %vm226, %v1725
      %s1734 = scalar_lea.vmem %s1, 288
      %v1735 = vld [vmem:[%s1734] sm:$0xf]
      %v1736 = vld [vmem:[%s1734 + $0x4] sm:$0xf]
      %v1737 = vld [vmem:[%s1734 + $0x8] sm:$0xf]
      %v1738 = vld [vmem:[%s1734 + $0xc] sm:$0xf]
      %v1739 = vld [vmem:[%s1734 + $0x10] sm:$0xf]
      %v1740 = vld [vmem:[%s1734 + $0x14] sm:$0xf]
      %v1741 = vld [vmem:[%s1734 + $0x18] sm:$0xf]
      %v1742 = vld [vmem:[%s1734 + $0x1c] sm:$0xf]
      %v1743 = vld [vmem:[%s1734 + $0x20] sm:$0xf]
      %v1744 = vld [vmem:[%s1734 + $0x24] sm:$0xf]
      %v1745 = vld [vmem:[%s1734 + $0x28] sm:$0xf]
      %v1746 = vld [vmem:[%s1734 + $0x2c] sm:$0xf]
      %v1747 = vld [vmem:[%s1734 + $0x30] sm:$0xf]
      %v1748 = vld [vmem:[%s1734 + $0x34] sm:$0xf]
      %v1749 = vld [vmem:[%s1734 + $0x38] sm:$0xf]
      %v1750 = vld [vmem:[%s1734 + $0x3c] sm:$0xf]
      %v1751 = vld [vmem:[%s1734 + $0x40] sm:$0xf]
      %v1752 = vld [vmem:[%s1734 + $0x44] sm:$0xf]
      %v1753 = vld [vmem:[%s1734 + $0x48] sm:$0xf]
      %v1754 = vld [vmem:[%s1734 + $0x4c] sm:$0xf]
      %v1755 = vld [vmem:[%s1734 + $0x50] sm:$0xf]
      %v1756 = vld [vmem:[%s1734 + $0x54] sm:$0xf]
      %v1757 = vld [vmem:[%s1734 + $0x58] sm:$0xf]
      %v1758 = vld [vmem:[%s1734 + $0x5c] sm:$0xf]
      %v1759 = vld [vmem:[%s1734 + $0x60] sm:$0xf]
      %v1760 = vld [vmem:[%s1734 + $0x64] sm:$0xf]
      %v1761 = vld [vmem:[%s1734 + $0x68] sm:$0xf]
      %v1762 = vld [vmem:[%s1734 + $0x6c] sm:$0xf]
      %v1763 = vld [vmem:[%s1734 + $0x70] sm:$0xf]
      %v1764 = vld [vmem:[%s1734 + $0x74] sm:$0xf]
      %v1765 = vld [vmem:[%s1734 + $0x78] sm:$0xf]
      %v1766 = vld [vmem:[%s1734 + $0x7c] sm:$0xf]
      %v1767 = vld [vmem:[%s1734 + $0x80] sm:$0xf]
      %v1768 = vld [vmem:[%s1734 + $0x84] sm:$0xf]
      %v1769 = vld [vmem:[%s1734 + $0x88] sm:$0xf]
      %v1770 = vld [vmem:[%s1734 + $0x8c] sm:$0xf]
      %v1771 = vld [vmem:[%s2 + $0x2] sm:$0x1]
      %v1772 = vld [vmem:[#allocation2] sm:$0xff]
      %v1773 = vld [vmem:[#allocation2 + $0x8] sm:$0x3]
      %v1774 = vld [vmem:[#allocation2 + $0x10] sm:$0xff]
      %v1775 = vld [vmem:[#allocation2 + $0x18] sm:$0x3]
      %v1776 = vld [vmem:[#allocation2 + $0x20] sm:$0xff]
      %v1777 = vld [vmem:[#allocation2 + $0x28] sm:$0x3]
      %v1778 = vld [vmem:[#allocation2 + $0x30] sm:$0xff]
      %v1779 = vld [vmem:[#allocation2 + $0x38] sm:$0x3]
      %v1780 = vld [vmem:[#allocation2 + $0x40] sm:$0xff]
      %v1781 = vld [vmem:[#allocation2 + $0x48] sm:$0x3]
      %v1782 = vld [vmem:[#allocation2 + $0x50] sm:$0xff]
      %v1783 = vld [vmem:[#allocation2 + $0x58] sm:$0x3]
      %v1784 = vld [vmem:[#allocation2 + $0x60] sm:$0xff]
      %v1785 = vld [vmem:[#allocation2 + $0x68] sm:$0x3]
      %v1786 = vld [vmem:[#allocation2 + $0x70] sm:$0xff]
      %v1787 = vld [vmem:[#allocation2 + $0x78] sm:$0x3]
      %v1788 = vld [vmem:[#allocation2 + $0x80] sm:$0xff]
      %v1789 = vld [vmem:[#allocation2 + $0x88] sm:$0x3]
      %v1790 = vld [vmem:[#allocation2 + $0x90] sm:$0xff]
      %v1791 = vld [vmem:[#allocation2 + $0x98] sm:$0x3]
      %v1792 = vpack.c.bf16 %v1772, %v1772
      %v1793 = vpack.c.bf16 %v1774, %v1774
      %v1794 = vpack.c.bf16 %v1776, %v1776
      %v1795 = vpack.c.bf16 %v1778, %v1778
      %v1796 = vpack.c.bf16 %v1780, %v1780
      %v1797 = vpack.c.bf16 %v1782, %v1782
      %v1798 = vpack.c.bf16 %v1784, %v1784
      %v1799 = vpack.c.bf16 %v1786, %v1786
      %1800 = vst.msk [vmem:[#allocation3] sm:$0xf] %vm330, %v1792
      %1801 = vst.msk [vmem:[#allocation3 + $0xc] sm:$0xf] %vm330, %v1793
      %1802 = vst.msk [vmem:[#allocation3 + $0x18] sm:$0xf] %vm330, %v1794
      %1803 = vst.msk [vmem:[#allocation3 + $0x24] sm:$0xf] %vm330, %v1795
      %1804 = vst.msk [vmem:[#allocation3 + $0x30] sm:$0xf] %vm330, %v1796
      %1805 = vst.msk [vmem:[#allocation3 + $0x3c] sm:$0xf] %vm330, %v1797
      %1806 = vst.msk [vmem:[#allocation3 + $0x48] sm:$0xf] %vm330, %v1798
      %1807 = vst.msk [vmem:[#allocation3 + $0x54] sm:$0xf] %vm330, %v1799
      %v1824 = vrot.slane %v1772, 1
      %v1825 = vrot.slane %v1773, 1
      %v1826 = vsel %vm355, %v1824, %v1825
      %v1827 = vrot.slane %v1774, 1
      %v1828 = vrot.slane %v1775, 1
      %v1829 = vsel %vm355, %v1827, %v1828
      %v1830 = vrot.slane %v1776, 1
      %v1831 = vrot.slane %v1777, 1
      %v1832 = vsel %vm355, %v1830, %v1831
      %v1833 = vrot.slane %v1778, 1
      %v1834 = vrot.slane %v1779, 1
      %v1835 = vsel %vm355, %v1833, %v1834
      %v1836 = vrot.slane %v1780, 1
      %v1837 = vrot.slane %v1781, 1
      %v1838 = vsel %vm355, %v1836, %v1837
      %v1839 = vrot.slane %v1782, 1
      %v1840 = vrot.slane %v1783, 1
      %v1841 = vsel %vm355, %v1839, %v1840
      %v1842 = vrot.slane %v1784, 1
      %v1843 = vrot.slane %v1785, 1
      %v1844 = vsel %vm355, %v1842, %v1843
      %v1845 = vrot.slane %v1786, 1
      %v1846 = vrot.slane %v1787, 1
      %v1847 = vsel %vm355, %v1845, %v1846
      %v1856 = vpack.c.bf16 %v1826, %v1826
      %v1857 = vpack.c.bf16 %v1829, %v1829
      %v1858 = vpack.c.bf16 %v1832, %v1832
      %v1859 = vpack.c.bf16 %v1835, %v1835
      %v1860 = vpack.c.bf16 %v1838, %v1838
      %v1861 = vpack.c.bf16 %v1841, %v1841
      %v1862 = vpack.c.bf16 %v1844, %v1844
      %v1863 = vpack.c.bf16 %v1847, %v1847
      %1872 = vrot.lane.b32.xlu0 %v1856, 32
      %v1873 = vpop.permute.xlu0 %1872
      %1874 = vrot.lane.b32.xlu0 %v1857, 32
      %v1875 = vpop.permute.xlu0 %1874
      %1876 = vrot.lane.b32.xlu0 %v1858, 32
      %v1877 = vpop.permute.xlu0 %1876
      %1878 = vrot.lane.b32.xlu0 %v1859, 32
      %v1879 = vpop.permute.xlu0 %1878
      %1880 = vrot.lane.b32.xlu0 %v1860, 32
      %v1881 = vpop.permute.xlu0 %1880
      %1882 = vrot.lane.b32.xlu0 %v1861, 32
      %v1883 = vpop.permute.xlu0 %1882
      %1884 = vrot.lane.b32.xlu0 %v1862, 32
      %v1885 = vpop.permute.xlu0 %1884
      %1886 = vrot.lane.b32.xlu0 %v1863, 32
      %v1887 = vpop.permute.xlu0 %1886
      %1896 = vst.msk [vmem:[#allocation3] sm:$0xf] %vm428, %v1873
      %1897 = vst.msk [vmem:[#allocation3 + $0xc] sm:$0xf] %vm428, %v1875
      %1898 = vst.msk [vmem:[#allocation3 + $0x18] sm:$0xf] %vm428, %v1877
      %1899 = vst.msk [vmem:[#allocation3 + $0x24] sm:$0xf] %vm428, %v1879
      %1900 = vst.msk [vmem:[#allocation3 + $0x30] sm:$0xf] %vm428, %v1881
      %1901 = vst.msk [vmem:[#allocation3 + $0x3c] sm:$0xf] %vm428, %v1883
      %1902 = vst.msk [vmem:[#allocation3 + $0x48] sm:$0xf] %vm428, %v1885
      %1903 = vst.msk [vmem:[#allocation3 + $0x54] sm:$0xf] %vm428, %v1887
      %v1904 = vrot.slane %v1772, 2
      %v1905 = vrot.slane %v1773, 2
      %v1906 = vsel %vm437, %v1904, %v1905
      %v1907 = vrot.slane %v1774, 2
      %v1908 = vrot.slane %v1775, 2
      %v1909 = vsel %vm437, %v1907, %v1908
      %v1910 = vrot.slane %v1776, 2
      %v1911 = vrot.slane %v1777, 2
      %v1912 = vsel %vm437, %v1910, %v1911
      %v1913 = vrot.slane %v1778, 2
      %v1914 = vrot.slane %v1779, 2
      %v1915 = vsel %vm437, %v1913, %v1914
      %v1916 = vrot.slane %v1780, 2
      %v1917 = vrot.slane %v1781, 2
      %v1918 = vsel %vm437, %v1916, %v1917
      %v1919 = vrot.slane %v1782, 2
      %v1920 = vrot.slane %v1783, 2
      %v1921 = vsel %vm437, %v1919, %v1920
      %v1922 = vrot.slane %v1784, 2
      %v1923 = vrot.slane %v1785, 2
      %v1924 = vsel %vm437, %v1922, %v1923
      %v1925 = vrot.slane %v1786, 2
      %v1926 = vrot.slane %v1787, 2
      %v1927 = vsel %vm437, %v1925, %v1926
      %v1936 = vpack.c.bf16 %v1906, %v1906
      %v1937 = vpack.c.bf16 %v1909, %v1909
      %v1938 = vpack.c.bf16 %v1912, %v1912
      %v1939 = vpack.c.bf16 %v1915, %v1915
      %v1940 = vpack.c.bf16 %v1918, %v1918
      %v1941 = vpack.c.bf16 %v1921, %v1921
      %v1942 = vpack.c.bf16 %v1924, %v1924
      %v1943 = vpack.c.bf16 %v1927, %v1927
      %1952 = vrot.lane.b32.xlu0 %v1936, 64
      %v1953 = vpop.permute.xlu0 %1952
      %1954 = vrot.lane.b32.xlu0 %v1937, 64
      %v1955 = vpop.permute.xlu0 %1954
      %1956 = vrot.lane.b32.xlu0 %v1938, 64
      %v1957 = vpop.permute.xlu0 %1956
      %1958 = vrot.lane.b32.xlu0 %v1939, 64
      %v1959 = vpop.permute.xlu0 %1958
      %1960 = vrot.lane.b32.xlu0 %v1940, 64
      %v1961 = vpop.permute.xlu0 %1960
      %1962 = vrot.lane.b32.xlu0 %v1941, 64
      %v1963 = vpop.permute.xlu0 %1962
      %1964 = vrot.lane.b32.xlu0 %v1942, 64
      %v1965 = vpop.permute.xlu0 %1964
      %1966 = vrot.lane.b32.xlu0 %v1943, 64
      %v1967 = vpop.permute.xlu0 %1966
      %1976 = vst.msk [vmem:[#allocation3] sm:$0xf] %vm510, %v1953
      %1977 = vst.msk [vmem:[#allocation3 + $0xc] sm:$0xf] %vm510, %v1955
      %1978 = vst.msk [vmem:[#allocation3 + $0x18] sm:$0xf] %vm510, %v1957
      %1979 = vst.msk [vmem:[#allocation3 + $0x24] sm:$0xf] %vm510, %v1959
      %1980 = vst.msk [vmem:[#allocation3 + $0x30] sm:$0xf] %vm510, %v1961
      %1981 = vst.msk [vmem:[#allocation3 + $0x3c] sm:$0xf] %vm510, %v1963
      %1982 = vst.msk [vmem:[#allocation3 + $0x48] sm:$0xf] %vm510, %v1965
      %1983 = vst.msk [vmem:[#allocation3 + $0x54] sm:$0xf] %vm510, %v1967
      %v1984 = vpack.c.bf16 %v1788, %v1788
      %1993 = vrot.lane.b32.xlu0 %v1793, 96
      %v1994 = vpop.permute.xlu0 %1993
      %1995 = vrot.lane.b32.xlu0 %v1794, 96
      %v1996 = vpop.permute.xlu0 %1995
      %1997 = vrot.lane.b32.xlu0 %v1795, 96
      %v1998 = vpop.permute.xlu0 %1997
      %1999 = vrot.lane.b32.xlu0 %v1796, 96
      %v2000 = vpop.permute.xlu0 %1999
      %2001 = vrot.lane.b32.xlu0 %v1797, 96
      %v2002 = vpop.permute.xlu0 %2001
      %2003 = vrot.lane.b32.xlu0 %v1798, 96
      %v2004 = vpop.permute.xlu0 %2003
      %2005 = vrot.lane.b32.xlu0 %v1799, 96
      %v2006 = vpop.permute.xlu0 %2005
      %2007 = vrot.lane.b32.xlu0 %v1984, 96
      %v2008 = vpop.permute.xlu0 %2007
      %2017 = vst.msk [vmem:[#allocation3] sm:$0xf] %vm552, %v1994
      %2018 = vst.msk [vmem:[#allocation3 + $0xc] sm:$0xf] %vm552, %v1996
      %2019 = vst.msk [vmem:[#allocation3 + $0x18] sm:$0xf] %vm552, %v1998
      %2020 = vst.msk [vmem:[#allocation3 + $0x24] sm:$0xf] %vm552, %v2000
      %2021 = vst.msk [vmem:[#allocation3 + $0x30] sm:$0xf] %vm552, %v2002
      %2022 = vst.msk [vmem:[#allocation3 + $0x3c] sm:$0xf] %vm552, %v2004
      %2023 = vst.msk [vmem:[#allocation3 + $0x48] sm:$0xf] %vm552, %v2006
      %2024 = vst.msk [vmem:[#allocation3 + $0x54] sm:$0xf] %vm552, %v2008
      %v2027 = vrot.slane %v1788, 1
      %v2028 = vrot.slane %v1789, 1
      %v2029 = vsel %vm355, %v2027, %v2028
      %v2031 = vpack.c.bf16 %v2029, %v2029
      %2032 = vst.msk [vmem:[#allocation3 + $0x4] sm:$0xf] %vm330, %v1857
      %2033 = vst.msk [vmem:[#allocation3 + $0x10] sm:$0xf] %vm330, %v1858
      %2034 = vst.msk [vmem:[#allocation3 + $0x1c] sm:$0xf] %vm330, %v1859
      %2035 = vst.msk [vmem:[#allocation3 + $0x28] sm:$0xf] %vm330, %v1860
      %2036 = vst.msk [vmem:[#allocation3 + $0x34] sm:$0xf] %vm330, %v1861
      %2037 = vst.msk [vmem:[#allocation3 + $0x40] sm:$0xf] %vm330, %v1862
      %2038 = vst.msk [vmem:[#allocation3 + $0x4c] sm:$0xf] %vm330, %v1863
      %2039 = vst.msk [vmem:[#allocation3 + $0x58] sm:$0xf] %vm330, %v2031
      %v2040 = vrot.slane %v1788, 2
      %v2041 = vrot.slane %v1789, 2
      %v2042 = vsel %vm437, %v2040, %v2041
      %v2044 = vpack.c.bf16 %v2042, %v2042
      %2046 = vrot.lane.b32.xlu0 %v1937, 32
      %v2047 = vpop.permute.xlu0 %2046
      %2048 = vrot.lane.b32.xlu0 %v1938, 32
      %v2049 = vpop.permute.xlu0 %2048
      %2050 = vrot.lane.b32.xlu0 %v1939, 32
      %v2051 = vpop.permute.xlu0 %2050
      %2052 = vrot.lane.b32.xlu0 %v1940, 32
      %v2053 = vpop.permute.xlu0 %2052
      %2054 = vrot.lane.b32.xlu0 %v1941, 32
      %v2055 = vpop.permute.xlu0 %2054
      %2056 = vrot.lane.b32.xlu0 %v1942, 32
      %v2057 = vpop.permute.xlu0 %2056
      %2058 = vrot.lane.b32.xlu0 %v1943, 32
      %v2059 = vpop.permute.xlu0 %2058
      %2060 = vrot.lane.b32.xlu0 %v2044, 32
      %v2061 = vpop.permute.xlu0 %2060
      %2070 = vst.msk [vmem:[#allocation3 + $0x4] sm:$0xf] %vm428, %v2047
      %2071 = vst.msk [vmem:[#allocation3 + $0x10] sm:$0xf] %vm428, %v2049
      %2072 = vst.msk [vmem:[#allocation3 + $0x1c] sm:$0xf] %vm428, %v2051
      %2073 = vst.msk [vmem:[#allocation3 + $0x28] sm:$0xf] %vm428, %v2053
      %2074 = vst.msk [vmem:[#allocation3 + $0x34] sm:$0xf] %vm428, %v2055
      %2075 = vst.msk [vmem:[#allocation3 + $0x40] sm:$0xf] %vm428, %v2057
      %2076 = vst.msk [vmem:[#allocation3 + $0x4c] sm:$0xf] %vm428, %v2059
      %2077 = vst.msk [vmem:[#allocation3 + $0x58] sm:$0xf] %vm428, %v2061
      %v2078 = vpack.c.bf16 %v1790, %v1790
      %2080 = vrot.lane.b32.xlu0 %v1794, 64
      %v2081 = vpop.permute.xlu0 %2080
      %2082 = vrot.lane.b32.xlu0 %v1795, 64
      %v2083 = vpop.permute.xlu0 %2082
      %2084 = vrot.lane.b32.xlu0 %v1796, 64
      %v2085 = vpop.permute.xlu0 %2084
      %2086 = vrot.lane.b32.xlu0 %v1797, 64
      %v2087 = vpop.permute.xlu0 %2086
      %2088 = vrot.lane.b32.xlu0 %v1798, 64
      %v2089 = vpop.permute.xlu0 %2088
      %2090 = vrot.lane.b32.xlu0 %v1799, 64
      %v2091 = vpop.permute.xlu0 %2090
      %2092 = vrot.lane.b32.xlu0 %v1984, 64
      %v2093 = vpop.permute.xlu0 %2092
      %2094 = vrot.lane.b32.xlu0 %v2078, 64
      %v2095 = vpop.permute.xlu0 %2094
      %2104 = vst.msk [vmem:[#allocation3 + $0x4] sm:$0xf] %vm510, %v2081
      %2105 = vst.msk [vmem:[#allocation3 + $0x10] sm:$0xf] %vm510, %v2083
      %2106 = vst.msk [vmem:[#allocation3 + $0x1c] sm:$0xf] %vm510, %v2085
      %2107 = vst.msk [vmem:[#allocation3 + $0x28] sm:$0xf] %vm510, %v2087
      %2108 = vst.msk [vmem:[#allocation3 + $0x34] sm:$0xf] %vm510, %v2089
      %2109 = vst.msk [vmem:[#allocation3 + $0x40] sm:$0xf] %vm510, %v2091
      %2110 = vst.msk [vmem:[#allocation3 + $0x4c] sm:$0xf] %vm510, %v2093
      %2111 = vst.msk [vmem:[#allocation3 + $0x58] sm:$0xf] %vm510, %v2095
      %v2114 = vrot.slane %v1790, 1
      %v2115 = vrot.slane %v1791, 1
      %v2116 = vsel %vm355, %v2114, %v2115
      %v2118 = vpack.c.bf16 %v2116, %v2116
      %2121 = vrot.lane.b32.xlu0 %v1858, 96
      %v2122 = vpop.permute.xlu0 %2121
      %2123 = vrot.lane.b32.xlu0 %v1859, 96
      %v2124 = vpop.permute.xlu0 %2123
      %2125 = vrot.lane.b32.xlu0 %v1860, 96
      %v2126 = vpop.permute.xlu0 %2125
      %2127 = vrot.lane.b32.xlu0 %v1861, 96
      %v2128 = vpop.permute.xlu0 %2127
      %2129 = vrot.lane.b32.xlu0 %v1862, 96
      %v2130 = vpop.permute.xlu0 %2129
      %2131 = vrot.lane.b32.xlu0 %v1863, 96
      %v2132 = vpop.permute.xlu0 %2131
      %2133 = vrot.lane.b32.xlu0 %v2031, 96
      %v2134 = vpop.permute.xlu0 %2133
      %2135 = vrot.lane.b32.xlu0 %v2118, 96
      %v2136 = vpop.permute.xlu0 %2135
      %2145 = vst.msk [vmem:[#allocation3 + $0x4] sm:$0xf] %vm552, %v2122
      %2146 = vst.msk [vmem:[#allocation3 + $0x10] sm:$0xf] %vm552, %v2124
      %2147 = vst.msk [vmem:[#allocation3 + $0x1c] sm:$0xf] %vm552, %v2126
      %2148 = vst.msk [vmem:[#allocation3 + $0x28] sm:$0xf] %vm552, %v2128
      %2149 = vst.msk [vmem:[#allocation3 + $0x34] sm:$0xf] %vm552, %v2130
      %2150 = vst.msk [vmem:[#allocation3 + $0x40] sm:$0xf] %vm552, %v2132
      %2151 = vst.msk [vmem:[#allocation3 + $0x4c] sm:$0xf] %vm552, %v2134
      %2152 = vst.msk [vmem:[#allocation3 + $0x58] sm:$0xf] %vm552, %v2136
      %v2153 = vrot.slane %v1790, 2
      %v2154 = vrot.slane %v1791, 2
      %v2155 = vsel %vm437, %v2153, %v2154
      %v2157 = vpack.c.bf16 %v2155, %v2155
      %2158 = vst.msk [vmem:[#allocation3 + $0x8] sm:$0xf] %vm330, %v1938
      %2159 = vst.msk [vmem:[#allocation3 + $0x14] sm:$0xf] %vm330, %v1939
      %2160 = vst.msk [vmem:[#allocation3 + $0x20] sm:$0xf] %vm330, %v1940
      %2161 = vst.msk [vmem:[#allocation3 + $0x2c] sm:$0xf] %vm330, %v1941
      %2162 = vst.msk [vmem:[#allocation3 + $0x38] sm:$0xf] %vm330, %v1942
      %2163 = vst.msk [vmem:[#allocation3 + $0x44] sm:$0xf] %vm330, %v1943
      %2164 = vst.msk [vmem:[#allocation3 + $0x50] sm:$0xf] %vm330, %v2044
      %2165 = vst.msk [vmem:[#allocation3 + $0x5c] sm:$0xf] %vm330, %v2157
      %v2166 = vld [vmem:[#allocation3] sm:$0xff]
      %v2167 = vld [vmem:[#allocation3 + $0x8] sm:$0xf]
      %v2168 = vld [vmem:[#allocation3 + $0xc] sm:$0xff]
      %v2169 = vld [vmem:[#allocation3 + $0x14] sm:$0xf]
      %v2170 = vld [vmem:[#allocation3 + $0x18] sm:$0xff]
      %v2171 = vld [vmem:[#allocation3 + $0x20] sm:$0xf]
      %v2172 = vld [vmem:[#allocation3 + $0x24] sm:$0xff]
      %v2173 = vld [vmem:[#allocation3 + $0x2c] sm:$0xf]
      %v2174 = vld [vmem:[#allocation3 + $0x30] sm:$0xff]
      %v2175 = vld [vmem:[#allocation3 + $0x38] sm:$0xf]
      %v2176 = vld [vmem:[#allocation3 + $0x3c] sm:$0xff]
      %v2177 = vld [vmem:[#allocation3 + $0x44] sm:$0xf]
      %v2178 = vld [vmem:[#allocation3 + $0x48] sm:$0xff]
      %v2179 = vld [vmem:[#allocation3 + $0x50] sm:$0xf]
      %v2180 = vld [vmem:[#allocation3 + $0x54] sm:$0xff]
      %v2181 = vld [vmem:[#allocation3 + $0x5c] sm:$0xf]
      %v2182 = vperm.slane %v1771, 0
      %v2199 = vunpack.c.l.b16 %v2166
      %v2200 = vunpack.c.h.b16 %v2166
      %v2201 = vunpack.c.l.b16 %v2167
      %v2202 = vunpack.c.l.b16 %v2168
      %v2203 = vunpack.c.h.b16 %v2168
      %v2204 = vunpack.c.l.b16 %v2169
      %v2205 = vunpack.c.l.b16 %v2170
      %v2206 = vunpack.c.h.b16 %v2170
      %v2207 = vunpack.c.l.b16 %v2171
      %v2208 = vunpack.c.l.b16 %v2172
      %v2209 = vunpack.c.h.b16 %v2172
      %v2210 = vunpack.c.l.b16 %v2173
      %v2211 = vunpack.c.l.b16 %v2174
      %v2212 = vunpack.c.h.b16 %v2174
      %v2213 = vunpack.c.l.b16 %v2175
      %v2214 = vunpack.c.l.b16 %v2176
      %v2215 = vunpack.c.h.b16 %v2176
      %v2216 = vunpack.c.l.b16 %v2177
      %v2217 = vunpack.c.l.b16 %v2178
      %v2218 = vunpack.c.h.b16 %v2178
      %v2219 = vunpack.c.l.b16 %v2179
      %v2220 = vunpack.c.l.b16 %v2180
      %v2221 = vunpack.c.h.b16 %v2180
      %v2222 = vunpack.c.l.b16 %v2181
      %v2223 = vpack.c.b16 %v2202, %v2199
      %v2224 = vpack.c.b16 %v2203, %v2200
      %v2225 = vpack.c.b16 %v2204, %v2201
      %v2226 = vpack.c.b16 %v2208, %v2205
      %v2227 = vpack.c.b16 %v2209, %v2206
      %v2228 = vpack.c.b16 %v2210, %v2207
      %v2229 = vpack.c.b16 %v2214, %v2211
      %v2230 = vpack.c.b16 %v2215, %v2212
      %v2231 = vpack.c.b16 %v2216, %v2213
      %v2232 = vpack.c.b16 %v2220, %v2217
      %v2233 = vpack.c.b16 %v2221, %v2218
      %v2234 = vpack.c.b16 %v2222, %v2219
      %v2279 = vunpack.c.l.b16 %v1735
      %v2280 = vunpack.c.l.b16 %v1736
      %v2281 = vunpack.c.l.b16 %v1737
      %v2282 = vunpack.c.l.b16 %v1738
      %v2283 = vunpack.c.l.b16 %v1739
      %v2284 = vunpack.c.l.b16 %v1740
      %v2285 = vunpack.c.l.b16 %v1741
      %v2286 = vunpack.c.l.b16 %v1742
      %v2287 = vunpack.c.l.b16 %v1743
      %v2288 = vunpack.c.l.b16 %v1744
      %v2289 = vunpack.c.l.b16 %v1745
      %v2290 = vunpack.c.l.b16 %v1746
      %v2291 = vunpack.c.l.b16 %v1747
      %v2292 = vunpack.c.l.b16 %v1748
      %v2293 = vunpack.c.l.b16 %v1749
      %v2294 = vunpack.c.l.b16 %v1750
      %v2295 = vunpack.c.l.b16 %v1751
      %v2296 = vunpack.c.l.b16 %v1752
      %v2297 = vunpack.c.l.b16 %v1753
      %v2298 = vunpack.c.l.b16 %v1754
      %v2299 = vunpack.c.l.b16 %v1755
      %v2300 = vunpack.c.l.b16 %v1756
      %v2301 = vunpack.c.l.b16 %v1757
      %v2302 = vunpack.c.l.b16 %v1758
      %v2303 = vunpack.c.l.b16 %v1759
      %v2304 = vunpack.c.l.b16 %v1760
      %v2305 = vunpack.c.l.b16 %v1761
      %v2306 = vunpack.c.l.b16 %v1762
      %v2307 = vunpack.c.l.b16 %v1763
      %v2308 = vunpack.c.l.b16 %v1764
      %v2309 = vunpack.c.l.b16 %v1765
      %v2310 = vunpack.c.l.b16 %v1766
      %v2311 = vunpack.c.l.b16 %v1767
      %v2312 = vunpack.c.l.b16 %v1768
      %v2313 = vunpack.c.l.b16 %v1769
      %v2314 = vunpack.c.l.b16 %v1770
      %v2315 = vpack.c.b16 %v2280, %v2279
      %v2316 = vpack.c.b16 %v2282, %v2281
      %v2317 = vpack.c.b16 %v2284, %v2283
      %v2318 = vpack.c.b16 %v2286, %v2285
      %v2319 = vpack.c.b16 %v2288, %v2287
      %v2320 = vpack.c.b16 %v2290, %v2289
      %v2321 = vpack.c.b16 %v2292, %v2291
      %v2322 = vpack.c.b16 %v2294, %v2293
      %v2323 = vpack.c.b16 %v2296, %v2295
      %v2324 = vpack.c.b16 %v2298, %v2297
      %v2325 = vpack.c.b16 %v2300, %v2299
      %v2326 = vpack.c.b16 %v2302, %v2301
      %v2327 = vpack.c.b16 %v2304, %v2303
      %v2328 = vpack.c.b16 %v2306, %v2305
      %v2329 = vpack.c.b16 %v2308, %v2307
      %v2330 = vpack.c.b16 %v2310, %v2309
      %v2331 = vpack.c.b16 %v2312, %v2311
      %v2332 = vpack.c.b16 %v2314, %v2313
      %v2352 = vsel %vm226, %v2225, 0
      %v2355 = vsel %vm226, %v2228, 0
      %v2358 = vsel %vm226, %v2231, 0
      %v2361 = vsel %vm226, %v2234, 0
      %2363 = vmatpush.bf16.msra.mxu0 %v2322
      %2364 = vmatpush.bf16.msra.mxu0 %v2321
      %2365 = vmatpush.bf16.msra.mxu0 %v2320
      %2366 = vmatpush.bf16.msra.mxu0 %v2319
      %2367 = vmatpush.bf16.msra.mxu0 %v2318
      %2368 = vmatpush.bf16.msra.mxu0 %v2317
      %2369 = vmatpush.bf16.msra.mxu0 %v2316
      %2370 = vmatpush.bf16.msra.mxu0 %v2315
      %2371 = vmatmul.bf16.gmra.mxu0 %v2223
      %v2372 = vpop.f32.mrf.mxu0
      %v2373 = vadd.f32 %v2182, %v2372
      %v2374 = vpop.f32.mrf.mxu0
      %v2375 = vadd.f32 %v2182, %v2374
      %2376 = vmatmul.bf16.gmra.mxu0 %v2226
      %v2377 = vpop.f32.mrf.mxu0
      %v2378 = vadd.f32 %v2182, %v2377
      %v2379 = vpop.f32.mrf.mxu0
      %v2380 = vadd.f32 %v2182, %v2379
      %2381 = vmatmul.bf16.gmra.mxu0 %v2229
      %v2382 = vpop.f32.mrf.mxu0
      %v2383 = vadd.f32 %v2182, %v2382
      %v2384 = vpop.f32.mrf.mxu0
      %v2385 = vadd.f32 %v2182, %v2384
      %2386 = vmatmul.bf16.gmra.mxu0 %v2232
      %v2387 = vpop.f32.mrf.mxu0
      %v2388 = vadd.f32 %v2182, %v2387
      %v2389 = vpop.f32.mrf.mxu0
      %v2390 = vadd.f32 %v2182, %v2389
      %2391 = vdwg.mxu0
      %2392 = vmatpush.bf16.msra.mxu0 %v2330
      %2393 = vmatpush.bf16.msra.mxu0 %v2329
      %2394 = vmatpush.bf16.msra.mxu0 %v2328
      %2395 = vmatpush.bf16.msra.mxu0 %v2327
      %2396 = vmatpush.bf16.msra.mxu0 %v2326
      %2397 = vmatpush.bf16.msra.mxu0 %v2325
      %2398 = vmatpush.bf16.msra.mxu0 %v2324
      %2399 = vmatpush.bf16.msra.mxu0 %v2323
      %2400 = vmatmul.bf16.gmra.mxu0 %v2224
      %v2401 = vpop.f32.mrf.mxu0
      %v2402 = vadd.f32 %v2373, %v2401
      %v2403 = vpop.f32.mrf.mxu0
      %v2404 = vadd.f32 %v2375, %v2403
      %2405 = vmatmul.bf16.gmra.mxu0 %v2227
      %v2406 = vpop.f32.mrf.mxu0
      %v2407 = vadd.f32 %v2378, %v2406
      %v2408 = vpop.f32.mrf.mxu0
      %v2409 = vadd.f32 %v2380, %v2408
      %2410 = vmatmul.bf16.gmra.mxu0 %v2230
      %v2411 = vpop.f32.mrf.mxu0
      %v2412 = vadd.f32 %v2383, %v2411
      %v2413 = vpop.f32.mrf.mxu0
      %v2414 = vadd.f32 %v2385, %v2413
      %2415 = vmatmul.bf16.gmra.mxu0 %v2233
      %v2416 = vpop.f32.mrf.mxu0
      %v2417 = vadd.f32 %v2388, %v2416
      %v2418 = vpop.f32.mrf.mxu0
      %v2419 = vadd.f32 %v2390, %v2418
      %2420 = vdwg.mxu0
      %2421 = vmatpush.bf16.msra.mxu0 0
      %2422 = vmatpush.bf16.msra.mxu0 0
      %2423 = vmatpush.bf16.msra.mxu0 0
      %2424 = vmatpush.bf16.msra.mxu0 0
      %2425 = vmatpush.bf16.msra.mxu0 0
      %2426 = vmatpush.bf16.msra.mxu0 0
      %2427 = vmatpush.bf16.msra.mxu0 %v2332
      %2428 = vmatpush.bf16.msra.mxu0 %v2331
      %2429 = vmatmul.bf16.gmra.mxu0 %v2352
      %v2430 = vpop.f32.mrf.mxu0
      %v2431 = vadd.f32 %v2402, %v2430
      %v2432 = vpop.f32.mrf.mxu0
      %v2433 = vadd.f32 %v2404, %v2432
      %2434 = vmatmul.bf16.gmra.mxu0 %v2355
      %v2435 = vpop.f32.mrf.mxu0
      %v2436 = vadd.f32 %v2407, %v2435
      %v2437 = vpop.f32.mrf.mxu0
      %v2438 = vadd.f32 %v2409, %v2437
      %2439 = vmatmul.bf16.gmra.mxu0 %v2358
      %v2440 = vpop.f32.mrf.mxu0
      %v2441 = vadd.f32 %v2412, %v2440
      %v2442 = vpop.f32.mrf.mxu0
      %v2443 = vadd.f32 %v2414, %v2442
      %2444 = vmatmul.bf16.gmra.mxu0 %v2361
      %v2445 = vpop.f32.mrf.mxu0
      %v2446 = vadd.f32 %v2417, %v2445
      %v2447 = vpop.f32.mrf.mxu0
      %v2448 = vadd.f32 %v2419, %v2447
      %2449 = vdwg.mxu0
      %v2450 = vadd.f32 %v2431, %v986
      %v2451 = vadd.f32 %v2433, %v987
      %v2452 = vadd.f32 %v2436, %v988
      %v2453 = vadd.f32 %v2438, %v989
      %v2454 = vadd.f32 %v2441, %v990
      %v2455 = vadd.f32 %v2443, %v991
      %v2456 = vadd.f32 %v2446, %v992
      %v2457 = vadd.f32 %v2448, %v993
      %v2458 = vmax.f32 %v2450, 0.0
      %v2459 = vmax.f32 %v2451, 0.0
      %v2460 = vmax.f32 %v2452, 0.0
      %v2461 = vmax.f32 %v2453, 0.0
      %v2462 = vmax.f32 %v2454, 0.0
      %v2463 = vmax.f32 %v2455, 0.0
      %v2464 = vmax.f32 %v2456, 0.0
      %v2465 = vmax.f32 %v2457, 0.0
      %2466 = vst.msk [vmem:[%s256 + $0x1] sm:$0xff] %vm226, %v2458
      %2467 = vst.msk [vmem:[%s256 + $0x11] sm:$0xff] %vm226, %v2459
      %2468 = vst.msk [vmem:[%s256 + $0x21] sm:$0xff] %vm226, %v2460
      %2469 = vst.msk [vmem:[%s256 + $0x31] sm:$0xff] %vm226, %v2461
      %2470 = vst.msk [vmem:[%s256 + $0x41] sm:$0xff] %vm226, %v2462
      %2471 = vst.msk [vmem:[%s256 + $0x51] sm:$0xff] %vm226, %v2463
      %2472 = vst.msk [vmem:[%s256 + $0x61] sm:$0xff] %vm226, %v2464
      %2473 = vst.msk [vmem:[%s256 + $0x71] sm:$0xff] %vm226, %v2465
      %s2474 = scalar_lea.vmem %s1, 432
      %v2475 = vld [vmem:[%s2474] sm:$0xf]
      %v2476 = vld [vmem:[%s2474 + $0x4] sm:$0xf]
      %v2477 = vld [vmem:[%s2474 + $0x8] sm:$0xf]
      %v2478 = vld [vmem:[%s2474 + $0xc] sm:$0xf]
      %v2479 = vld [vmem:[%s2474 + $0x10] sm:$0xf]
      %v2480 = vld [vmem:[%s2474 + $0x14] sm:$0xf]
      %v2481 = vld [vmem:[%s2474 + $0x18] sm:$0xf]
      %v2482 = vld [vmem:[%s2474 + $0x1c] sm:$0xf]
      %v2483 = vld [vmem:[%s2474 + $0x20] sm:$0xf]
      %v2484 = vld [vmem:[%s2474 + $0x24] sm:$0xf]
      %v2485 = vld [vmem:[%s2474 + $0x28] sm:$0xf]
      %v2486 = vld [vmem:[%s2474 + $0x2c] sm:$0xf]
      %v2487 = vld [vmem:[%s2474 + $0x30] sm:$0xf]
      %v2488 = vld [vmem:[%s2474 + $0x34] sm:$0xf]
      %v2489 = vld [vmem:[%s2474 + $0x38] sm:$0xf]
      %v2490 = vld [vmem:[%s2474 + $0x3c] sm:$0xf]
      %v2491 = vld [vmem:[%s2474 + $0x40] sm:$0xf]
      %v2492 = vld [vmem:[%s2474 + $0x44] sm:$0xf]
      %v2493 = vld [vmem:[%s2474 + $0x48] sm:$0xf]
      %v2494 = vld [vmem:[%s2474 + $0x4c] sm:$0xf]
      %v2495 = vld [vmem:[%s2474 + $0x50] sm:$0xf]
      %v2496 = vld [vmem:[%s2474 + $0x54] sm:$0xf]
      %v2497 = vld [vmem:[%s2474 + $0x58] sm:$0xf]
      %v2498 = vld [vmem:[%s2474 + $0x5c] sm:$0xf]
      %v2499 = vld [vmem:[%s2474 + $0x60] sm:$0xf]
      %v2500 = vld [vmem:[%s2474 + $0x64] sm:$0xf]
      %v2501 = vld [vmem:[%s2474 + $0x68] sm:$0xf]
      %v2502 = vld [vmem:[%s2474 + $0x6c] sm:$0xf]
      %v2503 = vld [vmem:[%s2474 + $0x70] sm:$0xf]
      %v2504 = vld [vmem:[%s2474 + $0x74] sm:$0xf]
      %v2505 = vld [vmem:[%s2474 + $0x78] sm:$0xf]
      %v2506 = vld [vmem:[%s2474 + $0x7c] sm:$0xf]
      %v2507 = vld [vmem:[%s2474 + $0x80] sm:$0xf]
      %v2508 = vld [vmem:[%s2474 + $0x84] sm:$0xf]
      %v2509 = vld [vmem:[%s2474 + $0x88] sm:$0xf]
      %v2510 = vld [vmem:[%s2474 + $0x8c] sm:$0xf]
      %v2511 = vld [vmem:[%s2 + $0x3] sm:$0x1]
      %v2512 = vld [vmem:[#allocation2] sm:$0xff]
      %v2513 = vld [vmem:[#allocation2 + $0x8] sm:$0x3]
      %v2514 = vld [vmem:[#allocation2 + $0x10] sm:$0xff]
      %v2515 = vld [vmem:[#allocation2 + $0x18] sm:$0x3]
      %v2516 = vld [vmem:[#allocation2 + $0x20] sm:$0xff]
      %v2517 = vld [vmem:[#allocation2 + $0x28] sm:$0x3]
      %v2518 = vld [vmem:[#allocation2 + $0x30] sm:$0xff]
      %v2519 = vld [vmem:[#allocation2 + $0x38] sm:$0x3]
      %v2520 = vld [vmem:[#allocation2 + $0x40] sm:$0xff]
      %v2521 = vld [vmem:[#allocation2 + $0x48] sm:$0x3]
      %v2522 = vld [vmem:[#allocation2 + $0x50] sm:$0xff]
      %v2523 = vld [vmem:[#allocation2 + $0x58] sm:$0x3]
      %v2524 = vld [vmem:[#allocation2 + $0x60] sm:$0xff]
      %v2525 = vld [vmem:[#allocation2 + $0x68] sm:$0x3]
      %v2526 = vld [vmem:[#allocation2 + $0x70] sm:$0xff]
      %v2527 = vld [vmem:[#allocation2 + $0x78] sm:$0x3]
      %v2528 = vld [vmem:[#allocation2 + $0x80] sm:$0xff]
      %v2529 = vld [vmem:[#allocation2 + $0x88] sm:$0x3]
      %v2530 = vld [vmem:[#allocation2 + $0x90] sm:$0xff]
      %v2531 = vld [vmem:[#allocation2 + $0x98] sm:$0x3]
      %v2532 = vpack.c.bf16 %v2512, %v2512
      %v2533 = vpack.c.bf16 %v2514, %v2514
      %v2534 = vpack.c.bf16 %v2516, %v2516
      %v2535 = vpack.c.bf16 %v2518, %v2518
      %v2536 = vpack.c.bf16 %v2520, %v2520
      %v2537 = vpack.c.bf16 %v2522, %v2522
      %v2538 = vpack.c.bf16 %v2524, %v2524
      %v2539 = vpack.c.bf16 %v2526, %v2526
      %2540 = vst.msk [vmem:[#allocation3] sm:$0xf] %vm330, %v2532
      %2541 = vst.msk [vmem:[#allocation3 + $0xc] sm:$0xf] %vm330, %v2533
      %2542 = vst.msk [vmem:[#allocation3 + $0x18] sm:$0xf] %vm330, %v2534
      %2543 = vst.msk [vmem:[#allocation3 + $0x24] sm:$0xf] %vm330, %v2535
      %2544 = vst.msk [vmem:[#allocation3 + $0x30] sm:$0xf] %vm330, %v2536
      %2545 = vst.msk [vmem:[#allocation3 + $0x3c] sm:$0xf] %vm330, %v2537
      %2546 = vst.msk [vmem:[#allocation3 + $0x48] sm:$0xf] %vm330, %v2538
      %2547 = vst.msk [vmem:[#allocation3 + $0x54] sm:$0xf] %vm330, %v2539
      %v2564 = vrot.slane %v2512, 1
      %v2565 = vrot.slane %v2513, 1
      %v2566 = vsel %vm355, %v2564, %v2565
      %v2567 = vrot.slane %v2514, 1
      %v2568 = vrot.slane %v2515, 1
      %v2569 = vsel %vm355, %v2567, %v2568
      %v2570 = vrot.slane %v2516, 1
      %v2571 = vrot.slane %v2517, 1
      %v2572 = vsel %vm355, %v2570, %v2571
      %v2573 = vrot.slane %v2518, 1
      %v2574 = vrot.slane %v2519, 1
      %v2575 = vsel %vm355, %v2573, %v2574
      %v2576 = vrot.slane %v2520, 1
      %v2577 = vrot.slane %v2521, 1
      %v2578 = vsel %vm355, %v2576, %v2577
      %v2579 = vrot.slane %v2522, 1
      %v2580 = vrot.slane %v2523, 1
      %v2581 = vsel %vm355, %v2579, %v2580
      %v2582 = vrot.slane %v2524, 1
      %v2583 = vrot.slane %v2525, 1
      %v2584 = vsel %vm355, %v2582, %v2583
      %v2585 = vrot.slane %v2526, 1
      %v2586 = vrot.slane %v2527, 1
      %v2587 = vsel %vm355, %v2585, %v2586
      %v2596 = vpack.c.bf16 %v2566, %v2566
      %v2597 = vpack.c.bf16 %v2569, %v2569
      %v2598 = vpack.c.bf16 %v2572, %v2572
      %v2599 = vpack.c.bf16 %v2575, %v2575
      %v2600 = vpack.c.bf16 %v2578, %v2578
      %v2601 = vpack.c.bf16 %v2581, %v2581
      %v2602 = vpack.c.bf16 %v2584, %v2584
      %v2603 = vpack.c.bf16 %v2587, %v2587
      %2612 = vrot.lane.b32.xlu0 %v2596, 32
      %v2613 = vpop.permute.xlu0 %2612
      %2614 = vrot.lane.b32.xlu0 %v2597, 32
      %v2615 = vpop.permute.xlu0 %2614
      %2616 = vrot.lane.b32.xlu0 %v2598, 32
      %v2617 = vpop.permute.xlu0 %2616
      %2618 = vrot.lane.b32.xlu0 %v2599, 32
      %v2619 = vpop.permute.xlu0 %2618
      %2620 = vrot.lane.b32.xlu0 %v2600, 32
      %v2621 = vpop.permute.xlu0 %2620
      %2622 = vrot.lane.b32.xlu0 %v2601, 32
      %v2623 = vpop.permute.xlu0 %2622
      %2624 = vrot.lane.b32.xlu0 %v2602, 32
      %v2625 = vpop.permute.xlu0 %2624
      %2626 = vrot.lane.b32.xlu0 %v2603, 32
      %v2627 = vpop.permute.xlu0 %2626
      %2636 = vst.msk [vmem:[#allocation3] sm:$0xf] %vm428, %v2613
      %2637 = vst.msk [vmem:[#allocation3 + $0xc] sm:$0xf] %vm428, %v2615
      %2638 = vst.msk [vmem:[#allocation3 + $0x18] sm:$0xf] %vm428, %v2617
      %2639 = vst.msk [vmem:[#allocation3 + $0x24] sm:$0xf] %vm428, %v2619
      %2640 = vst.msk [vmem:[#allocation3 + $0x30] sm:$0xf] %vm428, %v2621
      %2641 = vst.msk [vmem:[#allocation3 + $0x3c] sm:$0xf] %vm428, %v2623
      %2642 = vst.msk [vmem:[#allocation3 + $0x48] sm:$0xf] %vm428, %v2625
      %2643 = vst.msk [vmem:[#allocation3 + $0x54] sm:$0xf] %vm428, %v2627
      %v2644 = vrot.slane %v2512, 2
      %v2645 = vrot.slane %v2513, 2
      %v2646 = vsel %vm437, %v2644, %v2645
      %v2647 = vrot.slane %v2514, 2
      %v2648 = vrot.slane %v2515, 2
      %v2649 = vsel %vm437, %v2647, %v2648
      %v2650 = vrot.slane %v2516, 2
      %v2651 = vrot.slane %v2517, 2
      %v2652 = vsel %vm437, %v2650, %v2651
      %v2653 = vrot.slane %v2518, 2
      %v2654 = vrot.slane %v2519, 2
      %v2655 = vsel %vm437, %v2653, %v2654
      %v2656 = vrot.slane %v2520, 2
      %v2657 = vrot.slane %v2521, 2
      %v2658 = vsel %vm437, %v2656, %v2657
      %v2659 = vrot.slane %v2522, 2
      %v2660 = vrot.slane %v2523, 2
      %v2661 = vsel %vm437, %v2659, %v2660
      %v2662 = vrot.slane %v2524, 2
      %v2663 = vrot.slane %v2525, 2
      %v2664 = vsel %vm437, %v2662, %v2663
      %v2665 = vrot.slane %v2526, 2
      %v2666 = vrot.slane %v2527, 2
      %v2667 = vsel %vm437, %v2665, %v2666
      %v2676 = vpack.c.bf16 %v2646, %v2646
      %v2677 = vpack.c.bf16 %v2649, %v2649
      %v2678 = vpack.c.bf16 %v2652, %v2652
      %v2679 = vpack.c.bf16 %v2655, %v2655
      %v2680 = vpack.c.bf16 %v2658, %v2658
      %v2681 = vpack.c.bf16 %v2661, %v2661
      %v2682 = vpack.c.bf16 %v2664, %v2664
      %v2683 = vpack.c.bf16 %v2667, %v2667
      %2692 = vrot.lane.b32.xlu0 %v2676, 64
      %v2693 = vpop.permute.xlu0 %2692
      %2694 = vrot.lane.b32.xlu0 %v2677, 64
      %v2695 = vpop.permute.xlu0 %2694
      %2696 = vrot.lane.b32.xlu0 %v2678, 64
      %v2697 = vpop.permute.xlu0 %2696
      %2698 = vrot.lane.b32.xlu0 %v2679, 64
      %v2699 = vpop.permute.xlu0 %2698
      %2700 = vrot.lane.b32.xlu0 %v2680, 64
      %v2701 = vpop.permute.xlu0 %2700
      %2702 = vrot.lane.b32.xlu0 %v2681, 64
      %v2703 = vpop.permute.xlu0 %2702
      %2704 = vrot.lane.b32.xlu0 %v2682, 64
      %v2705 = vpop.permute.xlu0 %2704
      %2706 = vrot.lane.b32.xlu0 %v2683, 64
      %v2707 = vpop.permute.xlu0 %2706
      %2716 = vst.msk [vmem:[#allocation3] sm:$0xf] %vm510, %v2693
      %2717 = vst.msk [vmem:[#allocation3 + $0xc] sm:$0xf] %vm510, %v2695
      %2718 = vst.msk [vmem:[#allocation3 + $0x18] sm:$0xf] %vm510, %v2697
      %2719 = vst.msk [vmem:[#allocation3 + $0x24] sm:$0xf] %vm510, %v2699
      %2720 = vst.msk [vmem:[#allocation3 + $0x30] sm:$0xf] %vm510, %v2701
      %2721 = vst.msk [vmem:[#allocation3 + $0x3c] sm:$0xf] %vm510, %v2703
      %2722 = vst.msk [vmem:[#allocation3 + $0x48] sm:$0xf] %vm510, %v2705
      %2723 = vst.msk [vmem:[#allocation3 + $0x54] sm:$0xf] %vm510, %v2707
      %v2724 = vpack.c.bf16 %v2528, %v2528
      %2733 = vrot.lane.b32.xlu0 %v2533, 96
      %v2734 = vpop.permute.xlu0 %2733
      %2735 = vrot.lane.b32.xlu0 %v2534, 96
      %v2736 = vpop.permute.xlu0 %2735
      %2737 = vrot.lane.b32.xlu0 %v2535, 96
      %v2738 = vpop.permute.xlu0 %2737
      %2739 = vrot.lane.b32.xlu0 %v2536, 96
      %v2740 = vpop.permute.xlu0 %2739
      %2741 = vrot.lane.b32.xlu0 %v2537, 96
      %v2742 = vpop.permute.xlu0 %2741
      %2743 = vrot.lane.b32.xlu0 %v2538, 96
      %v2744 = vpop.permute.xlu0 %2743
      %2745 = vrot.lane.b32.xlu0 %v2539, 96
      %v2746 = vpop.permute.xlu0 %2745
      %2747 = vrot.lane.b32.xlu0 %v2724, 96
      %v2748 = vpop.permute.xlu0 %2747
      %2757 = vst.msk [vmem:[#allocation3] sm:$0xf] %vm552, %v2734
      %2758 = vst.msk [vmem:[#allocation3 + $0xc] sm:$0xf] %vm552, %v2736
      %2759 = vst.msk [vmem:[#allocation3 + $0x18] sm:$0xf] %vm552, %v2738
      %2760 = vst.msk [vmem:[#allocation3 + $0x24] sm:$0xf] %vm552, %v2740
      %2761 = vst.msk [vmem:[#allocation3 + $0x30] sm:$0xf] %vm552, %v2742
      %2762 = vst.msk [vmem:[#allocation3 + $0x3c] sm:$0xf] %vm552, %v2744
      %2763 = vst.msk [vmem:[#allocation3 + $0x48] sm:$0xf] %vm552, %v2746
      %2764 = vst.msk [vmem:[#allocation3 + $0x54] sm:$0xf] %vm552, %v2748
      %v2767 = vrot.slane %v2528, 1
      %v2768 = vrot.slane %v2529, 1
      %v2769 = vsel %vm355, %v2767, %v2768
      %v2771 = vpack.c.bf16 %v2769, %v2769
      %2772 = vst.msk [vmem:[#allocation3 + $0x4] sm:$0xf] %vm330, %v2597
      %2773 = vst.msk [vmem:[#allocation3 + $0x10] sm:$0xf] %vm330, %v2598
      %2774 = vst.msk [vmem:[#allocation3 + $0x1c] sm:$0xf] %vm330, %v2599
      %2775 = vst.msk [vmem:[#allocation3 + $0x28] sm:$0xf] %vm330, %v2600
      %2776 = vst.msk [vmem:[#allocation3 + $0x34] sm:$0xf] %vm330, %v2601
      %2777 = vst.msk [vmem:[#allocation3 + $0x40] sm:$0xf] %vm330, %v2602
      %2778 = vst.msk [vmem:[#allocation3 + $0x4c] sm:$0xf] %vm330, %v2603
      %2779 = vst.msk [vmem:[#allocation3 + $0x58] sm:$0xf] %vm330, %v2771
      %v2780 = vrot.slane %v2528, 2
      %v2781 = vrot.slane %v2529, 2
      %v2782 = vsel %vm437, %v2780, %v2781
      %v2784 = vpack.c.bf16 %v2782, %v2782
      %2786 = vrot.lane.b32.xlu0 %v2677, 32
      %v2787 = vpop.permute.xlu0 %2786
      %2788 = vrot.lane.b32.xlu0 %v2678, 32
      %v2789 = vpop.permute.xlu0 %2788
      %2790 = vrot.lane.b32.xlu0 %v2679, 32
      %v2791 = vpop.permute.xlu0 %2790
      %2792 = vrot.lane.b32.xlu0 %v2680, 32
      %v2793 = vpop.permute.xlu0 %2792
      %2794 = vrot.lane.b32.xlu0 %v2681, 32
      %v2795 = vpop.permute.xlu0 %2794
      %2796 = vrot.lane.b32.xlu0 %v2682, 32
      %v2797 = vpop.permute.xlu0 %2796
      %2798 = vrot.lane.b32.xlu0 %v2683, 32
      %v2799 = vpop.permute.xlu0 %2798
      %2800 = vrot.lane.b32.xlu0 %v2784, 32
      %v2801 = vpop.permute.xlu0 %2800
      %2810 = vst.msk [vmem:[#allocation3 + $0x4] sm:$0xf] %vm428, %v2787
      %2811 = vst.msk [vmem:[#allocation3 + $0x10] sm:$0xf] %vm428, %v2789
      %2812 = vst.msk [vmem:[#allocation3 + $0x1c] sm:$0xf] %vm428, %v2791
      %2813 = vst.msk [vmem:[#allocation3 + $0x28] sm:$0xf] %vm428, %v2793
      %2814 = vst.msk [vmem:[#allocation3 + $0x34] sm:$0xf] %vm428, %v2795
      %2815 = vst.msk [vmem:[#allocation3 + $0x40] sm:$0xf] %vm428, %v2797
      %2816 = vst.msk [vmem:[#allocation3 + $0x4c] sm:$0xf] %vm428, %v2799
      %2817 = vst.msk [vmem:[#allocation3 + $0x58] sm:$0xf] %vm428, %v2801
      %v2818 = vpack.c.bf16 %v2530, %v2530
      %2820 = vrot.lane.b32.xlu0 %v2534, 64
      %v2821 = vpop.permute.xlu0 %2820
      %2822 = vrot.lane.b32.xlu0 %v2535, 64
      %v2823 = vpop.permute.xlu0 %2822
      %2824 = vrot.lane.b32.xlu0 %v2536, 64
      %v2825 = vpop.permute.xlu0 %2824
      %2826 = vrot.lane.b32.xlu0 %v2537, 64
      %v2827 = vpop.permute.xlu0 %2826
      %2828 = vrot.lane.b32.xlu0 %v2538, 64
      %v2829 = vpop.permute.xlu0 %2828
      %2830 = vrot.lane.b32.xlu0 %v2539, 64
      %v2831 = vpop.permute.xlu0 %2830
      %2832 = vrot.lane.b32.xlu0 %v2724, 64
      %v2833 = vpop.permute.xlu0 %2832
      %2834 = vrot.lane.b32.xlu0 %v2818, 64
      %v2835 = vpop.permute.xlu0 %2834
      %2844 = vst.msk [vmem:[#allocation3 + $0x4] sm:$0xf] %vm510, %v2821
      %2845 = vst.msk [vmem:[#allocation3 + $0x10] sm:$0xf] %vm510, %v2823
      %2846 = vst.msk [vmem:[#allocation3 + $0x1c] sm:$0xf] %vm510, %v2825
      %2847 = vst.msk [vmem:[#allocation3 + $0x28] sm:$0xf] %vm510, %v2827
      %2848 = vst.msk [vmem:[#allocation3 + $0x34] sm:$0xf] %vm510, %v2829
      %2849 = vst.msk [vmem:[#allocation3 + $0x40] sm:$0xf] %vm510, %v2831
      %2850 = vst.msk [vmem:[#allocation3 + $0x4c] sm:$0xf] %vm510, %v2833
      %2851 = vst.msk [vmem:[#allocation3 + $0x58] sm:$0xf] %vm510, %v2835
      %v2854 = vrot.slane %v2530, 1
      %v2855 = vrot.slane %v2531, 1
      %v2856 = vsel %vm355, %v2854, %v2855
      %v2858 = vpack.c.bf16 %v2856, %v2856
      %2861 = vrot.lane.b32.xlu0 %v2598, 96
      %v2862 = vpop.permute.xlu0 %2861
      %2863 = vrot.lane.b32.xlu0 %v2599, 96
      %v2864 = vpop.permute.xlu0 %2863
      %2865 = vrot.lane.b32.xlu0 %v2600, 96
      %v2866 = vpop.permute.xlu0 %2865
      %2867 = vrot.lane.b32.xlu0 %v2601, 96
      %v2868 = vpop.permute.xlu0 %2867
      %2869 = vrot.lane.b32.xlu0 %v2602, 96
      %v2870 = vpop.permute.xlu0 %2869
      %2871 = vrot.lane.b32.xlu0 %v2603, 96
      %v2872 = vpop.permute.xlu0 %2871
      %2873 = vrot.lane.b32.xlu0 %v2771, 96
      %v2874 = vpop.permute.xlu0 %2873
      %2875 = vrot.lane.b32.xlu0 %v2858, 96
      %v2876 = vpop.permute.xlu0 %2875
      %2885 = vst.msk [vmem:[#allocation3 + $0x4] sm:$0xf] %vm552, %v2862
      %2886 = vst.msk [vmem:[#allocation3 + $0x10] sm:$0xf] %vm552, %v2864
      %2887 = vst.msk [vmem:[#allocation3 + $0x1c] sm:$0xf] %vm552, %v2866
      %2888 = vst.msk [vmem:[#allocation3 + $0x28] sm:$0xf] %vm552, %v2868
      %2889 = vst.msk [vmem:[#allocation3 + $0x34] sm:$0xf] %vm552, %v2870
      %2890 = vst.msk [vmem:[#allocation3 + $0x40] sm:$0xf] %vm552, %v2872
      %2891 = vst.msk [vmem:[#allocation3 + $0x4c] sm:$0xf] %vm552, %v2874
      %2892 = vst.msk [vmem:[#allocation3 + $0x58] sm:$0xf] %vm552, %v2876
      %v2893 = vrot.slane %v2530, 2
      %v2894 = vrot.slane %v2531, 2
      %v2895 = vsel %vm437, %v2893, %v2894
      %v2897 = vpack.c.bf16 %v2895, %v2895
      %2898 = vst.msk [vmem:[#allocation3 + $0x8] sm:$0xf] %vm330, %v2678
      %2899 = vst.msk [vmem:[#allocation3 + $0x14] sm:$0xf] %vm330, %v2679
      %2900 = vst.msk [vmem:[#allocation3 + $0x20] sm:$0xf] %vm330, %v2680
      %2901 = vst.msk [vmem:[#allocation3 + $0x2c] sm:$0xf] %vm330, %v2681
      %2902 = vst.msk [vmem:[#allocation3 + $0x38] sm:$0xf] %vm330, %v2682
      %2903 = vst.msk [vmem:[#allocation3 + $0x44] sm:$0xf] %vm330, %v2683
      %2904 = vst.msk [vmem:[#allocation3 + $0x50] sm:$0xf] %vm330, %v2784
      %2905 = vst.msk [vmem:[#allocation3 + $0x5c] sm:$0xf] %vm330, %v2897
      %v2906 = vld [vmem:[#allocation3] sm:$0xff]
      %v2907 = vld [vmem:[#allocation3 + $0x8] sm:$0xf]
      %v2908 = vld [vmem:[#allocation3 + $0xc] sm:$0xff]
      %v2909 = vld [vmem:[#allocation3 + $0x14] sm:$0xf]
      %v2910 = vld [vmem:[#allocation3 + $0x18] sm:$0xff]
      %v2911 = vld [vmem:[#allocation3 + $0x20] sm:$0xf]
      %v2912 = vld [vmem:[#allocation3 + $0x24] sm:$0xff]
      %v2913 = vld [vmem:[#allocation3 + $0x2c] sm:$0xf]
      %v2914 = vld [vmem:[#allocation3 + $0x30] sm:$0xff]
      %v2915 = vld [vmem:[#allocation3 + $0x38] sm:$0xf]
      %v2916 = vld [vmem:[#allocation3 + $0x3c] sm:$0xff]
      %v2917 = vld [vmem:[#allocation3 + $0x44] sm:$0xf]
      %v2918 = vld [vmem:[#allocation3 + $0x48] sm:$0xff]
      %v2919 = vld [vmem:[#allocation3 + $0x50] sm:$0xf]
      %v2920 = vld [vmem:[#allocation3 + $0x54] sm:$0xff]
      %v2921 = vld [vmem:[#allocation3 + $0x5c] sm:$0xf]
      %v2922 = vperm.slane %v2511, 0
      %v2939 = vunpack.c.l.b16 %v2906
      %v2940 = vunpack.c.h.b16 %v2906
      %v2941 = vunpack.c.l.b16 %v2907
      %v2942 = vunpack.c.l.b16 %v2908
      %v2943 = vunpack.c.h.b16 %v2908
      %v2944 = vunpack.c.l.b16 %v2909
      %v2945 = vunpack.c.l.b16 %v2910
      %v2946 = vunpack.c.h.b16 %v2910
      %v2947 = vunpack.c.l.b16 %v2911
      %v2948 = vunpack.c.l.b16 %v2912
      %v2949 = vunpack.c.h.b16 %v2912
      %v2950 = vunpack.c.l.b16 %v2913
      %v2951 = vunpack.c.l.b16 %v2914
      %v2952 = vunpack.c.h.b16 %v2914
      %v2953 = vunpack.c.l.b16 %v2915
      %v2954 = vunpack.c.l.b16 %v2916
      %v2955 = vunpack.c.h.b16 %v2916
      %v2956 = vunpack.c.l.b16 %v2917
      %v2957 = vunpack.c.l.b16 %v2918
      %v2958 = vunpack.c.h.b16 %v2918
      %v2959 = vunpack.c.l.b16 %v2919
      %v2960 = vunpack.c.l.b16 %v2920
      %v2961 = vunpack.c.h.b16 %v2920
      %v2962 = vunpack.c.l.b16 %v2921
      %v2963 = vpack.c.b16 %v2942, %v2939
      %v2964 = vpack.c.b16 %v2943, %v2940
      %v2965 = vpack.c.b16 %v2944, %v2941
      %v2966 = vpack.c.b16 %v2948, %v2945
      %v2967 = vpack.c.b16 %v2949, %v2946
      %v2968 = vpack.c.b16 %v2950, %v2947
      %v2969 = vpack.c.b16 %v2954, %v2951
      %v2970 = vpack.c.b16 %v2955, %v2952
      %v2971 = vpack.c.b16 %v2956, %v2953
      %v2972 = vpack.c.b16 %v2960, %v2957
      %v2973 = vpack.c.b16 %v2961, %v2958
      %v2974 = vpack.c.b16 %v2962, %v2959
      %v3019 = vunpack.c.l.b16 %v2475
      %v3020 = vunpack.c.l.b16 %v2476
      %v3021 = vunpack.c.l.b16 %v2477
      %v3022 = vunpack.c.l.b16 %v2478
      %v3023 = vunpack.c.l.b16 %v2479
      %v3024 = vunpack.c.l.b16 %v2480
      %v3025 = vunpack.c.l.b16 %v2481
      %v3026 = vunpack.c.l.b16 %v2482
      %v3027 = vunpack.c.l.b16 %v2483
      %v3028 = vunpack.c.l.b16 %v2484
      %v3029 = vunpack.c.l.b16 %v2485
      %v3030 = vunpack.c.l.b16 %v2486
      %v3031 = vunpack.c.l.b16 %v2487
      %v3032 = vunpack.c.l.b16 %v2488
      %v3033 = vunpack.c.l.b16 %v2489
      %v3034 = vunpack.c.l.b16 %v2490
      %v3035 = vunpack.c.l.b16 %v2491
      %v3036 = vunpack.c.l.b16 %v2492
      %v3037 = vunpack.c.l.b16 %v2493
      %v3038 = vunpack.c.l.b16 %v2494
      %v3039 = vunpack.c.l.b16 %v2495
      %v3040 = vunpack.c.l.b16 %v2496
      %v3041 = vunpack.c.l.b16 %v2497
      %v3042 = vunpack.c.l.b16 %v2498
      %v3043 = vunpack.c.l.b16 %v2499
      %v3044 = vunpack.c.l.b16 %v2500
      %v3045 = vunpack.c.l.b16 %v2501
      %v3046 = vunpack.c.l.b16 %v2502
      %v3047 = vunpack.c.l.b16 %v2503
      %v3048 = vunpack.c.l.b16 %v2504
      %v3049 = vunpack.c.l.b16 %v2505
      %v3050 = vunpack.c.l.b16 %v2506
      %v3051 = vunpack.c.l.b16 %v2507
      %v3052 = vunpack.c.l.b16 %v2508
      %v3053 = vunpack.c.l.b16 %v2509
      %v3054 = vunpack.c.l.b16 %v2510
      %v3055 = vpack.c.b16 %v3020, %v3019
      %v3056 = vpack.c.b16 %v3022, %v3021
      %v3057 = vpack.c.b16 %v3024, %v3023
      %v3058 = vpack.c.b16 %v3026, %v3025
      %v3059 = vpack.c.b16 %v3028, %v3027
      %v3060 = vpack.c.b16 %v3030, %v3029
      %v3061 = vpack.c.b16 %v3032, %v3031
      %v3062 = vpack.c.b16 %v3034, %v3033
      %v3063 = vpack.c.b16 %v3036, %v3035
      %v3064 = vpack.c.b16 %v3038, %v3037
      %v3065 = vpack.c.b16 %v3040, %v3039
      %v3066 = vpack.c.b16 %v3042, %v3041
      %v3067 = vpack.c.b16 %v3044, %v3043
      %v3068 = vpack.c.b16 %v3046, %v3045
      %v3069 = vpack.c.b16 %v3048, %v3047
      %v3070 = vpack.c.b16 %v3050, %v3049
      %v3071 = vpack.c.b16 %v3052, %v3051
      %v3072 = vpack.c.b16 %v3054, %v3053
      %v3092 = vsel %vm226, %v2965, 0
      %v3095 = vsel %vm226, %v2968, 0
      %v3098 = vsel %vm226, %v2971, 0
      %v3101 = vsel %vm226, %v2974, 0
      %3103 = vmatpush.bf16.msra.mxu0 %v3062
      %3104 = vmatpush.bf16.msra.mxu0 %v3061
      %3105 = vmatpush.bf16.msra.mxu0 %v3060
      %3106 = vmatpush.bf16.msra.mxu0 %v3059
      %3107 = vmatpush.bf16.msra.mxu0 %v3058
      %3108 = vmatpush.bf16.msra.mxu0 %v3057
      %3109 = vmatpush.bf16.msra.mxu0 %v3056
      %3110 = vmatpush.bf16.msra.mxu0 %v3055
      %3111 = vmatmul.bf16.gmra.mxu0 %v2963
      %v3112 = vpop.f32.mrf.mxu0
      %v3113 = vadd.f32 %v2922, %v3112
      %v3114 = vpop.f32.mrf.mxu0
      %v3115 = vadd.f32 %v2922, %v3114
      %3116 = vmatmul.bf16.gmra.mxu0 %v2966
      %v3117 = vpop.f32.mrf.mxu0
      %v3118 = vadd.f32 %v2922, %v3117
      %v3119 = vpop.f32.mrf.mxu0
      %v3120 = vadd.f32 %v2922, %v3119
      %3121 = vmatmul.bf16.gmra.mxu0 %v2969
      %v3122 = vpop.f32.mrf.mxu0
      %v3123 = vadd.f32 %v2922, %v3122
      %v3124 = vpop.f32.mrf.mxu0
      %v3125 = vadd.f32 %v2922, %v3124
      %3126 = vmatmul.bf16.gmra.mxu0 %v2972
      %v3127 = vpop.f32.mrf.mxu0
      %v3128 = vadd.f32 %v2922, %v3127
      %v3129 = vpop.f32.mrf.mxu0
      %v3130 = vadd.f32 %v2922, %v3129
      %3131 = vdwg.mxu0
      %3132 = vmatpush.bf16.msra.mxu0 %v3070
      %3133 = vmatpush.bf16.msra.mxu0 %v3069
      %3134 = vmatpush.bf16.msra.mxu0 %v3068
      %3135 = vmatpush.bf16.msra.mxu0 %v3067
      %3136 = vmatpush.bf16.msra.mxu0 %v3066
      %3137 = vmatpush.bf16.msra.mxu0 %v3065
      %3138 = vmatpush.bf16.msra.mxu0 %v3064
      %3139 = vmatpush.bf16.msra.mxu0 %v3063
      %3140 = vmatmul.bf16.gmra.mxu0 %v2964
      %v3141 = vpop.f32.mrf.mxu0
      %v3142 = vadd.f32 %v3113, %v3141
      %v3143 = vpop.f32.mrf.mxu0
      %v3144 = vadd.f32 %v3115, %v3143
      %3145 = vmatmul.bf16.gmra.mxu0 %v2967
      %v3146 = vpop.f32.mrf.mxu0
      %v3147 = vadd.f32 %v3118, %v3146
      %v3148 = vpop.f32.mrf.mxu0
      %v3149 = vadd.f32 %v3120, %v3148
      %3150 = vmatmul.bf16.gmra.mxu0 %v2970
      %v3151 = vpop.f32.mrf.mxu0
      %v3152 = vadd.f32 %v3123, %v3151
      %v3153 = vpop.f32.mrf.mxu0
      %v3154 = vadd.f32 %v3125, %v3153
      %3155 = vmatmul.bf16.gmra.mxu0 %v2973
      %v3156 = vpop.f32.mrf.mxu0
      %v3157 = vadd.f32 %v3128, %v3156
      %v3158 = vpop.f32.mrf.mxu0
      %v3159 = vadd.f32 %v3130, %v3158
      %3160 = vdwg.mxu0
      %3161 = vmatpush.bf16.msra.mxu0 0
      %3162 = vmatpush.bf16.msra.mxu0 0
      %3163 = vmatpush.bf16.msra.mxu0 0
      %3164 = vmatpush.bf16.msra.mxu0 0
      %3165 = vmatpush.bf16.msra.mxu0 0
      %3166 = vmatpush.bf16.msra.mxu0 0
      %3167 = vmatpush.bf16.msra.mxu0 %v3072
      %3168 = vmatpush.bf16.msra.mxu0 %v3071
      %3169 = vmatmul.bf16.gmra.mxu0 %v3092
      %v3170 = vpop.f32.mrf.mxu0
      %v3171 = vadd.f32 %v3142, %v3170
      %v3172 = vpop.f32.mrf.mxu0
      %v3173 = vadd.f32 %v3144, %v3172
      %3174 = vmatmul.bf16.gmra.mxu0 %v3095
      %v3175 = vpop.f32.mrf.mxu0
      %v3176 = vadd.f32 %v3147, %v3175
      %v3177 = vpop.f32.mrf.mxu0
      %v3178 = vadd.f32 %v3149, %v3177
      %3179 = vmatmul.bf16.gmra.mxu0 %v3098
      %v3180 = vpop.f32.mrf.mxu0
      %v3181 = vadd.f32 %v3152, %v3180
      %v3182 = vpop.f32.mrf.mxu0
      %v3183 = vadd.f32 %v3154, %v3182
      %3184 = vmatmul.bf16.gmra.mxu0 %v3101
      %v3185 = vpop.f32.mrf.mxu0
      %v3186 = vadd.f32 %v3157, %v3185
      %v3187 = vpop.f32.mrf.mxu0
      %v3188 = vadd.f32 %v3159, %v3187
      %3189 = vdwg.mxu0
      %v3190 = vmax.f32 %v3171, 0.0
      %v3191 = vmax.f32 %v3173, 0.0
      %v3192 = vmax.f32 %v3176, 0.0
      %v3193 = vmax.f32 %v3178, 0.0
      %v3194 = vmax.f32 %v3181, 0.0
      %v3195 = vmax.f32 %v3183, 0.0
      %v3196 = vmax.f32 %v3186, 0.0
      %v3197 = vmax.f32 %v3188, 0.0
      %3198 = vst.msk [vmem:[%s256 + $0x1] sm:$0xff] %vm226, %v3190
      %3199 = vst.msk [vmem:[%s256 + $0x11] sm:$0xff] %vm226, %v3191
      %3200 = vst.msk [vmem:[%s256 + $0x21] sm:$0xff] %vm226, %v3192
      %3201 = vst.msk [vmem:[%s256 + $0x31] sm:$0xff] %vm226, %v3193
      %3202 = vst.msk [vmem:[%s256 + $0x41] sm:$0xff] %vm226, %v3194
      %3203 = vst.msk [vmem:[%s256 + $0x51] sm:$0xff] %vm226, %v3195
      %3204 = vst.msk [vmem:[%s256 + $0x61] sm:$0xff] %vm226, %v3196
      %3205 = vst.msk [vmem:[%s256 + $0x71] sm:$0xff] %vm226, %v3197
      %s3206 = scalar_lea.vmem %s1, 576
      %v3207 = vld [vmem:[%s3206] sm:$0xf]
      %v3208 = vld [vmem:[%s3206 + $0x4] sm:$0xf]
      %v3209 = vld [vmem:[%s3206 + $0x8] sm:$0xf]
      %v3210 = vld [vmem:[%s3206 + $0xc] sm:$0xf]
      %v3211 = vld [vmem:[%s3206 + $0x10] sm:$0xf]
      %v3212 = vld [vmem:[%s3206 + $0x14] sm:$0xf]
      %v3213 = vld [vmem:[%s3206 + $0x18] sm:$0xf]
      %v3214 = vld [vmem:[%s3206 + $0x1c] sm:$0xf]
      %v3215 = vld [vmem:[%s3206 + $0x20] sm:$0xf]
      %v3216 = vld [vmem:[%s3206 + $0x24] sm:$0xf]
      %v3217 = vld [vmem:[%s3206 + $0x28] sm:$0xf]
      %v3218 = vld [vmem:[%s3206 + $0x2c] sm:$0xf]
      %v3219 = vld [vmem:[%s3206 + $0x30] sm:$0xf]
      %v3220 = vld [vmem:[%s3206 + $0x34] sm:$0xf]
      %v3221 = vld [vmem:[%s3206 + $0x38] sm:$0xf]
      %v3222 = vld [vmem:[%s3206 + $0x3c] sm:$0xf]
      %v3223 = vld [vmem:[%s3206 + $0x40] sm:$0xf]
      %v3224 = vld [vmem:[%s3206 + $0x44] sm:$0xf]
      %v3225 = vld [vmem:[%s3206 + $0x48] sm:$0xf]
      %v3226 = vld [vmem:[%s3206 + $0x4c] sm:$0xf]
      %v3227 = vld [vmem:[%s3206 + $0x50] sm:$0xf]
      %v3228 = vld [vmem:[%s3206 + $0x54] sm:$0xf]
      %v3229 = vld [vmem:[%s3206 + $0x58] sm:$0xf]
      %v3230 = vld [vmem:[%s3206 + $0x5c] sm:$0xf]
      %v3231 = vld [vmem:[%s3206 + $0x60] sm:$0xf]
      %v3232 = vld [vmem:[%s3206 + $0x64] sm:$0xf]
      %v3233 = vld [vmem:[%s3206 + $0x68] sm:$0xf]
      %v3234 = vld [vmem:[%s3206 + $0x6c] sm:$0xf]
      %v3235 = vld [vmem:[%s3206 + $0x70] sm:$0xf]
      %v3236 = vld [vmem:[%s3206 + $0x74] sm:$0xf]
      %v3237 = vld [vmem:[%s3206 + $0x78] sm:$0xf]
      %v3238 = vld [vmem:[%s3206 + $0x7c] sm:$0xf]
      %v3239 = vld [vmem:[%s3206 + $0x80] sm:$0xf]
      %v3240 = vld [vmem:[%s3206 + $0x84] sm:$0xf]
      %v3241 = vld [vmem:[%s3206 + $0x88] sm:$0xf]
      %v3242 = vld [vmem:[%s3206 + $0x8c] sm:$0xf]
      %v3243 = vld [vmem:[%s2 + $0x4] sm:$0x1]
      %v3244 = vld [vmem:[#allocation2] sm:$0xff]
      %v3245 = vld [vmem:[#allocation2 + $0x8] sm:$0x3]
      %v3246 = vld [vmem:[#allocation2 + $0x10] sm:$0xff]
      %v3247 = vld [vmem:[#allocation2 + $0x18] sm:$0x3]
      %v3248 = vld [vmem:[#allocation2 + $0x20] sm:$0xff]
      %v3249 = vld [vmem:[#allocation2 + $0x28] sm:$0x3]
      %v3250 = vld [vmem:[#allocation2 + $0x30] sm:$0xff]
      %v3251 = vld [vmem:[#allocation2 + $0x38] sm:$0x3]
      %v3252 = vld [vmem:[#allocation2 + $0x40] sm:$0xff]
      %v3253 = vld [vmem:[#allocation2 + $0x48] sm:$0x3]
      %v3254 = vld [vmem:[#allocation2 + $0x50] sm:$0xff]
      %v3255 = vld [vmem:[#allocation2 + $0x58] sm:$0x3]
      %v3256 = vld [vmem:[#allocation2 + $0x60] sm:$0xff]
      %v3257 = vld [vmem:[#allocation2 + $0x68] sm:$0x3]
      %v3258 = vld [vmem:[#allocation2 + $0x70] sm:$0xff]
      %v3259 = vld [vmem:[#allocation2 + $0x78] sm:$0x3]
      %v3260 = vld [vmem:[#allocation2 + $0x80] sm:$0xff]
      %v3261 = vld [vmem:[#allocation2 + $0x88] sm:$0x3]
      %v3262 = vld [vmem:[#allocation2 + $0x90] sm:$0xff]
      %v3263 = vld [vmem:[#allocation2 + $0x98] sm:$0x3]
      %v3264 = vpack.c.bf16 %v3244, %v3244
      %v3265 = vpack.c.bf16 %v3246, %v3246
      %v3266 = vpack.c.bf16 %v3248, %v3248
      %v3267 = vpack.c.bf16 %v3250, %v3250
      %v3268 = vpack.c.bf16 %v3252, %v3252
      %v3269 = vpack.c.bf16 %v3254, %v3254
      %v3270 = vpack.c.bf16 %v3256, %v3256
      %v3271 = vpack.c.bf16 %v3258, %v3258
      %3272 = vst.msk [vmem:[#allocation3] sm:$0xf] %vm330, %v3264
      %3273 = vst.msk [vmem:[#allocation3 + $0xc] sm:$0xf] %vm330, %v3265
      %3274 = vst.msk [vmem:[#allocation3 + $0x18] sm:$0xf] %vm330, %v3266
      %3275 = vst.msk [vmem:[#allocation3 + $0x24] sm:$0xf] %vm330, %v3267
      %3276 = vst.msk [vmem:[#allocation3 + $0x30] sm:$0xf] %vm330, %v3268
      %3277 = vst.msk [vmem:[#allocation3 + $0x3c] sm:$0xf] %vm330, %v3269
      %3278 = vst.msk [vmem:[#allocation3 + $0x48] sm:$0xf] %vm330, %v3270
      %3279 = vst.msk [vmem:[#allocation3 + $0x54] sm:$0xf] %vm330, %v3271
      %v3296 = vrot.slane %v3244, 1
      %v3297 = vrot.slane %v3245, 1
      %v3298 = vsel %vm355, %v3296, %v3297
      %v3299 = vrot.slane %v3246, 1
      %v3300 = vrot.slane %v3247, 1
      %v3301 = vsel %vm355, %v3299, %v3300
      %v3302 = vrot.slane %v3248, 1
      %v3303 = vrot.slane %v3249, 1
      %v3304 = vsel %vm355, %v3302, %v3303
      %v3305 = vrot.slane %v3250, 1
      %v3306 = vrot.slane %v3251, 1
      %v3307 = vsel %vm355, %v3305, %v3306
      %v3308 = vrot.slane %v3252, 1
      %v3309 = vrot.slane %v3253, 1
      %v3310 = vsel %vm355, %v3308, %v3309
      %v3311 = vrot.slane %v3254, 1
      %v3312 = vrot.slane %v3255, 1
      %v3313 = vsel %vm355, %v3311, %v3312
      %v3314 = vrot.slane %v3256, 1
      %v3315 = vrot.slane %v3257, 1
      %v3316 = vsel %vm355, %v3314, %v3315
      %v3317 = vrot.slane %v3258, 1
      %v3318 = vrot.slane %v3259, 1
      %v3319 = vsel %vm355, %v3317, %v3318
      %v3328 = vpack.c.bf16 %v3298, %v3298
      %v3329 = vpack.c.bf16 %v3301, %v3301
      %v3330 = vpack.c.bf16 %v3304, %v3304
      %v3331 = vpack.c.bf16 %v3307, %v3307
      %v3332 = vpack.c.bf16 %v3310, %v3310
      %v3333 = vpack.c.bf16 %v3313, %v3313
      %v3334 = vpack.c.bf16 %v3316, %v3316
      %v3335 = vpack.c.bf16 %v3319, %v3319
      %3344 = vrot.lane.b32.xlu0 %v3328, 32
      %v3345 = vpop.permute.xlu0 %3344
      %3346 = vrot.lane.b32.xlu0 %v3329, 32
      %v3347 = vpop.permute.xlu0 %3346
      %3348 = vrot.lane.b32.xlu0 %v3330, 32
      %v3349 = vpop.permute.xlu0 %3348
      %3350 = vrot.lane.b32.xlu0 %v3331, 32
      %v3351 = vpop.permute.xlu0 %3350
      %3352 = vrot.lane.b32.xlu0 %v3332, 32
      %v3353 = vpop.permute.xlu0 %3352
      %3354 = vrot.lane.b32.xlu0 %v3333, 32
      %v3355 = vpop.permute.xlu0 %3354
      %3356 = vrot.lane.b32.xlu0 %v3334, 32
      %v3357 = vpop.permute.xlu0 %3356
      %3358 = vrot.lane.b32.xlu0 %v3335, 32
      %v3359 = vpop.permute.xlu0 %3358
      %3368 = vst.msk [vmem:[#allocation3] sm:$0xf] %vm428, %v3345
      %3369 = vst.msk [vmem:[#allocation3 + $0xc] sm:$0xf] %vm428, %v3347
      %3370 = vst.msk [vmem:[#allocation3 + $0x18] sm:$0xf] %vm428, %v3349
      %3371 = vst.msk [vmem:[#allocation3 + $0x24] sm:$0xf] %vm428, %v3351
      %3372 = vst.msk [vmem:[#allocation3 + $0x30] sm:$0xf] %vm428, %v3353
      %3373 = vst.msk [vmem:[#allocation3 + $0x3c] sm:$0xf] %vm428, %v3355
      %3374 = vst.msk [vmem:[#allocation3 + $0x48] sm:$0xf] %vm428, %v3357
      %3375 = vst.msk [vmem:[#allocation3 + $0x54] sm:$0xf] %vm428, %v3359
      %v3376 = vrot.slane %v3244, 2
      %v3377 = vrot.slane %v3245, 2
      %v3378 = vsel %vm437, %v3376, %v3377
      %v3379 = vrot.slane %v3246, 2
      %v3380 = vrot.slane %v3247, 2
      %v3381 = vsel %vm437, %v3379, %v3380
      %v3382 = vrot.slane %v3248, 2
      %v3383 = vrot.slane %v3249, 2
      %v3384 = vsel %vm437, %v3382, %v3383
      %v3385 = vrot.slane %v3250, 2
      %v3386 = vrot.slane %v3251, 2
      %v3387 = vsel %vm437, %v3385, %v3386
      %v3388 = vrot.slane %v3252, 2
      %v3389 = vrot.slane %v3253, 2
      %v3390 = vsel %vm437, %v3388, %v3389
      %v3391 = vrot.slane %v3254, 2
      %v3392 = vrot.slane %v3255, 2
      %v3393 = vsel %vm437, %v3391, %v3392
      %v3394 = vrot.slane %v3256, 2
      %v3395 = vrot.slane %v3257, 2
      %v3396 = vsel %vm437, %v3394, %v3395
      %v3397 = vrot.slane %v3258, 2
      %v3398 = vrot.slane %v3259, 2
      %v3399 = vsel %vm437, %v3397, %v3398
      %v3408 = vpack.c.bf16 %v3378, %v3378
      %v3409 = vpack.c.bf16 %v3381, %v3381
      %v3410 = vpack.c.bf16 %v3384, %v3384
      %v3411 = vpack.c.bf16 %v3387, %v3387
      %v3412 = vpack.c.bf16 %v3390, %v3390
      %v3413 = vpack.c.bf16 %v3393, %v3393
      %v3414 = vpack.c.bf16 %v3396, %v3396
      %v3415 = vpack.c.bf16 %v3399, %v3399
      %3424 = vrot.lane.b32.xlu0 %v3408, 64
      %v3425 = vpop.permute.xlu0 %3424
      %3426 = vrot.lane.b32.xlu0 %v3409, 64
      %v3427 = vpop.permute.xlu0 %3426
      %3428 = vrot.lane.b32.xlu0 %v3410, 64
      %v3429 = vpop.permute.xlu0 %3428
      %3430 = vrot.lane.b32.xlu0 %v3411, 64
      %v3431 = vpop.permute.xlu0 %3430
      %3432 = vrot.lane.b32.xlu0 %v3412, 64
      %v3433 = vpop.permute.xlu0 %3432
      %3434 = vrot.lane.b32.xlu0 %v3413, 64
      %v3435 = vpop.permute.xlu0 %3434
      %3436 = vrot.lane.b32.xlu0 %v3414, 64
      %v3437 = vpop.permute.xlu0 %3436
      %3438 = vrot.lane.b32.xlu0 %v3415, 64
      %v3439 = vpop.permute.xlu0 %3438
      %3448 = vst.msk [vmem:[#allocation3] sm:$0xf] %vm510, %v3425
      %3449 = vst.msk [vmem:[#allocation3 + $0xc] sm:$0xf] %vm510, %v3427
      %3450 = vst.msk [vmem:[#allocation3 + $0x18] sm:$0xf] %vm510, %v3429
      %3451 = vst.msk [vmem:[#allocation3 + $0x24] sm:$0xf] %vm510, %v3431
      %3452 = vst.msk [vmem:[#allocation3 + $0x30] sm:$0xf] %vm510, %v3433
      %3453 = vst.msk [vmem:[#allocation3 + $0x3c] sm:$0xf] %vm510, %v3435
      %3454 = vst.msk [vmem:[#allocation3 + $0x48] sm:$0xf] %vm510, %v3437
      %3455 = vst.msk [vmem:[#allocation3 + $0x54] sm:$0xf] %vm510, %v3439
      %v3456 = vpack.c.bf16 %v3260, %v3260
      %3465 = vrot.lane.b32.xlu0 %v3265, 96
      %v3466 = vpop.permute.xlu0 %3465
      %3467 = vrot.lane.b32.xlu0 %v3266, 96
      %v3468 = vpop.permute.xlu0 %3467
      %3469 = vrot.lane.b32.xlu0 %v3267, 96
      %v3470 = vpop.permute.xlu0 %3469
      %3471 = vrot.lane.b32.xlu0 %v3268, 96
      %v3472 = vpop.permute.xlu0 %3471
      %3473 = vrot.lane.b32.xlu0 %v3269, 96
      %v3474 = vpop.permute.xlu0 %3473
      %3475 = vrot.lane.b32.xlu0 %v3270, 96
      %v3476 = vpop.permute.xlu0 %3475
      %3477 = vrot.lane.b32.xlu0 %v3271, 96
      %v3478 = vpop.permute.xlu0 %3477
      %3479 = vrot.lane.b32.xlu0 %v3456, 96
      %v3480 = vpop.permute.xlu0 %3479
      %3489 = vst.msk [vmem:[#allocation3] sm:$0xf] %vm552, %v3466
      %3490 = vst.msk [vmem:[#allocation3 + $0xc] sm:$0xf] %vm552, %v3468
      %3491 = vst.msk [vmem:[#allocation3 + $0x18] sm:$0xf] %vm552, %v3470
      %3492 = vst.msk [vmem:[#allocation3 + $0x24] sm:$0xf] %vm552, %v3472
      %3493 = vst.msk [vmem:[#allocation3 + $0x30] sm:$0xf] %vm552, %v3474
      %3494 = vst.msk [vmem:[#allocation3 + $0x3c] sm:$0xf] %vm552, %v3476
      %3495 = vst.msk [vmem:[#allocation3 + $0x48] sm:$0xf] %vm552, %v3478
      %3496 = vst.msk [vmem:[#allocation3 + $0x54] sm:$0xf] %vm552, %v3480
      %v3499 = vrot.slane %v3260, 1
      %v3500 = vrot.slane %v3261, 1
      %v3501 = vsel %vm355, %v3499, %v3500
      %v3503 = vpack.c.bf16 %v3501, %v3501
      %3504 = vst.msk [vmem:[#allocation3 + $0x4] sm:$0xf] %vm330, %v3329
      %3505 = vst.msk [vmem:[#allocation3 + $0x10] sm:$0xf] %vm330, %v3330
      %3506 = vst.msk [vmem:[#allocation3 + $0x1c] sm:$0xf] %vm330, %v3331
      %3507 = vst.msk [vmem:[#allocation3 + $0x28] sm:$0xf] %vm330, %v3332
      %3508 = vst.msk [vmem:[#allocation3 + $0x34] sm:$0xf] %vm330, %v3333
      %3509 = vst.msk [vmem:[#allocation3 + $0x40] sm:$0xf] %vm330, %v3334
      %3510 = vst.msk [vmem:[#allocation3 + $0x4c] sm:$0xf] %vm330, %v3335
      %3511 = vst.msk [vmem:[#allocation3 + $0x58] sm:$0xf] %vm330, %v3503
      %v3512 = vrot.slane %v3260, 2
      %v3513 = vrot.slane %v3261, 2
      %v3514 = vsel %vm437, %v3512, %v3513
      %v3516 = vpack.c.bf16 %v3514, %v3514
      %3518 = vrot.lane.b32.xlu0 %v3409, 32
      %v3519 = vpop.permute.xlu0 %3518
      %3520 = vrot.lane.b32.xlu0 %v3410, 32
      %v3521 = vpop.permute.xlu0 %3520
      %3522 = vrot.lane.b32.xlu0 %v3411, 32
      %v3523 = vpop.permute.xlu0 %3522
      %3524 = vrot.lane.b32.xlu0 %v3412, 32
      %v3525 = vpop.permute.xlu0 %3524
      %3526 = vrot.lane.b32.xlu0 %v3413, 32
      %v3527 = vpop.permute.xlu0 %3526
      %3528 = vrot.lane.b32.xlu0 %v3414, 32
      %v3529 = vpop.permute.xlu0 %3528
      %3530 = vrot.lane.b32.xlu0 %v3415, 32
      %v3531 = vpop.permute.xlu0 %3530
      %3532 = vrot.lane.b32.xlu0 %v3516, 32
      %v3533 = vpop.permute.xlu0 %3532
      %3542 = vst.msk [vmem:[#allocation3 + $0x4] sm:$0xf] %vm428, %v3519
      %3543 = vst.msk [vmem:[#allocation3 + $0x10] sm:$0xf] %vm428, %v3521
      %3544 = vst.msk [vmem:[#allocation3 + $0x1c] sm:$0xf] %vm428, %v3523
      %3545 = vst.msk [vmem:[#allocation3 + $0x28] sm:$0xf] %vm428, %v3525
      %3546 = vst.msk [vmem:[#allocation3 + $0x34] sm:$0xf] %vm428, %v3527
      %3547 = vst.msk [vmem:[#allocation3 + $0x40] sm:$0xf] %vm428, %v3529
      %3548 = vst.msk [vmem:[#allocation3 + $0x4c] sm:$0xf] %vm428, %v3531
      %3549 = vst.msk [vmem:[#allocation3 + $0x58] sm:$0xf] %vm428, %v3533
      %v3550 = vpack.c.bf16 %v3262, %v3262
      %3552 = vrot.lane.b32.xlu0 %v3266, 64
      %v3553 = vpop.permute.xlu0 %3552
      %3554 = vrot.lane.b32.xlu0 %v3267, 64
      %v3555 = vpop.permute.xlu0 %3554
      %3556 = vrot.lane.b32.xlu0 %v3268, 64
      %v3557 = vpop.permute.xlu0 %3556
      %3558 = vrot.lane.b32.xlu0 %v3269, 64
      %v3559 = vpop.permute.xlu0 %3558
      %3560 = vrot.lane.b32.xlu0 %v3270, 64
      %v3561 = vpop.permute.xlu0 %3560
      %3562 = vrot.lane.b32.xlu0 %v3271, 64
      %v3563 = vpop.permute.xlu0 %3562
      %3564 = vrot.lane.b32.xlu0 %v3456, 64
      %v3565 = vpop.permute.xlu0 %3564
      %3566 = vrot.lane.b32.xlu0 %v3550, 64
      %v3567 = vpop.permute.xlu0 %3566
      %3576 = vst.msk [vmem:[#allocation3 + $0x4] sm:$0xf] %vm510, %v3553
      %3577 = vst.msk [vmem:[#allocation3 + $0x10] sm:$0xf] %vm510, %v3555
      %3578 = vst.msk [vmem:[#allocation3 + $0x1c] sm:$0xf] %vm510, %v3557
      %3579 = vst.msk [vmem:[#allocation3 + $0x28] sm:$0xf] %vm510, %v3559
      %3580 = vst.msk [vmem:[#allocation3 + $0x34] sm:$0xf] %vm510, %v3561
      %3581 = vst.msk [vmem:[#allocation3 + $0x40] sm:$0xf] %vm510, %v3563
      %3582 = vst.msk [vmem:[#allocation3 + $0x4c] sm:$0xf] %vm510, %v3565
      %3583 = vst.msk [vmem:[#allocation3 + $0x58] sm:$0xf] %vm510, %v3567
      %v3586 = vrot.slane %v3262, 1
      %v3587 = vrot.slane %v3263, 1
      %v3588 = vsel %vm355, %v3586, %v3587
      %v3590 = vpack.c.bf16 %v3588, %v3588
      %3593 = vrot.lane.b32.xlu0 %v3330, 96
      %v3594 = vpop.permute.xlu0 %3593
      %3595 = vrot.lane.b32.xlu0 %v3331, 96
      %v3596 = vpop.permute.xlu0 %3595
      %3597 = vrot.lane.b32.xlu0 %v3332, 96
      %v3598 = vpop.permute.xlu0 %3597
      %3599 = vrot.lane.b32.xlu0 %v3333, 96
      %v3600 = vpop.permute.xlu0 %3599
      %3601 = vrot.lane.b32.xlu0 %v3334, 96
      %v3602 = vpop.permute.xlu0 %3601
      %3603 = vrot.lane.b32.xlu0 %v3335, 96
      %v3604 = vpop.permute.xlu0 %3603
      %3605 = vrot.lane.b32.xlu0 %v3503, 96
      %v3606 = vpop.permute.xlu0 %3605
      %3607 = vrot.lane.b32.xlu0 %v3590, 96
      %v3608 = vpop.permute.xlu0 %3607
      %3617 = vst.msk [vmem:[#allocation3 + $0x4] sm:$0xf] %vm552, %v3594
      %3618 = vst.msk [vmem:[#allocation3 + $0x10] sm:$0xf] %vm552, %v3596
      %3619 = vst.msk [vmem:[#allocation3 + $0x1c] sm:$0xf] %vm552, %v3598
      %3620 = vst.msk [vmem:[#allocation3 + $0x28] sm:$0xf] %vm552, %v3600
      %3621 = vst.msk [vmem:[#allocation3 + $0x34] sm:$0xf] %vm552, %v3602
      %3622 = vst.msk [vmem:[#allocation3 + $0x40] sm:$0xf] %vm552, %v3604
      %3623 = vst.msk [vmem:[#allocation3 + $0x4c] sm:$0xf] %vm552, %v3606
      %3624 = vst.msk [vmem:[#allocation3 + $0x58] sm:$0xf] %vm552, %v3608
      %v3625 = vrot.slane %v3262, 2
      %v3626 = vrot.slane %v3263, 2
      %v3627 = vsel %vm437, %v3625, %v3626
      %v3629 = vpack.c.bf16 %v3627, %v3627
      %3630 = vst.msk [vmem:[#allocation3 + $0x8] sm:$0xf] %vm330, %v3410
      %3631 = vst.msk [vmem:[#allocation3 + $0x14] sm:$0xf] %vm330, %v3411
      %3632 = vst.msk [vmem:[#allocation3 + $0x20] sm:$0xf] %vm330, %v3412
      %3633 = vst.msk [vmem:[#allocation3 + $0x2c] sm:$0xf] %vm330, %v3413
      %3634 = vst.msk [vmem:[#allocation3 + $0x38] sm:$0xf] %vm330, %v3414
      %3635 = vst.msk [vmem:[#allocation3 + $0x44] sm:$0xf] %vm330, %v3415
      %3636 = vst.msk [vmem:[#allocation3 + $0x50] sm:$0xf] %vm330, %v3516
      %3637 = vst.msk [vmem:[#allocation3 + $0x5c] sm:$0xf] %vm330, %v3629
      %v3638 = vld [vmem:[#allocation3] sm:$0xff]
      %v3639 = vld [vmem:[#allocation3 + $0x8] sm:$0xf]
      %v3640 = vld [vmem:[#allocation3 + $0xc] sm:$0xff]
      %v3641 = vld [vmem:[#allocation3 + $0x14] sm:$0xf]
      %v3642 = vld [vmem:[#allocation3 + $0x18] sm:$0xff]
      %v3643 = vld [vmem:[#allocation3 + $0x20] sm:$0xf]
      %v3644 = vld [vmem:[#allocation3 + $0x24] sm:$0xff]
      %v3645 = vld [vmem:[#allocation3 + $0x2c] sm:$0xf]
      %v3646 = vld [vmem:[#allocation3 + $0x30] sm:$0xff]
      %v3647 = vld [vmem:[#allocation3 + $0x38] sm:$0xf]
      %v3648 = vld [vmem:[#allocation3 + $0x3c] sm:$0xff]
      %v3649 = vld [vmem:[#allocation3 + $0x44] sm:$0xf]
      %v3650 = vld [vmem:[#allocation3 + $0x48] sm:$0xff]
      %v3651 = vld [vmem:[#allocation3 + $0x50] sm:$0xf]
      %v3652 = vld [vmem:[#allocation3 + $0x54] sm:$0xff]
      %v3653 = vld [vmem:[#allocation3 + $0x5c] sm:$0xf]
      %v3654 = vperm.slane %v3243, 0
      %v3671 = vunpack.c.l.b16 %v3638
      %v3672 = vunpack.c.h.b16 %v3638
      %v3673 = vunpack.c.l.b16 %v3639
      %v3674 = vunpack.c.l.b16 %v3640
      %v3675 = vunpack.c.h.b16 %v3640
      %v3676 = vunpack.c.l.b16 %v3641
      %v3677 = vunpack.c.l.b16 %v3642
      %v3678 = vunpack.c.h.b16 %v3642
      %v3679 = vunpack.c.l.b16 %v3643
      %v3680 = vunpack.c.l.b16 %v3644
      %v3681 = vunpack.c.h.b16 %v3644
      %v3682 = vunpack.c.l.b16 %v3645
      %v3683 = vunpack.c.l.b16 %v3646
      %v3684 = vunpack.c.h.b16 %v3646
      %v3685 = vunpack.c.l.b16 %v3647
      %v3686 = vunpack.c.l.b16 %v3648
      %v3687 = vunpack.c.h.b16 %v3648
      %v3688 = vunpack.c.l.b16 %v3649
      %v3689 = vunpack.c.l.b16 %v3650
      %v3690 = vunpack.c.h.b16 %v3650
      %v3691 = vunpack.c.l.b16 %v3651
      %v3692 = vunpack.c.l.b16 %v3652
      %v3693 = vunpack.c.h.b16 %v3652
      %v3694 = vunpack.c.l.b16 %v3653
      %v3695 = vpack.c.b16 %v3674, %v3671
      %v3696 = vpack.c.b16 %v3675, %v3672
      %v3697 = vpack.c.b16 %v3676, %v3673
      %v3698 = vpack.c.b16 %v3680, %v3677
      %v3699 = vpack.c.b16 %v3681, %v3678
      %v3700 = vpack.c.b16 %v3682, %v3679
      %v3701 = vpack.c.b16 %v3686, %v3683
      %v3702 = vpack.c.b16 %v3687, %v3684
      %v3703 = vpack.c.b16 %v3688, %v3685
      %v3704 = vpack.c.b16 %v3692, %v3689
      %v3705 = vpack.c.b16 %v3693, %v3690
      %v3706 = vpack.c.b16 %v3694, %v3691
      %v3751 = vunpack.c.l.b16 %v3207
      %v3752 = vunpack.c.l.b16 %v3208
      %v3753 = vunpack.c.l.b16 %v3209
      %v3754 = vunpack.c.l.b16 %v3210
      %v3755 = vunpack.c.l.b16 %v3211
      %v3756 = vunpack.c.l.b16 %v3212
      %v3757 = vunpack.c.l.b16 %v3213
      %v3758 = vunpack.c.l.b16 %v3214
      %v3759 = vunpack.c.l.b16 %v3215
      %v3760 = vunpack.c.l.b16 %v3216
      %v3761 = vunpack.c.l.b16 %v3217
      %v3762 = vunpack.c.l.b16 %v3218
      %v3763 = vunpack.c.l.b16 %v3219
      %v3764 = vunpack.c.l.b16 %v3220
      %v3765 = vunpack.c.l.b16 %v3221
      %v3766 = vunpack.c.l.b16 %v3222
      %v3767 = vunpack.c.l.b16 %v3223
      %v3768 = vunpack.c.l.b16 %v3224
      %v3769 = vunpack.c.l.b16 %v3225
      %v3770 = vunpack.c.l.b16 %v3226
      %v3771 = vunpack.c.l.b16 %v3227
      %v3772 = vunpack.c.l.b16 %v3228
      %v3773 = vunpack.c.l.b16 %v3229
      %v3774 = vunpack.c.l.b16 %v3230
      %v3775 = vunpack.c.l.b16 %v3231
      %v3776 = vunpack.c.l.b16 %v3232
      %v3777 = vunpack.c.l.b16 %v3233
      %v3778 = vunpack.c.l.b16 %v3234
      %v3779 = vunpack.c.l.b16 %v3235
      %v3780 = vunpack.c.l.b16 %v3236
      %v3781 = vunpack.c.l.b16 %v3237
      %v3782 = vunpack.c.l.b16 %v3238
      %v3783 = vunpack.c.l.b16 %v3239
      %v3784 = vunpack.c.l.b16 %v3240
      %v3785 = vunpack.c.l.b16 %v3241
      %v3786 = vunpack.c.l.b16 %v3242
      %v3787 = vpack.c.b16 %v3752, %v3751
      %v3788 = vpack.c.b16 %v3754, %v3753
      %v3789 = vpack.c.b16 %v3756, %v3755
      %v3790 = vpack.c.b16 %v3758, %v3757
      %v3791 = vpack.c.b16 %v3760, %v3759
      %v3792 = vpack.c.b16 %v3762, %v3761
      %v3793 = vpack.c.b16 %v3764, %v3763
      %v3794 = vpack.c.b16 %v3766, %v3765
      %v3795 = vpack.c.b16 %v3768, %v3767
      %v3796 = vpack.c.b16 %v3770, %v3769
      %v3797 = vpack.c.b16 %v3772, %v3771
      %v3798 = vpack.c.b16 %v3774, %v3773
      %v3799 = vpack.c.b16 %v3776, %v3775
      %v3800 = vpack.c.b16 %v3778, %v3777
      %v3801 = vpack.c.b16 %v3780, %v3779
      %v3802 = vpack.c.b16 %v3782, %v3781
      %v3803 = vpack.c.b16 %v3784, %v3783
      %v3804 = vpack.c.b16 %v3786, %v3785
      %v3824 = vsel %vm226, %v3697, 0
      %v3827 = vsel %vm226, %v3700, 0
      %v3830 = vsel %vm226, %v3703, 0
      %v3833 = vsel %vm226, %v3706, 0
      %3835 = vmatpush.bf16.msra.mxu0 %v3794
      %3836 = vmatpush.bf16.msra.mxu0 %v3793
      %3837 = vmatpush.bf16.msra.mxu0 %v3792
      %3838 = vmatpush.bf16.msra.mxu0 %v3791
      %3839 = vmatpush.bf16.msra.mxu0 %v3790
      %3840 = vmatpush.bf16.msra.mxu0 %v3789
      %3841 = vmatpush.bf16.msra.mxu0 %v3788
      %3842 = vmatpush.bf16.msra.mxu0 %v3787
      %3843 = vmatmul.bf16.gmra.mxu0 %v3695
      %v3844 = vpop.f32.mrf.mxu0
      %v3845 = vadd.f32 %v3654, %v3844
      %v3846 = vpop.f32.mrf.mxu0
      %v3847 = vadd.f32 %v3654, %v3846
      %3848 = vmatmul.bf16.gmra.mxu0 %v3698
      %v3849 = vpop.f32.mrf.mxu0
      %v3850 = vadd.f32 %v3654, %v3849
      %v3851 = vpop.f32.mrf.mxu0
      %v3852 = vadd.f32 %v3654, %v3851
      %3853 = vmatmul.bf16.gmra.mxu0 %v3701
      %v3854 = vpop.f32.mrf.mxu0
      %v3855 = vadd.f32 %v3654, %v3854
      %v3856 = vpop.f32.mrf.mxu0
      %v3857 = vadd.f32 %v3654, %v3856
      %3858 = vmatmul.bf16.gmra.mxu0 %v3704
      %v3859 = vpop.f32.mrf.mxu0
      %v3860 = vadd.f32 %v3654, %v3859
      %v3861 = vpop.f32.mrf.mxu0
      %v3862 = vadd.f32 %v3654, %v3861
      %3863 = vdwg.mxu0
      %3864 = vmatpush.bf16.msra.mxu0 %v3802
      %3865 = vmatpush.bf16.msra.mxu0 %v3801
      %3866 = vmatpush.bf16.msra.mxu0 %v3800
      %3867 = vmatpush.bf16.msra.mxu0 %v3799
      %3868 = vmatpush.bf16.msra.mxu0 %v3798
      %3869 = vmatpush.bf16.msra.mxu0 %v3797
      %3870 = vmatpush.bf16.msra.mxu0 %v3796
      %3871 = vmatpush.bf16.msra.mxu0 %v3795
      %3872 = vmatmul.bf16.gmra.mxu0 %v3696
      %v3873 = vpop.f32.mrf.mxu0
      %v3874 = vadd.f32 %v3845, %v3873
      %v3875 = vpop.f32.mrf.mxu0
      %v3876 = vadd.f32 %v3847, %v3875
      %3877 = vmatmul.bf16.gmra.mxu0 %v3699
      %v3878 = vpop.f32.mrf.mxu0
      %v3879 = vadd.f32 %v3850, %v3878
      %v3880 = vpop.f32.mrf.mxu0
      %v3881 = vadd.f32 %v3852, %v3880
      %3882 = vmatmul.bf16.gmra.mxu0 %v3702
      %v3883 = vpop.f32.mrf.mxu0
      %v3884 = vadd.f32 %v3855, %v3883
      %v3885 = vpop.f32.mrf.mxu0
      %v3886 = vadd.f32 %v3857, %v3885
      %3887 = vmatmul.bf16.gmra.mxu0 %v3705
      %v3888 = vpop.f32.mrf.mxu0
      %v3889 = vadd.f32 %v3860, %v3888
      %v3890 = vpop.f32.mrf.mxu0
      %v3891 = vadd.f32 %v3862, %v3890
      %3892 = vdwg.mxu0
      %3893 = vmatpush.bf16.msra.mxu0 0
      %3894 = vmatpush.bf16.msra.mxu0 0
      %3895 = vmatpush.bf16.msra.mxu0 0
      %3896 = vmatpush.bf16.msra.mxu0 0
      %3897 = vmatpush.bf16.msra.mxu0 0
      %3898 = vmatpush.bf16.msra.mxu0 0
      %3899 = vmatpush.bf16.msra.mxu0 %v3804
      %3900 = vmatpush.bf16.msra.mxu0 %v3803
      %3901 = vmatmul.bf16.gmra.mxu0 %v3824
      %v3902 = vpop.f32.mrf.mxu0
      %v3903 = vadd.f32 %v3874, %v3902
      %v3904 = vpop.f32.mrf.mxu0
      %v3905 = vadd.f32 %v3876, %v3904
      %3906 = vmatmul.bf16.gmra.mxu0 %v3827
      %v3907 = vpop.f32.mrf.mxu0
      %v3908 = vadd.f32 %v3879, %v3907
      %v3909 = vpop.f32.mrf.mxu0
      %v3910 = vadd.f32 %v3881, %v3909
      %3911 = vmatmul.bf16.gmra.mxu0 %v3830
      %v3912 = vpop.f32.mrf.mxu0
      %v3913 = vadd.f32 %v3884, %v3912
      %v3914 = vpop.f32.mrf.mxu0
      %v3915 = vadd.f32 %v3886, %v3914
      %3916 = vmatmul.bf16.gmra.mxu0 %v3833
      %v3917 = vpop.f32.mrf.mxu0
      %v3918 = vadd.f32 %v3889, %v3917
      %v3919 = vpop.f32.mrf.mxu0
      %v3920 = vadd.f32 %v3891, %v3919
      %3921 = vdwg.mxu0
      %v3922 = vadd.f32 %v3903, %v2458
      %v3923 = vadd.f32 %v3905, %v2459
      %v3924 = vadd.f32 %v3908, %v2460
      %v3925 = vadd.f32 %v3910, %v2461
      %v3926 = vadd.f32 %v3913, %v2462
      %v3927 = vadd.f32 %v3915, %v2463
      %v3928 = vadd.f32 %v3918, %v2464
      %v3929 = vadd.f32 %v3920, %v2465
      %v3930 = vmax.f32 %v3922, 0.0
      %v3931 = vmax.f32 %v3923, 0.0
      %v3932 = vmax.f32 %v3924, 0.0
      %v3933 = vmax.f32 %v3925, 0.0
      %v3934 = vmax.f32 %v3926, 0.0
      %v3935 = vmax.f32 %v3927, 0.0
      %v3936 = vmax.f32 %v3928, 0.0
      %v3937 = vmax.f32 %v3929, 0.0
      %3938 = vst.msk [vmem:[%s256 + $0x1] sm:$0xff] %vm226, %v3930
      %3939 = vst.msk [vmem:[%s256 + $0x11] sm:$0xff] %vm226, %v3931
      %3940 = vst.msk [vmem:[%s256 + $0x21] sm:$0xff] %vm226, %v3932
      %3941 = vst.msk [vmem:[%s256 + $0x31] sm:$0xff] %vm226, %v3933
      %3942 = vst.msk [vmem:[%s256 + $0x41] sm:$0xff] %vm226, %v3934
      %3943 = vst.msk [vmem:[%s256 + $0x51] sm:$0xff] %vm226, %v3935
      %3944 = vst.msk [vmem:[%s256 + $0x61] sm:$0xff] %vm226, %v3936
      %3945 = vst.msk [vmem:[%s256 + $0x71] sm:$0xff] %vm226, %v3937
      %s3946 = scalar_lea.vmem %s1, 720
      %v3947 = vld [vmem:[%s3946] sm:$0xf]
      %v3948 = vld [vmem:[%s3946 + $0x4] sm:$0xf]
      %v3949 = vld [vmem:[%s3946 + $0x8] sm:$0xf]
      %v3950 = vld [vmem:[%s3946 + $0xc] sm:$0xf]
      %v3951 = vld [vmem:[%s3946 + $0x10] sm:$0xf]
      %v3952 = vld [vmem:[%s3946 + $0x14] sm:$0xf]
      %v3953 = vld [vmem:[%s3946 + $0x18] sm:$0xf]
      %v3954 = vld [vmem:[%s3946 + $0x1c] sm:$0xf]
      %v3955 = vld [vmem:[%s3946 + $0x20] sm:$0xf]
      %v3956 = vld [vmem:[%s3946 + $0x24] sm:$0xf]
      %v3957 = vld [vmem:[%s3946 + $0x28] sm:$0xf]
      %v3958 = vld [vmem:[%s3946 + $0x2c] sm:$0xf]
      %v3959 = vld [vmem:[%s3946 + $0x30] sm:$0xf]
      %v3960 = vld [vmem:[%s3946 + $0x34] sm:$0xf]
      %v3961 = vld [vmem:[%s3946 + $0x38] sm:$0xf]
      %v3962 = vld [vmem:[%s3946 + $0x3c] sm:$0xf]
      %v3963 = vld [vmem:[%s3946 + $0x40] sm:$0xf]
      %v3964 = vld [vmem:[%s3946 + $0x44] sm:$0xf]
      %v3965 = vld [vmem:[%s3946 + $0x48] sm:$0xf]
      %v3966 = vld [vmem:[%s3946 + $0x4c] sm:$0xf]
      %v3967 = vld [vmem:[%s3946 + $0x50] sm:$0xf]
      %v3968 = vld [vmem:[%s3946 + $0x54] sm:$0xf]
      %v3969 = vld [vmem:[%s3946 + $0x58] sm:$0xf]
      %v3970 = vld [vmem:[%s3946 + $0x5c] sm:$0xf]
      %v3971 = vld [vmem:[%s3946 + $0x60] sm:$0xf]
      %v3972 = vld [vmem:[%s3946 + $0x64] sm:$0xf]
      %v3973 = vld [vmem:[%s3946 + $0x68] sm:$0xf]
      %v3974 = vld [vmem:[%s3946 + $0x6c] sm:$0xf]
      %v3975 = vld [vmem:[%s3946 + $0x70] sm:$0xf]
      %v3976 = vld [vmem:[%s3946 + $0x74] sm:$0xf]
      %v3977 = vld [vmem:[%s3946 + $0x78] sm:$0xf]
      %v3978 = vld [vmem:[%s3946 + $0x7c] sm:$0xf]
      %v3979 = vld [vmem:[%s3946 + $0x80] sm:$0xf]
      %v3980 = vld [vmem:[%s3946 + $0x84] sm:$0xf]
      %v3981 = vld [vmem:[%s3946 + $0x88] sm:$0xf]
      %v3982 = vld [vmem:[%s3946 + $0x8c] sm:$0xf]
      %v3983 = vld [vmem:[%s2 + $0x5] sm:$0x1]
      %v3984 = vld [vmem:[#allocation2] sm:$0xff]
      %v3985 = vld [vmem:[#allocation2 + $0x8] sm:$0x3]
      %v3986 = vld [vmem:[#allocation2 + $0x10] sm:$0xff]
      %v3987 = vld [vmem:[#allocation2 + $0x18] sm:$0x3]
      %v3988 = vld [vmem:[#allocation2 + $0x20] sm:$0xff]
      %v3989 = vld [vmem:[#allocation2 + $0x28] sm:$0x3]
      %v3990 = vld [vmem:[#allocation2 + $0x30] sm:$0xff]
      %v3991 = vld [vmem:[#allocation2 + $0x38] sm:$0x3]
      %v3992 = vld [vmem:[#allocation2 + $0x40] sm:$0xff]
      %v3993 = vld [vmem:[#allocation2 + $0x48] sm:$0x3]
      %v3994 = vld [vmem:[#allocation2 + $0x50] sm:$0xff]
      %v3995 = vld [vmem:[#allocation2 + $0x58] sm:$0x3]
      %v3996 = vld [vmem:[#allocation2 + $0x60] sm:$0xff]
      %v3997 = vld [vmem:[#allocation2 + $0x68] sm:$0x3]
      %v3998 = vld [vmem:[#allocation2 + $0x70] sm:$0xff]
      %v3999 = vld [vmem:[#allocation2 + $0x78] sm:$0x3]
      %v4000 = vld [vmem:[#allocation2 + $0x80] sm:$0xff]
      %v4001 = vld [vmem:[#allocation2 + $0x88] sm:$0x3]
      %v4002 = vld [vmem:[#allocation2 + $0x90] sm:$0xff]
      %v4003 = vld [vmem:[#allocation2 + $0x98] sm:$0x3]
      %v4004 = vpack.c.bf16 %v3984, %v3984
      %v4005 = vpack.c.bf16 %v3986, %v3986
      %v4006 = vpack.c.bf16 %v3988, %v3988
      %v4007 = vpack.c.bf16 %v3990, %v3990
      %v4008 = vpack.c.bf16 %v3992, %v3992
      %v4009 = vpack.c.bf16 %v3994, %v3994
      %v4010 = vpack.c.bf16 %v3996, %v3996
      %v4011 = vpack.c.bf16 %v3998, %v3998
      %4012 = vst.msk [vmem:[#allocation3] sm:$0xf] %vm330, %v4004
      %4013 = vst.msk [vmem:[#allocation3 + $0xc] sm:$0xf] %vm330, %v4005
      %4014 = vst.msk [vmem:[#allocation3 + $0x18] sm:$0xf] %vm330, %v4006
      %4015 = vst.msk [vmem:[#allocation3 + $0x24] sm:$0xf] %vm330, %v4007
      %4016 = vst.msk [vmem:[#allocation3 + $0x30] sm:$0xf] %vm330, %v4008
      %4017 = vst.msk [vmem:[#allocation3 + $0x3c] sm:$0xf] %vm330, %v4009
      %4018 = vst.msk [vmem:[#allocation3 + $0x48] sm:$0xf] %vm330, %v4010
      %4019 = vst.msk [vmem:[#allocation3 + $0x54] sm:$0xf] %vm330, %v4011
      %v4036 = vrot.slane %v3984, 1
      %v4037 = vrot.slane %v3985, 1
      %v4038 = vsel %vm355, %v4036, %v4037
      %v4039 = vrot.slane %v3986, 1
      %v4040 = vrot.slane %v3987, 1
      %v4041 = vsel %vm355, %v4039, %v4040
      %v4042 = vrot.slane %v3988, 1
      %v4043 = vrot.slane %v3989, 1
      %v4044 = vsel %vm355, %v4042, %v4043
      %v4045 = vrot.slane %v3990, 1
      %v4046 = vrot.slane %v3991, 1
      %v4047 = vsel %vm355, %v4045, %v4046
      %v4048 = vrot.slane %v3992, 1
      %v4049 = vrot.slane %v3993, 1
      %v4050 = vsel %vm355, %v4048, %v4049
      %v4051 = vrot.slane %v3994, 1
      %v4052 = vrot.slane %v3995, 1
      %v4053 = vsel %vm355, %v4051, %v4052
      %v4054 = vrot.slane %v3996, 1
      %v4055 = vrot.slane %v3997, 1
      %v4056 = vsel %vm355, %v4054, %v4055
      %v4057 = vrot.slane %v3998, 1
      %v4058 = vrot.slane %v3999, 1
      %v4059 = vsel %vm355, %v4057, %v4058
      %v4068 = vpack.c.bf16 %v4038, %v4038
      %v4069 = vpack.c.bf16 %v4041, %v4041
      %v4070 = vpack.c.bf16 %v4044, %v4044
      %v4071 = vpack.c.bf16 %v4047, %v4047
      %v4072 = vpack.c.bf16 %v4050, %v4050
      %v4073 = vpack.c.bf16 %v4053, %v4053
      %v4074 = vpack.c.bf16 %v4056, %v4056
      %v4075 = vpack.c.bf16 %v4059, %v4059
      %4084 = vrot.lane.b32.xlu0 %v4068, 32
      %v4085 = vpop.permute.xlu0 %4084
      %4086 = vrot.lane.b32.xlu0 %v4069, 32
      %v4087 = vpop.permute.xlu0 %4086
      %4088 = vrot.lane.b32.xlu0 %v4070, 32
      %v4089 = vpop.permute.xlu0 %4088
      %4090 = vrot.lane.b32.xlu0 %v4071, 32
      %v4091 = vpop.permute.xlu0 %4090
      %4092 = vrot.lane.b32.xlu0 %v4072, 32
      %v4093 = vpop.permute.xlu0 %4092
      %4094 = vrot.lane.b32.xlu0 %v4073, 32
      %v4095 = vpop.permute.xlu0 %4094
      %4096 = vrot.lane.b32.xlu0 %v4074, 32
      %v4097 = vpop.permute.xlu0 %4096
      %4098 = vrot.lane.b32.xlu0 %v4075, 32
      %v4099 = vpop.permute.xlu0 %4098
      %4108 = vst.msk [vmem:[#allocation3] sm:$0xf] %vm428, %v4085
      %4109 = vst.msk [vmem:[#allocation3 + $0xc] sm:$0xf] %vm428, %v4087
      %4110 = vst.msk [vmem:[#allocation3 + $0x18] sm:$0xf] %vm428, %v4089
      %4111 = vst.msk [vmem:[#allocation3 + $0x24] sm:$0xf] %vm428, %v4091
      %4112 = vst.msk [vmem:[#allocation3 + $0x30] sm:$0xf] %vm428, %v4093
      %4113 = vst.msk [vmem:[#allocation3 + $0x3c] sm:$0xf] %vm428, %v4095
      %4114 = vst.msk [vmem:[#allocation3 + $0x48] sm:$0xf] %vm428, %v4097
      %4115 = vst.msk [vmem:[#allocation3 + $0x54] sm:$0xf] %vm428, %v4099
      %v4116 = vrot.slane %v3984, 2
      %v4117 = vrot.slane %v3985, 2
      %v4118 = vsel %vm437, %v4116, %v4117
      %v4119 = vrot.slane %v3986, 2
      %v4120 = vrot.slane %v3987, 2
      %v4121 = vsel %vm437, %v4119, %v4120
      %v4122 = vrot.slane %v3988, 2
      %v4123 = vrot.slane %v3989, 2
      %v4124 = vsel %vm437, %v4122, %v4123
      %v4125 = vrot.slane %v3990, 2
      %v4126 = vrot.slane %v3991, 2
      %v4127 = vsel %vm437, %v4125, %v4126
      %v4128 = vrot.slane %v3992, 2
      %v4129 = vrot.slane %v3993, 2
      %v4130 = vsel %vm437, %v4128, %v4129
      %v4131 = vrot.slane %v3994, 2
      %v4132 = vrot.slane %v3995, 2
      %v4133 = vsel %vm437, %v4131, %v4132
      %v4134 = vrot.slane %v3996, 2
      %v4135 = vrot.slane %v3997, 2
      %v4136 = vsel %vm437, %v4134, %v4135
      %v4137 = vrot.slane %v3998, 2
      %v4138 = vrot.slane %v3999, 2
      %v4139 = vsel %vm437, %v4137, %v4138
      %v4148 = vpack.c.bf16 %v4118, %v4118
      %v4149 = vpack.c.bf16 %v4121, %v4121
      %v4150 = vpack.c.bf16 %v4124, %v4124
      %v4151 = vpack.c.bf16 %v4127, %v4127
      %v4152 = vpack.c.bf16 %v4130, %v4130
      %v4153 = vpack.c.bf16 %v4133, %v4133
      %v4154 = vpack.c.bf16 %v4136, %v4136
      %v4155 = vpack.c.bf16 %v4139, %v4139
      %4164 = vrot.lane.b32.xlu0 %v4148, 64
      %v4165 = vpop.permute.xlu0 %4164
      %4166 = vrot.lane.b32.xlu0 %v4149, 64
      %v4167 = vpop.permute.xlu0 %4166
      %4168 = vrot.lane.b32.xlu0 %v4150, 64
      %v4169 = vpop.permute.xlu0 %4168
      %4170 = vrot.lane.b32.xlu0 %v4151, 64
      %v4171 = vpop.permute.xlu0 %4170
      %4172 = vrot.lane.b32.xlu0 %v4152, 64
      %v4173 = vpop.permute.xlu0 %4172
      %4174 = vrot.lane.b32.xlu0 %v4153, 64
      %v4175 = vpop.permute.xlu0 %4174
      %4176 = vrot.lane.b32.xlu0 %v4154, 64
      %v4177 = vpop.permute.xlu0 %4176
      %4178 = vrot.lane.b32.xlu0 %v4155, 64
      %v4179 = vpop.permute.xlu0 %4178
      %4188 = vst.msk [vmem:[#allocation3] sm:$0xf] %vm510, %v4165
      %4189 = vst.msk [vmem:[#allocation3 + $0xc] sm:$0xf] %vm510, %v4167
      %4190 = vst.msk [vmem:[#allocation3 + $0x18] sm:$0xf] %vm510, %v4169
      %4191 = vst.msk [vmem:[#allocation3 + $0x24] sm:$0xf] %vm510, %v4171
      %4192 = vst.msk [vmem:[#allocation3 + $0x30] sm:$0xf] %vm510, %v4173
      %4193 = vst.msk [vmem:[#allocation3 + $0x3c] sm:$0xf] %vm510, %v4175
      %4194 = vst.msk [vmem:[#allocation3 + $0x48] sm:$0xf] %vm510, %v4177
      %4195 = vst.msk [vmem:[#allocation3 + $0x54] sm:$0xf] %vm510, %v4179
      %v4196 = vpack.c.bf16 %v4000, %v4000
      %4205 = vrot.lane.b32.xlu0 %v4005, 96
      %v4206 = vpop.permute.xlu0 %4205
      %4207 = vrot.lane.b32.xlu0 %v4006, 96
      %v4208 = vpop.permute.xlu0 %4207
      %4209 = vrot.lane.b32.xlu0 %v4007, 96
      %v4210 = vpop.permute.xlu0 %4209
      %4211 = vrot.lane.b32.xlu0 %v4008, 96
      %v4212 = vpop.permute.xlu0 %4211
      %4213 = vrot.lane.b32.xlu0 %v4009, 96
      %v4214 = vpop.permute.xlu0 %4213
      %4215 = vrot.lane.b32.xlu0 %v4010, 96
      %v4216 = vpop.permute.xlu0 %4215
      %4217 = vrot.lane.b32.xlu0 %v4011, 96
      %v4218 = vpop.permute.xlu0 %4217
      %4219 = vrot.lane.b32.xlu0 %v4196, 96
      %v4220 = vpop.permute.xlu0 %4219
      %4229 = vst.msk [vmem:[#allocation3] sm:$0xf] %vm552, %v4206
      %4230 = vst.msk [vmem:[#allocation3 + $0xc] sm:$0xf] %vm552, %v4208
      %4231 = vst.msk [vmem:[#allocation3 + $0x18] sm:$0xf] %vm552, %v4210
      %4232 = vst.msk [vmem:[#allocation3 + $0x24] sm:$0xf] %vm552, %v4212
      %4233 = vst.msk [vmem:[#allocation3 + $0x30] sm:$0xf] %vm552, %v4214
      %4234 = vst.msk [vmem:[#allocation3 + $0x3c] sm:$0xf] %vm552, %v4216
      %4235 = vst.msk [vmem:[#allocation3 + $0x48] sm:$0xf] %vm552, %v4218
      %4236 = vst.msk [vmem:[#allocation3 + $0x54] sm:$0xf] %vm552, %v4220
      %v4239 = vrot.slane %v4000, 1
      %v4240 = vrot.slane %v4001, 1
      %v4241 = vsel %vm355, %v4239, %v4240
      %v4243 = vpack.c.bf16 %v4241, %v4241
      %4244 = vst.msk [vmem:[#allocation3 + $0x4] sm:$0xf] %vm330, %v4069
      %4245 = vst.msk [vmem:[#allocation3 + $0x10] sm:$0xf] %vm330, %v4070
      %4246 = vst.msk [vmem:[#allocation3 + $0x1c] sm:$0xf] %vm330, %v4071
      %4247 = vst.msk [vmem:[#allocation3 + $0x28] sm:$0xf] %vm330, %v4072
      %4248 = vst.msk [vmem:[#allocation3 + $0x34] sm:$0xf] %vm330, %v4073
      %4249 = vst.msk [vmem:[#allocation3 + $0x40] sm:$0xf] %vm330, %v4074
      %4250 = vst.msk [vmem:[#allocation3 + $0x4c] sm:$0xf] %vm330, %v4075
      %4251 = vst.msk [vmem:[#allocation3 + $0x58] sm:$0xf] %vm330, %v4243
      %v4252 = vrot.slane %v4000, 2
      %v4253 = vrot.slane %v4001, 2
      %v4254 = vsel %vm437, %v4252, %v4253
      %v4256 = vpack.c.bf16 %v4254, %v4254
      %4258 = vrot.lane.b32.xlu0 %v4149, 32
      %v4259 = vpop.permute.xlu0 %4258
      %4260 = vrot.lane.b32.xlu0 %v4150, 32
      %v4261 = vpop.permute.xlu0 %4260
      %4262 = vrot.lane.b32.xlu0 %v4151, 32
      %v4263 = vpop.permute.xlu0 %4262
      %4264 = vrot.lane.b32.xlu0 %v4152, 32
      %v4265 = vpop.permute.xlu0 %4264
      %4266 = vrot.lane.b32.xlu0 %v4153, 32
      %v4267 = vpop.permute.xlu0 %4266
      %4268 = vrot.lane.b32.xlu0 %v4154, 32
      %v4269 = vpop.permute.xlu0 %4268
      %4270 = vrot.lane.b32.xlu0 %v4155, 32
      %v4271 = vpop.permute.xlu0 %4270
      %4272 = vrot.lane.b32.xlu0 %v4256, 32
      %v4273 = vpop.permute.xlu0 %4272
      %4282 = vst.msk [vmem:[#allocation3 + $0x4] sm:$0xf] %vm428, %v4259
      %4283 = vst.msk [vmem:[#allocation3 + $0x10] sm:$0xf] %vm428, %v4261
      %4284 = vst.msk [vmem:[#allocation3 + $0x1c] sm:$0xf] %vm428, %v4263
      %4285 = vst.msk [vmem:[#allocation3 + $0x28] sm:$0xf] %vm428, %v4265
      %4286 = vst.msk [vmem:[#allocation3 + $0x34] sm:$0xf] %vm428, %v4267
      %4287 = vst.msk [vmem:[#allocation3 + $0x40] sm:$0xf] %vm428, %v4269
      %4288 = vst.msk [vmem:[#allocation3 + $0x4c] sm:$0xf] %vm428, %v4271
      %4289 = vst.msk [vmem:[#allocation3 + $0x58] sm:$0xf] %vm428, %v4273
      %v4290 = vpack.c.bf16 %v4002, %v4002
      %4292 = vrot.lane.b32.xlu0 %v4006, 64
      %v4293 = vpop.permute.xlu0 %4292
      %4294 = vrot.lane.b32.xlu0 %v4007, 64
      %v4295 = vpop.permute.xlu0 %4294
      %4296 = vrot.lane.b32.xlu0 %v4008, 64
      %v4297 = vpop.permute.xlu0 %4296
      %4298 = vrot.lane.b32.xlu0 %v4009, 64
      %v4299 = vpop.permute.xlu0 %4298
      %4300 = vrot.lane.b32.xlu0 %v4010, 64
      %v4301 = vpop.permute.xlu0 %4300
      %4302 = vrot.lane.b32.xlu0 %v4011, 64
      %v4303 = vpop.permute.xlu0 %4302
      %4304 = vrot.lane.b32.xlu0 %v4196, 64
      %v4305 = vpop.permute.xlu0 %4304
      %4306 = vrot.lane.b32.xlu0 %v4290, 64
      %v4307 = vpop.permute.xlu0 %4306
      %4316 = vst.msk [vmem:[#allocation3 + $0x4] sm:$0xf] %vm510, %v4293
      %4317 = vst.msk [vmem:[#allocation3 + $0x10] sm:$0xf] %vm510, %v4295
      %4318 = vst.msk [vmem:[#allocation3 + $0x1c] sm:$0xf] %vm510, %v4297
      %4319 = vst.msk [vmem:[#allocation3 + $0x28] sm:$0xf] %vm510, %v4299
      %4320 = vst.msk [vmem:[#allocation3 + $0x34] sm:$0xf] %vm510, %v4301
      %4321 = vst.msk [vmem:[#allocation3 + $0x40] sm:$0xf] %vm510, %v4303
      %4322 = vst.msk [vmem:[#allocation3 + $0x4c] sm:$0xf] %vm510, %v4305
      %4323 = vst.msk [vmem:[#allocation3 + $0x58] sm:$0xf] %vm510, %v4307
      %v4326 = vrot.slane %v4002, 1
      %v4327 = vrot.slane %v4003, 1
      %v4328 = vsel %vm355, %v4326, %v4327
      %v4330 = vpack.c.bf16 %v4328, %v4328
      %4333 = vrot.lane.b32.xlu0 %v4070, 96
      %v4334 = vpop.permute.xlu0 %4333
      %4335 = vrot.lane.b32.xlu0 %v4071, 96
      %v4336 = vpop.permute.xlu0 %4335
      %4337 = vrot.lane.b32.xlu0 %v4072, 96
      %v4338 = vpop.permute.xlu0 %4337
      %4339 = vrot.lane.b32.xlu0 %v4073, 96
      %v4340 = vpop.permute.xlu0 %4339
      %4341 = vrot.lane.b32.xlu0 %v4074, 96
      %v4342 = vpop.permute.xlu0 %4341
      %4343 = vrot.lane.b32.xlu0 %v4075, 96
      %v4344 = vpop.permute.xlu0 %4343
      %4345 = vrot.lane.b32.xlu0 %v4243, 96
      %v4346 = vpop.permute.xlu0 %4345
      %4347 = vrot.lane.b32.xlu0 %v4330, 96
      %v4348 = vpop.permute.xlu0 %4347
      %4357 = vst.msk [vmem:[#allocation3 + $0x4] sm:$0xf] %vm552, %v4334
      %4358 = vst.msk [vmem:[#allocation3 + $0x10] sm:$0xf] %vm552, %v4336
      %4359 = vst.msk [vmem:[#allocation3 + $0x1c] sm:$0xf] %vm552, %v4338
      %4360 = vst.msk [vmem:[#allocation3 + $0x28] sm:$0xf] %vm552, %v4340
      %4361 = vst.msk [vmem:[#allocation3 + $0x34] sm:$0xf] %vm552, %v4342
      %4362 = vst.msk [vmem:[#allocation3 + $0x40] sm:$0xf] %vm552, %v4344
      %4363 = vst.msk [vmem:[#allocation3 + $0x4c] sm:$0xf] %vm552, %v4346
      %4364 = vst.msk [vmem:[#allocation3 + $0x58] sm:$0xf] %vm552, %v4348
      %v4365 = vrot.slane %v4002, 2
      %v4366 = vrot.slane %v4003, 2
      %v4367 = vsel %vm437, %v4365, %v4366
      %v4369 = vpack.c.bf16 %v4367, %v4367
      %4370 = vst.msk [vmem:[#allocation3 + $0x8] sm:$0xf] %vm330, %v4150
      %4371 = vst.msk [vmem:[#allocation3 + $0x14] sm:$0xf] %vm330, %v4151
      %4372 = vst.msk [vmem:[#allocation3 + $0x20] sm:$0xf] %vm330, %v4152
      %4373 = vst.msk [vmem:[#allocation3 + $0x2c] sm:$0xf] %vm330, %v4153
      %4374 = vst.msk [vmem:[#allocation3 + $0x38] sm:$0xf] %vm330, %v4154
      %4375 = vst.msk [vmem:[#allocation3 + $0x44] sm:$0xf] %vm330, %v4155
      %4376 = vst.msk [vmem:[#allocation3 + $0x50] sm:$0xf] %vm330, %v4256
      %4377 = vst.msk [vmem:[#allocation3 + $0x5c] sm:$0xf] %vm330, %v4369
      %v4378 = vld [vmem:[#allocation3] sm:$0xff]
      %v4379 = vld [vmem:[#allocation3 + $0x8] sm:$0xf]
      %v4380 = vld [vmem:[#allocation3 + $0xc] sm:$0xff]
      %v4381 = vld [vmem:[#allocation3 + $0x14] sm:$0xf]
      %v4382 = vld [vmem:[#allocation3 + $0x18] sm:$0xff]
      %v4383 = vld [vmem:[#allocation3 + $0x20] sm:$0xf]
      %v4384 = vld [vmem:[#allocation3 + $0x24] sm:$0xff]
      %v4385 = vld [vmem:[#allocation3 + $0x2c] sm:$0xf]
      %v4386 = vld [vmem:[#allocation3 + $0x30] sm:$0xff]
      %v4387 = vld [vmem:[#allocation3 + $0x38] sm:$0xf]
      %v4388 = vld [vmem:[#allocation3 + $0x3c] sm:$0xff]
      %v4389 = vld [vmem:[#allocation3 + $0x44] sm:$0xf]
      %v4390 = vld [vmem:[#allocation3 + $0x48] sm:$0xff]
      %v4391 = vld [vmem:[#allocation3 + $0x50] sm:$0xf]
      %v4392 = vld [vmem:[#allocation3 + $0x54] sm:$0xff]
      %v4393 = vld [vmem:[#allocation3 + $0x5c] sm:$0xf]
      %v4394 = vperm.slane %v3983, 0
      %v4411 = vunpack.c.l.b16 %v4378
      %v4412 = vunpack.c.h.b16 %v4378
      %v4413 = vunpack.c.l.b16 %v4379
      %v4414 = vunpack.c.l.b16 %v4380
      %v4415 = vunpack.c.h.b16 %v4380
      %v4416 = vunpack.c.l.b16 %v4381
      %v4417 = vunpack.c.l.b16 %v4382
      %v4418 = vunpack.c.h.b16 %v4382
      %v4419 = vunpack.c.l.b16 %v4383
      %v4420 = vunpack.c.l.b16 %v4384
      %v4421 = vunpack.c.h.b16 %v4384
      %v4422 = vunpack.c.l.b16 %v4385
      %v4423 = vunpack.c.l.b16 %v4386
      %v4424 = vunpack.c.h.b16 %v4386
      %v4425 = vunpack.c.l.b16 %v4387
      %v4426 = vunpack.c.l.b16 %v4388
      %v4427 = vunpack.c.h.b16 %v4388
      %v4428 = vunpack.c.l.b16 %v4389
      %v4429 = vunpack.c.l.b16 %v4390
      %v4430 = vunpack.c.h.b16 %v4390
      %v4431 = vunpack.c.l.b16 %v4391
      %v4432 = vunpack.c.l.b16 %v4392
      %v4433 = vunpack.c.h.b16 %v4392
      %v4434 = vunpack.c.l.b16 %v4393
      %v4435 = vpack.c.b16 %v4414, %v4411
      %v4436 = vpack.c.b16 %v4415, %v4412
      %v4437 = vpack.c.b16 %v4416, %v4413
      %v4438 = vpack.c.b16 %v4420, %v4417
      %v4439 = vpack.c.b16 %v4421, %v4418
      %v4440 = vpack.c.b16 %v4422, %v4419
      %v4441 = vpack.c.b16 %v4426, %v4423
      %v4442 = vpack.c.b16 %v4427, %v4424
      %v4443 = vpack.c.b16 %v4428, %v4425
      %v4444 = vpack.c.b16 %v4432, %v4429
      %v4445 = vpack.c.b16 %v4433, %v4430
      %v4446 = vpack.c.b16 %v4434, %v4431
      %v4491 = vunpack.c.l.b16 %v3947
      %v4492 = vunpack.c.l.b16 %v3948
      %v4493 = vunpack.c.l.b16 %v3949
      %v4494 = vunpack.c.l.b16 %v3950
      %v4495 = vunpack.c.l.b16 %v3951
      %v4496 = vunpack.c.l.b16 %v3952
      %v4497 = vunpack.c.l.b16 %v3953
      %v4498 = vunpack.c.l.b16 %v3954
      %v4499 = vunpack.c.l.b16 %v3955
      %v4500 = vunpack.c.l.b16 %v3956
      %v4501 = vunpack.c.l.b16 %v3957
      %v4502 = vunpack.c.l.b16 %v3958
      %v4503 = vunpack.c.l.b16 %v3959
      %v4504 = vunpack.c.l.b16 %v3960
      %v4505 = vunpack.c.l.b16 %v3961
      %v4506 = vunpack.c.l.b16 %v3962
      %v4507 = vunpack.c.l.b16 %v3963
      %v4508 = vunpack.c.l.b16 %v3964
      %v4509 = vunpack.c.l.b16 %v3965
      %v4510 = vunpack.c.l.b16 %v3966
      %v4511 = vunpack.c.l.b16 %v3967
      %v4512 = vunpack.c.l.b16 %v3968
      %v4513 = vunpack.c.l.b16 %v3969
      %v4514 = vunpack.c.l.b16 %v3970
      %v4515 = vunpack.c.l.b16 %v3971
      %v4516 = vunpack.c.l.b16 %v3972
      %v4517 = vunpack.c.l.b16 %v3973
      %v4518 = vunpack.c.l.b16 %v3974
      %v4519 = vunpack.c.l.b16 %v3975
      %v4520 = vunpack.c.l.b16 %v3976
      %v4521 = vunpack.c.l.b16 %v3977
      %v4522 = vunpack.c.l.b16 %v3978
      %v4523 = vunpack.c.l.b16 %v3979
      %v4524 = vunpack.c.l.b16 %v3980
      %v4525 = vunpack.c.l.b16 %v3981
      %v4526 = vunpack.c.l.b16 %v3982
      %v4527 = vpack.c.b16 %v4492, %v4491
      %v4528 = vpack.c.b16 %v4494, %v4493
      %v4529 = vpack.c.b16 %v4496, %v4495
      %v4530 = vpack.c.b16 %v4498, %v4497
      %v4531 = vpack.c.b16 %v4500, %v4499
      %v4532 = vpack.c.b16 %v4502, %v4501
      %v4533 = vpack.c.b16 %v4504, %v4503
      %v4534 = vpack.c.b16 %v4506, %v4505
      %v4535 = vpack.c.b16 %v4508, %v4507
      %v4536 = vpack.c.b16 %v4510, %v4509
      %v4537 = vpack.c.b16 %v4512, %v4511
      %v4538 = vpack.c.b16 %v4514, %v4513
      %v4539 = vpack.c.b16 %v4516, %v4515
      %v4540 = vpack.c.b16 %v4518, %v4517
      %v4541 = vpack.c.b16 %v4520, %v4519
      %v4542 = vpack.c.b16 %v4522, %v4521
      %v4543 = vpack.c.b16 %v4524, %v4523
      %v4544 = vpack.c.b16 %v4526, %v4525
      %v4564 = vsel %vm226, %v4437, 0
      %v4567 = vsel %vm226, %v4440, 0
      %v4570 = vsel %vm226, %v4443, 0
      %v4573 = vsel %vm226, %v4446, 0
      %4575 = vmatpush.bf16.msra.mxu0 %v4534
      %4576 = vmatpush.bf16.msra.mxu0 %v4533
      %4577 = vmatpush.bf16.msra.mxu0 %v4532
      %4578 = vmatpush.bf16.msra.mxu0 %v4531
      %4579 = vmatpush.bf16.msra.mxu0 %v4530
      %4580 = vmatpush.bf16.msra.mxu0 %v4529
      %4581 = vmatpush.bf16.msra.mxu0 %v4528
      %4582 = vmatpush.bf16.msra.mxu0 %v4527
      %4583 = vmatmul.bf16.gmra.mxu0 %v4435
      %v4584 = vpop.f32.mrf.mxu0
      %v4585 = vadd.f32 %v4394, %v4584
      %v4586 = vpop.f32.mrf.mxu0
      %v4587 = vadd.f32 %v4394, %v4586
      %4588 = vmatmul.bf16.gmra.mxu0 %v4438
      %v4589 = vpop.f32.mrf.mxu0
      %v4590 = vadd.f32 %v4394, %v4589
      %v4591 = vpop.f32.mrf.mxu0
      %v4592 = vadd.f32 %v4394, %v4591
      %4593 = vmatmul.bf16.gmra.mxu0 %v4441
      %v4594 = vpop.f32.mrf.mxu0
      %v4595 = vadd.f32 %v4394, %v4594
      %v4596 = vpop.f32.mrf.mxu0
      %v4597 = vadd.f32 %v4394, %v4596
      %4598 = vmatmul.bf16.gmra.mxu0 %v4444
      %v4599 = vpop.f32.mrf.mxu0
      %v4600 = vadd.f32 %v4394, %v4599
      %v4601 = vpop.f32.mrf.mxu0
      %v4602 = vadd.f32 %v4394, %v4601
      %4603 = vdwg.mxu0
      %4604 = vmatpush.bf16.msra.mxu0 %v4542
      %4605 = vmatpush.bf16.msra.mxu0 %v4541
      %4606 = vmatpush.bf16.msra.mxu0 %v4540
      %4607 = vmatpush.bf16.msra.mxu0 %v4539
      %4608 = vmatpush.bf16.msra.mxu0 %v4538
      %4609 = vmatpush.bf16.msra.mxu0 %v4537
      %4610 = vmatpush.bf16.msra.mxu0 %v4536
      %4611 = vmatpush.bf16.msra.mxu0 %v4535
      %4612 = vmatmul.bf16.gmra.mxu0 %v4436
      %v4613 = vpop.f32.mrf.mxu0
      %v4614 = vadd.f32 %v4585, %v4613
      %v4615 = vpop.f32.mrf.mxu0
      %v4616 = vadd.f32 %v4587, %v4615
      %4617 = vmatmul.bf16.gmra.mxu0 %v4439
      %v4618 = vpop.f32.mrf.mxu0
      %v4619 = vadd.f32 %v4590, %v4618
      %v4620 = vpop.f32.mrf.mxu0
      %v4621 = vadd.f32 %v4592, %v4620
      %4622 = vmatmul.bf16.gmra.mxu0 %v4442
      %v4623 = vpop.f32.mrf.mxu0
      %v4624 = vadd.f32 %v4595, %v4623
      %v4625 = vpop.f32.mrf.mxu0
      %v4626 = vadd.f32 %v4597, %v4625
      %4627 = vmatmul.bf16.gmra.mxu0 %v4445
      %v4628 = vpop.f32.mrf.mxu0
      %v4629 = vadd.f32 %v4600, %v4628
      %v4630 = vpop.f32.mrf.mxu0
      %v4631 = vadd.f32 %v4602, %v4630
      %4632 = vdwg.mxu0
      %4633 = vmatpush.bf16.msra.mxu0 0
      %4634 = vmatpush.bf16.msra.mxu0 0
      %4635 = vmatpush.bf16.msra.mxu0 0
      %4636 = vmatpush.bf16.msra.mxu0 0
      %4637 = vmatpush.bf16.msra.mxu0 0
      %4638 = vmatpush.bf16.msra.mxu0 0
      %4639 = vmatpush.bf16.msra.mxu0 %v4544
      %4640 = vmatpush.bf16.msra.mxu0 %v4543
      %4641 = vmatmul.bf16.gmra.mxu0 %v4564
      %v4642 = vpop.f32.mrf.mxu0
      %v4643 = vadd.f32 %v4614, %v4642
      %v4644 = vpop.f32.mrf.mxu0
      %v4645 = vadd.f32 %v4616, %v4644
      %4646 = vmatmul.bf16.gmra.mxu0 %v4567
      %v4647 = vpop.f32.mrf.mxu0
      %v4648 = vadd.f32 %v4619, %v4647
      %v4649 = vpop.f32.mrf.mxu0
      %v4650 = vadd.f32 %v4621, %v4649
      %4651 = vmatmul.bf16.gmra.mxu0 %v4570
      %v4652 = vpop.f32.mrf.mxu0
      %v4653 = vadd.f32 %v4624, %v4652
      %v4654 = vpop.f32.mrf.mxu0
      %v4655 = vadd.f32 %v4626, %v4654
      %4656 = vmatmul.bf16.gmra.mxu0 %v4573
      %v4657 = vpop.f32.mrf.mxu0
      %v4658 = vadd.f32 %v4629, %v4657
      %v4659 = vpop.f32.mrf.mxu0
      %v4660 = vadd.f32 %v4631, %v4659
      %4661 = vdwg.mxu0
      %v4662 = vmax.f32 %v4643, 0.0
      %v4663 = vmax.f32 %v4645, 0.0
      %v4664 = vmax.f32 %v4648, 0.0
      %v4665 = vmax.f32 %v4650, 0.0
      %v4666 = vmax.f32 %v4653, 0.0
      %v4667 = vmax.f32 %v4655, 0.0
      %v4668 = vmax.f32 %v4658, 0.0
      %v4669 = vmax.f32 %v4660, 0.0
      %4670 = vst.msk [vmem:[%s256 + $0x1] sm:$0xff] %vm226, %v4662
      %4671 = vst.msk [vmem:[%s256 + $0x11] sm:$0xff] %vm226, %v4663
      %4672 = vst.msk [vmem:[%s256 + $0x21] sm:$0xff] %vm226, %v4664
      %4673 = vst.msk [vmem:[%s256 + $0x31] sm:$0xff] %vm226, %v4665
      %4674 = vst.msk [vmem:[%s256 + $0x41] sm:$0xff] %vm226, %v4666
      %4675 = vst.msk [vmem:[%s256 + $0x51] sm:$0xff] %vm226, %v4667
      %4676 = vst.msk [vmem:[%s256 + $0x61] sm:$0xff] %vm226, %v4668
      %4677 = vst.msk [vmem:[%s256 + $0x71] sm:$0xff] %vm226, %v4669
      %s4678 = scalar_lea.vmem %s1, 864
      %v4679 = vld [vmem:[%s4678] sm:$0xf]
      %v4680 = vld [vmem:[%s4678 + $0x4] sm:$0xf]
      %v4681 = vld [vmem:[%s4678 + $0x8] sm:$0xf]
      %v4682 = vld [vmem:[%s4678 + $0xc] sm:$0xf]
      %v4683 = vld [vmem:[%s4678 + $0x10] sm:$0xf]
      %v4684 = vld [vmem:[%s4678 + $0x14] sm:$0xf]
      %v4685 = vld [vmem:[%s4678 + $0x18] sm:$0xf]
      %v4686 = vld [vmem:[%s4678 + $0x1c] sm:$0xf]
      %v4687 = vld [vmem:[%s4678 + $0x20] sm:$0xf]
      %v4688 = vld [vmem:[%s4678 + $0x24] sm:$0xf]
      %v4689 = vld [vmem:[%s4678 + $0x28] sm:$0xf]
      %v4690 = vld [vmem:[%s4678 + $0x2c] sm:$0xf]
      %v4691 = vld [vmem:[%s4678 + $0x30] sm:$0xf]
      %v4692 = vld [vmem:[%s4678 + $0x34] sm:$0xf]
      %v4693 = vld [vmem:[%s4678 + $0x38] sm:$0xf]
      %v4694 = vld [vmem:[%s4678 + $0x3c] sm:$0xf]
      %v4695 = vld [vmem:[%s4678 + $0x40] sm:$0xf]
      %v4696 = vld [vmem:[%s4678 + $0x44] sm:$0xf]
      %v4697 = vld [vmem:[%s4678 + $0x48] sm:$0xf]
      %v4698 = vld [vmem:[%s4678 + $0x4c] sm:$0xf]
      %v4699 = vld [vmem:[%s4678 + $0x50] sm:$0xf]
      %v4700 = vld [vmem:[%s4678 + $0x54] sm:$0xf]
      %v4701 = vld [vmem:[%s4678 + $0x58] sm:$0xf]
      %v4702 = vld [vmem:[%s4678 + $0x5c] sm:$0xf]
      %v4703 = vld [vmem:[%s4678 + $0x60] sm:$0xf]
      %v4704 = vld [vmem:[%s4678 + $0x64] sm:$0xf]
      %v4705 = vld [vmem:[%s4678 + $0x68] sm:$0xf]
      %v4706 = vld [vmem:[%s4678 + $0x6c] sm:$0xf]
      %v4707 = vld [vmem:[%s4678 + $0x70] sm:$0xf]
      %v4708 = vld [vmem:[%s4678 + $0x74] sm:$0xf]
      %v4709 = vld [vmem:[%s4678 + $0x78] sm:$0xf]
      %v4710 = vld [vmem:[%s4678 + $0x7c] sm:$0xf]
      %v4711 = vld [vmem:[%s4678 + $0x80] sm:$0xf]
      %v4712 = vld [vmem:[%s4678 + $0x84] sm:$0xf]
      %v4713 = vld [vmem:[%s4678 + $0x88] sm:$0xf]
      %v4714 = vld [vmem:[%s4678 + $0x8c] sm:$0xf]
      %v4715 = vld [vmem:[%s2 + $0x6] sm:$0x1]
      %v4716 = vld [vmem:[#allocation2] sm:$0xff]
      %v4717 = vld [vmem:[#allocation2 + $0x8] sm:$0x3]
      %v4718 = vld [vmem:[#allocation2 + $0x10] sm:$0xff]
      %v4719 = vld [vmem:[#allocation2 + $0x18] sm:$0x3]
      %v4720 = vld [vmem:[#allocation2 + $0x20] sm:$0xff]
      %v4721 = vld [vmem:[#allocation2 + $0x28] sm:$0x3]
      %v4722 = vld [vmem:[#allocation2 + $0x30] sm:$0xff]
      %v4723 = vld [vmem:[#allocation2 + $0x38] sm:$0x3]
      %v4724 = vld [vmem:[#allocation2 + $0x40] sm:$0xff]
      %v4725 = vld [vmem:[#allocation2 + $0x48] sm:$0x3]
      %v4726 = vld [vmem:[#allocation2 + $0x50] sm:$0xff]
      %v4727 = vld [vmem:[#allocation2 + $0x58] sm:$0x3]
      %v4728 = vld [vmem:[#allocation2 + $0x60] sm:$0xff]
      %v4729 = vld [vmem:[#allocation2 + $0x68] sm:$0x3]
      %v4730 = vld [vmem:[#allocation2 + $0x70] sm:$0xff]
      %v4731 = vld [vmem:[#allocation2 + $0x78] sm:$0x3]
      %v4732 = vld [vmem:[#allocation2 + $0x80] sm:$0xff]
      %v4733 = vld [vmem:[#allocation2 + $0x88] sm:$0x3]
      %v4734 = vld [vmem:[#allocation2 + $0x90] sm:$0xff]
      %v4735 = vld [vmem:[#allocation2 + $0x98] sm:$0x3]
      %v4736 = vpack.c.bf16 %v4716, %v4716
      %v4737 = vpack.c.bf16 %v4718, %v4718
      %v4738 = vpack.c.bf16 %v4720, %v4720
      %v4739 = vpack.c.bf16 %v4722, %v4722
      %v4740 = vpack.c.bf16 %v4724, %v4724
      %v4741 = vpack.c.bf16 %v4726, %v4726
      %v4742 = vpack.c.bf16 %v4728, %v4728
      %v4743 = vpack.c.bf16 %v4730, %v4730
      %4744 = vst.msk [vmem:[#allocation3] sm:$0xf] %vm330, %v4736
      %4745 = vst.msk [vmem:[#allocation3 + $0xc] sm:$0xf] %vm330, %v4737
      %4746 = vst.msk [vmem:[#allocation3 + $0x18] sm:$0xf] %vm330, %v4738
      %4747 = vst.msk [vmem:[#allocation3 + $0x24] sm:$0xf] %vm330, %v4739
      %4748 = vst.msk [vmem:[#allocation3 + $0x30] sm:$0xf] %vm330, %v4740
      %4749 = vst.msk [vmem:[#allocation3 + $0x3c] sm:$0xf] %vm330, %v4741
      %4750 = vst.msk [vmem:[#allocation3 + $0x48] sm:$0xf] %vm330, %v4742
      %4751 = vst.msk [vmem:[#allocation3 + $0x54] sm:$0xf] %vm330, %v4743
      %v4768 = vrot.slane %v4716, 1
      %v4769 = vrot.slane %v4717, 1
      %v4770 = vsel %vm355, %v4768, %v4769
      %v4771 = vrot.slane %v4718, 1
      %v4772 = vrot.slane %v4719, 1
      %v4773 = vsel %vm355, %v4771, %v4772
      %v4774 = vrot.slane %v4720, 1
      %v4775 = vrot.slane %v4721, 1
      %v4776 = vsel %vm355, %v4774, %v4775
      %v4777 = vrot.slane %v4722, 1
      %v4778 = vrot.slane %v4723, 1
      %v4779 = vsel %vm355, %v4777, %v4778
      %v4780 = vrot.slane %v4724, 1
      %v4781 = vrot.slane %v4725, 1
      %v4782 = vsel %vm355, %v4780, %v4781
      %v4783 = vrot.slane %v4726, 1
      %v4784 = vrot.slane %v4727, 1
      %v4785 = vsel %vm355, %v4783, %v4784
      %v4786 = vrot.slane %v4728, 1
      %v4787 = vrot.slane %v4729, 1
      %v4788 = vsel %vm355, %v4786, %v4787
      %v4789 = vrot.slane %v4730, 1
      %v4790 = vrot.slane %v4731, 1
      %v4791 = vsel %vm355, %v4789, %v4790
      %v4800 = vpack.c.bf16 %v4770, %v4770
      %v4801 = vpack.c.bf16 %v4773, %v4773
      %v4802 = vpack.c.bf16 %v4776, %v4776
      %v4803 = vpack.c.bf16 %v4779, %v4779
      %v4804 = vpack.c.bf16 %v4782, %v4782
      %v4805 = vpack.c.bf16 %v4785, %v4785
      %v4806 = vpack.c.bf16 %v4788, %v4788
      %v4807 = vpack.c.bf16 %v4791, %v4791
      %4816 = vrot.lane.b32.xlu0 %v4800, 32
      %v4817 = vpop.permute.xlu0 %4816
      %4818 = vrot.lane.b32.xlu0 %v4801, 32
      %v4819 = vpop.permute.xlu0 %4818
      %4820 = vrot.lane.b32.xlu0 %v4802, 32
      %v4821 = vpop.permute.xlu0 %4820
      %4822 = vrot.lane.b32.xlu0 %v4803, 32
      %v4823 = vpop.permute.xlu0 %4822
      %4824 = vrot.lane.b32.xlu0 %v4804, 32
      %v4825 = vpop.permute.xlu0 %4824
      %4826 = vrot.lane.b32.xlu0 %v4805, 32
      %v4827 = vpop.permute.xlu0 %4826
      %4828 = vrot.lane.b32.xlu0 %v4806, 32
      %v4829 = vpop.permute.xlu0 %4828
      %4830 = vrot.lane.b32.xlu0 %v4807, 32
      %v4831 = vpop.permute.xlu0 %4830
      %4840 = vst.msk [vmem:[#allocation3] sm:$0xf] %vm428, %v4817
      %4841 = vst.msk [vmem:[#allocation3 + $0xc] sm:$0xf] %vm428, %v4819
      %4842 = vst.msk [vmem:[#allocation3 + $0x18] sm:$0xf] %vm428, %v4821
      %4843 = vst.msk [vmem:[#allocation3 + $0x24] sm:$0xf] %vm428, %v4823
      %4844 = vst.msk [vmem:[#allocation3 + $0x30] sm:$0xf] %vm428, %v4825
      %4845 = vst.msk [vmem:[#allocation3 + $0x3c] sm:$0xf] %vm428, %v4827
      %4846 = vst.msk [vmem:[#allocation3 + $0x48] sm:$0xf] %vm428, %v4829
      %4847 = vst.msk [vmem:[#allocation3 + $0x54] sm:$0xf] %vm428, %v4831
      %v4848 = vrot.slane %v4716, 2
      %v4849 = vrot.slane %v4717, 2
      %v4850 = vsel %vm437, %v4848, %v4849
      %v4851 = vrot.slane %v4718, 2
      %v4852 = vrot.slane %v4719, 2
      %v4853 = vsel %vm437, %v4851, %v4852
      %v4854 = vrot.slane %v4720, 2
      %v4855 = vrot.slane %v4721, 2
      %v4856 = vsel %vm437, %v4854, %v4855
      %v4857 = vrot.slane %v4722, 2
      %v4858 = vrot.slane %v4723, 2
      %v4859 = vsel %vm437, %v4857, %v4858
      %v4860 = vrot.slane %v4724, 2
      %v4861 = vrot.slane %v4725, 2
      %v4862 = vsel %vm437, %v4860, %v4861
      %v4863 = vrot.slane %v4726, 2
      %v4864 = vrot.slane %v4727, 2
      %v4865 = vsel %vm437, %v4863, %v4864
      %v4866 = vrot.slane %v4728, 2
      %v4867 = vrot.slane %v4729, 2
      %v4868 = vsel %vm437, %v4866, %v4867
      %v4869 = vrot.slane %v4730, 2
      %v4870 = vrot.slane %v4731, 2
      %v4871 = vsel %vm437, %v4869, %v4870
      %v4880 = vpack.c.bf16 %v4850, %v4850
      %v4881 = vpack.c.bf16 %v4853, %v4853
      %v4882 = vpack.c.bf16 %v4856, %v4856
      %v4883 = vpack.c.bf16 %v4859, %v4859
      %v4884 = vpack.c.bf16 %v4862, %v4862
      %v4885 = vpack.c.bf16 %v4865, %v4865
      %v4886 = vpack.c.bf16 %v4868, %v4868
      %v4887 = vpack.c.bf16 %v4871, %v4871
      %4896 = vrot.lane.b32.xlu0 %v4880, 64
      %v4897 = vpop.permute.xlu0 %4896
      %4898 = vrot.lane.b32.xlu0 %v4881, 64
      %v4899 = vpop.permute.xlu0 %4898
      %4900 = vrot.lane.b32.xlu0 %v4882, 64
      %v4901 = vpop.permute.xlu0 %4900
      %4902 = vrot.lane.b32.xlu0 %v4883, 64
      %v4903 = vpop.permute.xlu0 %4902
      %4904 = vrot.lane.b32.xlu0 %v4884, 64
      %v4905 = vpop.permute.xlu0 %4904
      %4906 = vrot.lane.b32.xlu0 %v4885, 64
      %v4907 = vpop.permute.xlu0 %4906
      %4908 = vrot.lane.b32.xlu0 %v4886, 64
      %v4909 = vpop.permute.xlu0 %4908
      %4910 = vrot.lane.b32.xlu0 %v4887, 64
      %v4911 = vpop.permute.xlu0 %4910
      %4920 = vst.msk [vmem:[#allocation3] sm:$0xf] %vm510, %v4897
      %4921 = vst.msk [vmem:[#allocation3 + $0xc] sm:$0xf] %vm510, %v4899
      %4922 = vst.msk [vmem:[#allocation3 + $0x18] sm:$0xf] %vm510, %v4901
      %4923 = vst.msk [vmem:[#allocation3 + $0x24] sm:$0xf] %vm510, %v4903
      %4924 = vst.msk [vmem:[#allocation3 + $0x30] sm:$0xf] %vm510, %v4905
      %4925 = vst.msk [vmem:[#allocation3 + $0x3c] sm:$0xf] %vm510, %v4907
      %4926 = vst.msk [vmem:[#allocation3 + $0x48] sm:$0xf] %vm510, %v4909
      %4927 = vst.msk [vmem:[#allocation3 + $0x54] sm:$0xf] %vm510, %v4911
      %v4928 = vpack.c.bf16 %v4732, %v4732
      %4937 = vrot.lane.b32.xlu0 %v4737, 96
      %v4938 = vpop.permute.xlu0 %4937
      %4939 = vrot.lane.b32.xlu0 %v4738, 96
      %v4940 = vpop.permute.xlu0 %4939
      %4941 = vrot.lane.b32.xlu0 %v4739, 96
      %v4942 = vpop.permute.xlu0 %4941
      %4943 = vrot.lane.b32.xlu0 %v4740, 96
      %v4944 = vpop.permute.xlu0 %4943
      %4945 = vrot.lane.b32.xlu0 %v4741, 96
      %v4946 = vpop.permute.xlu0 %4945
      %4947 = vrot.lane.b32.xlu0 %v4742, 96
      %v4948 = vpop.permute.xlu0 %4947
      %4949 = vrot.lane.b32.xlu0 %v4743, 96
      %v4950 = vpop.permute.xlu0 %4949
      %4951 = vrot.lane.b32.xlu0 %v4928, 96
      %v4952 = vpop.permute.xlu0 %4951
      %4961 = vst.msk [vmem:[#allocation3] sm:$0xf] %vm552, %v4938
      %4962 = vst.msk [vmem:[#allocation3 + $0xc] sm:$0xf] %vm552, %v4940
      %4963 = vst.msk [vmem:[#allocation3 + $0x18] sm:$0xf] %vm552, %v4942
      %4964 = vst.msk [vmem:[#allocation3 + $0x24] sm:$0xf] %vm552, %v4944
      %4965 = vst.msk [vmem:[#allocation3 + $0x30] sm:$0xf] %vm552, %v4946
      %4966 = vst.msk [vmem:[#allocation3 + $0x3c] sm:$0xf] %vm552, %v4948
      %4967 = vst.msk [vmem:[#allocation3 + $0x48] sm:$0xf] %vm552, %v4950
      %4968 = vst.msk [vmem:[#allocation3 + $0x54] sm:$0xf] %vm552, %v4952
      %v4971 = vrot.slane %v4732, 1
      %v4972 = vrot.slane %v4733, 1
      %v4973 = vsel %vm355, %v4971, %v4972
      %v4975 = vpack.c.bf16 %v4973, %v4973
      %4976 = vst.msk [vmem:[#allocation3 + $0x4] sm:$0xf] %vm330, %v4801
      %4977 = vst.msk [vmem:[#allocation3 + $0x10] sm:$0xf] %vm330, %v4802
      %4978 = vst.msk [vmem:[#allocation3 + $0x1c] sm:$0xf] %vm330, %v4803
      %4979 = vst.msk [vmem:[#allocation3 + $0x28] sm:$0xf] %vm330, %v4804
      %4980 = vst.msk [vmem:[#allocation3 + $0x34] sm:$0xf] %vm330, %v4805
      %4981 = vst.msk [vmem:[#allocation3 + $0x40] sm:$0xf] %vm330, %v4806
      %4982 = vst.msk [vmem:[#allocation3 + $0x4c] sm:$0xf] %vm330, %v4807
      %4983 = vst.msk [vmem:[#allocation3 + $0x58] sm:$0xf] %vm330, %v4975
      %v4984 = vrot.slane %v4732, 2
      %v4985 = vrot.slane %v4733, 2
      %v4986 = vsel %vm437, %v4984, %v4985
      %v4988 = vpack.c.bf16 %v4986, %v4986
      %4990 = vrot.lane.b32.xlu0 %v4881, 32
      %v4991 = vpop.permute.xlu0 %4990
      %4992 = vrot.lane.b32.xlu0 %v4882, 32
      %v4993 = vpop.permute.xlu0 %4992
      %4994 = vrot.lane.b32.xlu0 %v4883, 32
      %v4995 = vpop.permute.xlu0 %4994
      %4996 = vrot.lane.b32.xlu0 %v4884, 32
      %v4997 = vpop.permute.xlu0 %4996
      %4998 = vrot.lane.b32.xlu0 %v4885, 32
      %v4999 = vpop.permute.xlu0 %4998
      %5000 = vrot.lane.b32.xlu0 %v4886, 32
      %v5001 = vpop.permute.xlu0 %5000
      %5002 = vrot.lane.b32.xlu0 %v4887, 32
      %v5003 = vpop.permute.xlu0 %5002
      %5004 = vrot.lane.b32.xlu0 %v4988, 32
      %v5005 = vpop.permute.xlu0 %5004
      %5014 = vst.msk [vmem:[#allocation3 + $0x4] sm:$0xf] %vm428, %v4991
      %5015 = vst.msk [vmem:[#allocation3 + $0x10] sm:$0xf] %vm428, %v4993
      %5016 = vst.msk [vmem:[#allocation3 + $0x1c] sm:$0xf] %vm428, %v4995
      %5017 = vst.msk [vmem:[#allocation3 + $0x28] sm:$0xf] %vm428, %v4997
      %5018 = vst.msk [vmem:[#allocation3 + $0x34] sm:$0xf] %vm428, %v4999
      %5019 = vst.msk [vmem:[#allocation3 + $0x40] sm:$0xf] %vm428, %v5001
      %5020 = vst.msk [vmem:[#allocation3 + $0x4c] sm:$0xf] %vm428, %v5003
      %5021 = vst.msk [vmem:[#allocation3 + $0x58] sm:$0xf] %vm428, %v5005
      %v5022 = vpack.c.bf16 %v4734, %v4734
      %5024 = vrot.lane.b32.xlu0 %v4738, 64
      %v5025 = vpop.permute.xlu0 %5024
      %5026 = vrot.lane.b32.xlu0 %v4739, 64
      %v5027 = vpop.permute.xlu0 %5026
      %5028 = vrot.lane.b32.xlu0 %v4740, 64
      %v5029 = vpop.permute.xlu0 %5028
      %5030 = vrot.lane.b32.xlu0 %v4741, 64
      %v5031 = vpop.permute.xlu0 %5030
      %5032 = vrot.lane.b32.xlu0 %v4742, 64
      %v5033 = vpop.permute.xlu0 %5032
      %5034 = vrot.lane.b32.xlu0 %v4743, 64
      %v5035 = vpop.permute.xlu0 %5034
      %5036 = vrot.lane.b32.xlu0 %v4928, 64
      %v5037 = vpop.permute.xlu0 %5036
      %5038 = vrot.lane.b32.xlu0 %v5022, 64
      %v5039 = vpop.permute.xlu0 %5038
      %5048 = vst.msk [vmem:[#allocation3 + $0x4] sm:$0xf] %vm510, %v5025
      %5049 = vst.msk [vmem:[#allocation3 + $0x10] sm:$0xf] %vm510, %v5027
      %5050 = vst.msk [vmem:[#allocation3 + $0x1c] sm:$0xf] %vm510, %v5029
      %5051 = vst.msk [vmem:[#allocation3 + $0x28] sm:$0xf] %vm510, %v5031
      %5052 = vst.msk [vmem:[#allocation3 + $0x34] sm:$0xf] %vm510, %v5033
      %5053 = vst.msk [vmem:[#allocation3 + $0x40] sm:$0xf] %vm510, %v5035
      %5054 = vst.msk [vmem:[#allocation3 + $0x4c] sm:$0xf] %vm510, %v5037
      %5055 = vst.msk [vmem:[#allocation3 + $0x58] sm:$0xf] %vm510, %v5039
      %v5058 = vrot.slane %v4734, 1
      %v5059 = vrot.slane %v4735, 1
      %v5060 = vsel %vm355, %v5058, %v5059
      %v5062 = vpack.c.bf16 %v5060, %v5060
      %5065 = vrot.lane.b32.xlu0 %v4802, 96
      %v5066 = vpop.permute.xlu0 %5065
      %5067 = vrot.lane.b32.xlu0 %v4803, 96
      %v5068 = vpop.permute.xlu0 %5067
      %5069 = vrot.lane.b32.xlu0 %v4804, 96
      %v5070 = vpop.permute.xlu0 %5069
      %5071 = vrot.lane.b32.xlu0 %v4805, 96
      %v5072 = vpop.permute.xlu0 %5071
      %5073 = vrot.lane.b32.xlu0 %v4806, 96
      %v5074 = vpop.permute.xlu0 %5073
      %5075 = vrot.lane.b32.xlu0 %v4807, 96
      %v5076 = vpop.permute.xlu0 %5075
      %5077 = vrot.lane.b32.xlu0 %v4975, 96
      %v5078 = vpop.permute.xlu0 %5077
      %5079 = vrot.lane.b32.xlu0 %v5062, 96
      %v5080 = vpop.permute.xlu0 %5079
      %5089 = vst.msk [vmem:[#allocation3 + $0x4] sm:$0xf] %vm552, %v5066
      %5090 = vst.msk [vmem:[#allocation3 + $0x10] sm:$0xf] %vm552, %v5068
      %5091 = vst.msk [vmem:[#allocation3 + $0x1c] sm:$0xf] %vm552, %v5070
      %5092 = vst.msk [vmem:[#allocation3 + $0x28] sm:$0xf] %vm552, %v5072
      %5093 = vst.msk [vmem:[#allocation3 + $0x34] sm:$0xf] %vm552, %v5074
      %5094 = vst.msk [vmem:[#allocation3 + $0x40] sm:$0xf] %vm552, %v5076
      %5095 = vst.msk [vmem:[#allocation3 + $0x4c] sm:$0xf] %vm552, %v5078
      %5096 = vst.msk [vmem:[#allocation3 + $0x58] sm:$0xf] %vm552, %v5080
      %v5097 = vrot.slane %v4734, 2
      %v5098 = vrot.slane %v4735, 2
      %v5099 = vsel %vm437, %v5097, %v5098
      %v5101 = vpack.c.bf16 %v5099, %v5099
      %5102 = vst.msk [vmem:[#allocation3 + $0x8] sm:$0xf] %vm330, %v4882
      %5103 = vst.msk [vmem:[#allocation3 + $0x14] sm:$0xf] %vm330, %v4883
      %5104 = vst.msk [vmem:[#allocation3 + $0x20] sm:$0xf] %vm330, %v4884
      %5105 = vst.msk [vmem:[#allocation3 + $0x2c] sm:$0xf] %vm330, %v4885
      %5106 = vst.msk [vmem:[#allocation3 + $0x38] sm:$0xf] %vm330, %v4886
      %5107 = vst.msk [vmem:[#allocation3 + $0x44] sm:$0xf] %vm330, %v4887
      %5108 = vst.msk [vmem:[#allocation3 + $0x50] sm:$0xf] %vm330, %v4988
      %5109 = vst.msk [vmem:[#allocation3 + $0x5c] sm:$0xf] %vm330, %v5101
      %v5110 = vld [vmem:[#allocation3] sm:$0xff]
      %v5111 = vld [vmem:[#allocation3 + $0x8] sm:$0xf]
      %v5112 = vld [vmem:[#allocation3 + $0xc] sm:$0xff]
      %v5113 = vld [vmem:[#allocation3 + $0x14] sm:$0xf]
      %v5114 = vld [vmem:[#allocation3 + $0x18] sm:$0xff]
      %v5115 = vld [vmem:[#allocation3 + $0x20] sm:$0xf]
      %v5116 = vld [vmem:[#allocation3 + $0x24] sm:$0xff]
      %v5117 = vld [vmem:[#allocation3 + $0x2c] sm:$0xf]
      %v5118 = vld [vmem:[#allocation3 + $0x30] sm:$0xff]
      %v5119 = vld [vmem:[#allocation3 + $0x38] sm:$0xf]
      %v5120 = vld [vmem:[#allocation3 + $0x3c] sm:$0xff]
      %v5121 = vld [vmem:[#allocation3 + $0x44] sm:$0xf]
      %v5122 = vld [vmem:[#allocation3 + $0x48] sm:$0xff]
      %v5123 = vld [vmem:[#allocation3 + $0x50] sm:$0xf]
      %v5124 = vld [vmem:[#allocation3 + $0x54] sm:$0xff]
      %v5125 = vld [vmem:[#allocation3 + $0x5c] sm:$0xf]
      %v5126 = vperm.slane %v4715, 0
      %v5143 = vunpack.c.l.b16 %v5110
      %v5144 = vunpack.c.h.b16 %v5110
      %v5145 = vunpack.c.l.b16 %v5111
      %v5146 = vunpack.c.l.b16 %v5112
      %v5147 = vunpack.c.h.b16 %v5112
      %v5148 = vunpack.c.l.b16 %v5113
      %v5149 = vunpack.c.l.b16 %v5114
      %v5150 = vunpack.c.h.b16 %v5114
      %v5151 = vunpack.c.l.b16 %v5115
      %v5152 = vunpack.c.l.b16 %v5116
      %v5153 = vunpack.c.h.b16 %v5116
      %v5154 = vunpack.c.l.b16 %v5117
      %v5155 = vunpack.c.l.b16 %v5118
      %v5156 = vunpack.c.h.b16 %v5118
      %v5157 = vunpack.c.l.b16 %v5119
      %v5158 = vunpack.c.l.b16 %v5120
      %v5159 = vunpack.c.h.b16 %v5120
      %v5160 = vunpack.c.l.b16 %v5121
      %v5161 = vunpack.c.l.b16 %v5122
      %v5162 = vunpack.c.h.b16 %v5122
      %v5163 = vunpack.c.l.b16 %v5123
      %v5164 = vunpack.c.l.b16 %v5124
      %v5165 = vunpack.c.h.b16 %v5124
      %v5166 = vunpack.c.l.b16 %v5125
      %v5167 = vpack.c.b16 %v5146, %v5143
      %v5168 = vpack.c.b16 %v5147, %v5144
      %v5169 = vpack.c.b16 %v5148, %v5145
      %v5170 = vpack.c.b16 %v5152, %v5149
      %v5171 = vpack.c.b16 %v5153, %v5150
      %v5172 = vpack.c.b16 %v5154, %v5151
      %v5173 = vpack.c.b16 %v5158, %v5155
      %v5174 = vpack.c.b16 %v5159, %v5156
      %v5175 = vpack.c.b16 %v5160, %v5157
      %v5176 = vpack.c.b16 %v5164, %v5161
      %v5177 = vpack.c.b16 %v5165, %v5162
      %v5178 = vpack.c.b16 %v5166, %v5163
      %v5223 = vunpack.c.l.b16 %v4679
      %v5224 = vunpack.c.l.b16 %v4680
      %v5225 = vunpack.c.l.b16 %v4681
      %v5226 = vunpack.c.l.b16 %v4682
      %v5227 = vunpack.c.l.b16 %v4683
      %v5228 = vunpack.c.l.b16 %v4684
      %v5229 = vunpack.c.l.b16 %v4685
      %v5230 = vunpack.c.l.b16 %v4686
      %v5231 = vunpack.c.l.b16 %v4687
      %v5232 = vunpack.c.l.b16 %v4688
      %v5233 = vunpack.c.l.b16 %v4689
      %v5234 = vunpack.c.l.b16 %v4690
      %v5235 = vunpack.c.l.b16 %v4691
      %v5236 = vunpack.c.l.b16 %v4692
      %v5237 = vunpack.c.l.b16 %v4693
      %v5238 = vunpack.c.l.b16 %v4694
      %v5239 = vunpack.c.l.b16 %v4695
      %v5240 = vunpack.c.l.b16 %v4696
      %v5241 = vunpack.c.l.b16 %v4697
      %v5242 = vunpack.c.l.b16 %v4698
      %v5243 = vunpack.c.l.b16 %v4699
      %v5244 = vunpack.c.l.b16 %v4700
      %v5245 = vunpack.c.l.b16 %v4701
      %v5246 = vunpack.c.l.b16 %v4702
      %v5247 = vunpack.c.l.b16 %v4703
      %v5248 = vunpack.c.l.b16 %v4704
      %v5249 = vunpack.c.l.b16 %v4705
      %v5250 = vunpack.c.l.b16 %v4706
      %v5251 = vunpack.c.l.b16 %v4707
      %v5252 = vunpack.c.l.b16 %v4708
      %v5253 = vunpack.c.l.b16 %v4709
      %v5254 = vunpack.c.l.b16 %v4710
      %v5255 = vunpack.c.l.b16 %v4711
      %v5256 = vunpack.c.l.b16 %v4712
      %v5257 = vunpack.c.l.b16 %v4713
      %v5258 = vunpack.c.l.b16 %v4714
      %v5259 = vpack.c.b16 %v5224, %v5223
      %v5260 = vpack.c.b16 %v5226, %v5225
      %v5261 = vpack.c.b16 %v5228, %v5227
      %v5262 = vpack.c.b16 %v5230, %v5229
      %v5263 = vpack.c.b16 %v5232, %v5231
      %v5264 = vpack.c.b16 %v5234, %v5233
      %v5265 = vpack.c.b16 %v5236, %v5235
      %v5266 = vpack.c.b16 %v5238, %v5237
      %v5267 = vpack.c.b16 %v5240, %v5239
      %v5268 = vpack.c.b16 %v5242, %v5241
      %v5269 = vpack.c.b16 %v5244, %v5243
      %v5270 = vpack.c.b16 %v5246, %v5245
      %v5271 = vpack.c.b16 %v5248, %v5247
      %v5272 = vpack.c.b16 %v5250, %v5249
      %v5273 = vpack.c.b16 %v5252, %v5251
      %v5274 = vpack.c.b16 %v5254, %v5253
      %v5275 = vpack.c.b16 %v5256, %v5255
      %v5276 = vpack.c.b16 %v5258, %v5257
      %v5296 = vsel %vm226, %v5169, 0
      %v5299 = vsel %vm226, %v5172, 0
      %v5302 = vsel %vm226, %v5175, 0
      %v5305 = vsel %vm226, %v5178, 0
      %5307 = vmatpush.bf16.msra.mxu0 %v5266
      %5308 = vmatpush.bf16.msra.mxu0 %v5265
      %5309 = vmatpush.bf16.msra.mxu0 %v5264
      %5310 = vmatpush.bf16.msra.mxu0 %v5263
      %5311 = vmatpush.bf16.msra.mxu0 %v5262
      %5312 = vmatpush.bf16.msra.mxu0 %v5261
      %5313 = vmatpush.bf16.msra.mxu0 %v5260
      %5314 = vmatpush.bf16.msra.mxu0 %v5259
      %5315 = vmatmul.bf16.gmra.mxu0 %v5167
      %v5316 = vpop.f32.mrf.mxu0
      %v5317 = vadd.f32 %v5126, %v5316
      %v5318 = vpop.f32.mrf.mxu0
      %v5319 = vadd.f32 %v5126, %v5318
      %5320 = vmatmul.bf16.gmra.mxu0 %v5170
      %v5321 = vpop.f32.mrf.mxu0
      %v5322 = vadd.f32 %v5126, %v5321
      %v5323 = vpop.f32.mrf.mxu0
      %v5324 = vadd.f32 %v5126, %v5323
      %5325 = vmatmul.bf16.gmra.mxu0 %v5173
      %v5326 = vpop.f32.mrf.mxu0
      %v5327 = vadd.f32 %v5126, %v5326
      %v5328 = vpop.f32.mrf.mxu0
      %v5329 = vadd.f32 %v5126, %v5328
      %5330 = vmatmul.bf16.gmra.mxu0 %v5176
      %v5331 = vpop.f32.mrf.mxu0
      %v5332 = vadd.f32 %v5126, %v5331
      %v5333 = vpop.f32.mrf.mxu0
      %v5334 = vadd.f32 %v5126, %v5333
      %5335 = vdwg.mxu0
      %5336 = vmatpush.bf16.msra.mxu0 %v5274
      %5337 = vmatpush.bf16.msra.mxu0 %v5273
      %5338 = vmatpush.bf16.msra.mxu0 %v5272
      %5339 = vmatpush.bf16.msra.mxu0 %v5271
      %5340 = vmatpush.bf16.msra.mxu0 %v5270
      %5341 = vmatpush.bf16.msra.mxu0 %v5269
      %5342 = vmatpush.bf16.msra.mxu0 %v5268
      %5343 = vmatpush.bf16.msra.mxu0 %v5267
      %5344 = vmatmul.bf16.gmra.mxu0 %v5168
      %v5345 = vpop.f32.mrf.mxu0
      %v5346 = vadd.f32 %v5317, %v5345
      %v5347 = vpop.f32.mrf.mxu0
      %v5348 = vadd.f32 %v5319, %v5347
      %5349 = vmatmul.bf16.gmra.mxu0 %v5171
      %v5350 = vpop.f32.mrf.mxu0
      %v5351 = vadd.f32 %v5322, %v5350
      %v5352 = vpop.f32.mrf.mxu0
      %v5353 = vadd.f32 %v5324, %v5352
      %5354 = vmatmul.bf16.gmra.mxu0 %v5174
      %v5355 = vpop.f32.mrf.mxu0
      %v5356 = vadd.f32 %v5327, %v5355
      %v5357 = vpop.f32.mrf.mxu0
      %v5358 = vadd.f32 %v5329, %v5357
      %5359 = vmatmul.bf16.gmra.mxu0 %v5177
      %v5360 = vpop.f32.mrf.mxu0
      %v5361 = vadd.f32 %v5332, %v5360
      %v5362 = vpop.f32.mrf.mxu0
      %v5363 = vadd.f32 %v5334, %v5362
      %5364 = vdwg.mxu0
      %5365 = vmatpush.bf16.msra.mxu0 0
      %5366 = vmatpush.bf16.msra.mxu0 0
      %5367 = vmatpush.bf16.msra.mxu0 0
      %5368 = vmatpush.bf16.msra.mxu0 0
      %5369 = vmatpush.bf16.msra.mxu0 0
      %5370 = vmatpush.bf16.msra.mxu0 0
      %5371 = vmatpush.bf16.msra.mxu0 %v5276
      %5372 = vmatpush.bf16.msra.mxu0 %v5275
      %5373 = vmatmul.bf16.gmra.mxu0 %v5296
      %v5374 = vpop.f32.mrf.mxu0
      %v5375 = vadd.f32 %v5346, %v5374
      %v5376 = vpop.f32.mrf.mxu0
      %v5377 = vadd.f32 %v5348, %v5376
      %5378 = vmatmul.bf16.gmra.mxu0 %v5299
      %v5379 = vpop.f32.mrf.mxu0
      %v5380 = vadd.f32 %v5351, %v5379
      %v5381 = vpop.f32.mrf.mxu0
      %v5382 = vadd.f32 %v5353, %v5381
      %5383 = vmatmul.bf16.gmra.mxu0 %v5302
      %v5384 = vpop.f32.mrf.mxu0
      %v5385 = vadd.f32 %v5356, %v5384
      %v5386 = vpop.f32.mrf.mxu0
      %v5387 = vadd.f32 %v5358, %v5386
      %5388 = vmatmul.bf16.gmra.mxu0 %v5305
      %v5389 = vpop.f32.mrf.mxu0
      %v5390 = vadd.f32 %v5361, %v5389
      %v5391 = vpop.f32.mrf.mxu0
      %v5392 = vadd.f32 %v5363, %v5391
      %5393 = vdwg.mxu0
      %v5394 = vadd.f32 %v5375, %v3930
      %v5395 = vadd.f32 %v5377, %v3931
      %v5396 = vadd.f32 %v5380, %v3932
      %v5397 = vadd.f32 %v5382, %v3933
      %v5398 = vadd.f32 %v5385, %v3934
      %v5399 = vadd.f32 %v5387, %v3935
      %v5400 = vadd.f32 %v5390, %v3936
      %v5401 = vadd.f32 %v5392, %v3937
      %v5402 = vmax.f32 %v5394, 0.0
      %v5403 = vmax.f32 %v5395, 0.0
      %v5404 = vmax.f32 %v5396, 0.0
      %v5405 = vmax.f32 %v5397, 0.0
      %v5406 = vmax.f32 %v5398, 0.0
      %v5407 = vmax.f32 %v5399, 0.0
      %v5408 = vmax.f32 %v5400, 0.0
      %v5409 = vmax.f32 %v5401, 0.0
      %5410 = vst.msk [vmem:[%s256 + $0x1] sm:$0xff] %vm226, %v5402
      %5411 = vst.msk [vmem:[%s256 + $0x11] sm:$0xff] %vm226, %v5403
      %5412 = vst.msk [vmem:[%s256 + $0x21] sm:$0xff] %vm226, %v5404
      %5413 = vst.msk [vmem:[%s256 + $0x31] sm:$0xff] %vm226, %v5405
      %5414 = vst.msk [vmem:[%s256 + $0x41] sm:$0xff] %vm226, %v5406
      %5415 = vst.msk [vmem:[%s256 + $0x51] sm:$0xff] %vm226, %v5407
      %5416 = vst.msk [vmem:[%s256 + $0x61] sm:$0xff] %vm226, %v5408
      %5417 = vst.msk [vmem:[%s256 + $0x71] sm:$0xff] %vm226, %v5409
      %s5418 = scalar_lea.vmem %s1, 1008
      %v5419 = vld [vmem:[%s5418] sm:$0xf]
      %v5420 = vld [vmem:[%s5418 + $0x4] sm:$0xf]
      %v5421 = vld [vmem:[%s5418 + $0x8] sm:$0xf]
      %v5422 = vld [vmem:[%s5418 + $0xc] sm:$0xf]
      %v5423 = vld [vmem:[%s5418 + $0x10] sm:$0xf]
      %v5424 = vld [vmem:[%s5418 + $0x14] sm:$0xf]
      %v5425 = vld [vmem:[%s5418 + $0x18] sm:$0xf]
      %v5426 = vld [vmem:[%s5418 + $0x1c] sm:$0xf]
      %v5427 = vld [vmem:[%s5418 + $0x20] sm:$0xf]
      %v5428 = vld [vmem:[%s5418 + $0x24] sm:$0xf]
      %v5429 = vld [vmem:[%s5418 + $0x28] sm:$0xf]
      %v5430 = vld [vmem:[%s5418 + $0x2c] sm:$0xf]
      %v5431 = vld [vmem:[%s5418 + $0x30] sm:$0xf]
      %v5432 = vld [vmem:[%s5418 + $0x34] sm:$0xf]
      %v5433 = vld [vmem:[%s5418 + $0x38] sm:$0xf]
      %v5434 = vld [vmem:[%s5418 + $0x3c] sm:$0xf]
      %v5435 = vld [vmem:[%s5418 + $0x40] sm:$0xf]
      %v5436 = vld [vmem:[%s5418 + $0x44] sm:$0xf]
      %v5437 = vld [vmem:[%s5418 + $0x48] sm:$0xf]
      %v5438 = vld [vmem:[%s5418 + $0x4c] sm:$0xf]
      %v5439 = vld [vmem:[%s5418 + $0x50] sm:$0xf]
      %v5440 = vld [vmem:[%s5418 + $0x54] sm:$0xf]
      %v5441 = vld [vmem:[%s5418 + $0x58] sm:$0xf]
      %v5442 = vld [vmem:[%s5418 + $0x5c] sm:$0xf]
      %v5443 = vld [vmem:[%s5418 + $0x60] sm:$0xf]
      %v5444 = vld [vmem:[%s5418 + $0x64] sm:$0xf]
      %v5445 = vld [vmem:[%s5418 + $0x68] sm:$0xf]
      %v5446 = vld [vmem:[%s5418 + $0x6c] sm:$0xf]
      %v5447 = vld [vmem:[%s5418 + $0x70] sm:$0xf]
      %v5448 = vld [vmem:[%s5418 + $0x74] sm:$0xf]
      %v5449 = vld [vmem:[%s5418 + $0x78] sm:$0xf]
      %v5450 = vld [vmem:[%s5418 + $0x7c] sm:$0xf]
      %v5451 = vld [vmem:[%s5418 + $0x80] sm:$0xf]
      %v5452 = vld [vmem:[%s5418 + $0x84] sm:$0xf]
      %v5453 = vld [vmem:[%s5418 + $0x88] sm:$0xf]
      %v5454 = vld [vmem:[%s5418 + $0x8c] sm:$0xf]
      %v5455 = vld [vmem:[%s2 + $0x7] sm:$0x1]
      %v5456 = vld [vmem:[#allocation2] sm:$0xff]
      %v5457 = vld [vmem:[#allocation2 + $0x8] sm:$0x3]
      %v5458 = vld [vmem:[#allocation2 + $0x10] sm:$0xff]
      %v5459 = vld [vmem:[#allocation2 + $0x18] sm:$0x3]
      %v5460 = vld [vmem:[#allocation2 + $0x20] sm:$0xff]
      %v5461 = vld [vmem:[#allocation2 + $0x28] sm:$0x3]
      %v5462 = vld [vmem:[#allocation2 + $0x30] sm:$0xff]
      %v5463 = vld [vmem:[#allocation2 + $0x38] sm:$0x3]
      %v5464 = vld [vmem:[#allocation2 + $0x40] sm:$0xff]
      %v5465 = vld [vmem:[#allocation2 + $0x48] sm:$0x3]
      %v5466 = vld [vmem:[#allocation2 + $0x50] sm:$0xff]
      %v5467 = vld [vmem:[#allocation2 + $0x58] sm:$0x3]
      %v5468 = vld [vmem:[#allocation2 + $0x60] sm:$0xff]
      %v5469 = vld [vmem:[#allocation2 + $0x68] sm:$0x3]
      %v5470 = vld [vmem:[#allocation2 + $0x70] sm:$0xff]
      %v5471 = vld [vmem:[#allocation2 + $0x78] sm:$0x3]
      %v5472 = vld [vmem:[#allocation2 + $0x80] sm:$0xff]
      %v5473 = vld [vmem:[#allocation2 + $0x88] sm:$0x3]
      %v5474 = vld [vmem:[#allocation2 + $0x90] sm:$0xff]
      %v5475 = vld [vmem:[#allocation2 + $0x98] sm:$0x3]
      %v5476 = vpack.c.bf16 %v5456, %v5456
      %v5477 = vpack.c.bf16 %v5458, %v5458
      %v5478 = vpack.c.bf16 %v5460, %v5460
      %v5479 = vpack.c.bf16 %v5462, %v5462
      %v5480 = vpack.c.bf16 %v5464, %v5464
      %v5481 = vpack.c.bf16 %v5466, %v5466
      %v5482 = vpack.c.bf16 %v5468, %v5468
      %v5483 = vpack.c.bf16 %v5470, %v5470
      %5484 = vst.msk [vmem:[#allocation3] sm:$0xf] %vm330, %v5476
      %5485 = vst.msk [vmem:[#allocation3 + $0xc] sm:$0xf] %vm330, %v5477
      %5486 = vst.msk [vmem:[#allocation3 + $0x18] sm:$0xf] %vm330, %v5478
      %5487 = vst.msk [vmem:[#allocation3 + $0x24] sm:$0xf] %vm330, %v5479
      %5488 = vst.msk [vmem:[#allocation3 + $0x30] sm:$0xf] %vm330, %v5480
      %5489 = vst.msk [vmem:[#allocation3 + $0x3c] sm:$0xf] %vm330, %v5481
      %5490 = vst.msk [vmem:[#allocation3 + $0x48] sm:$0xf] %vm330, %v5482
      %5491 = vst.msk [vmem:[#allocation3 + $0x54] sm:$0xf] %vm330, %v5483
      %v5508 = vrot.slane %v5456, 1
      %v5509 = vrot.slane %v5457, 1
      %v5510 = vsel %vm355, %v5508, %v5509
      %v5511 = vrot.slane %v5458, 1
      %v5512 = vrot.slane %v5459, 1
      %v5513 = vsel %vm355, %v5511, %v5512
      %v5514 = vrot.slane %v5460, 1
      %v5515 = vrot.slane %v5461, 1
      %v5516 = vsel %vm355, %v5514, %v5515
      %v5517 = vrot.slane %v5462, 1
      %v5518 = vrot.slane %v5463, 1
      %v5519 = vsel %vm355, %v5517, %v5518
      %v5520 = vrot.slane %v5464, 1
      %v5521 = vrot.slane %v5465, 1
      %v5522 = vsel %vm355, %v5520, %v5521
      %v5523 = vrot.slane %v5466, 1
      %v5524 = vrot.slane %v5467, 1
      %v5525 = vsel %vm355, %v5523, %v5524
      %v5526 = vrot.slane %v5468, 1
      %v5527 = vrot.slane %v5469, 1
      %v5528 = vsel %vm355, %v5526, %v5527
      %v5529 = vrot.slane %v5470, 1
      %v5530 = vrot.slane %v5471, 1
      %v5531 = vsel %vm355, %v5529, %v5530
      %v5540 = vpack.c.bf16 %v5510, %v5510
      %v5541 = vpack.c.bf16 %v5513, %v5513
      %v5542 = vpack.c.bf16 %v5516, %v5516
      %v5543 = vpack.c.bf16 %v5519, %v5519
      %v5544 = vpack.c.bf16 %v5522, %v5522
      %v5545 = vpack.c.bf16 %v5525, %v5525
      %v5546 = vpack.c.bf16 %v5528, %v5528
      %v5547 = vpack.c.bf16 %v5531, %v5531
      %5556 = vrot.lane.b32.xlu0 %v5540, 32
      %v5557 = vpop.permute.xlu0 %5556
      %5558 = vrot.lane.b32.xlu0 %v5541, 32
      %v5559 = vpop.permute.xlu0 %5558
      %5560 = vrot.lane.b32.xlu0 %v5542, 32
      %v5561 = vpop.permute.xlu0 %5560
      %5562 = vrot.lane.b32.xlu0 %v5543, 32
      %v5563 = vpop.permute.xlu0 %5562
      %5564 = vrot.lane.b32.xlu0 %v5544, 32
      %v5565 = vpop.permute.xlu0 %5564
      %5566 = vrot.lane.b32.xlu0 %v5545, 32
      %v5567 = vpop.permute.xlu0 %5566
      %5568 = vrot.lane.b32.xlu0 %v5546, 32
      %v5569 = vpop.permute.xlu0 %5568
      %5570 = vrot.lane.b32.xlu0 %v5547, 32
      %v5571 = vpop.permute.xlu0 %5570
      %5580 = vst.msk [vmem:[#allocation3] sm:$0xf] %vm428, %v5557
      %5581 = vst.msk [vmem:[#allocation3 + $0xc] sm:$0xf] %vm428, %v5559
      %5582 = vst.msk [vmem:[#allocation3 + $0x18] sm:$0xf] %vm428, %v5561
      %5583 = vst.msk [vmem:[#allocation3 + $0x24] sm:$0xf] %vm428, %v5563
      %5584 = vst.msk [vmem:[#allocation3 + $0x30] sm:$0xf] %vm428, %v5565
      %5585 = vst.msk [vmem:[#allocation3 + $0x3c] sm:$0xf] %vm428, %v5567
      %5586 = vst.msk [vmem:[#allocation3 + $0x48] sm:$0xf] %vm428, %v5569
      %5587 = vst.msk [vmem:[#allocation3 + $0x54] sm:$0xf] %vm428, %v5571
      %v5588 = vrot.slane %v5456, 2
      %v5589 = vrot.slane %v5457, 2
      %v5590 = vsel %vm437, %v5588, %v5589
      %v5591 = vrot.slane %v5458, 2
      %v5592 = vrot.slane %v5459, 2
      %v5593 = vsel %vm437, %v5591, %v5592
      %v5594 = vrot.slane %v5460, 2
      %v5595 = vrot.slane %v5461, 2
      %v5596 = vsel %vm437, %v5594, %v5595
      %v5597 = vrot.slane %v5462, 2
      %v5598 = vrot.slane %v5463, 2
      %v5599 = vsel %vm437, %v5597, %v5598
      %v5600 = vrot.slane %v5464, 2
      %v5601 = vrot.slane %v5465, 2
      %v5602 = vsel %vm437, %v5600, %v5601
      %v5603 = vrot.slane %v5466, 2
      %v5604 = vrot.slane %v5467, 2
      %v5605 = vsel %vm437, %v5603, %v5604
      %v5606 = vrot.slane %v5468, 2
      %v5607 = vrot.slane %v5469, 2
      %v5608 = vsel %vm437, %v5606, %v5607
      %v5609 = vrot.slane %v5470, 2
      %v5610 = vrot.slane %v5471, 2
      %v5611 = vsel %vm437, %v5609, %v5610
      %v5620 = vpack.c.bf16 %v5590, %v5590
      %v5621 = vpack.c.bf16 %v5593, %v5593
      %v5622 = vpack.c.bf16 %v5596, %v5596
      %v5623 = vpack.c.bf16 %v5599, %v5599
      %v5624 = vpack.c.bf16 %v5602, %v5602
      %v5625 = vpack.c.bf16 %v5605, %v5605
      %v5626 = vpack.c.bf16 %v5608, %v5608
      %v5627 = vpack.c.bf16 %v5611, %v5611
      %5636 = vrot.lane.b32.xlu0 %v5620, 64
      %v5637 = vpop.permute.xlu0 %5636
      %5638 = vrot.lane.b32.xlu0 %v5621, 64
      %v5639 = vpop.permute.xlu0 %5638
      %5640 = vrot.lane.b32.xlu0 %v5622, 64
      %v5641 = vpop.permute.xlu0 %5640
      %5642 = vrot.lane.b32.xlu0 %v5623, 64
      %v5643 = vpop.permute.xlu0 %5642
      %5644 = vrot.lane.b32.xlu0 %v5624, 64
      %v5645 = vpop.permute.xlu0 %5644
      %5646 = vrot.lane.b32.xlu0 %v5625, 64
      %v5647 = vpop.permute.xlu0 %5646
      %5648 = vrot.lane.b32.xlu0 %v5626, 64
      %v5649 = vpop.permute.xlu0 %5648
      %5650 = vrot.lane.b32.xlu0 %v5627, 64
      %v5651 = vpop.permute.xlu0 %5650
      %5660 = vst.msk [vmem:[#allocation3] sm:$0xf] %vm510, %v5637
      %5661 = vst.msk [vmem:[#allocation3 + $0xc] sm:$0xf] %vm510, %v5639
      %5662 = vst.msk [vmem:[#allocation3 + $0x18] sm:$0xf] %vm510, %v5641
      %5663 = vst.msk [vmem:[#allocation3 + $0x24] sm:$0xf] %vm510, %v5643
      %5664 = vst.msk [vmem:[#allocation3 + $0x30] sm:$0xf] %vm510, %v5645
      %5665 = vst.msk [vmem:[#allocation3 + $0x3c] sm:$0xf] %vm510, %v5647
      %5666 = vst.msk [vmem:[#allocation3 + $0x48] sm:$0xf] %vm510, %v5649
      %5667 = vst.msk [vmem:[#allocation3 + $0x54] sm:$0xf] %vm510, %v5651
      %v5668 = vpack.c.bf16 %v5472, %v5472
      %5677 = vrot.lane.b32.xlu0 %v5477, 96
      %v5678 = vpop.permute.xlu0 %5677
      %5679 = vrot.lane.b32.xlu0 %v5478, 96
      %v5680 = vpop.permute.xlu0 %5679
      %5681 = vrot.lane.b32.xlu0 %v5479, 96
      %v5682 = vpop.permute.xlu0 %5681
      %5683 = vrot.lane.b32.xlu0 %v5480, 96
      %v5684 = vpop.permute.xlu0 %5683
      %5685 = vrot.lane.b32.xlu0 %v5481, 96
      %v5686 = vpop.permute.xlu0 %5685
      %5687 = vrot.lane.b32.xlu0 %v5482, 96
      %v5688 = vpop.permute.xlu0 %5687
      %5689 = vrot.lane.b32.xlu0 %v5483, 96
      %v5690 = vpop.permute.xlu0 %5689
      %5691 = vrot.lane.b32.xlu0 %v5668, 96
      %v5692 = vpop.permute.xlu0 %5691
      %5701 = vst.msk [vmem:[#allocation3] sm:$0xf] %vm552, %v5678
      %5702 = vst.msk [vmem:[#allocation3 + $0xc] sm:$0xf] %vm552, %v5680
      %5703 = vst.msk [vmem:[#allocation3 + $0x18] sm:$0xf] %vm552, %v5682
      %5704 = vst.msk [vmem:[#allocation3 + $0x24] sm:$0xf] %vm552, %v5684
      %5705 = vst.msk [vmem:[#allocation3 + $0x30] sm:$0xf] %vm552, %v5686
      %5706 = vst.msk [vmem:[#allocation3 + $0x3c] sm:$0xf] %vm552, %v5688
      %5707 = vst.msk [vmem:[#allocation3 + $0x48] sm:$0xf] %vm552, %v5690
      %5708 = vst.msk [vmem:[#allocation3 + $0x54] sm:$0xf] %vm552, %v5692
      %v5711 = vrot.slane %v5472, 1
      %v5712 = vrot.slane %v5473, 1
      %v5713 = vsel %vm355, %v5711, %v5712
      %v5715 = vpack.c.bf16 %v5713, %v5713
      %5716 = vst.msk [vmem:[#allocation3 + $0x4] sm:$0xf] %vm330, %v5541
      %5717 = vst.msk [vmem:[#allocation3 + $0x10] sm:$0xf] %vm330, %v5542
      %5718 = vst.msk [vmem:[#allocation3 + $0x1c] sm:$0xf] %vm330, %v5543
      %5719 = vst.msk [vmem:[#allocation3 + $0x28] sm:$0xf] %vm330, %v5544
      %5720 = vst.msk [vmem:[#allocation3 + $0x34] sm:$0xf] %vm330, %v5545
      %5721 = vst.msk [vmem:[#allocation3 + $0x40] sm:$0xf] %vm330, %v5546
      %5722 = vst.msk [vmem:[#allocation3 + $0x4c] sm:$0xf] %vm330, %v5547
      %5723 = vst.msk [vmem:[#allocation3 + $0x58] sm:$0xf] %vm330, %v5715
      %v5724 = vrot.slane %v5472, 2
      %v5725 = vrot.slane %v5473, 2
      %v5726 = vsel %vm437, %v5724, %v5725
      %v5728 = vpack.c.bf16 %v5726, %v5726
      %5730 = vrot.lane.b32.xlu0 %v5621, 32
      %v5731 = vpop.permute.xlu0 %5730
      %5732 = vrot.lane.b32.xlu0 %v5622, 32
      %v5733 = vpop.permute.xlu0 %5732
      %5734 = vrot.lane.b32.xlu0 %v5623, 32
      %v5735 = vpop.permute.xlu0 %5734
      %5736 = vrot.lane.b32.xlu0 %v5624, 32
      %v5737 = vpop.permute.xlu0 %5736
      %5738 = vrot.lane.b32.xlu0 %v5625, 32
      %v5739 = vpop.permute.xlu0 %5738
      %5740 = vrot.lane.b32.xlu0 %v5626, 32
      %v5741 = vpop.permute.xlu0 %5740
      %5742 = vrot.lane.b32.xlu0 %v5627, 32
      %v5743 = vpop.permute.xlu0 %5742
      %5744 = vrot.lane.b32.xlu0 %v5728, 32
      %v5745 = vpop.permute.xlu0 %5744
      %5754 = vst.msk [vmem:[#allocation3 + $0x4] sm:$0xf] %vm428, %v5731
      %5755 = vst.msk [vmem:[#allocation3 + $0x10] sm:$0xf] %vm428, %v5733
      %5756 = vst.msk [vmem:[#allocation3 + $0x1c] sm:$0xf] %vm428, %v5735
      %5757 = vst.msk [vmem:[#allocation3 + $0x28] sm:$0xf] %vm428, %v5737
      %5758 = vst.msk [vmem:[#allocation3 + $0x34] sm:$0xf] %vm428, %v5739
      %5759 = vst.msk [vmem:[#allocation3 + $0x40] sm:$0xf] %vm428, %v5741
      %5760 = vst.msk [vmem:[#allocation3 + $0x4c] sm:$0xf] %vm428, %v5743
      %5761 = vst.msk [vmem:[#allocation3 + $0x58] sm:$0xf] %vm428, %v5745
      %v5762 = vpack.c.bf16 %v5474, %v5474
      %5764 = vrot.lane.b32.xlu0 %v5478, 64
      %v5765 = vpop.permute.xlu0 %5764
      %5766 = vrot.lane.b32.xlu0 %v5479, 64
      %v5767 = vpop.permute.xlu0 %5766
      %5768 = vrot.lane.b32.xlu0 %v5480, 64
      %v5769 = vpop.permute.xlu0 %5768
      %5770 = vrot.lane.b32.xlu0 %v5481, 64
      %v5771 = vpop.permute.xlu0 %5770
      %5772 = vrot.lane.b32.xlu0 %v5482, 64
      %v5773 = vpop.permute.xlu0 %5772
      %5774 = vrot.lane.b32.xlu0 %v5483, 64
      %v5775 = vpop.permute.xlu0 %5774
      %5776 = vrot.lane.b32.xlu0 %v5668, 64
      %v5777 = vpop.permute.xlu0 %5776
      %5778 = vrot.lane.b32.xlu0 %v5762, 64
      %v5779 = vpop.permute.xlu0 %5778
      %5788 = vst.msk [vmem:[#allocation3 + $0x4] sm:$0xf] %vm510, %v5765
      %5789 = vst.msk [vmem:[#allocation3 + $0x10] sm:$0xf] %vm510, %v5767
      %5790 = vst.msk [vmem:[#allocation3 + $0x1c] sm:$0xf] %vm510, %v5769
      %5791 = vst.msk [vmem:[#allocation3 + $0x28] sm:$0xf] %vm510, %v5771
      %5792 = vst.msk [vmem:[#allocation3 + $0x34] sm:$0xf] %vm510, %v5773
      %5793 = vst.msk [vmem:[#allocation3 + $0x40] sm:$0xf] %vm510, %v5775
      %5794 = vst.msk [vmem:[#allocation3 + $0x4c] sm:$0xf] %vm510, %v5777
      %5795 = vst.msk [vmem:[#allocation3 + $0x58] sm:$0xf] %vm510, %v5779
      %v5798 = vrot.slane %v5474, 1
      %v5799 = vrot.slane %v5475, 1
      %v5800 = vsel %vm355, %v5798, %v5799
      %v5802 = vpack.c.bf16 %v5800, %v5800
      %5805 = vrot.lane.b32.xlu0 %v5542, 96
      %v5806 = vpop.permute.xlu0 %5805
      %5807 = vrot.lane.b32.xlu0 %v5543, 96
      %v5808 = vpop.permute.xlu0 %5807
      %5809 = vrot.lane.b32.xlu0 %v5544, 96
      %v5810 = vpop.permute.xlu0 %5809
      %5811 = vrot.lane.b32.xlu0 %v5545, 96
      %v5812 = vpop.permute.xlu0 %5811
      %5813 = vrot.lane.b32.xlu0 %v5546, 96
      %v5814 = vpop.permute.xlu0 %5813
      %5815 = vrot.lane.b32.xlu0 %v5547, 96
      %v5816 = vpop.permute.xlu0 %5815
      %5817 = vrot.lane.b32.xlu0 %v5715, 96
      %v5818 = vpop.permute.xlu0 %5817
      %5819 = vrot.lane.b32.xlu0 %v5802, 96
      %v5820 = vpop.permute.xlu0 %5819
      %5829 = vst.msk [vmem:[#allocation3 + $0x4] sm:$0xf] %vm552, %v5806
      %5830 = vst.msk [vmem:[#allocation3 + $0x10] sm:$0xf] %vm552, %v5808
      %5831 = vst.msk [vmem:[#allocation3 + $0x1c] sm:$0xf] %vm552, %v5810
      %5832 = vst.msk [vmem:[#allocation3 + $0x28] sm:$0xf] %vm552, %v5812
      %5833 = vst.msk [vmem:[#allocation3 + $0x34] sm:$0xf] %vm552, %v5814
      %5834 = vst.msk [vmem:[#allocation3 + $0x40] sm:$0xf] %vm552, %v5816
      %5835 = vst.msk [vmem:[#allocation3 + $0x4c] sm:$0xf] %vm552, %v5818
      %5836 = vst.msk [vmem:[#allocation3 + $0x58] sm:$0xf] %vm552, %v5820
      %v5837 = vrot.slane %v5474, 2
      %v5838 = vrot.slane %v5475, 2
      %v5839 = vsel %vm437, %v5837, %v5838
      %v5841 = vpack.c.bf16 %v5839, %v5839
      %5842 = vst.msk [vmem:[#allocation3 + $0x8] sm:$0xf] %vm330, %v5622
      %5843 = vst.msk [vmem:[#allocation3 + $0x14] sm:$0xf] %vm330, %v5623
      %5844 = vst.msk [vmem:[#allocation3 + $0x20] sm:$0xf] %vm330, %v5624
      %5845 = vst.msk [vmem:[#allocation3 + $0x2c] sm:$0xf] %vm330, %v5625
      %5846 = vst.msk [vmem:[#allocation3 + $0x38] sm:$0xf] %vm330, %v5626
      %5847 = vst.msk [vmem:[#allocation3 + $0x44] sm:$0xf] %vm330, %v5627
      %5848 = vst.msk [vmem:[#allocation3 + $0x50] sm:$0xf] %vm330, %v5728
      %5849 = vst.msk [vmem:[#allocation3 + $0x5c] sm:$0xf] %vm330, %v5841
      %v5850 = vld [vmem:[#allocation3] sm:$0xff]
      %v5851 = vld [vmem:[#allocation3 + $0x8] sm:$0xf]
      %v5852 = vld [vmem:[#allocation3 + $0xc] sm:$0xff]
      %v5853 = vld [vmem:[#allocation3 + $0x14] sm:$0xf]
      %v5854 = vld [vmem:[#allocation3 + $0x18] sm:$0xff]
      %v5855 = vld [vmem:[#allocation3 + $0x20] sm:$0xf]
      %v5856 = vld [vmem:[#allocation3 + $0x24] sm:$0xff]
      %v5857 = vld [vmem:[#allocation3 + $0x2c] sm:$0xf]
      %v5858 = vld [vmem:[#allocation3 + $0x30] sm:$0xff]
      %v5859 = vld [vmem:[#allocation3 + $0x38] sm:$0xf]
      %v5860 = vld [vmem:[#allocation3 + $0x3c] sm:$0xff]
      %v5861 = vld [vmem:[#allocation3 + $0x44] sm:$0xf]
      %v5862 = vld [vmem:[#allocation3 + $0x48] sm:$0xff]
      %v5863 = vld [vmem:[#allocation3 + $0x50] sm:$0xf]
      %v5864 = vld [vmem:[#allocation3 + $0x54] sm:$0xff]
      %v5865 = vld [vmem:[#allocation3 + $0x5c] sm:$0xf]
      %v5866 = vperm.slane %v5455, 0
      %v5883 = vunpack.c.l.b16 %v5850
      %v5884 = vunpack.c.h.b16 %v5850
      %v5885 = vunpack.c.l.b16 %v5851
      %v5886 = vunpack.c.l.b16 %v5852
      %v5887 = vunpack.c.h.b16 %v5852
      %v5888 = vunpack.c.l.b16 %v5853
      %v5889 = vunpack.c.l.b16 %v5854
      %v5890 = vunpack.c.h.b16 %v5854
      %v5891 = vunpack.c.l.b16 %v5855
      %v5892 = vunpack.c.l.b16 %v5856
      %v5893 = vunpack.c.h.b16 %v5856
      %v5894 = vunpack.c.l.b16 %v5857
      %v5895 = vunpack.c.l.b16 %v5858
      %v5896 = vunpack.c.h.b16 %v5858
      %v5897 = vunpack.c.l.b16 %v5859
      %v5898 = vunpack.c.l.b16 %v5860
      %v5899 = vunpack.c.h.b16 %v5860
      %v5900 = vunpack.c.l.b16 %v5861
      %v5901 = vunpack.c.l.b16 %v5862
      %v5902 = vunpack.c.h.b16 %v5862
      %v5903 = vunpack.c.l.b16 %v5863
      %v5904 = vunpack.c.l.b16 %v5864
      %v5905 = vunpack.c.h.b16 %v5864
      %v5906 = vunpack.c.l.b16 %v5865
      %v5907 = vpack.c.b16 %v5886, %v5883
      %v5908 = vpack.c.b16 %v5887, %v5884
      %v5909 = vpack.c.b16 %v5888, %v5885
      %v5910 = vpack.c.b16 %v5892, %v5889
      %v5911 = vpack.c.b16 %v5893, %v5890
      %v5912 = vpack.c.b16 %v5894, %v5891
      %v5913 = vpack.c.b16 %v5898, %v5895
      %v5914 = vpack.c.b16 %v5899, %v5896
      %v5915 = vpack.c.b16 %v5900, %v5897
      %v5916 = vpack.c.b16 %v5904, %v5901
      %v5917 = vpack.c.b16 %v5905, %v5902
      %v5918 = vpack.c.b16 %v5906, %v5903
      %v5963 = vunpack.c.l.b16 %v5419
      %v5964 = vunpack.c.l.b16 %v5420
      %v5965 = vunpack.c.l.b16 %v5421
      %v5966 = vunpack.c.l.b16 %v5422
      %v5967 = vunpack.c.l.b16 %v5423
      %v5968 = vunpack.c.l.b16 %v5424
      %v5969 = vunpack.c.l.b16 %v5425
      %v5970 = vunpack.c.l.b16 %v5426
      %v5971 = vunpack.c.l.b16 %v5427
      %v5972 = vunpack.c.l.b16 %v5428
      %v5973 = vunpack.c.l.b16 %v5429
      %v5974 = vunpack.c.l.b16 %v5430
      %v5975 = vunpack.c.l.b16 %v5431
      %v5976 = vunpack.c.l.b16 %v5432
      %v5977 = vunpack.c.l.b16 %v5433
      %v5978 = vunpack.c.l.b16 %v5434
      %v5979 = vunpack.c.l.b16 %v5435
      %v5980 = vunpack.c.l.b16 %v5436
      %v5981 = vunpack.c.l.b16 %v5437
      %v5982 = vunpack.c.l.b16 %v5438
      %v5983 = vunpack.c.l.b16 %v5439
      %v5984 = vunpack.c.l.b16 %v5440
      %v5985 = vunpack.c.l.b16 %v5441
      %v5986 = vunpack.c.l.b16 %v5442
      %v5987 = vunpack.c.l.b16 %v5443
      %v5988 = vunpack.c.l.b16 %v5444
      %v5989 = vunpack.c.l.b16 %v5445
      %v5990 = vunpack.c.l.b16 %v5446
      %v5991 = vunpack.c.l.b16 %v5447
      %v5992 = vunpack.c.l.b16 %v5448
      %v5993 = vunpack.c.l.b16 %v5449
      %v5994 = vunpack.c.l.b16 %v5450
      %v5995 = vunpack.c.l.b16 %v5451
      %v5996 = vunpack.c.l.b16 %v5452
      %v5997 = vunpack.c.l.b16 %v5453
      %v5998 = vunpack.c.l.b16 %v5454
      %v5999 = vpack.c.b16 %v5964, %v5963
      %v6000 = vpack.c.b16 %v5966, %v5965
      %v6001 = vpack.c.b16 %v5968, %v5967
      %v6002 = vpack.c.b16 %v5970, %v5969
      %v6003 = vpack.c.b16 %v5972, %v5971
      %v6004 = vpack.c.b16 %v5974, %v5973
      %v6005 = vpack.c.b16 %v5976, %v5975
      %v6006 = vpack.c.b16 %v5978, %v5977
      %v6007 = vpack.c.b16 %v5980, %v5979
      %v6008 = vpack.c.b16 %v5982, %v5981
      %v6009 = vpack.c.b16 %v5984, %v5983
      %v6010 = vpack.c.b16 %v5986, %v5985
      %v6011 = vpack.c.b16 %v5988, %v5987
      %v6012 = vpack.c.b16 %v5990, %v5989
      %v6013 = vpack.c.b16 %v5992, %v5991
      %v6014 = vpack.c.b16 %v5994, %v5993
      %v6015 = vpack.c.b16 %v5996, %v5995
      %v6016 = vpack.c.b16 %v5998, %v5997
      %v6036 = vsel %vm226, %v5909, 0
      %v6039 = vsel %vm226, %v5912, 0
      %v6042 = vsel %vm226, %v5915, 0
      %v6045 = vsel %vm226, %v5918, 0
      %6047 = vmatpush.bf16.msra.mxu0 %v6006
      %6048 = vmatpush.bf16.msra.mxu0 %v6005
      %6049 = vmatpush.bf16.msra.mxu0 %v6004
      %6050 = vmatpush.bf16.msra.mxu0 %v6003
      %6051 = vmatpush.bf16.msra.mxu0 %v6002
      %6052 = vmatpush.bf16.msra.mxu0 %v6001
      %6053 = vmatpush.bf16.msra.mxu0 %v6000
      %6054 = vmatpush.bf16.msra.mxu0 %v5999
      %6055 = vmatmul.bf16.gmra.mxu0 %v5907
      %v6056 = vpop.f32.mrf.mxu0
      %v6057 = vadd.f32 %v5866, %v6056
      %v6058 = vpop.f32.mrf.mxu0
      %v6059 = vadd.f32 %v5866, %v6058
      %6060 = vmatmul.bf16.gmra.mxu0 %v5910
      %v6061 = vpop.f32.mrf.mxu0
      %v6062 = vadd.f32 %v5866, %v6061
      %v6063 = vpop.f32.mrf.mxu0
      %v6064 = vadd.f32 %v5866, %v6063
      %6065 = vmatmul.bf16.gmra.mxu0 %v5913
      %v6066 = vpop.f32.mrf.mxu0
      %v6067 = vadd.f32 %v5866, %v6066
      %v6068 = vpop.f32.mrf.mxu0
      %v6069 = vadd.f32 %v5866, %v6068
      %6070 = vmatmul.bf16.gmra.mxu0 %v5916
      %v6071 = vpop.f32.mrf.mxu0
      %v6072 = vadd.f32 %v5866, %v6071
      %v6073 = vpop.f32.mrf.mxu0
      %v6074 = vadd.f32 %v5866, %v6073
      %6075 = vdwg.mxu0
      %6076 = vmatpush.bf16.msra.mxu0 %v6014
      %6077 = vmatpush.bf16.msra.mxu0 %v6013
      %6078 = vmatpush.bf16.msra.mxu0 %v6012
      %6079 = vmatpush.bf16.msra.mxu0 %v6011
      %6080 = vmatpush.bf16.msra.mxu0 %v6010
      %6081 = vmatpush.bf16.msra.mxu0 %v6009
      %6082 = vmatpush.bf16.msra.mxu0 %v6008
      %6083 = vmatpush.bf16.msra.mxu0 %v6007
      %6084 = vmatmul.bf16.gmra.mxu0 %v5908
      %v6085 = vpop.f32.mrf.mxu0
      %v6086 = vadd.f32 %v6057, %v6085
      %v6087 = vpop.f32.mrf.mxu0
      %v6088 = vadd.f32 %v6059, %v6087
      %6089 = vmatmul.bf16.gmra.mxu0 %v5911
      %v6090 = vpop.f32.mrf.mxu0
      %v6091 = vadd.f32 %v6062, %v6090
      %v6092 = vpop.f32.mrf.mxu0
      %v6093 = vadd.f32 %v6064, %v6092
      %6094 = vmatmul.bf16.gmra.mxu0 %v5914
      %v6095 = vpop.f32.mrf.mxu0
      %v6096 = vadd.f32 %v6067, %v6095
      %v6097 = vpop.f32.mrf.mxu0
      %v6098 = vadd.f32 %v6069, %v6097
      %6099 = vmatmul.bf16.gmra.mxu0 %v5917
      %v6100 = vpop.f32.mrf.mxu0
      %v6101 = vadd.f32 %v6072, %v6100
      %v6102 = vpop.f32.mrf.mxu0
      %v6103 = vadd.f32 %v6074, %v6102
      %6104 = vdwg.mxu0
      %6105 = vmatpush.bf16.msra.mxu0 0
      %6106 = vmatpush.bf16.msra.mxu0 0
      %6107 = vmatpush.bf16.msra.mxu0 0
      %6108 = vmatpush.bf16.msra.mxu0 0
      %6109 = vmatpush.bf16.msra.mxu0 0
      %6110 = vmatpush.bf16.msra.mxu0 0
      %6111 = vmatpush.bf16.msra.mxu0 %v6016
      %6112 = vmatpush.bf16.msra.mxu0 %v6015
      %6113 = vmatmul.bf16.gmra.mxu0 %v6036
      %v6114 = vpop.f32.mrf.mxu0
      %v6115 = vadd.f32 %v6086, %v6114
      %v6116 = vpop.f32.mrf.mxu0
      %v6117 = vadd.f32 %v6088, %v6116
      %6118 = vmatmul.bf16.gmra.mxu0 %v6039
      %v6119 = vpop.f32.mrf.mxu0
      %v6120 = vadd.f32 %v6091, %v6119
      %v6121 = vpop.f32.mrf.mxu0
      %v6122 = vadd.f32 %v6093, %v6121
      %6123 = vmatmul.bf16.gmra.mxu0 %v6042
      %v6124 = vpop.f32.mrf.mxu0
      %v6125 = vadd.f32 %v6096, %v6124
      %v6126 = vpop.f32.mrf.mxu0
      %v6127 = vadd.f32 %v6098, %v6126
      %6128 = vmatmul.bf16.gmra.mxu0 %v6045
      %v6129 = vpop.f32.mrf.mxu0
      %v6130 = vadd.f32 %v6101, %v6129
      %v6131 = vpop.f32.mrf.mxu0
      %v6132 = vadd.f32 %v6103, %v6131
      %6133 = vdwg.mxu0
      %v6134 = vmax.f32 %v6115, 0.0
      %v6135 = vmax.f32 %v6117, 0.0
      %v6136 = vmax.f32 %v6120, 0.0
      %v6137 = vmax.f32 %v6122, 0.0
      %v6138 = vmax.f32 %v6125, 0.0
      %v6139 = vmax.f32 %v6127, 0.0
      %v6140 = vmax.f32 %v6130, 0.0
      %v6141 = vmax.f32 %v6132, 0.0
      %6142 = vst.msk [vmem:[%s256 + $0x1] sm:$0xff] %vm226, %v6134
      %6143 = vst.msk [vmem:[%s256 + $0x11] sm:$0xff] %vm226, %v6135
      %6144 = vst.msk [vmem:[%s256 + $0x21] sm:$0xff] %vm226, %v6136
      %6145 = vst.msk [vmem:[%s256 + $0x31] sm:$0xff] %vm226, %v6137
      %6146 = vst.msk [vmem:[%s256 + $0x41] sm:$0xff] %vm226, %v6138
      %6147 = vst.msk [vmem:[%s256 + $0x51] sm:$0xff] %vm226, %v6139
      %6148 = vst.msk [vmem:[%s256 + $0x61] sm:$0xff] %vm226, %v6140
      %6149 = vst.msk [vmem:[%s256 + $0x71] sm:$0xff] %vm226, %v6141
      %s6150 = scalar_lea.vmem %s1, 1152
      %v6151 = vld [vmem:[%s6150] sm:$0xf]
      %v6152 = vld [vmem:[%s6150 + $0x4] sm:$0xf]
      %v6153 = vld [vmem:[%s6150 + $0x8] sm:$0xf]
      %v6154 = vld [vmem:[%s6150 + $0xc] sm:$0xf]
      %v6155 = vld [vmem:[%s6150 + $0x10] sm:$0xf]
      %v6156 = vld [vmem:[%s6150 + $0x14] sm:$0xf]
      %v6157 = vld [vmem:[%s6150 + $0x18] sm:$0xf]
      %v6158 = vld [vmem:[%s6150 + $0x1c] sm:$0xf]
      %v6159 = vld [vmem:[%s6150 + $0x20] sm:$0xf]
      %v6160 = vld [vmem:[%s6150 + $0x24] sm:$0xf]
      %v6161 = vld [vmem:[%s6150 + $0x28] sm:$0xf]
      %v6162 = vld [vmem:[%s6150 + $0x2c] sm:$0xf]
      %v6163 = vld [vmem:[%s6150 + $0x30] sm:$0xf]
      %v6164 = vld [vmem:[%s6150 + $0x34] sm:$0xf]
      %v6165 = vld [vmem:[%s6150 + $0x38] sm:$0xf]
      %v6166 = vld [vmem:[%s6150 + $0x3c] sm:$0xf]
      %v6167 = vld [vmem:[%s6150 + $0x40] sm:$0xf]
      %v6168 = vld [vmem:[%s6150 + $0x44] sm:$0xf]
      %v6169 = vld [vmem:[%s6150 + $0x48] sm:$0xf]
      %v6170 = vld [vmem:[%s6150 + $0x4c] sm:$0xf]
      %v6171 = vld [vmem:[%s6150 + $0x50] sm:$0xf]
      %v6172 = vld [vmem:[%s6150 + $0x54] sm:$0xf]
      %v6173 = vld [vmem:[%s6150 + $0x58] sm:$0xf]
      %v6174 = vld [vmem:[%s6150 + $0x5c] sm:$0xf]
      %v6175 = vld [vmem:[%s6150 + $0x60] sm:$0xf]
      %v6176 = vld [vmem:[%s6150 + $0x64] sm:$0xf]
      %v6177 = vld [vmem:[%s6150 + $0x68] sm:$0xf]
      %v6178 = vld [vmem:[%s6150 + $0x6c] sm:$0xf]
      %v6179 = vld [vmem:[%s6150 + $0x70] sm:$0xf]
      %v6180 = vld [vmem:[%s6150 + $0x74] sm:$0xf]
      %v6181 = vld [vmem:[%s6150 + $0x78] sm:$0xf]
      %v6182 = vld [vmem:[%s6150 + $0x7c] sm:$0xf]
      %v6183 = vld [vmem:[%s6150 + $0x80] sm:$0xf]
      %v6184 = vld [vmem:[%s6150 + $0x84] sm:$0xf]
      %v6185 = vld [vmem:[%s6150 + $0x88] sm:$0xf]
      %v6186 = vld [vmem:[%s6150 + $0x8c] sm:$0xf]
      %v6187 = vld [vmem:[%s2 + $0x8] sm:$0x1]
      %v6188 = vld [vmem:[#allocation2] sm:$0xff]
      %v6189 = vld [vmem:[#allocation2 + $0x8] sm:$0x3]
      %v6190 = vld [vmem:[#allocation2 + $0x10] sm:$0xff]
      %v6191 = vld [vmem:[#allocation2 + $0x18] sm:$0x3]
      %v6192 = vld [vmem:[#allocation2 + $0x20] sm:$0xff]
      %v6193 = vld [vmem:[#allocation2 + $0x28] sm:$0x3]
      %v6194 = vld [vmem:[#allocation2 + $0x30] sm:$0xff]
      %v6195 = vld [vmem:[#allocation2 + $0x38] sm:$0x3]
      %v6196 = vld [vmem:[#allocation2 + $0x40] sm:$0xff]
      %v6197 = vld [vmem:[#allocation2 + $0x48] sm:$0x3]
      %v6198 = vld [vmem:[#allocation2 + $0x50] sm:$0xff]
      %v6199 = vld [vmem:[#allocation2 + $0x58] sm:$0x3]
      %v6200 = vld [vmem:[#allocation2 + $0x60] sm:$0xff]
      %v6201 = vld [vmem:[#allocation2 + $0x68] sm:$0x3]
      %v6202 = vld [vmem:[#allocation2 + $0x70] sm:$0xff]
      %v6203 = vld [vmem:[#allocation2 + $0x78] sm:$0x3]
      %v6204 = vld [vmem:[#allocation2 + $0x80] sm:$0xff]
      %v6205 = vld [vmem:[#allocation2 + $0x88] sm:$0x3]
      %v6206 = vld [vmem:[#allocation2 + $0x90] sm:$0xff]
      %v6207 = vld [vmem:[#allocation2 + $0x98] sm:$0x3]
      %v6208 = vpack.c.bf16 %v6188, %v6188
      %v6209 = vpack.c.bf16 %v6190, %v6190
      %v6210 = vpack.c.bf16 %v6192, %v6192
      %v6211 = vpack.c.bf16 %v6194, %v6194
      %v6212 = vpack.c.bf16 %v6196, %v6196
      %v6213 = vpack.c.bf16 %v6198, %v6198
      %v6214 = vpack.c.bf16 %v6200, %v6200
      %v6215 = vpack.c.bf16 %v6202, %v6202
      %6216 = vst.msk [vmem:[#allocation3] sm:$0xf] %vm330, %v6208
      %6217 = vst.msk [vmem:[#allocation3 + $0xc] sm:$0xf] %vm330, %v6209
      %6218 = vst.msk [vmem:[#allocation3 + $0x18] sm:$0xf] %vm330, %v6210
      %6219 = vst.msk [vmem:[#allocation3 + $0x24] sm:$0xf] %vm330, %v6211
      %6220 = vst.msk [vmem:[#allocation3 + $0x30] sm:$0xf] %vm330, %v6212
      %6221 = vst.msk [vmem:[#allocation3 + $0x3c] sm:$0xf] %vm330, %v6213
      %6222 = vst.msk [vmem:[#allocation3 + $0x48] sm:$0xf] %vm330, %v6214
      %6223 = vst.msk [vmem:[#allocation3 + $0x54] sm:$0xf] %vm330, %v6215
      %v6240 = vrot.slane %v6188, 1
      %v6241 = vrot.slane %v6189, 1
      %v6242 = vsel %vm355, %v6240, %v6241
      %v6243 = vrot.slane %v6190, 1
      %v6244 = vrot.slane %v6191, 1
      %v6245 = vsel %vm355, %v6243, %v6244
      %v6246 = vrot.slane %v6192, 1
      %v6247 = vrot.slane %v6193, 1
      %v6248 = vsel %vm355, %v6246, %v6247
      %v6249 = vrot.slane %v6194, 1
      %v6250 = vrot.slane %v6195, 1
      %v6251 = vsel %vm355, %v6249, %v6250
      %v6252 = vrot.slane %v6196, 1
      %v6253 = vrot.slane %v6197, 1
      %v6254 = vsel %vm355, %v6252, %v6253
      %v6255 = vrot.slane %v6198, 1
      %v6256 = vrot.slane %v6199, 1
      %v6257 = vsel %vm355, %v6255, %v6256
      %v6258 = vrot.slane %v6200, 1
      %v6259 = vrot.slane %v6201, 1
      %v6260 = vsel %vm355, %v6258, %v6259
      %v6261 = vrot.slane %v6202, 1
      %v6262 = vrot.slane %v6203, 1
      %v6263 = vsel %vm355, %v6261, %v6262
      %v6272 = vpack.c.bf16 %v6242, %v6242
      %v6273 = vpack.c.bf16 %v6245, %v6245
      %v6274 = vpack.c.bf16 %v6248, %v6248
      %v6275 = vpack.c.bf16 %v6251, %v6251
      %v6276 = vpack.c.bf16 %v6254, %v6254
      %v6277 = vpack.c.bf16 %v6257, %v6257
      %v6278 = vpack.c.bf16 %v6260, %v6260
      %v6279 = vpack.c.bf16 %v6263, %v6263
      %6288 = vrot.lane.b32.xlu0 %v6272, 32
      %v6289 = vpop.permute.xlu0 %6288
      %6290 = vrot.lane.b32.xlu0 %v6273, 32
      %v6291 = vpop.permute.xlu0 %6290
      %6292 = vrot.lane.b32.xlu0 %v6274, 32
      %v6293 = vpop.permute.xlu0 %6292
      %6294 = vrot.lane.b32.xlu0 %v6275, 32
      %v6295 = vpop.permute.xlu0 %6294
      %6296 = vrot.lane.b32.xlu0 %v6276, 32
      %v6297 = vpop.permute.xlu0 %6296
      %6298 = vrot.lane.b32.xlu0 %v6277, 32
      %v6299 = vpop.permute.xlu0 %6298
      %6300 = vrot.lane.b32.xlu0 %v6278, 32
      %v6301 = vpop.permute.xlu0 %6300
      %6302 = vrot.lane.b32.xlu0 %v6279, 32
      %v6303 = vpop.permute.xlu0 %6302
      %6312 = vst.msk [vmem:[#allocation3] sm:$0xf] %vm428, %v6289
      %6313 = vst.msk [vmem:[#allocation3 + $0xc] sm:$0xf] %vm428, %v6291
      %6314 = vst.msk [vmem:[#allocation3 + $0x18] sm:$0xf] %vm428, %v6293
      %6315 = vst.msk [vmem:[#allocation3 + $0x24] sm:$0xf] %vm428, %v6295
      %6316 = vst.msk [vmem:[#allocation3 + $0x30] sm:$0xf] %vm428, %v6297
      %6317 = vst.msk [vmem:[#allocation3 + $0x3c] sm:$0xf] %vm428, %v6299
      %6318 = vst.msk [vmem:[#allocation3 + $0x48] sm:$0xf] %vm428, %v6301
      %6319 = vst.msk [vmem:[#allocation3 + $0x54] sm:$0xf] %vm428, %v6303
      %v6320 = vrot.slane %v6188, 2
      %v6321 = vrot.slane %v6189, 2
      %v6322 = vsel %vm437, %v6320, %v6321
      %v6323 = vrot.slane %v6190, 2
      %v6324 = vrot.slane %v6191, 2
      %v6325 = vsel %vm437, %v6323, %v6324
      %v6326 = vrot.slane %v6192, 2
      %v6327 = vrot.slane %v6193, 2
      %v6328 = vsel %vm437, %v6326, %v6327
      %v6329 = vrot.slane %v6194, 2
      %v6330 = vrot.slane %v6195, 2
      %v6331 = vsel %vm437, %v6329, %v6330
      %v6332 = vrot.slane %v6196, 2
      %v6333 = vrot.slane %v6197, 2
      %v6334 = vsel %vm437, %v6332, %v6333
      %v6335 = vrot.slane %v6198, 2
      %v6336 = vrot.slane %v6199, 2
      %v6337 = vsel %vm437, %v6335, %v6336
      %v6338 = vrot.slane %v6200, 2
      %v6339 = vrot.slane %v6201, 2
      %v6340 = vsel %vm437, %v6338, %v6339
      %v6341 = vrot.slane %v6202, 2
      %v6342 = vrot.slane %v6203, 2
      %v6343 = vsel %vm437, %v6341, %v6342
      %v6352 = vpack.c.bf16 %v6322, %v6322
      %v6353 = vpack.c.bf16 %v6325, %v6325
      %v6354 = vpack.c.bf16 %v6328, %v6328
      %v6355 = vpack.c.bf16 %v6331, %v6331
      %v6356 = vpack.c.bf16 %v6334, %v6334
      %v6357 = vpack.c.bf16 %v6337, %v6337
      %v6358 = vpack.c.bf16 %v6340, %v6340
      %v6359 = vpack.c.bf16 %v6343, %v6343
      %6368 = vrot.lane.b32.xlu0 %v6352, 64
      %v6369 = vpop.permute.xlu0 %6368
      %6370 = vrot.lane.b32.xlu0 %v6353, 64
      %v6371 = vpop.permute.xlu0 %6370
      %6372 = vrot.lane.b32.xlu0 %v6354, 64
      %v6373 = vpop.permute.xlu0 %6372
      %6374 = vrot.lane.b32.xlu0 %v6355, 64
      %v6375 = vpop.permute.xlu0 %6374
      %6376 = vrot.lane.b32.xlu0 %v6356, 64
      %v6377 = vpop.permute.xlu0 %6376
      %6378 = vrot.lane.b32.xlu0 %v6357, 64
      %v6379 = vpop.permute.xlu0 %6378
      %6380 = vrot.lane.b32.xlu0 %v6358, 64
      %v6381 = vpop.permute.xlu0 %6380
      %6382 = vrot.lane.b32.xlu0 %v6359, 64
      %v6383 = vpop.permute.xlu0 %6382
      %6392 = vst.msk [vmem:[#allocation3] sm:$0xf] %vm510, %v6369
      %6393 = vst.msk [vmem:[#allocation3 + $0xc] sm:$0xf] %vm510, %v6371
      %6394 = vst.msk [vmem:[#allocation3 + $0x18] sm:$0xf] %vm510, %v6373
      %6395 = vst.msk [vmem:[#allocation3 + $0x24] sm:$0xf] %vm510, %v6375
      %6396 = vst.msk [vmem:[#allocation3 + $0x30] sm:$0xf] %vm510, %v6377
      %6397 = vst.msk [vmem:[#allocation3 + $0x3c] sm:$0xf] %vm510, %v6379
      %6398 = vst.msk [vmem:[#allocation3 + $0x48] sm:$0xf] %vm510, %v6381
      %6399 = vst.msk [vmem:[#allocation3 + $0x54] sm:$0xf] %vm510, %v6383
      %v6400 = vpack.c.bf16 %v6204, %v6204
      %6409 = vrot.lane.b32.xlu0 %v6209, 96
      %v6410 = vpop.permute.xlu0 %6409
      %6411 = vrot.lane.b32.xlu0 %v6210, 96
      %v6412 = vpop.permute.xlu0 %6411
      %6413 = vrot.lane.b32.xlu0 %v6211, 96
      %v6414 = vpop.permute.xlu0 %6413
      %6415 = vrot.lane.b32.xlu0 %v6212, 96
      %v6416 = vpop.permute.xlu0 %6415
      %6417 = vrot.lane.b32.xlu0 %v6213, 96
      %v6418 = vpop.permute.xlu0 %6417
      %6419 = vrot.lane.b32.xlu0 %v6214, 96
      %v6420 = vpop.permute.xlu0 %6419
      %6421 = vrot.lane.b32.xlu0 %v6215, 96
      %v6422 = vpop.permute.xlu0 %6421
      %6423 = vrot.lane.b32.xlu0 %v6400, 96
      %v6424 = vpop.permute.xlu0 %6423
      %6433 = vst.msk [vmem:[#allocation3] sm:$0xf] %vm552, %v6410
      %6434 = vst.msk [vmem:[#allocation3 + $0xc] sm:$0xf] %vm552, %v6412
      %6435 = vst.msk [vmem:[#allocation3 + $0x18] sm:$0xf] %vm552, %v6414
      %6436 = vst.msk [vmem:[#allocation3 + $0x24] sm:$0xf] %vm552, %v6416
      %6437 = vst.msk [vmem:[#allocation3 + $0x30] sm:$0xf] %vm552, %v6418
      %6438 = vst.msk [vmem:[#allocation3 + $0x3c] sm:$0xf] %vm552, %v6420
      %6439 = vst.msk [vmem:[#allocation3 + $0x48] sm:$0xf] %vm552, %v6422
      %6440 = vst.msk [vmem:[#allocation3 + $0x54] sm:$0xf] %vm552, %v6424
      %v6443 = vrot.slane %v6204, 1
      %v6444 = vrot.slane %v6205, 1
      %v6445 = vsel %vm355, %v6443, %v6444
      %v6447 = vpack.c.bf16 %v6445, %v6445
      %6448 = vst.msk [vmem:[#allocation3 + $0x4] sm:$0xf] %vm330, %v6273
      %6449 = vst.msk [vmem:[#allocation3 + $0x10] sm:$0xf] %vm330, %v6274
      %6450 = vst.msk [vmem:[#allocation3 + $0x1c] sm:$0xf] %vm330, %v6275
      %6451 = vst.msk [vmem:[#allocation3 + $0x28] sm:$0xf] %vm330, %v6276
      %6452 = vst.msk [vmem:[#allocation3 + $0x34] sm:$0xf] %vm330, %v6277
      %6453 = vst.msk [vmem:[#allocation3 + $0x40] sm:$0xf] %vm330, %v6278
      %6454 = vst.msk [vmem:[#allocation3 + $0x4c] sm:$0xf] %vm330, %v6279
      %6455 = vst.msk [vmem:[#allocation3 + $0x58] sm:$0xf] %vm330, %v6447
      %v6456 = vrot.slane %v6204, 2
      %v6457 = vrot.slane %v6205, 2
      %v6458 = vsel %vm437, %v6456, %v6457
      %v6460 = vpack.c.bf16 %v6458, %v6458
      %6462 = vrot.lane.b32.xlu0 %v6353, 32
      %v6463 = vpop.permute.xlu0 %6462
      %6464 = vrot.lane.b32.xlu0 %v6354, 32
      %v6465 = vpop.permute.xlu0 %6464
      %6466 = vrot.lane.b32.xlu0 %v6355, 32
      %v6467 = vpop.permute.xlu0 %6466
      %6468 = vrot.lane.b32.xlu0 %v6356, 32
      %v6469 = vpop.permute.xlu0 %6468
      %6470 = vrot.lane.b32.xlu0 %v6357, 32
      %v6471 = vpop.permute.xlu0 %6470
      %6472 = vrot.lane.b32.xlu0 %v6358, 32
      %v6473 = vpop.permute.xlu0 %6472
      %6474 = vrot.lane.b32.xlu0 %v6359, 32
      %v6475 = vpop.permute.xlu0 %6474
      %6476 = vrot.lane.b32.xlu0 %v6460, 32
      %v6477 = vpop.permute.xlu0 %6476
      %6486 = vst.msk [vmem:[#allocation3 + $0x4] sm:$0xf] %vm428, %v6463
      %6487 = vst.msk [vmem:[#allocation3 + $0x10] sm:$0xf] %vm428, %v6465
      %6488 = vst.msk [vmem:[#allocation3 + $0x1c] sm:$0xf] %vm428, %v6467
      %6489 = vst.msk [vmem:[#allocation3 + $0x28] sm:$0xf] %vm428, %v6469
      %6490 = vst.msk [vmem:[#allocation3 + $0x34] sm:$0xf] %vm428, %v6471
      %6491 = vst.msk [vmem:[#allocation3 + $0x40] sm:$0xf] %vm428, %v6473
      %6492 = vst.msk [vmem:[#allocation3 + $0x4c] sm:$0xf] %vm428, %v6475
      %6493 = vst.msk [vmem:[#allocation3 + $0x58] sm:$0xf] %vm428, %v6477
      %v6494 = vpack.c.bf16 %v6206, %v6206
      %6496 = vrot.lane.b32.xlu0 %v6210, 64
      %v6497 = vpop.permute.xlu0 %6496
      %6498 = vrot.lane.b32.xlu0 %v6211, 64
      %v6499 = vpop.permute.xlu0 %6498
      %6500 = vrot.lane.b32.xlu0 %v6212, 64
      %v6501 = vpop.permute.xlu0 %6500
      %6502 = vrot.lane.b32.xlu0 %v6213, 64
      %v6503 = vpop.permute.xlu0 %6502
      %6504 = vrot.lane.b32.xlu0 %v6214, 64
      %v6505 = vpop.permute.xlu0 %6504
      %6506 = vrot.lane.b32.xlu0 %v6215, 64
      %v6507 = vpop.permute.xlu0 %6506
      %6508 = vrot.lane.b32.xlu0 %v6400, 64
      %v6509 = vpop.permute.xlu0 %6508
      %6510 = vrot.lane.b32.xlu0 %v6494, 64
      %v6511 = vpop.permute.xlu0 %6510
      %6520 = vst.msk [vmem:[#allocation3 + $0x4] sm:$0xf] %vm510, %v6497
      %6521 = vst.msk [vmem:[#allocation3 + $0x10] sm:$0xf] %vm510, %v6499
      %6522 = vst.msk [vmem:[#allocation3 + $0x1c] sm:$0xf] %vm510, %v6501
      %6523 = vst.msk [vmem:[#allocation3 + $0x28] sm:$0xf] %vm510, %v6503
      %6524 = vst.msk [vmem:[#allocation3 + $0x34] sm:$0xf] %vm510, %v6505
      %6525 = vst.msk [vmem:[#allocation3 + $0x40] sm:$0xf] %vm510, %v6507
      %6526 = vst.msk [vmem:[#allocation3 + $0x4c] sm:$0xf] %vm510, %v6509
      %6527 = vst.msk [vmem:[#allocation3 + $0x58] sm:$0xf] %vm510, %v6511
      %v6530 = vrot.slane %v6206, 1
      %v6531 = vrot.slane %v6207, 1
      %v6532 = vsel %vm355, %v6530, %v6531
      %v6534 = vpack.c.bf16 %v6532, %v6532
      %6537 = vrot.lane.b32.xlu0 %v6274, 96
      %v6538 = vpop.permute.xlu0 %6537
      %6539 = vrot.lane.b32.xlu0 %v6275, 96
      %v6540 = vpop.permute.xlu0 %6539
      %6541 = vrot.lane.b32.xlu0 %v6276, 96
      %v6542 = vpop.permute.xlu0 %6541
      %6543 = vrot.lane.b32.xlu0 %v6277, 96
      %v6544 = vpop.permute.xlu0 %6543
      %6545 = vrot.lane.b32.xlu0 %v6278, 96
      %v6546 = vpop.permute.xlu0 %6545
      %6547 = vrot.lane.b32.xlu0 %v6279, 96
      %v6548 = vpop.permute.xlu0 %6547
      %6549 = vrot.lane.b32.xlu0 %v6447, 96
      %v6550 = vpop.permute.xlu0 %6549
      %6551 = vrot.lane.b32.xlu0 %v6534, 96
      %v6552 = vpop.permute.xlu0 %6551
      %6561 = vst.msk [vmem:[#allocation3 + $0x4] sm:$0xf] %vm552, %v6538
      %6562 = vst.msk [vmem:[#allocation3 + $0x10] sm:$0xf] %vm552, %v6540
      %6563 = vst.msk [vmem:[#allocation3 + $0x1c] sm:$0xf] %vm552, %v6542
      %6564 = vst.msk [vmem:[#allocation3 + $0x28] sm:$0xf] %vm552, %v6544
      %6565 = vst.msk [vmem:[#allocation3 + $0x34] sm:$0xf] %vm552, %v6546
      %6566 = vst.msk [vmem:[#allocation3 + $0x40] sm:$0xf] %vm552, %v6548
      %6567 = vst.msk [vmem:[#allocation3 + $0x4c] sm:$0xf] %vm552, %v6550
      %6568 = vst.msk [vmem:[#allocation3 + $0x58] sm:$0xf] %vm552, %v6552
      %v6569 = vrot.slane %v6206, 2
      %v6570 = vrot.slane %v6207, 2
      %v6571 = vsel %vm437, %v6569, %v6570
      %v6573 = vpack.c.bf16 %v6571, %v6571
      %6574 = vst.msk [vmem:[#allocation3 + $0x8] sm:$0xf] %vm330, %v6354
      %6575 = vst.msk [vmem:[#allocation3 + $0x14] sm:$0xf] %vm330, %v6355
      %6576 = vst.msk [vmem:[#allocation3 + $0x20] sm:$0xf] %vm330, %v6356
      %6577 = vst.msk [vmem:[#allocation3 + $0x2c] sm:$0xf] %vm330, %v6357
      %6578 = vst.msk [vmem:[#allocation3 + $0x38] sm:$0xf] %vm330, %v6358
      %6579 = vst.msk [vmem:[#allocation3 + $0x44] sm:$0xf] %vm330, %v6359
      %6580 = vst.msk [vmem:[#allocation3 + $0x50] sm:$0xf] %vm330, %v6460
      %6581 = vst.msk [vmem:[#allocation3 + $0x5c] sm:$0xf] %vm330, %v6573
      %v6582 = vld [vmem:[#allocation3] sm:$0xff]
      %v6583 = vld [vmem:[#allocation3 + $0x8] sm:$0xf]
      %v6584 = vld [vmem:[#allocation3 + $0xc] sm:$0xff]
      %v6585 = vld [vmem:[#allocation3 + $0x14] sm:$0xf]
      %v6586 = vld [vmem:[#allocation3 + $0x18] sm:$0xff]
      %v6587 = vld [vmem:[#allocation3 + $0x20] sm:$0xf]
      %v6588 = vld [vmem:[#allocation3 + $0x24] sm:$0xff]
      %v6589 = vld [vmem:[#allocation3 + $0x2c] sm:$0xf]
      %v6590 = vld [vmem:[#allocation3 + $0x30] sm:$0xff]
      %v6591 = vld [vmem:[#allocation3 + $0x38] sm:$0xf]
      %v6592 = vld [vmem:[#allocation3 + $0x3c] sm:$0xff]
      %v6593 = vld [vmem:[#allocation3 + $0x44] sm:$0xf]
      %v6594 = vld [vmem:[#allocation3 + $0x48] sm:$0xff]
      %v6595 = vld [vmem:[#allocation3 + $0x50] sm:$0xf]
      %v6596 = vld [vmem:[#allocation3 + $0x54] sm:$0xff]
      %v6597 = vld [vmem:[#allocation3 + $0x5c] sm:$0xf]
      %v6598 = vperm.slane %v6187, 0
      %v6615 = vunpack.c.l.b16 %v6582
      %v6616 = vunpack.c.h.b16 %v6582
      %v6617 = vunpack.c.l.b16 %v6583
      %v6618 = vunpack.c.l.b16 %v6584
      %v6619 = vunpack.c.h.b16 %v6584
      %v6620 = vunpack.c.l.b16 %v6585
      %v6621 = vunpack.c.l.b16 %v6586
      %v6622 = vunpack.c.h.b16 %v6586
      %v6623 = vunpack.c.l.b16 %v6587
      %v6624 = vunpack.c.l.b16 %v6588
      %v6625 = vunpack.c.h.b16 %v6588
      %v6626 = vunpack.c.l.b16 %v6589
      %v6627 = vunpack.c.l.b16 %v6590
      %v6628 = vunpack.c.h.b16 %v6590
      %v6629 = vunpack.c.l.b16 %v6591
      %v6630 = vunpack.c.l.b16 %v6592
      %v6631 = vunpack.c.h.b16 %v6592
      %v6632 = vunpack.c.l.b16 %v6593
      %v6633 = vunpack.c.l.b16 %v6594
      %v6634 = vunpack.c.h.b16 %v6594
      %v6635 = vunpack.c.l.b16 %v6595
      %v6636 = vunpack.c.l.b16 %v6596
      %v6637 = vunpack.c.h.b16 %v6596
      %v6638 = vunpack.c.l.b16 %v6597
      %v6639 = vpack.c.b16 %v6618, %v6615
      %v6640 = vpack.c.b16 %v6619, %v6616
      %v6641 = vpack.c.b16 %v6620, %v6617
      %v6642 = vpack.c.b16 %v6624, %v6621
      %v6643 = vpack.c.b16 %v6625, %v6622
      %v6644 = vpack.c.b16 %v6626, %v6623
      %v6645 = vpack.c.b16 %v6630, %v6627
      %v6646 = vpack.c.b16 %v6631, %v6628
      %v6647 = vpack.c.b16 %v6632, %v6629
      %v6648 = vpack.c.b16 %v6636, %v6633
      %v6649 = vpack.c.b16 %v6637, %v6634
      %v6650 = vpack.c.b16 %v6638, %v6635
      %v6695 = vunpack.c.l.b16 %v6151
      %v6696 = vunpack.c.l.b16 %v6152
      %v6697 = vunpack.c.l.b16 %v6153
      %v6698 = vunpack.c.l.b16 %v6154
      %v6699 = vunpack.c.l.b16 %v6155
      %v6700 = vunpack.c.l.b16 %v6156
      %v6701 = vunpack.c.l.b16 %v6157
      %v6702 = vunpack.c.l.b16 %v6158
      %v6703 = vunpack.c.l.b16 %v6159
      %v6704 = vunpack.c.l.b16 %v6160
      %v6705 = vunpack.c.l.b16 %v6161
      %v6706 = vunpack.c.l.b16 %v6162
      %v6707 = vunpack.c.l.b16 %v6163
      %v6708 = vunpack.c.l.b16 %v6164
      %v6709 = vunpack.c.l.b16 %v6165
      %v6710 = vunpack.c.l.b16 %v6166
      %v6711 = vunpack.c.l.b16 %v6167
      %v6712 = vunpack.c.l.b16 %v6168
      %v6713 = vunpack.c.l.b16 %v6169
      %v6714 = vunpack.c.l.b16 %v6170
      %v6715 = vunpack.c.l.b16 %v6171
      %v6716 = vunpack.c.l.b16 %v6172
      %v6717 = vunpack.c.l.b16 %v6173
      %v6718 = vunpack.c.l.b16 %v6174
      %v6719 = vunpack.c.l.b16 %v6175
      %v6720 = vunpack.c.l.b16 %v6176
      %v6721 = vunpack.c.l.b16 %v6177
      %v6722 = vunpack.c.l.b16 %v6178
      %v6723 = vunpack.c.l.b16 %v6179
      %v6724 = vunpack.c.l.b16 %v6180
      %v6725 = vunpack.c.l.b16 %v6181
      %v6726 = vunpack.c.l.b16 %v6182
      %v6727 = vunpack.c.l.b16 %v6183
      %v6728 = vunpack.c.l.b16 %v6184
      %v6729 = vunpack.c.l.b16 %v6185
      %v6730 = vunpack.c.l.b16 %v6186
      %v6731 = vpack.c.b16 %v6696, %v6695
      %v6732 = vpack.c.b16 %v6698, %v6697
      %v6733 = vpack.c.b16 %v6700, %v6699
      %v6734 = vpack.c.b16 %v6702, %v6701
      %v6735 = vpack.c.b16 %v6704, %v6703
      %v6736 = vpack.c.b16 %v6706, %v6705
      %v6737 = vpack.c.b16 %v6708, %v6707
      %v6738 = vpack.c.b16 %v6710, %v6709
      %v6739 = vpack.c.b16 %v6712, %v6711
      %v6740 = vpack.c.b16 %v6714, %v6713
      %v6741 = vpack.c.b16 %v6716, %v6715
      %v6742 = vpack.c.b16 %v6718, %v6717
      %v6743 = vpack.c.b16 %v6720, %v6719
      %v6744 = vpack.c.b16 %v6722, %v6721
      %v6745 = vpack.c.b16 %v6724, %v6723
      %v6746 = vpack.c.b16 %v6726, %v6725
      %v6747 = vpack.c.b16 %v6728, %v6727
      %v6748 = vpack.c.b16 %v6730, %v6729
      %v6768 = vsel %vm226, %v6641, 0
      %v6771 = vsel %vm226, %v6644, 0
      %v6774 = vsel %vm226, %v6647, 0
      %v6777 = vsel %vm226, %v6650, 0
      %6779 = vmatpush.bf16.msra.mxu0 %v6738
      %6780 = vmatpush.bf16.msra.mxu0 %v6737
      %6781 = vmatpush.bf16.msra.mxu0 %v6736
      %6782 = vmatpush.bf16.msra.mxu0 %v6735
      %6783 = vmatpush.bf16.msra.mxu0 %v6734
      %6784 = vmatpush.bf16.msra.mxu0 %v6733
      %6785 = vmatpush.bf16.msra.mxu0 %v6732
      %6786 = vmatpush.bf16.msra.mxu0 %v6731
      %6787 = vmatmul.bf16.gmra.mxu0 %v6639
      %v6788 = vpop.f32.mrf.mxu0
      %v6789 = vadd.f32 %v6598, %v6788
      %v6790 = vpop.f32.mrf.mxu0
      %v6791 = vadd.f32 %v6598, %v6790
      %6792 = vmatmul.bf16.gmra.mxu0 %v6642
      %v6793 = vpop.f32.mrf.mxu0
      %v6794 = vadd.f32 %v6598, %v6793
      %v6795 = vpop.f32.mrf.mxu0
      %v6796 = vadd.f32 %v6598, %v6795
      %6797 = vmatmul.bf16.gmra.mxu0 %v6645
      %v6798 = vpop.f32.mrf.mxu0
      %v6799 = vadd.f32 %v6598, %v6798
      %v6800 = vpop.f32.mrf.mxu0
      %v6801 = vadd.f32 %v6598, %v6800
      %6802 = vmatmul.bf16.gmra.mxu0 %v6648
      %v6803 = vpop.f32.mrf.mxu0
      %v6804 = vadd.f32 %v6598, %v6803
      %v6805 = vpop.f32.mrf.mxu0
      %v6806 = vadd.f32 %v6598, %v6805
      %6807 = vdwg.mxu0
      %6808 = vmatpush.bf16.msra.mxu0 %v6746
      %6809 = vmatpush.bf16.msra.mxu0 %v6745
      %6810 = vmatpush.bf16.msra.mxu0 %v6744
      %6811 = vmatpush.bf16.msra.mxu0 %v6743
      %6812 = vmatpush.bf16.msra.mxu0 %v6742
      %6813 = vmatpush.bf16.msra.mxu0 %v6741
      %6814 = vmatpush.bf16.msra.mxu0 %v6740
      %6815 = vmatpush.bf16.msra.mxu0 %v6739
      %6816 = vmatmul.bf16.gmra.mxu0 %v6640
      %v6817 = vpop.f32.mrf.mxu0
      %v6818 = vadd.f32 %v6789, %v6817
      %v6819 = vpop.f32.mrf.mxu0
      %v6820 = vadd.f32 %v6791, %v6819
      %6821 = vmatmul.bf16.gmra.mxu0 %v6643
      %v6822 = vpop.f32.mrf.mxu0
      %v6823 = vadd.f32 %v6794, %v6822
      %v6824 = vpop.f32.mrf.mxu0
      %v6825 = vadd.f32 %v6796, %v6824
      %6826 = vmatmul.bf16.gmra.mxu0 %v6646
      %v6827 = vpop.f32.mrf.mxu0
      %v6828 = vadd.f32 %v6799, %v6827
      %v6829 = vpop.f32.mrf.mxu0
      %v6830 = vadd.f32 %v6801, %v6829
      %6831 = vmatmul.bf16.gmra.mxu0 %v6649
      %v6832 = vpop.f32.mrf.mxu0
      %v6833 = vadd.f32 %v6804, %v6832
      %v6834 = vpop.f32.mrf.mxu0
      %v6835 = vadd.f32 %v6806, %v6834
      %6836 = vdwg.mxu0
      %6837 = vmatpush.bf16.msra.mxu0 0
      %6838 = vmatpush.bf16.msra.mxu0 0
      %6839 = vmatpush.bf16.msra.mxu0 0
      %6840 = vmatpush.bf16.msra.mxu0 0
      %6841 = vmatpush.bf16.msra.mxu0 0
      %6842 = vmatpush.bf16.msra.mxu0 0
      %6843 = vmatpush.bf16.msra.mxu0 %v6748
      %6844 = vmatpush.bf16.msra.mxu0 %v6747
      %6845 = vmatmul.bf16.gmra.mxu0 %v6768
      %v6846 = vpop.f32.mrf.mxu0
      %v6847 = vadd.f32 %v6818, %v6846
      %v6848 = vpop.f32.mrf.mxu0
      %v6849 = vadd.f32 %v6820, %v6848
      %6850 = vmatmul.bf16.gmra.mxu0 %v6771
      %v6851 = vpop.f32.mrf.mxu0
      %v6852 = vadd.f32 %v6823, %v6851
      %v6853 = vpop.f32.mrf.mxu0
      %v6854 = vadd.f32 %v6825, %v6853
      %6855 = vmatmul.bf16.gmra.mxu0 %v6774
      %v6856 = vpop.f32.mrf.mxu0
      %v6857 = vadd.f32 %v6828, %v6856
      %v6858 = vpop.f32.mrf.mxu0
      %v6859 = vadd.f32 %v6830, %v6858
      %6860 = vmatmul.bf16.gmra.mxu0 %v6777
      %v6861 = vpop.f32.mrf.mxu0
      %v6862 = vadd.f32 %v6833, %v6861
      %v6863 = vpop.f32.mrf.mxu0
      %v6864 = vadd.f32 %v6835, %v6863
      %6865 = vdwg.mxu0
      %v6866 = vadd.f32 %v6847, %v5402
      %v6867 = vadd.f32 %v6849, %v5403
      %v6868 = vadd.f32 %v6852, %v5404
      %v6869 = vadd.f32 %v6854, %v5405
      %v6870 = vadd.f32 %v6857, %v5406
      %v6871 = vadd.f32 %v6859, %v5407
      %v6872 = vadd.f32 %v6862, %v5408
      %v6873 = vadd.f32 %v6864, %v5409
      %v6874 = vmax.f32 %v6866, 0.0
      %v6875 = vmax.f32 %v6867, 0.0
      %v6876 = vmax.f32 %v6868, 0.0
      %v6877 = vmax.f32 %v6869, 0.0
      %v6878 = vmax.f32 %v6870, 0.0
      %v6879 = vmax.f32 %v6871, 0.0
      %v6880 = vmax.f32 %v6872, 0.0
      %v6881 = vmax.f32 %v6873, 0.0
      %6882 = vst.msk [vmem:[%s256 + $0x1] sm:$0xff] %vm226, %v6874
      %6883 = vst.msk [vmem:[%s256 + $0x11] sm:$0xff] %vm226, %v6875
      %6884 = vst.msk [vmem:[%s256 + $0x21] sm:$0xff] %vm226, %v6876
      %6885 = vst.msk [vmem:[%s256 + $0x31] sm:$0xff] %vm226, %v6877
      %6886 = vst.msk [vmem:[%s256 + $0x41] sm:$0xff] %vm226, %v6878
      %6887 = vst.msk [vmem:[%s256 + $0x51] sm:$0xff] %vm226, %v6879
      %6888 = vst.msk [vmem:[%s256 + $0x61] sm:$0xff] %vm226, %v6880
      %6889 = vst.msk [vmem:[%s256 + $0x71] sm:$0xff] %vm226, %v6881
      %v6890 = vld [vmem:[%s3] sm:$0xf]
      %v6891 = vld [vmem:[%s3 + $0x4] sm:$0xf]
      %v6892 = vld [vmem:[%s3 + $0x8] sm:$0xf]
      %v6893 = vld [vmem:[%s3 + $0xc] sm:$0xf]
      %v6894 = vld [vmem:[%s3 + $0x10] sm:$0xf]
      %v6895 = vld [vmem:[%s3 + $0x14] sm:$0xf]
      %v6896 = vld [vmem:[%s3 + $0x18] sm:$0xf]
      %v6897 = vld [vmem:[%s3 + $0x1c] sm:$0xf]
      %v6898 = vld [vmem:[%s3 + $0x20] sm:$0xf]
      %v6899 = vld [vmem:[%s3 + $0x24] sm:$0xf]
      %v6900 = vld [vmem:[%s3 + $0x28] sm:$0xf]
      %v6901 = vld [vmem:[%s3 + $0x2c] sm:$0xf]
      %v6902 = vld [vmem:[%s3 + $0x30] sm:$0xf]
      %v6903 = vld [vmem:[%s3 + $0x34] sm:$0xf]
      %v6904 = vld [vmem:[%s3 + $0x38] sm:$0xf]
      %v6905 = vld [vmem:[%s3 + $0x3c] sm:$0xf]
      %v6906 = vld [vmem:[%s3 + $0x40] sm:$0xf]
      %v6907 = vld [vmem:[%s3 + $0x44] sm:$0xf]
      %v6908 = vld [vmem:[%s3 + $0x48] sm:$0xf]
      %v6909 = vld [vmem:[%s3 + $0x4c] sm:$0xf]
      %v6910 = vld [vmem:[%s3 + $0x50] sm:$0xf]
      %v6911 = vld [vmem:[%s3 + $0x54] sm:$0xf]
      %v6912 = vld [vmem:[%s3 + $0x58] sm:$0xf]
      %v6913 = vld [vmem:[%s3 + $0x5c] sm:$0xf]
      %v6914 = vld [vmem:[%s3 + $0x60] sm:$0xf]
      %v6915 = vld [vmem:[%s3 + $0x64] sm:$0xf]
      %v6916 = vld [vmem:[%s3 + $0x68] sm:$0xf]
      %v6917 = vld [vmem:[%s3 + $0x6c] sm:$0xf]
      %v6918 = vld [vmem:[%s3 + $0x70] sm:$0xf]
      %v6919 = vld [vmem:[%s3 + $0x74] sm:$0xf]
      %v6920 = vld [vmem:[%s3 + $0x78] sm:$0xf]
      %v6921 = vld [vmem:[%s3 + $0x7c] sm:$0xf]
      %v6922 = vld [vmem:[%s3 + $0x80] sm:$0xf]
      %v6923 = vld [vmem:[%s3 + $0x84] sm:$0xf]
      %v6924 = vld [vmem:[%s3 + $0x88] sm:$0xf]
      %v6925 = vld [vmem:[%s3 + $0x8c] sm:$0xf]
      %v6926 = vld [vmem:[%s4] sm:$0x1]
      %v6927 = vld [vmem:[#allocation2] sm:$0xff]
      %v6928 = vld [vmem:[#allocation2 + $0x8] sm:$0x3]
      %v6929 = vld [vmem:[#allocation2 + $0x10] sm:$0xff]
      %v6930 = vld [vmem:[#allocation2 + $0x18] sm:$0x3]
      %v6931 = vld [vmem:[#allocation2 + $0x20] sm:$0xff]
      %v6932 = vld [vmem:[#allocation2 + $0x28] sm:$0x3]
      %v6933 = vld [vmem:[#allocation2 + $0x30] sm:$0xff]
      %v6934 = vld [vmem:[#allocation2 + $0x38] sm:$0x3]
      %v6935 = vld [vmem:[#allocation2 + $0x40] sm:$0xff]
      %v6936 = vld [vmem:[#allocation2 + $0x48] sm:$0x3]
      %v6937 = vld [vmem:[#allocation2 + $0x50] sm:$0xff]
      %v6938 = vld [vmem:[#allocation2 + $0x58] sm:$0x3]
      %v6939 = vld [vmem:[#allocation2 + $0x60] sm:$0xff]
      %v6940 = vld [vmem:[#allocation2 + $0x68] sm:$0x3]
      %v6941 = vld [vmem:[#allocation2 + $0x70] sm:$0xff]
      %v6942 = vld [vmem:[#allocation2 + $0x78] sm:$0x3]
      %v6943 = vld [vmem:[#allocation2 + $0x80] sm:$0xff]
      %v6944 = vld [vmem:[#allocation2 + $0x88] sm:$0x3]
      %v6945 = vld [vmem:[#allocation2 + $0x90] sm:$0xff]
      %v6946 = vld [vmem:[#allocation2 + $0x98] sm:$0x3]
      %v6947 = vpack.c.bf16 %v6927, %v6927
      %v6948 = vpack.c.bf16 %v6929, %v6929
      %v6949 = vpack.c.bf16 %v6931, %v6931
      %v6950 = vpack.c.bf16 %v6933, %v6933
      %v6951 = vpack.c.bf16 %v6935, %v6935
      %v6952 = vpack.c.bf16 %v6937, %v6937
      %v6953 = vpack.c.bf16 %v6939, %v6939
      %v6954 = vpack.c.bf16 %v6941, %v6941
      %6955 = vst.msk [vmem:[#allocation3] sm:$0xf] %vm330, %v6947
      %6956 = vst.msk [vmem:[#allocation3 + $0xc] sm:$0xf] %vm330, %v6948
      %6957 = vst.msk [vmem:[#allocation3 + $0x18] sm:$0xf] %vm330, %v6949
      %6958 = vst.msk [vmem:[#allocation3 + $0x24] sm:$0xf] %vm330, %v6950
      %6959 = vst.msk [vmem:[#allocation3 + $0x30] sm:$0xf] %vm330, %v6951
      %6960 = vst.msk [vmem:[#allocation3 + $0x3c] sm:$0xf] %vm330, %v6952
      %6961 = vst.msk [vmem:[#allocation3 + $0x48] sm:$0xf] %vm330, %v6953
      %6962 = vst.msk [vmem:[#allocation3 + $0x54] sm:$0xf] %vm330, %v6954
      %v6979 = vrot.slane %v6927, 1
      %v6980 = vrot.slane %v6928, 1
      %v6981 = vsel %vm355, %v6979, %v6980
      %v6982 = vrot.slane %v6929, 1
      %v6983 = vrot.slane %v6930, 1
      %v6984 = vsel %vm355, %v6982, %v6983
      %v6985 = vrot.slane %v6931, 1
      %v6986 = vrot.slane %v6932, 1
      %v6987 = vsel %vm355, %v6985, %v6986
      %v6988 = vrot.slane %v6933, 1
      %v6989 = vrot.slane %v6934, 1
      %v6990 = vsel %vm355, %v6988, %v6989
      %v6991 = vrot.slane %v6935, 1
      %v6992 = vrot.slane %v6936, 1
      %v6993 = vsel %vm355, %v6991, %v6992
      %v6994 = vrot.slane %v6937, 1
      %v6995 = vrot.slane %v6938, 1
      %v6996 = vsel %vm355, %v6994, %v6995
      %v6997 = vrot.slane %v6939, 1
      %v6998 = vrot.slane %v6940, 1
      %v6999 = vsel %vm355, %v6997, %v6998
      %v7000 = vrot.slane %v6941, 1
      %v7001 = vrot.slane %v6942, 1
      %v7002 = vsel %vm355, %v7000, %v7001
      %v7011 = vpack.c.bf16 %v6981, %v6981
      %v7012 = vpack.c.bf16 %v6984, %v6984
      %v7013 = vpack.c.bf16 %v6987, %v6987
      %v7014 = vpack.c.bf16 %v6990, %v6990
      %v7015 = vpack.c.bf16 %v6993, %v6993
      %v7016 = vpack.c.bf16 %v6996, %v6996
      %v7017 = vpack.c.bf16 %v6999, %v6999
      %v7018 = vpack.c.bf16 %v7002, %v7002
      %7027 = vrot.lane.b32.xlu0 %v7011, 32
      %v7028 = vpop.permute.xlu0 %7027
      %7029 = vrot.lane.b32.xlu0 %v7012, 32
      %v7030 = vpop.permute.xlu0 %7029
      %7031 = vrot.lane.b32.xlu0 %v7013, 32
      %v7032 = vpop.permute.xlu0 %7031
      %7033 = vrot.lane.b32.xlu0 %v7014, 32
      %v7034 = vpop.permute.xlu0 %7033
      %7035 = vrot.lane.b32.xlu0 %v7015, 32
      %v7036 = vpop.permute.xlu0 %7035
      %7037 = vrot.lane.b32.xlu0 %v7016, 32
      %v7038 = vpop.permute.xlu0 %7037
      %7039 = vrot.lane.b32.xlu0 %v7017, 32
      %v7040 = vpop.permute.xlu0 %7039
      %7041 = vrot.lane.b32.xlu0 %v7018, 32
      %v7042 = vpop.permute.xlu0 %7041
      %7051 = vst.msk [vmem:[#allocation3] sm:$0xf] %vm428, %v7028
      %7052 = vst.msk [vmem:[#allocation3 + $0xc] sm:$0xf] %vm428, %v7030
      %7053 = vst.msk [vmem:[#allocation3 + $0x18] sm:$0xf] %vm428, %v7032
      %7054 = vst.msk [vmem:[#allocation3 + $0x24] sm:$0xf] %vm428, %v7034
      %7055 = vst.msk [vmem:[#allocation3 + $0x30] sm:$0xf] %vm428, %v7036
      %7056 = vst.msk [vmem:[#allocation3 + $0x3c] sm:$0xf] %vm428, %v7038
      %7057 = vst.msk [vmem:[#allocation3 + $0x48] sm:$0xf] %vm428, %v7040
      %7058 = vst.msk [vmem:[#allocation3 + $0x54] sm:$0xf] %vm428, %v7042
      %v7059 = vrot.slane %v6927, 2
      %v7060 = vrot.slane %v6928, 2
      %v7061 = vsel %vm437, %v7059, %v7060
      %v7062 = vrot.slane %v6929, 2
      %v7063 = vrot.slane %v6930, 2
      %v7064 = vsel %vm437, %v7062, %v7063
      %v7065 = vrot.slane %v6931, 2
      %v7066 = vrot.slane %v6932, 2
      %v7067 = vsel %vm437, %v7065, %v7066
      %v7068 = vrot.slane %v6933, 2
      %v7069 = vrot.slane %v6934, 2
      %v7070 = vsel %vm437, %v7068, %v7069
      %v7071 = vrot.slane %v6935, 2
      %v7072 = vrot.slane %v6936, 2
      %v7073 = vsel %vm437, %v7071, %v7072
      %v7074 = vrot.slane %v6937, 2
      %v7075 = vrot.slane %v6938, 2
      %v7076 = vsel %vm437, %v7074, %v7075
      %v7077 = vrot.slane %v6939, 2
      %v7078 = vrot.slane %v6940, 2
      %v7079 = vsel %vm437, %v7077, %v7078
      %v7080 = vrot.slane %v6941, 2
      %v7081 = vrot.slane %v6942, 2
      %v7082 = vsel %vm437, %v7080, %v7081
      %v7091 = vpack.c.bf16 %v7061, %v7061
      %v7092 = vpack.c.bf16 %v7064, %v7064
      %v7093 = vpack.c.bf16 %v7067, %v7067
      %v7094 = vpack.c.bf16 %v7070, %v7070
      %v7095 = vpack.c.bf16 %v7073, %v7073
      %v7096 = vpack.c.bf16 %v7076, %v7076
      %v7097 = vpack.c.bf16 %v7079, %v7079
      %v7098 = vpack.c.bf16 %v7082, %v7082
      %7107 = vrot.lane.b32.xlu0 %v7091, 64
      %v7108 = vpop.permute.xlu0 %7107
      %7109 = vrot.lane.b32.xlu0 %v7092, 64
      %v7110 = vpop.permute.xlu0 %7109
      %7111 = vrot.lane.b32.xlu0 %v7093, 64
      %v7112 = vpop.permute.xlu0 %7111
      %7113 = vrot.lane.b32.xlu0 %v7094, 64
      %v7114 = vpop.permute.xlu0 %7113
      %7115 = vrot.lane.b32.xlu0 %v7095, 64
      %v7116 = vpop.permute.xlu0 %7115
      %7117 = vrot.lane.b32.xlu0 %v7096, 64
      %v7118 = vpop.permute.xlu0 %7117
      %7119 = vrot.lane.b32.xlu0 %v7097, 64
      %v7120 = vpop.permute.xlu0 %7119
      %7121 = vrot.lane.b32.xlu0 %v7098, 64
      %v7122 = vpop.permute.xlu0 %7121
      %7131 = vst.msk [vmem:[#allocation3] sm:$0xf] %vm510, %v7108
      %7132 = vst.msk [vmem:[#allocation3 + $0xc] sm:$0xf] %vm510, %v7110
      %7133 = vst.msk [vmem:[#allocation3 + $0x18] sm:$0xf] %vm510, %v7112
      %7134 = vst.msk [vmem:[#allocation3 + $0x24] sm:$0xf] %vm510, %v7114
      %7135 = vst.msk [vmem:[#allocation3 + $0x30] sm:$0xf] %vm510, %v7116
      %7136 = vst.msk [vmem:[#allocation3 + $0x3c] sm:$0xf] %vm510, %v7118
      %7137 = vst.msk [vmem:[#allocation3 + $0x48] sm:$0xf] %vm510, %v7120
      %7138 = vst.msk [vmem:[#allocation3 + $0x54] sm:$0xf] %vm510, %v7122
      %v7139 = vpack.c.bf16 %v6943, %v6943
      %7148 = vrot.lane.b32.xlu0 %v6948, 96
      %v7149 = vpop.permute.xlu0 %7148
      %7150 = vrot.lane.b32.xlu0 %v6949, 96
      %v7151 = vpop.permute.xlu0 %7150
      %7152 = vrot.lane.b32.xlu0 %v6950, 96
      %v7153 = vpop.permute.xlu0 %7152
      %7154 = vrot.lane.b32.xlu0 %v6951, 96
      %v7155 = vpop.permute.xlu0 %7154
      %7156 = vrot.lane.b32.xlu0 %v6952, 96
      %v7157 = vpop.permute.xlu0 %7156
      %7158 = vrot.lane.b32.xlu0 %v6953, 96
      %v7159 = vpop.permute.xlu0 %7158
      %7160 = vrot.lane.b32.xlu0 %v6954, 96
      %v7161 = vpop.permute.xlu0 %7160
      %7162 = vrot.lane.b32.xlu0 %v7139, 96
      %v7163 = vpop.permute.xlu0 %7162
      %7172 = vst.msk [vmem:[#allocation3] sm:$0xf] %vm552, %v7149
      %7173 = vst.msk [vmem:[#allocation3 + $0xc] sm:$0xf] %vm552, %v7151
      %7174 = vst.msk [vmem:[#allocation3 + $0x18] sm:$0xf] %vm552, %v7153
      %7175 = vst.msk [vmem:[#allocation3 + $0x24] sm:$0xf] %vm552, %v7155
      %7176 = vst.msk [vmem:[#allocation3 + $0x30] sm:$0xf] %vm552, %v7157
      %7177 = vst.msk [vmem:[#allocation3 + $0x3c] sm:$0xf] %vm552, %v7159
      %7178 = vst.msk [vmem:[#allocation3 + $0x48] sm:$0xf] %vm552, %v7161
      %7179 = vst.msk [vmem:[#allocation3 + $0x54] sm:$0xf] %vm552, %v7163
      %v7182 = vrot.slane %v6943, 1
      %v7183 = vrot.slane %v6944, 1
      %v7184 = vsel %vm355, %v7182, %v7183
      %v7186 = vpack.c.bf16 %v7184, %v7184
      %7187 = vst.msk [vmem:[#allocation3 + $0x4] sm:$0xf] %vm330, %v7012
      %7188 = vst.msk [vmem:[#allocation3 + $0x10] sm:$0xf] %vm330, %v7013
      %7189 = vst.msk [vmem:[#allocation3 + $0x1c] sm:$0xf] %vm330, %v7014
      %7190 = vst.msk [vmem:[#allocation3 + $0x28] sm:$0xf] %vm330, %v7015
      %7191 = vst.msk [vmem:[#allocation3 + $0x34] sm:$0xf] %vm330, %v7016
      %7192 = vst.msk [vmem:[#allocation3 + $0x40] sm:$0xf] %vm330, %v7017
      %7193 = vst.msk [vmem:[#allocation3 + $0x4c] sm:$0xf] %vm330, %v7018
      %7194 = vst.msk [vmem:[#allocation3 + $0x58] sm:$0xf] %vm330, %v7186
      %v7195 = vrot.slane %v6943, 2
      %v7196 = vrot.slane %v6944, 2
      %v7197 = vsel %vm437, %v7195, %v7196
      %v7199 = vpack.c.bf16 %v7197, %v7197
      %7201 = vrot.lane.b32.xlu0 %v7092, 32
      %v7202 = vpop.permute.xlu0 %7201
      %7203 = vrot.lane.b32.xlu0 %v7093, 32
      %v7204 = vpop.permute.xlu0 %7203
      %7205 = vrot.lane.b32.xlu0 %v7094, 32
      %v7206 = vpop.permute.xlu0 %7205
      %7207 = vrot.lane.b32.xlu0 %v7095, 32
      %v7208 = vpop.permute.xlu0 %7207
      %7209 = vrot.lane.b32.xlu0 %v7096, 32
      %v7210 = vpop.permute.xlu0 %7209
      %7211 = vrot.lane.b32.xlu0 %v7097, 32
      %v7212 = vpop.permute.xlu0 %7211
      %7213 = vrot.lane.b32.xlu0 %v7098, 32
      %v7214 = vpop.permute.xlu0 %7213
      %7215 = vrot.lane.b32.xlu0 %v7199, 32
      %v7216 = vpop.permute.xlu0 %7215
      %7225 = vst.msk [vmem:[#allocation3 + $0x4] sm:$0xf] %vm428, %v7202
      %7226 = vst.msk [vmem:[#allocation3 + $0x10] sm:$0xf] %vm428, %v7204
      %7227 = vst.msk [vmem:[#allocation3 + $0x1c] sm:$0xf] %vm428, %v7206
      %7228 = vst.msk [vmem:[#allocation3 + $0x28] sm:$0xf] %vm428, %v7208
      %7229 = vst.msk [vmem:[#allocation3 + $0x34] sm:$0xf] %vm428, %v7210
      %7230 = vst.msk [vmem:[#allocation3 + $0x40] sm:$0xf] %vm428, %v7212
      %7231 = vst.msk [vmem:[#allocation3 + $0x4c] sm:$0xf] %vm428, %v7214
      %7232 = vst.msk [vmem:[#allocation3 + $0x58] sm:$0xf] %vm428, %v7216
      %v7233 = vpack.c.bf16 %v6945, %v6945
      %7235 = vrot.lane.b32.xlu0 %v6949, 64
      %v7236 = vpop.permute.xlu0 %7235
      %7237 = vrot.lane.b32.xlu0 %v6950, 64
      %v7238 = vpop.permute.xlu0 %7237
      %7239 = vrot.lane.b32.xlu0 %v6951, 64
      %v7240 = vpop.permute.xlu0 %7239
      %7241 = vrot.lane.b32.xlu0 %v6952, 64
      %v7242 = vpop.permute.xlu0 %7241
      %7243 = vrot.lane.b32.xlu0 %v6953, 64
      %v7244 = vpop.permute.xlu0 %7243
      %7245 = vrot.lane.b32.xlu0 %v6954, 64
      %v7246 = vpop.permute.xlu0 %7245
      %7247 = vrot.lane.b32.xlu0 %v7139, 64
      %v7248 = vpop.permute.xlu0 %7247
      %7249 = vrot.lane.b32.xlu0 %v7233, 64
      %v7250 = vpop.permute.xlu0 %7249
      %7259 = vst.msk [vmem:[#allocation3 + $0x4] sm:$0xf] %vm510, %v7236
      %7260 = vst.msk [vmem:[#allocation3 + $0x10] sm:$0xf] %vm510, %v7238
      %7261 = vst.msk [vmem:[#allocation3 + $0x1c] sm:$0xf] %vm510, %v7240
      %7262 = vst.msk [vmem:[#allocation3 + $0x28] sm:$0xf] %vm510, %v7242
      %7263 = vst.msk [vmem:[#allocation3 + $0x34] sm:$0xf] %vm510, %v7244
      %7264 = vst.msk [vmem:[#allocation3 + $0x40] sm:$0xf] %vm510, %v7246
      %7265 = vst.msk [vmem:[#allocation3 + $0x4c] sm:$0xf] %vm510, %v7248
      %7266 = vst.msk [vmem:[#allocation3 + $0x58] sm:$0xf] %vm510, %v7250
      %v7269 = vrot.slane %v6945, 1
      %v7270 = vrot.slane %v6946, 1
      %v7271 = vsel %vm355, %v7269, %v7270
      %v7273 = vpack.c.bf16 %v7271, %v7271
      %7276 = vrot.lane.b32.xlu0 %v7013, 96
      %v7277 = vpop.permute.xlu0 %7276
      %7278 = vrot.lane.b32.xlu0 %v7014, 96
      %v7279 = vpop.permute.xlu0 %7278
      %7280 = vrot.lane.b32.xlu0 %v7015, 96
      %v7281 = vpop.permute.xlu0 %7280
      %7282 = vrot.lane.b32.xlu0 %v7016, 96
      %v7283 = vpop.permute.xlu0 %7282
      %7284 = vrot.lane.b32.xlu0 %v7017, 96
      %v7285 = vpop.permute.xlu0 %7284
      %7286 = vrot.lane.b32.xlu0 %v7018, 96
      %v7287 = vpop.permute.xlu0 %7286
      %7288 = vrot.lane.b32.xlu0 %v7186, 96
      %v7289 = vpop.permute.xlu0 %7288
      %7290 = vrot.lane.b32.xlu0 %v7273, 96
      %v7291 = vpop.permute.xlu0 %7290
      %7300 = vst.msk [vmem:[#allocation3 + $0x4] sm:$0xf] %vm552, %v7277
      %7301 = vst.msk [vmem:[#allocation3 + $0x10] sm:$0xf] %vm552, %v7279
      %7302 = vst.msk [vmem:[#allocation3 + $0x1c] sm:$0xf] %vm552, %v7281
      %7303 = vst.msk [vmem:[#allocation3 + $0x28] sm:$0xf] %vm552, %v7283
      %7304 = vst.msk [vmem:[#allocation3 + $0x34] sm:$0xf] %vm552, %v7285
      %7305 = vst.msk [vmem:[#allocation3 + $0x40] sm:$0xf] %vm552, %v7287
      %7306 = vst.msk [vmem:[#allocation3 + $0x4c] sm:$0xf] %vm552, %v7289
      %7307 = vst.msk [vmem:[#allocation3 + $0x58] sm:$0xf] %vm552, %v7291
      %v7308 = vrot.slane %v6945, 2
      %v7309 = vrot.slane %v6946, 2
      %v7310 = vsel %vm437, %v7308, %v7309
      %v7312 = vpack.c.bf16 %v7310, %v7310
      %7313 = vst.msk [vmem:[#allocation3 + $0x8] sm:$0xf] %vm330, %v7093
      %7314 = vst.msk [vmem:[#allocation3 + $0x14] sm:$0xf] %vm330, %v7094
      %7315 = vst.msk [vmem:[#allocation3 + $0x20] sm:$0xf] %vm330, %v7095
      %7316 = vst.msk [vmem:[#allocation3 + $0x2c] sm:$0xf] %vm330, %v7096
      %7317 = vst.msk [vmem:[#allocation3 + $0x38] sm:$0xf] %vm330, %v7097
      %7318 = vst.msk [vmem:[#allocation3 + $0x44] sm:$0xf] %vm330, %v7098
      %7319 = vst.msk [vmem:[#allocation3 + $0x50] sm:$0xf] %vm330, %v7199
      %7320 = vst.msk [vmem:[#allocation3 + $0x5c] sm:$0xf] %vm330, %v7312
      %v7321 = vld [vmem:[#allocation3] sm:$0xff]
      %v7322 = vld [vmem:[#allocation3 + $0x8] sm:$0xf]
      %v7323 = vld [vmem:[#allocation3 + $0xc] sm:$0xff]
      %v7324 = vld [vmem:[#allocation3 + $0x14] sm:$0xf]
      %v7325 = vld [vmem:[#allocation3 + $0x18] sm:$0xff]
      %v7326 = vld [vmem:[#allocation3 + $0x20] sm:$0xf]
      %v7327 = vld [vmem:[#allocation3 + $0x24] sm:$0xff]
      %v7328 = vld [vmem:[#allocation3 + $0x2c] sm:$0xf]
      %v7329 = vld [vmem:[#allocation3 + $0x30] sm:$0xff]
      %v7330 = vld [vmem:[#allocation3 + $0x38] sm:$0xf]
      %v7331 = vld [vmem:[#allocation3 + $0x3c] sm:$0xff]
      %v7332 = vld [vmem:[#allocation3 + $0x44] sm:$0xf]
      %v7333 = vld [vmem:[#allocation3 + $0x48] sm:$0xff]
      %v7334 = vld [vmem:[#allocation3 + $0x50] sm:$0xf]
      %v7335 = vld [vmem:[#allocation3 + $0x54] sm:$0xff]
      %v7336 = vld [vmem:[#allocation3 + $0x5c] sm:$0xf]
      %v7338 = vperm.slane %v6926, 0
      %v7356 = vunpack.c.l.b16 %v7321
      %v7357 = vunpack.c.h.b16 %v7321
      %v7358 = vunpack.c.l.b16 %v7322
      %v7359 = vunpack.c.l.b16 %v7323
      %v7360 = vunpack.c.h.b16 %v7323
      %v7361 = vunpack.c.l.b16 %v7324
      %v7362 = vunpack.c.l.b16 %v7325
      %v7363 = vunpack.c.h.b16 %v7325
      %v7364 = vunpack.c.l.b16 %v7326
      %v7365 = vunpack.c.l.b16 %v7327
      %v7366 = vunpack.c.h.b16 %v7327
      %v7367 = vunpack.c.l.b16 %v7328
      %v7368 = vunpack.c.l.b16 %v7329
      %v7369 = vunpack.c.h.b16 %v7329
      %v7370 = vunpack.c.l.b16 %v7330
      %v7371 = vunpack.c.l.b16 %v7331
      %v7372 = vunpack.c.h.b16 %v7331
      %v7373 = vunpack.c.l.b16 %v7332
      %v7374 = vunpack.c.l.b16 %v7333
      %v7375 = vunpack.c.h.b16 %v7333
      %v7376 = vunpack.c.l.b16 %v7334
      %v7377 = vunpack.c.l.b16 %v7335
      %v7378 = vunpack.c.h.b16 %v7335
      %v7379 = vunpack.c.l.b16 %v7336
      %v7380 = vpack.c.b16 %v7359, %v7356
      %v7381 = vpack.c.b16 %v7360, %v7357
      %v7382 = vpack.c.b16 %v7361, %v7358
      %v7383 = vpack.c.b16 %v7365, %v7362
      %v7384 = vpack.c.b16 %v7366, %v7363
      %v7385 = vpack.c.b16 %v7367, %v7364
      %v7386 = vpack.c.b16 %v7371, %v7368
      %v7387 = vpack.c.b16 %v7372, %v7369
      %v7388 = vpack.c.b16 %v7373, %v7370
      %v7389 = vpack.c.b16 %v7377, %v7374
      %v7390 = vpack.c.b16 %v7378, %v7375
      %v7391 = vpack.c.b16 %v7379, %v7376
      %v7436 = vunpack.c.l.b16 %v6890
      %v7437 = vunpack.c.l.b16 %v6891
      %v7438 = vunpack.c.l.b16 %v6892
      %v7439 = vunpack.c.l.b16 %v6893
      %v7440 = vunpack.c.l.b16 %v6894
      %v7441 = vunpack.c.l.b16 %v6895
      %v7442 = vunpack.c.l.b16 %v6896
      %v7443 = vunpack.c.l.b16 %v6897
      %v7444 = vunpack.c.l.b16 %v6898
      %v7445 = vunpack.c.l.b16 %v6899
      %v7446 = vunpack.c.l.b16 %v6900
      %v7447 = vunpack.c.l.b16 %v6901
      %v7448 = vunpack.c.l.b16 %v6902
      %v7449 = vunpack.c.l.b16 %v6903
      %v7450 = vunpack.c.l.b16 %v6904
      %v7451 = vunpack.c.l.b16 %v6905
      %v7452 = vunpack.c.l.b16 %v6906
      %v7453 = vunpack.c.l.b16 %v6907
      %v7454 = vunpack.c.l.b16 %v6908
      %v7455 = vunpack.c.l.b16 %v6909
      %v7456 = vunpack.c.l.b16 %v6910
      %v7457 = vunpack.c.l.b16 %v6911
      %v7458 = vunpack.c.l.b16 %v6912
      %v7459 = vunpack.c.l.b16 %v6913
      %v7460 = vunpack.c.l.b16 %v6914
      %v7461 = vunpack.c.l.b16 %v6915
      %v7462 = vunpack.c.l.b16 %v6916
      %v7463 = vunpack.c.l.b16 %v6917
      %v7464 = vunpack.c.l.b16 %v6918
      %v7465 = vunpack.c.l.b16 %v6919
      %v7466 = vunpack.c.l.b16 %v6920
      %v7467 = vunpack.c.l.b16 %v6921
      %v7468 = vunpack.c.l.b16 %v6922
      %v7469 = vunpack.c.l.b16 %v6923
      %v7470 = vunpack.c.l.b16 %v6924
      %v7471 = vunpack.c.l.b16 %v6925
      %v7472 = vpack.c.b16 %v7437, %v7436
      %v7473 = vpack.c.b16 %v7439, %v7438
      %v7474 = vpack.c.b16 %v7441, %v7440
      %v7475 = vpack.c.b16 %v7443, %v7442
      %v7476 = vpack.c.b16 %v7445, %v7444
      %v7477 = vpack.c.b16 %v7447, %v7446
      %v7478 = vpack.c.b16 %v7449, %v7448
      %v7479 = vpack.c.b16 %v7451, %v7450
      %v7480 = vpack.c.b16 %v7453, %v7452
      %v7481 = vpack.c.b16 %v7455, %v7454
      %v7482 = vpack.c.b16 %v7457, %v7456
      %v7483 = vpack.c.b16 %v7459, %v7458
      %v7484 = vpack.c.b16 %v7461, %v7460
      %v7485 = vpack.c.b16 %v7463, %v7462
      %v7486 = vpack.c.b16 %v7465, %v7464
      %v7487 = vpack.c.b16 %v7467, %v7466
      %v7488 = vpack.c.b16 %v7469, %v7468
      %v7489 = vpack.c.b16 %v7471, %v7470
      %v7509 = vsel %vm226, %v7382, 0
      %v7512 = vsel %vm226, %v7385, 0
      %v7515 = vsel %vm226, %v7388, 0
      %v7518 = vsel %vm226, %v7391, 0
      %7520 = vmatpush.bf16.msra.mxu0 %v7479
      %7521 = vmatpush.bf16.msra.mxu0 %v7478
      %7522 = vmatpush.bf16.msra.mxu0 %v7477
      %7523 = vmatpush.bf16.msra.mxu0 %v7476
      %7524 = vmatpush.bf16.msra.mxu0 %v7475
      %7525 = vmatpush.bf16.msra.mxu0 %v7474
      %7526 = vmatpush.bf16.msra.mxu0 %v7473
      %7527 = vmatpush.bf16.msra.mxu0 %v7472
      %7528 = vmatmul.bf16.gmra.mxu0 %v7380
      %v7529 = vpop.f32.mrf.mxu0
      %v7530 = vadd.f32 %v7338, %v7529
      %v7531 = vpop.f32.mrf.mxu0
      %v7532 = vadd.f32 %v7338, %v7531
      %7533 = vmatmul.bf16.gmra.mxu0 %v7383
      %v7534 = vpop.f32.mrf.mxu0
      %v7535 = vadd.f32 %v7338, %v7534
      %v7536 = vpop.f32.mrf.mxu0
      %v7537 = vadd.f32 %v7338, %v7536
      %7538 = vmatmul.bf16.gmra.mxu0 %v7386
      %v7539 = vpop.f32.mrf.mxu0
      %v7540 = vadd.f32 %v7338, %v7539
      %v7541 = vpop.f32.mrf.mxu0
      %v7542 = vadd.f32 %v7338, %v7541
      %7543 = vmatmul.bf16.gmra.mxu0 %v7389
      %v7544 = vpop.f32.mrf.mxu0
      %v7545 = vadd.f32 %v7338, %v7544
      %v7546 = vpop.f32.mrf.mxu0
      %v7547 = vadd.f32 %v7338, %v7546
      %7548 = vdwg.mxu0
      %7549 = vmatpush.bf16.msra.mxu0 %v7487
      %7550 = vmatpush.bf16.msra.mxu0 %v7486
      %7551 = vmatpush.bf16.msra.mxu0 %v7485
      %7552 = vmatpush.bf16.msra.mxu0 %v7484
      %7553 = vmatpush.bf16.msra.mxu0 %v7483
      %7554 = vmatpush.bf16.msra.mxu0 %v7482
      %7555 = vmatpush.bf16.msra.mxu0 %v7481
      %7556 = vmatpush.bf16.msra.mxu0 %v7480
      %7557 = vmatmul.bf16.gmra.mxu0 %v7381
      %v7558 = vpop.f32.mrf.mxu0
      %v7559 = vadd.f32 %v7530, %v7558
      %v7560 = vpop.f32.mrf.mxu0
      %v7561 = vadd.f32 %v7532, %v7560
      %7562 = vmatmul.bf16.gmra.mxu0 %v7384
      %v7563 = vpop.f32.mrf.mxu0
      %v7564 = vadd.f32 %v7535, %v7563
      %v7565 = vpop.f32.mrf.mxu0
      %v7566 = vadd.f32 %v7537, %v7565
      %7567 = vmatmul.bf16.gmra.mxu0 %v7387
      %v7568 = vpop.f32.mrf.mxu0
      %v7569 = vadd.f32 %v7540, %v7568
      %v7570 = vpop.f32.mrf.mxu0
      %v7571 = vadd.f32 %v7542, %v7570
      %7572 = vmatmul.bf16.gmra.mxu0 %v7390
      %v7573 = vpop.f32.mrf.mxu0
      %v7574 = vadd.f32 %v7545, %v7573
      %v7575 = vpop.f32.mrf.mxu0
      %v7576 = vadd.f32 %v7547, %v7575
      %7577 = vdwg.mxu0
      %7578 = vmatpush.bf16.msra.mxu0 0
      %7579 = vmatpush.bf16.msra.mxu0 0
      %7580 = vmatpush.bf16.msra.mxu0 0
      %7581 = vmatpush.bf16.msra.mxu0 0
      %7582 = vmatpush.bf16.msra.mxu0 0
      %7583 = vmatpush.bf16.msra.mxu0 0
      %7584 = vmatpush.bf16.msra.mxu0 %v7489
      %7585 = vmatpush.bf16.msra.mxu0 %v7488
      %7586 = vmatmul.bf16.gmra.mxu0 %v7509
      %v7587 = vpop.f32.mrf.mxu0
      %v7588 = vadd.f32 %v7559, %v7587
      %v7589 = vpop.f32.mrf.mxu0
      %v7590 = vadd.f32 %v7561, %v7589
      %7591 = vmatmul.bf16.gmra.mxu0 %v7512
      %v7592 = vpop.f32.mrf.mxu0
      %v7593 = vadd.f32 %v7564, %v7592
      %v7594 = vpop.f32.mrf.mxu0
      %v7595 = vadd.f32 %v7566, %v7594
      %7596 = vmatmul.bf16.gmra.mxu0 %v7515
      %v7597 = vpop.f32.mrf.mxu0
      %v7598 = vadd.f32 %v7569, %v7597
      %v7599 = vpop.f32.mrf.mxu0
      %v7600 = vadd.f32 %v7571, %v7599
      %7601 = vmatmul.bf16.gmra.mxu0 %v7518
      %v7602 = vpop.f32.mrf.mxu0
      %v7603 = vadd.f32 %v7574, %v7602
      %v7604 = vpop.f32.mrf.mxu0
      %v7605 = vadd.f32 %v7576, %v7604
      %7606 = vdwg.mxu0
      %v7607 = vmax.f32 %v7588, 0.0
      %v7608 = vmax.f32 %v7590, 0.0
      %v7609 = vmax.f32 %v7593, 0.0
      %v7610 = vmax.f32 %v7595, 0.0
      %v7611 = vmax.f32 %v7598, 0.0
      %v7612 = vmax.f32 %v7600, 0.0
      %v7613 = vmax.f32 %v7603, 0.0
      %v7614 = vmax.f32 %v7605, 0.0
      %v7615 = vpack.c.bf16 %v7607, %v7607
      %v7616 = vpack.c.bf16 %v7608, %v7608
      %v7617 = vpack.c.bf16 %v7609, %v7609
      %v7618 = vpack.c.bf16 %v7610, %v7610
      %v7619 = vpack.c.bf16 %v7611, %v7611
      %v7620 = vpack.c.bf16 %v7612, %v7612
      %v7621 = vpack.c.bf16 %v7613, %v7613
      %v7622 = vpack.c.bf16 %v7614, %v7614
      %vm7623 = vcmask 519168
      %7624 = vst.msk [vmem:[%s224] sm:$0xf] %vm7623, %v7615
      %7625 = vst.msk [vmem:[%s224 + $0x4] sm:$0xf] %vm7623, %v7616
      %7626 = vst.msk [vmem:[%s224 + $0x8] sm:$0xf] %vm7623, %v7617
      %7627 = vst.msk [vmem:[%s224 + $0xc] sm:$0xf] %vm7623, %v7618
      %7628 = vst.msk [vmem:[%s224 + $0x10] sm:$0xf] %vm7623, %v7619
      %7629 = vst.msk [vmem:[%s224 + $0x14] sm:$0xf] %vm7623, %v7620
      %7630 = vst.msk [vmem:[%s224 + $0x18] sm:$0xf] %vm7623, %v7621
      %7631 = vst.msk [vmem:[%s224 + $0x1c] sm:$0xf] %vm7623, %v7622
      %p7632 = scmp.lt.s32.totalorder %s16, 1
      %s7633 = scalar_select %p7632, %s16, 1
      %s7634 = smul.addr %s7633, 8
      %s7635 = smul.addr %s7634, 4
      %s7636 = scalar_lea.vmem %s5, %s7635
      // Predicated region
      $region41: #{gonnet_forward.2} parent=39 // pred_check
        %p7637 = pneg %p144
      $region42: #{gonnet_forward.2} parent=39 // pred_check_branch
        %7639 = sbr.rel (%p7637) target = $region44
      $region43: #{gonnet_forward.2} parent=39 // pred_region
        _
      $region44: #{gonnet_forward.2} parent=39 // pred_fallthru
        _
    $region40: #{gonnet_forward.2} parent=5 // pred_fallthru
      _
    %p7640 = scmp.le.s32.totalorder 2, %s11
    // Predicated region
    $region45: #{gonnet_forward.2} parent=5 // pred_check
      %p7641 = pneg %p7640
    $region46: #{gonnet_forward.2} parent=5 // pred_check_branch
      %7643 = sbr.rel (%p7641) target = $region48
    $region47: #{gonnet_forward.2} parent=5 // pred_region
      %s7644 = ssub.s32 %s11, 2
      // Predicated region
      $region49: #{gonnet_forward.2} parent=47 // pred_check
        %p7645 = pneg %p150
      $region50: #{gonnet_forward.2} parent=47 // pred_check_branch
        %7647 = sbr.rel (%p7645) target = $region52
      $region51: #{gonnet_forward.2} parent=47 // pred_region
        %p7648 = scmp.lt.s32.totalorder %s17, 1
        %s7649 = scalar_select %p7648, %s17, 1
        %s7650 = smul.addr %s7649, 8
        %s7651 = smul.addr %s7650, 4
        %s7652 = scalar_lea.vmem %s5, %s7651
      $region52: #{gonnet_forward.2} parent=47 // pred_fallthru
        _
    $region48: #{gonnet_forward.2} parent=5 // pred_fallthru
      _
  $region6: #{gonnet_forward.2} parent=0 // loop_footer
    %s15 = sadd.s32 1, %s11
  $region7: #{gonnet_forward.2} parent=0 // loop_footer_branch
    %10 = sbr.rel target = $region3
  $region8: #{gonnet_forward.2} parent=0 // loop_exit
    _

</llo_original>
